<compile_context>
chip_gen: v7x
topology: tpu7x:2x2x1
jax: 0.10.0
libtpu: 0.0.40
codegen_flags: <defaults>
</compile_context>

<pallas_src>
import functools
import math

import jax
import jax.numpy as jnp
import numpy as np
from jax import lax
from jax.experimental import pallas as pl
from jax.experimental.pallas import tpu as pltpu

EPS = 1e-5


def _round_up(x, m):
    return (x + m - 1) // m * m


def _vmem_limit(request_bytes):
    """Generation-aware VMEM request, capped safely below physical capacity."""
    cap = 64 * 1024 * 1024                      # conservative (v7x) fallback
    try:
        info_fn = getattr(pltpu, "get_tpu_info", None)
        if info_fn is not None:
            cap = int(info_fn().vmem_capacity_bytes)
    except Exception:
        pass
    ceiling = cap * 7 // 8                      # leave headroom for compiler scratch
    return int(min(ceiling, max(request_bytes + (2 << 20), 8 << 20)))


# ---------------------------------------------------------------------------
# Phase A: conv as 9 shifted matmuls + per-tile partial batch statistics
# ---------------------------------------------------------------------------
def conv_stats_kernel(xq_ref, w_ref, y_ref, sum_ref, sq_ref, *, oh, ow):
    # xq_ref : (TB, 4, OH+1, OW+1, C_in) f32  — stride-2 parity planes (ee, eo, oe, oo)
    # w_ref  : (9, C_in, C_pad) f32           — per-tap weight matrices, tap = kh*3+kw
    # y_ref  : (TB*OH*OW, C_pad) f32          — pre-BN conv output for this batch tile
    # sum_ref/sq_ref: (1, 8, C_pad) f32       — per-tile partials (8 identical rows so
    #                                           the block stays (8,128)-aligned)
    tb = xq_ref.shape[0]
    c_in = xq_ref.shape[-1]
    c_pad = w_ref.shape[-1]
    rows = tb * oh * ow

    xq = xq_ref[...]
    w = w_ref[...]
    acc = jnp.zeros((rows, c_pad), jnp.float32)
    # Tap (kh, kw) reads parity plane (kh%2, kw%2) at offset (kh//2, kw//2):
    # contiguous static slices only -> no strided VMEM loads, no im2col in HBM.
    for kh in range(3):
        for kw in range(3):
            p = (kh % 2) * 2 + (kw % 2)
            dr, dc = kh // 2, kw // 2
            tap = xq[:, p, dr:dr + oh, dc:dc + ow, :]          # (TB, OH, OW, C_in)
            lhs = tap.reshape(rows, c_in)
            acc = acc + jnp.dot(lhs, w[kh * 3 + kw],
                                preferred_element_type=jnp.float32,
                                precision=lax.Precision.HIGHEST)

    y_ref[...] = acc.astype(y_ref.dtype)
    s = jnp.sum(acc, axis=0, keepdims=True)                    # (1, C_pad)
    sq = jnp.sum(acc * acc, axis=0, keepdims=True)
    sum_ref[...] = jnp.broadcast_to(s.reshape(1, 1, c_pad), sum_ref.shape)
    sq_ref[...] = jnp.broadcast_to(sq.reshape(1, 1, c_pad), sq_ref.shape)


# ---------------------------------------------------------------------------
# Phase B: normalize + affine + ReLU (pure elementwise, mem-bound)
# ---------------------------------------------------------------------------
def bn_relu_kernel(y_ref, scale_ref, shift_ref, o_ref):
    o_ref[...] = jnp.maximum(y_ref[...] * scale_ref[...] + shift_ref[...],
                             0.0).astype(o_ref.dtype)


# ---------------------------------------------------------------------------
# Wrapper
# ---------------------------------------------------------------------------
def conv_block_forward(x, conv_w, conv_b, gamma, beta, *, rows_target=1024):
    """x: [N, C_in, H, W] -> [N, C_out, OH, OW]; fused Conv + BN(train) + ReLU."""
    del conv_b  # per-channel conv bias cancels exactly in BatchNorm mean subtraction

    N, C_in, H, W = x.shape
    C_out = conv_w.shape[0]
    OH = (H + 2 - 3) // 2 + 1
    OW = (W + 2 - 3) // 2 + 1
    C_pad = _round_up(C_out, 128)

    # ---- batch-tile size: ~rows_target output rows per grid step, multiple of 8 ----
    tpi = OH * OW                                    # output rows per image
    tb = max(1, min(N, rows_target // tpi if tpi <= rows_target else 1))
    base = 8 // math.gcd(tpi, 8)                     # make TB*OH*OW a multiple of 8
    tb = max(base, (tb // base) * base)
    nb = pl.cdiv(N, tb)
    N_pad = nb * tb
    R = tb * tpi                                     # rows per grid step
    M = N * tpi                                      # true sample count for BN stats
    M_pad = N_pad * tpi
    # Zero-padded images produce y == 0 (no conv bias), so they contribute nothing
    # to sum / sumsq; stats are divided by the true M below.

    # ---- layout prep (single ~input-sized pass; replaces materialized im2col) ------
    nhwc = jnp.transpose(x, (0, 2, 3, 1)).astype(jnp.float32)
    hp = 2 * OH + 1 - H                              # bottom pad -> both parities OH+1
    wp = 2 * OW + 1 - W
    xp = jnp.pad(nhwc, ((0, N_pad - N), (1, hp), (1, wp), (0, 0)))
    xq = jnp.stack([xp[:, 0::2, 0::2, :], xp[:, 0::2, 1::2, :],
                    xp[:, 1::2, 0::2, :], xp[:, 1::2, 1::2, :]],
                   axis=1)                           # (N_pad, 4, OH+1, OW+1, C_in)

    w9 = jnp.transpose(conv_w, (2, 3, 1, 0)).reshape(9, C_in, C_out)
    w9 = jnp.pad(w9, ((0, 0), (0, 0), (0, C_pad - C_out))).astype(jnp.float32)

    # ---- phase A: conv + per-tile partial stats -------------------------------------
    vmem_a = _vmem_limit(
        2 * (tb * 4 * (OH + 1) * (OW + 1) * C_in * 4)   # input block (double buffered)
        + 2 * (9 * C_in * C_pad * 4)                    # weight block (2 bufs by default)
        + 2 * (R * C_pad * 4)                           # y block
        + 4 * (8 * C_pad * 4)                           # stats blocks
        + R * C_pad * 4)                                # f32 accumulator
    y, psum, psq = pl.pallas_call(
        functools.partial(conv_stats_kernel, oh=OH, ow=OW),
        out_shape=(jax.ShapeDtypeStruct((M_pad, C_pad), jnp.float32),
                   jax.ShapeDtypeStruct((nb, 8, C_pad), jnp.float32),
                   jax.ShapeDtypeStruct((nb, 8, C_pad), jnp.float32)),
        grid=(nb,),
        in_specs=[pl.BlockSpec((tb, 4, OH + 1, OW + 1, C_in),
                               lambda b: (b, 0, 0, 0, 0)),
                  pl.BlockSpec((9, C_in, C_pad), lambda b: (0, 0, 0))],
        out_specs=(pl.BlockSpec((R, C_pad), lambda b: (b, 0)),
                   pl.BlockSpec((1, 8, C_pad), lambda b: (b, 0, 0)),
                   pl.BlockSpec((1, 8, C_pad), lambda b: (b, 0, 0))),
        compiler_params=pltpu.CompilerParams(
            dimension_semantics=("parallel",),   # per-tile partials -> both TCs on v7x
            vmem_limit_bytes=vmem_a),
        cost_estimate=pl.CostEstimate(
            flops=2 * M_pad * 9 * C_in * C_pad,
            transcendentals=0,
            bytes_accessed=(N_pad * 4 * (OH + 1) * (OW + 1) * C_in * 4
                            + 9 * C_in * C_pad * 4 + M_pad * C_pad * 4)),
    )(xq, w9)

    # ---- tiny per-channel stats finalization (plain JAX) ---------------------------
    sum_c = jnp.sum(psum[:, 0, :], axis=0)
    sq_c = jnp.sum(psq[:, 0, :], axis=0)
    mean = sum_c / M
    # TODO(synk): switch to a Chan-style per-tile mean/var merge if |mean| >> std.
    var = jnp.maximum(sq_c / M - mean * mean, 0.0)
    inv_std = lax.rsqrt(var + jnp.float32(EPS))
    gamma_p = jnp.pad(gamma.astype(jnp.float32), (0, C_pad - C_out))
    beta_p = jnp.pad(beta.astype(jnp.float32), (0, C_pad - C_out))
    scale = (gamma_p * inv_std).reshape(1, C_pad)
    shift = (beta_p - mean * gamma_p * inv_std).reshape(1, C_pad)

    # ---- phase B: normalize + ReLU ---------------------------------------------------
    vmem_b = _vmem_limit(4 * (R * C_pad * 4) + 4 * (C_pad * 4))
    out_flat = pl.pallas_call(
        bn_relu_kernel,
        out_shape=jax.ShapeDtypeStruct((M_pad, C_pad), jnp.float32),
        grid=(nb,),
        in_specs=[pl.BlockSpec((R, C_pad), lambda b: (b, 0)),
                  pl.BlockSpec((1, C_pad), lambda b: (0, 0)),
                  pl.BlockSpec((1, C_pad), lambda b: (0, 0))],
        out_specs=pl.BlockSpec((R, C_pad), lambda b: (b, 0)),
        compiler_params=pltpu.CompilerParams(
            dimension_semantics=("parallel",),
            vmem_limit_bytes=vmem_b),
        cost_estimate=pl.CostEstimate(
            flops=2 * M_pad * C_pad,
            transcendentals=0,
            bytes_accessed=2 * M_pad * C_pad * 4),
    )(y, scale, shift)

    # strip padding, [M, C_out] -> NCHW (module contract; extra XLA transpose pass)
    out = out_flat[:M, :C_out].reshape(N, OH, OW, C_out)
    return jnp.transpose(out, (0, 3, 1, 2))


# ---------------------------------------------------------------------------
# Pure-JAX reference mirroring PyTorch ConvBlock.forward (train-mode BN)
# ---------------------------------------------------------------------------
def reference_forward(x, conv_w, conv_b, gamma, beta):
    y = lax.conv_general_dilated(
        x, conv_w, window_strides=(2, 2), padding=((1, 1), (1, 1)),
        dimension_numbers=("NCHW", "OIHW", "NCHW"),
        precision=lax.Precision.HIGHEST)
    y = y + conv_b.reshape(1, -1, 1, 1)
    mean = jnp.mean(y, axis=(0, 2, 3), keepdims=True)
    var = jnp.mean((y - mean) ** 2, axis=(0, 2, 3), keepdims=True)  # biased
    y = gamma.reshape(1, -1, 1, 1) * (y - mean) / jnp.sqrt(var + EPS) \
        + beta.reshape(1, -1, 1, 1)
    return jnp.maximum(y, 0.0)


if __name__ == "__main__":
    key = jax.random.PRNGKey(0)
    k_x, k_w, k_b, k_g, k_bt = jax.random.split(key, 5)

    N, C_in, H, W = 2, 4, 16, 16
    C_out = 8

    x = jax.random.normal(k_x, (N, C_in, H, W), dtype=jnp.float32)
    fan_in = C_in * 3 * 3
    bound = 1.0 / np.sqrt(fan_in)
    conv_w = jax.random.uniform(k_w, (C_out, C_in, 3, 3), jnp.float32, -bound, bound)
    conv_b = jax.random.uniform(k_b, (C_out,), jnp.float32, -bound, bound)
    gamma = 1.0 + 0.1 * jax.random.normal(k_g, (C_out,), dtype=jnp.float32)
    beta = 0.1 * jax.random.normal(k_bt, (C_out,), dtype=jnp.float32)

    out = conv_block_forward(x, conv_w, conv_b, gamma, beta)
    out = jax.block_until_ready(out)

    ref = reference_forward(x, conv_w, conv_b, gamma, beta)
    assert out.shape == (N, C_out, H // 2, W // 2), out.shape
    np.testing.assert_allclose(np.asarray(out), np.asarray(ref), rtol=2e-3, atol=2e-3)

    print("KERNEL_OK")
</pallas_src>

<mosaic_0001>
module attributes {stable_mosaic.version = 11 : i64} {
  func.func @conv_stats_kernel(%arg0: i32, %arg1: memref<2x4x9x9x4xf32, #tpu.memory_space<vmem>>, %arg2: memref<9x4x128xf32, #tpu.memory_space<vmem>>, %arg3: memref<128x128xf32, #tpu.memory_space<vmem>>, %arg4: memref<1x8x128xf32, #tpu.memory_space<vmem>>, %arg5: memref<1x8x128xf32, #tpu.memory_space<vmem>>) attributes {dimension_semantics = [#tpu.dimension_semantics<parallel>], iteration_bounds = array<i64: 1>, scalar_prefetch = 0 : i64, scratch_operands = 0 : i64, tpu.core_type = #tpu.core_type<tc>, window_params = [{transform_indices = @transform_0, window_bounds = array<i64: 2, 4, 9, 9, 4>}, {pipeline_mode = #tpu.pipeline_mode<synchronous>, transform_indices = @transform_1, window_bounds = array<i64: 9, 4, 128>}, {transform_indices = @transform_2, window_bounds = array<i64: 128, 128>}, {transform_indices = @transform_3, window_bounds = array<i64: 1, 8, 128>}, {transform_indices = @transform_4, window_bounds = array<i64: 1, 8, 128>}]} {
    %c0 = arith.constant 0 : index
    %c0_0 = arith.constant 0 : index
    %c0_1 = arith.constant 0 : index
    %c0_2 = arith.constant 0 : index
    %c0_3 = arith.constant 0 : index
    %0 = vector.load %arg1[%c0, %c0_0, %c0_1, %c0_2, %c0_3] : memref<2x4x9x9x4xf32, #tpu.memory_space<vmem>>, vector<2x4x9x9x4xf32>
    %c0_4 = arith.constant 0 : index
    %c0_5 = arith.constant 0 : index
    %c0_6 = arith.constant 0 : index
    %1 = vector.load %arg2[%c0_4, %c0_5, %c0_6] : memref<9x4x128xf32, #tpu.memory_space<vmem>>, vector<9x4x128xf32>
    %cst = arith.constant 0.000000e+00 : f32
    %2 = vector.broadcast %cst : f32 to vector<128x128xf32>
    %3 = vector.extract_strided_slice %0 {offsets = [0, 0, 0, 0, 0], sizes = [2, 1, 8, 8, 4], strides = [1, 1, 1, 1, 1]} : vector<2x4x9x9x4xf32> to vector<2x1x8x8x4xf32>
    %4 = vector.shape_cast %3 : vector<2x1x8x8x4xf32> to vector<2x8x8x4xf32>
    %5 = vector.shape_cast %4 : vector<2x8x8x4xf32> to vector<128x4xf32>
    %6 = vector.extract_strided_slice %1 {offsets = [0, 0, 0], sizes = [1, 4, 128], strides = [1, 1, 1]} : vector<9x4x128xf32> to vector<1x4x128xf32>
    %7 = vector.shape_cast %6 : vector<1x4x128xf32> to vector<4x128xf32>
    %cst_7 = arith.constant dense<0.000000e+00> : vector<128x128xf32>
    %8 = tpu.matmul %5, %7, %cst_7 {dimension_numbers = #tpu.dot_dimension_numbers<[1], [0], [0], [1], [0, 0, 1, 1], [], []>, precision = #tpu.contract_precision<fp32>} : vector<128x4xf32>, vector<4x128xf32>, vector<128x128xf32> -> vector<128x128xf32>
    %9 = arith.addf %2, %8 : vector<128x128xf32>
    %10 = vector.extract_strided_slice %0 {offsets = [0, 1, 0, 0, 0], sizes = [2, 1, 8, 8, 4], strides = [1, 1, 1, 1, 1]} : vector<2x4x9x9x4xf32> to vector<2x1x8x8x4xf32>
    %11 = vector.shape_cast %10 : vector<2x1x8x8x4xf32> to vector<2x8x8x4xf32>
    %12 = vector.shape_cast %11 : vector<2x8x8x4xf32> to vector<128x4xf32>
    %13 = vector.extract_strided_slice %1 {offsets = [1, 0, 0], sizes = [1, 4, 128], strides = [1, 1, 1]} : vector<9x4x128xf32> to vector<1x4x128xf32>
    %14 = vector.shape_cast %13 : vector<1x4x128xf32> to vector<4x128xf32>
    %cst_8 = arith.constant dense<0.000000e+00> : vector<128x128xf32>
    %15 = tpu.matmul %12, %14, %cst_8 {dimension_numbers = #tpu.dot_dimension_numbers<[1], [0], [0], [1], [0, 0, 1, 1], [], []>, precision = #tpu.contract_precision<fp32>} : vector<128x4xf32>, vector<4x128xf32>, vector<128x128xf32> -> vector<128x128xf32>
    %16 = arith.addf %9, %15 : vector<128x128xf32>
    %17 = vector.extract_strided_slice %0 {offsets = [0, 0, 0, 1, 0], sizes = [2, 1, 8, 8, 4], strides = [1, 1, 1, 1, 1]} : vector<2x4x9x9x4xf32> to vector<2x1x8x8x4xf32>
    %18 = vector.shape_cast %17 : vector<2x1x8x8x4xf32> to vector<2x8x8x4xf32>
    %19 = vector.shape_cast %18 : vector<2x8x8x4xf32> to vector<128x4xf32>
    %20 = vector.extract_strided_slice %1 {offsets = [2, 0, 0], sizes = [1, 4, 128], strides = [1, 1, 1]} : vector<9x4x128xf32> to vector<1x4x128xf32>
    %21 = vector.shape_cast %20 : vector<1x4x128xf32> to vector<4x128xf32>
    %cst_9 = arith.constant dense<0.000000e+00> : vector<128x128xf32>
    %22 = tpu.matmul %19, %21, %cst_9 {dimension_numbers = #tpu.dot_dimension_numbers<[1], [0], [0], [1], [0, 0, 1, 1], [], []>, precision = #tpu.contract_precision<fp32>} : vector<128x4xf32>, vector<4x128xf32>, vector<128x128xf32> -> vector<128x128xf32>
    %23 = arith.addf %16, %22 : vector<128x128xf32>
    %24 = vector.extract_strided_slice %0 {offsets = [0, 2, 0, 0, 0], sizes = [2, 1, 8, 8, 4], strides = [1, 1, 1, 1, 1]} : vector<2x4x9x9x4xf32> to vector<2x1x8x8x4xf32>
    %25 = vector.shape_cast %24 : vector<2x1x8x8x4xf32> to vector<2x8x8x4xf32>
    %26 = vector.shape_cast %25 : vector<2x8x8x4xf32> to vector<128x4xf32>
    %27 = vector.extract_strided_slice %1 {offsets = [3, 0, 0], sizes = [1, 4, 128], strides = [1, 1, 1]} : vector<9x4x128xf32> to vector<1x4x128xf32>
    %28 = vector.shape_cast %27 : vector<1x4x128xf32> to vector<4x128xf32>
    %cst_10 = arith.constant dense<0.000000e+00> : vector<128x128xf32>
    %29 = tpu.matmul %26, %28, %cst_10 {dimension_numbers = #tpu.dot_dimension_numbers<[1], [0], [0], [1], [0, 0, 1, 1], [], []>, precision = #tpu.contract_precision<fp32>} : vector<128x4xf32>, vector<4x128xf32>, vector<128x128xf32> -> vector<128x128xf32>
    %30 = arith.addf %23, %29 : vector<128x128xf32>
    %31 = vector.extract_strided_slice %0 {offsets = [0, 3, 0, 0, 0], sizes = [2, 1, 8, 8, 4], strides = [1, 1, 1, 1, 1]} : vector<2x4x9x9x4xf32> to vector<2x1x8x8x4xf32>
    %32 = vector.shape_cast %31 : vector<2x1x8x8x4xf32> to vector<2x8x8x4xf32>
    %33 = vector.shape_cast %32 : vector<2x8x8x4xf32> to vector<128x4xf32>
    %34 = vector.extract_strided_slice %1 {offsets = [4, 0, 0], sizes = [1, 4, 128], strides = [1, 1, 1]} : vector<9x4x128xf32> to vector<1x4x128xf32>
    %35 = vector.shape_cast %34 : vector<1x4x128xf32> to vector<4x128xf32>
    %cst_11 = arith.constant dense<0.000000e+00> : vector<128x128xf32>
    %36 = tpu.matmul %33, %35, %cst_11 {dimension_numbers = #tpu.dot_dimension_numbers<[1], [0], [0], [1], [0, 0, 1, 1], [], []>, precision = #tpu.contract_precision<fp32>} : vector<128x4xf32>, vector<4x128xf32>, vector<128x128xf32> -> vector<128x128xf32>
    %37 = arith.addf %30, %36 : vector<128x128xf32>
    %38 = vector.extract_strided_slice %0 {offsets = [0, 2, 0, 1, 0], sizes = [2, 1, 8, 8, 4], strides = [1, 1, 1, 1, 1]} : vector<2x4x9x9x4xf32> to vector<2x1x8x8x4xf32>
    %39 = vector.shape_cast %38 : vector<2x1x8x8x4xf32> to vector<2x8x8x4xf32>
    %40 = vector.shape_cast %39 : vector<2x8x8x4xf32> to vector<128x4xf32>
    %41 = vector.extract_strided_slice %1 {offsets = [5, 0, 0], sizes = [1, 4, 128], strides = [1, 1, 1]} : vector<9x4x128xf32> to vector<1x4x128xf32>
    %42 = vector.shape_cast %41 : vector<1x4x128xf32> to vector<4x128xf32>
    %cst_12 = arith.constant dense<0.000000e+00> : vector<128x128xf32>
    %43 = tpu.matmul %40, %42, %cst_12 {dimension_numbers = #tpu.dot_dimension_numbers<[1], [0], [0], [1], [0, 0, 1, 1], [], []>, precision = #tpu.contract_precision<fp32>} : vector<128x4xf32>, vector<4x128xf32>, vector<128x128xf32> -> vector<128x128xf32>
    %44 = arith.addf %37, %43 : vector<128x128xf32>
    %45 = vector.extract_strided_slice %0 {offsets = [0, 0, 1, 0, 0], sizes = [2, 1, 8, 8, 4], strides = [1, 1, 1, 1, 1]} : vector<2x4x9x9x4xf32> to vector<2x1x8x8x4xf32>
    %46 = vector.shape_cast %45 : vector<2x1x8x8x4xf32> to vector<2x8x8x4xf32>
    %47 = vector.shape_cast %46 : vector<2x8x8x4xf32> to vector<128x4xf32>
    %48 = vector.extract_strided_slice %1 {offsets = [6, 0, 0], sizes = [1, 4, 128], strides = [1, 1, 1]} : vector<9x4x128xf32> to vector<1x4x128xf32>
    %49 = vector.shape_cast %48 : vector<1x4x128xf32> to vector<4x128xf32>
    %cst_13 = arith.constant dense<0.000000e+00> : vector<128x128xf32>
    %50 = tpu.matmul %47, %49, %cst_13 {dimension_numbers = #tpu.dot_dimension_numbers<[1], [0], [0], [1], [0, 0, 1, 1], [], []>, precision = #tpu.contract_precision<fp32>} : vector<128x4xf32>, vector<4x128xf32>, vector<128x128xf32> -> vector<128x128xf32>
    %51 = arith.addf %44, %50 : vector<128x128xf32>
    %52 = vector.extract_strided_slice %0 {offsets = [0, 1, 1, 0, 0], sizes = [2, 1, 8, 8, 4], strides = [1, 1, 1, 1, 1]} : vector<2x4x9x9x4xf32> to vector<2x1x8x8x4xf32>
    %53 = vector.shape_cast %52 : vector<2x1x8x8x4xf32> to vector<2x8x8x4xf32>
    %54 = vector.shape_cast %53 : vector<2x8x8x4xf32> to vector<128x4xf32>
    %55 = vector.extract_strided_slice %1 {offsets = [7, 0, 0], sizes = [1, 4, 128], strides = [1, 1, 1]} : vector<9x4x128xf32> to vector<1x4x128xf32>
    %56 = vector.shape_cast %55 : vector<1x4x128xf32> to vector<4x128xf32>
    %cst_14 = arith.constant dense<0.000000e+00> : vector<128x128xf32>
    %57 = tpu.matmul %54, %56, %cst_14 {dimension_numbers = #tpu.dot_dimension_numbers<[1], [0], [0], [1], [0, 0, 1, 1], [], []>, precision = #tpu.contract_precision<fp32>} : vector<128x4xf32>, vector<4x128xf32>, vector<128x128xf32> -> vector<128x128xf32>
    %58 = arith.addf %51, %57 : vector<128x128xf32>
    %59 = vector.extract_strided_slice %0 {offsets = [0, 0, 1, 1, 0], sizes = [2, 1, 8, 8, 4], strides = [1, 1, 1, 1, 1]} : vector<2x4x9x9x4xf32> to vector<2x1x8x8x4xf32>
    %60 = vector.shape_cast %59 : vector<2x1x8x8x4xf32> to vector<2x8x8x4xf32>
    %61 = vector.shape_cast %60 : vector<2x8x8x4xf32> to vector<128x4xf32>
    %62 = vector.extract_strided_slice %1 {offsets = [8, 0, 0], sizes = [1, 4, 128], strides = [1, 1, 1]} : vector<9x4x128xf32> to vector<1x4x128xf32>
    %63 = vector.shape_cast %62 : vector<1x4x128xf32> to vector<4x128xf32>
    %cst_15 = arith.constant dense<0.000000e+00> : vector<128x128xf32>
    %64 = tpu.matmul %61, %63, %cst_15 {dimension_numbers = #tpu.dot_dimension_numbers<[1], [0], [0], [1], [0, 0, 1, 1], [], []>, precision = #tpu.contract_precision<fp32>} : vector<128x4xf32>, vector<4x128xf32>, vector<128x128xf32> -> vector<128x128xf32>
    %65 = arith.addf %58, %64 : vector<128x128xf32>
    %c0_16 = arith.constant 0 : index
    %c0_17 = arith.constant 0 : index
    %66 = vector.load %arg3[%c0_16, %c0_17] : memref<128x128xf32, #tpu.memory_space<vmem>>, vector<128x128xf32>
    tpu.vector_store %arg3[%c0_16, %c0_17], %65 {strides = array<i32>} : memref<128x128xf32, #tpu.memory_space<vmem>>, vector<128x128xf32>,
    %cst_18 = arith.constant dense<0.000000e+00> : vector<128xf32>
    %67 = vector.multi_reduction <add>, %65, %cst_18 [0] : vector<128x128xf32> to vector<128xf32>
    %68 = vector.shape_cast %67 : vector<128xf32> to vector<1x128xf32>
    %69 = arith.mulf %65, %65 : vector<128x128xf32>
    %cst_19 = arith.constant dense<0.000000e+00> : vector<128xf32>
    %70 = vector.multi_reduction <add>, %69, %cst_19 [0] : vector<128x128xf32> to vector<128xf32>
    %71 = vector.shape_cast %70 : vector<128xf32> to vector<1x128xf32>
    %72 = vector.shape_cast %68 : vector<1x128xf32> to vector<1x1x128xf32>
    %73 = vector.shape_cast %72 : vector<1x1x128xf32> to vector<1x1x128xf32>
    %74 = vector.broadcast %73 : vector<1x1x128xf32> to vector<1x8x128xf32>
    %c0_20 = arith.constant 0 : index
    %c0_21 = arith.constant 0 : index
    %c0_22 = arith.constant 0 : index
    %75 = vector.load %arg4[%c0_20, %c0_21, %c0_22] : memref<1x8x128xf32, #tpu.memory_space<vmem>>, vector<1x8x128xf32>
    tpu.vector_store %arg4[%c0_20, %c0_21, %c0_22], %74 {strides = array<i32>} : memref<1x8x128xf32, #tpu.memory_space<vmem>>, vector<1x8x128xf32>,
    %76 = vector.shape_cast %71 : vector<1x128xf32> to vector<1x1x128xf32>
    %77 = vector.shape_cast %76 : vector<1x1x128xf32> to vector<1x1x128xf32>
    %78 = vector.broadcast %77 : vector<1x1x128xf32> to vector<1x8x128xf32>
    %c0_23 = arith.constant 0 : index
    %c0_24 = arith.constant 0 : index
    %c0_25 = arith.constant 0 : index
    %79 = vector.load %arg5[%c0_23, %c0_24, %c0_25] : memref<1x8x128xf32, #tpu.memory_space<vmem>>, vector<1x8x128xf32>
    tpu.vector_store %arg5[%c0_23, %c0_24, %c0_25], %78 {strides = array<i32>} : memref<1x8x128xf32, #tpu.memory_space<vmem>>, vector<1x8x128xf32>,
    return
  }
  func.func @transform_0(%arg0: i32) -> (i32, i32, i32, i32, i32) {
    %c0_i32 = arith.constant 0 : i32
    %c0_i32_0 = arith.constant 0 : i32
    %c0_i32_1 = arith.constant 0 : i32
    %c0_i32_2 = arith.constant 0 : i32
    %c0_i32_3 = arith.constant 0 : i32
    return %arg0, %c0_i32, %c0_i32_0, %c0_i32_1, %c0_i32_2 : i32, i32, i32, i32, i32
  }
  func.func @transform_1(%arg0: i32) -> (i32, i32, i32) {
    %c0_i32 = arith.constant 0 : i32
    %c0_i32_0 = arith.constant 0 : i32
    %c0_i32_1 = arith.constant 0 : i32
    %c0_i32_2 = arith.constant 0 : i32
    return %c0_i32, %c0_i32_0, %c0_i32_1 : i32, i32, i32
  }
  func.func @transform_2(%arg0: i32) -> (i32, i32) {
    %c0_i32 = arith.constant 0 : i32
    %c0_i32_0 = arith.constant 0 : i32
    return %arg0, %c0_i32 : i32, i32
  }
  func.func @transform_3(%arg0: i32) -> (i32, i32, i32) {
    %c0_i32 = arith.constant 0 : i32
    %c0_i32_0 = arith.constant 0 : i32
    %c0_i32_1 = arith.constant 0 : i32
    return %arg0, %c0_i32, %c0_i32_0 : i32, i32, i32
  }
  func.func @transform_4(%arg0: i32) -> (i32, i32, i32) {
    %c0_i32 = arith.constant 0 : i32
    %c0_i32_0 = arith.constant 0 : i32
    %c0_i32_1 = arith.constant 0 : i32
    return %arg0, %c0_i32, %c0_i32_0 : i32, i32, i32
  }
}

</mosaic_0001>

<llo_original>
// kernel: tpu_custom_call.1
$region0: #{tpu_custom_call.1}
  #allocation0 [shape = 'u32[]', space=smem, size = 0x4, offset = 0x4, fixed_abs, tag = 'smem constant byte address 0x4 - core index']
  #allocation1 [shape = 'u32[144,128]{1,0:T(1,128)}', space=vmem, size = 0x12000, scoped, tag = 'internal scratch']
  %s0 = inlined_call_operand.vmem [shape: f32[2,4,9,9,4], index: 0, kind: input, shape index: {}]
  %s1 = inlined_call_operand.vmem [shape: f32[9,4,128], index: 1, kind: input, shape index: {}]
  %s2 = inlined_call_operand.hbm [shape: f32[128,128], index: 2, kind: output, shape index: {0}]
  %s3 = inlined_call_operand.hbm [shape: f32[1,8,128], index: 3, kind: output, shape index: {1}]
  %s4 = inlined_call_operand.hbm [shape: f32[1,8,128], index: 4, kind: output, shape index: {2}]
  %5 = xla_tuple %s2, %s3, %s4
  %s6 = sld [smem:[#allocation0]]
  $region34: #{tpu_custom_call.1} parent=0
    _
  %s8 = ssub.s32 1, %s6
  %s9 = scalar_select 0, %s8, %s6
  $region1: #{tpu_custom_call.1} parent=0
    #allocation2 [shape = 'u8[65536]{0}', space=vmem, size = 0x10000, scoped, tag = 'output window, operand 0, single buffered']
    #allocation3 [shape = 's32[1]{0}', space=sflag, size = 0x4, scoped, tag = 'scoped memory for tpu_custom_call.1']
    #allocation4 [shape = 'u8[4096]{0}', space=vmem, size = 0x1000, scoped, tag = 'output window, operand 1, single buffered']
    #allocation5 [shape = 's32[1]{0}', space=sflag, size = 0x4, scoped, tag = 'scoped memory for tpu_custom_call.1']
    #allocation6 [shape = 'u8[4096]{0}', space=vmem, size = 0x1000, scoped, tag = 'output window, operand 2, single buffered']
    %10 = vsyncpa [#allocation3], 0
    %11 = vsyncpa [#allocation5], 0
    // Predicated region
    $region2: #{tpu_custom_call.1} parent=1 // pred_check
      _
    $region3: #{tpu_custom_call.1} parent=1 // pred_check_branch
      %13 = sbr.rel (0) target = $region5
    $region4: #{tpu_custom_call.1} parent=1 // pred_region
      _
    $region5: #{tpu_custom_call.1} parent=1 // pred_fallthru
      _
    // Predicated region
    $region6: #{tpu_custom_call.1} parent=1 // pred_check
      _
    $region7: #{tpu_custom_call.1} parent=1 // pred_check_branch
      %15 = sbr.rel (0) target = $region9
    $region8: #{tpu_custom_call.1} parent=1 // pred_region
      _
    $region9: #{tpu_custom_call.1} parent=1 // pred_fallthru
      _
    %v16 = vld [vmem:[%s0] sm:$0xff]
    %v17 = vld [vmem:[%s0 + $0x8] sm:$0x1]
    %v18 = vld [vmem:[%s0 + $0x10] sm:$0xff]
    %v19 = vld [vmem:[%s0 + $0x18] sm:$0x1]
    %v20 = vld [vmem:[%s0 + $0x20] sm:$0xff]
    %v21 = vld [vmem:[%s0 + $0x28] sm:$0x1]
    %v22 = vld [vmem:[%s0 + $0x30] sm:$0xff]
    %v23 = vld [vmem:[%s0 + $0x38] sm:$0x1]
    %v24 = vld [vmem:[%s0 + $0x40] sm:$0xff]
    %v25 = vld [vmem:[%s0 + $0x48] sm:$0x1]
    %v26 = vld [vmem:[%s0 + $0x50] sm:$0xff]
    %v27 = vld [vmem:[%s0 + $0x58] sm:$0x1]
    %v28 = vld [vmem:[%s0 + $0x60] sm:$0xff]
    %v29 = vld [vmem:[%s0 + $0x68] sm:$0x1]
    %v30 = vld [vmem:[%s0 + $0x70] sm:$0xff]
    %v31 = vld [vmem:[%s0 + $0x78] sm:$0x1]
    %v32 = vld [vmem:[%s0 + $0x80] sm:$0xff]
    %v33 = vld [vmem:[%s0 + $0x88] sm:$0x1]
    %v34 = vld [vmem:[%s0 + $0x90] sm:$0xff]
    %v35 = vld [vmem:[%s0 + $0xa0] sm:$0xff]
    %v36 = vld [vmem:[%s0 + $0xb0] sm:$0xff]
    %v37 = vld [vmem:[%s0 + $0xc0] sm:$0xff]
    %v38 = vld [vmem:[%s0 + $0xd0] sm:$0xff]
    %v39 = vld [vmem:[%s0 + $0xe0] sm:$0xff]
    %v40 = vld [vmem:[%s0 + $0xf0] sm:$0xff]
    %v41 = vld [vmem:[%s0 + $0x100] sm:$0xff]
    %v42 = vld [vmem:[%s0 + $0x110] sm:$0xff]
    %v43 = vld [vmem:[%s0 + $0x120] sm:$0xff]
    %v44 = vld [vmem:[%s0 + $0x128] sm:$0x1]
    %v45 = vld [vmem:[%s0 + $0x130] sm:$0xff]
    %v46 = vld [vmem:[%s0 + $0x138] sm:$0x1]
    %v47 = vld [vmem:[%s0 + $0x140] sm:$0xff]
    %v48 = vld [vmem:[%s0 + $0x148] sm:$0x1]
    %v49 = vld [vmem:[%s0 + $0x150] sm:$0xff]
    %v50 = vld [vmem:[%s0 + $0x158] sm:$0x1]
    %v51 = vld [vmem:[%s0 + $0x160] sm:$0xff]
    %v52 = vld [vmem:[%s0 + $0x168] sm:$0x1]
    %v53 = vld [vmem:[%s0 + $0x170] sm:$0xff]
    %v54 = vld [vmem:[%s0 + $0x178] sm:$0x1]
    %v55 = vld [vmem:[%s0 + $0x180] sm:$0xff]
    %v56 = vld [vmem:[%s0 + $0x188] sm:$0x1]
    %v57 = vld [vmem:[%s0 + $0x190] sm:$0xff]
    %v58 = vld [vmem:[%s0 + $0x198] sm:$0x1]
    %v59 = vld [vmem:[%s0 + $0x1b0] sm:$0xff]
    %v60 = vld [vmem:[%s0 + $0x1c0] sm:$0xff]
    %v61 = vld [vmem:[%s0 + $0x1d0] sm:$0xff]
    %v62 = vld [vmem:[%s0 + $0x1e0] sm:$0xff]
    %v63 = vld [vmem:[%s0 + $0x1f0] sm:$0xff]
    %v64 = vld [vmem:[%s0 + $0x200] sm:$0xff]
    %v65 = vld [vmem:[%s0 + $0x210] sm:$0xff]
    %v66 = vld [vmem:[%s0 + $0x220] sm:$0xff]
    %v67 = vld [vmem:[%s0 + $0x240] sm:$0xff]
    %v68 = vld [vmem:[%s0 + $0x248] sm:$0x1]
    %v69 = vld [vmem:[%s0 + $0x250] sm:$0xff]
    %v70 = vld [vmem:[%s0 + $0x258] sm:$0x1]
    %v71 = vld [vmem:[%s0 + $0x260] sm:$0xff]
    %v72 = vld [vmem:[%s0 + $0x268] sm:$0x1]
    %v73 = vld [vmem:[%s0 + $0x270] sm:$0xff]
    %v74 = vld [vmem:[%s0 + $0x278] sm:$0x1]
    %v75 = vld [vmem:[%s0 + $0x280] sm:$0xff]
    %v76 = vld [vmem:[%s0 + $0x288] sm:$0x1]
    %v77 = vld [vmem:[%s0 + $0x290] sm:$0xff]
    %v78 = vld [vmem:[%s0 + $0x298] sm:$0x1]
    %v79 = vld [vmem:[%s0 + $0x2a0] sm:$0xff]
    %v80 = vld [vmem:[%s0 + $0x2a8] sm:$0x1]
    %v81 = vld [vmem:[%s0 + $0x2b0] sm:$0xff]
    %v82 = vld [vmem:[%s0 + $0x2b8] sm:$0x1]
    %v83 = vld [vmem:[%s0 + $0x2c0] sm:$0xff]
    %v84 = vld [vmem:[%s0 + $0x2c8] sm:$0x1]
    %v85 = vld [vmem:[%s0 + $0x2d0] sm:$0xff]
    %v86 = vld [vmem:[%s0 + $0x2e0] sm:$0xff]
    %v87 = vld [vmem:[%s0 + $0x2f0] sm:$0xff]
    %v88 = vld [vmem:[%s0 + $0x300] sm:$0xff]
    %v89 = vld [vmem:[%s0 + $0x310] sm:$0xff]
    %v90 = vld [vmem:[%s0 + $0x320] sm:$0xff]
    %v91 = vld [vmem:[%s0 + $0x330] sm:$0xff]
    %v92 = vld [vmem:[%s0 + $0x340] sm:$0xff]
    %v93 = vld [vmem:[%s0 + $0x350] sm:$0xff]
    %v94 = vld [vmem:[%s0 + $0x360] sm:$0xff]
    %v95 = vld [vmem:[%s0 + $0x368] sm:$0x1]
    %v96 = vld [vmem:[%s0 + $0x370] sm:$0xff]
    %v97 = vld [vmem:[%s0 + $0x378] sm:$0x1]
    %v98 = vld [vmem:[%s0 + $0x380] sm:$0xff]
    %v99 = vld [vmem:[%s0 + $0x388] sm:$0x1]
    %v100 = vld [vmem:[%s0 + $0x390] sm:$0xff]
    %v101 = vld [vmem:[%s0 + $0x398] sm:$0x1]
    %v102 = vld [vmem:[%s0 + $0x3a0] sm:$0xff]
    %v103 = vld [vmem:[%s0 + $0x3a8] sm:$0x1]
    %v104 = vld [vmem:[%s0 + $0x3b0] sm:$0xff]
    %v105 = vld [vmem:[%s0 + $0x3b8] sm:$0x1]
    %v106 = vld [vmem:[%s0 + $0x3c0] sm:$0xff]
    %v107 = vld [vmem:[%s0 + $0x3c8] sm:$0x1]
    %v108 = vld [vmem:[%s0 + $0x3d0] sm:$0xff]
    %v109 = vld [vmem:[%s0 + $0x3d8] sm:$0x1]
    %v110 = vld [vmem:[%s0 + $0x3f0] sm:$0xff]
    %v111 = vld [vmem:[%s0 + $0x400] sm:$0xff]
    %v112 = vld [vmem:[%s0 + $0x410] sm:$0xff]
    %v113 = vld [vmem:[%s0 + $0x420] sm:$0xff]
    %v114 = vld [vmem:[%s0 + $0x430] sm:$0xff]
    %v115 = vld [vmem:[%s0 + $0x440] sm:$0xff]
    %v116 = vld [vmem:[%s0 + $0x450] sm:$0xff]
    %v117 = vld [vmem:[%s0 + $0x460] sm:$0xff]
    %v118 = vld [vmem:[%s1] sm:$0xf]
    %v119 = vld [vmem:[%s1 + $0x4] sm:$0xf]
    %v120 = vld [vmem:[%s1 + $0x8] sm:$0xf]
    %v121 = vld [vmem:[%s1 + $0xc] sm:$0xf]
    %v122 = vld [vmem:[%s1 + $0x10] sm:$0xf]
    %v123 = vld [vmem:[%s1 + $0x14] sm:$0xf]
    %v124 = vld [vmem:[%s1 + $0x18] sm:$0xf]
    %v125 = vld [vmem:[%s1 + $0x1c] sm:$0xf]
    %v126 = vld [vmem:[%s1 + $0x20] sm:$0xf]
    %vm127 = vcmask 31744
    %v129 = vsel %vm127, %v34, 0
    %v132 = vsel %vm127, %v35, 0
    %v135 = vsel %vm127, %v36, 0
    %v138 = vsel %vm127, %v37, 0
    %v141 = vsel %vm127, %v38, 0
    %v144 = vsel %vm127, %v39, 0
    %v147 = vsel %vm127, %v40, 0
    %v150 = vsel %vm127, %v41, 0
    %v153 = vsel %vm127, %v85, 0
    %v156 = vsel %vm127, %v86, 0
    %v159 = vsel %vm127, %v87, 0
    %v162 = vsel %vm127, %v88, 0
    %v165 = vsel %vm127, %v89, 0
    %v168 = vsel %vm127, %v90, 0
    %v171 = vsel %vm127, %v91, 0
    %v174 = vsel %vm127, %v92, 0
    %vm176 = vcmask 1043456
    %v178 = vsel %vm176, %v119, 0
    %180 = vmatprep.subr.mxu0 0.0
    %v181 = vand.u32 %v178, 4294901760
    %182 = vmatpush1.msra.mxu0 %v181
    %183 = vmatprep.subr.mxu0 0.0
    %184 = vmatpush1.msra.mxu0 0.0
    %185 = vmatprep.subr.mxu0 0.0
    %186 = vmatpush1.msra.mxu0 0.0
    %187 = vmatprep.subr.mxu0 0.0
    %188 = vmatpush1.msra.mxu0 0.0
    %189 = vmatprep.subr.mxu0 0.0
    %190 = vmatpush1.msra.mxu0 0.0
    %191 = vmatprep.subr.mxu0 0.0
    %192 = vmatpush1.msra.mxu0 0.0
    %193 = vmatprep.subr.mxu0 0.0
    %194 = vmatpush1.msra.mxu0 0.0
    %195 = vmatprep.subr.mxu0 0.0
    %196 = vmatpush1.msra.mxu0 0.0
    %197 = vmatprep.subr.mxu0 0.0
    %198 = vmatpush1.msra.mxu0 0.0
    %199 = vmatprep.subr.mxu0 0.0
    %200 = vmatpush1.msra.mxu0 0.0
    %201 = vmatprep.subr.mxu0 0.0
    %202 = vmatpush1.msra.mxu0 0.0
    %203 = vmatprep.subr.mxu0 0.0
    %204 = vmatpush1.msra.mxu0 0.0
    %205 = vmatprep.subr.mxu0 0.0
    %206 = vmatpush1.msra.mxu0 0.0
    %207 = vmatprep.subr.mxu0 0.0
    %208 = vmatpush1.msra.mxu0 0.0
    %209 = vmatprep.subr.mxu0 0.0
    %210 = vmatpush1.msra.mxu0 0.0
    %211 = vmatprep.subr.mxu0 0.0
    %212 = vmatpush1.msra.mxu0 0.0
    %213 = vmatprep.subr.mxu0 0.0
    %214 = vmatpush1.msra.mxu0 0.0
    %215 = vmatprep.subr.mxu0 0.0
    %216 = vmatpush1.msra.mxu0 0.0
    %217 = vmatprep.subr.mxu0 0.0
    %218 = vmatpush1.msra.mxu0 0.0
    %219 = vmatprep.subr.mxu0 0.0
    %220 = vmatpush1.msra.mxu0 0.0
    %221 = vmatprep.subr.mxu0 0.0
    %222 = vmatpush1.msra.mxu0 0.0
    %223 = vmatprep.subr.mxu0 0.0
    %224 = vmatpush1.msra.mxu0 0.0
    %225 = vmatprep.subr.mxu0 0.0
    %226 = vmatpush1.msra.mxu0 0.0
    %227 = vmatprep.subr.mxu0 0.0
    %228 = vmatpush1.msra.mxu0 0.0
    %229 = vmatprep.subr.mxu0 0.0
    %230 = vmatpush1.msra.mxu0 0.0
    %231 = vmatprep.subr.mxu0 0.0
    %232 = vmatpush1.msra.mxu0 0.0
    %233 = vmatprep.subr.mxu0 0.0
    %234 = vmatpush1.msra.mxu0 0.0
    %235 = vmatprep.subr.mxu0 0.0
    %236 = vmatpush1.msra.mxu0 0.0
    %237 = vmatprep.subr.mxu0 0.0
    %238 = vmatpush1.msra.mxu0 0.0
    %239 = vmatprep.subr.mxu0 0.0
    %240 = vmatpush1.msra.mxu0 0.0
    %241 = vmatprep.subr.mxu0 0.0
    %242 = vmatpush1.msra.mxu0 0.0
    %243 = vmatprep.subr.mxu0 0.0
    %244 = vmatpush1.msra.mxu0 0.0
    %245 = vmatprep.mubr.f32.mxu0 0.0
    %v246 = vand.u32 %v129, 4294901760
    %v247 = vsub.f32 %v129, %v246
    %v248 = vand.u32 %v247, 4294901760
    %v249 = vsub.f32 %v247, %v248
    %v250 = vand.u32 %v249, 4294901760
    %251 = vmatmul.mubr.f32.gmra.mrb[0].mxu0 %v250
    %v252 = vpop.f32.mrb[0].mxu0
    %v253 = vadd.f32 0.0, %v252
    %v254 = vpop.f32.mrb[0].mxu0
    %255 = vmatprep.mubr.f32.mxu0 0.0
    %v256 = vand.u32 %v132, 4294901760
    %v257 = vsub.f32 %v132, %v256
    %v258 = vand.u32 %v257, 4294901760
    %v259 = vsub.f32 %v257, %v258
    %v260 = vand.u32 %v259, 4294901760
    %261 = vmatmul.mubr.f32.gmra.mrb[0].mxu0 %v260
    %v262 = vpop.f32.mrb[0].mxu0
    %v263 = vadd.f32 0.0, %v262
    %v264 = vpop.f32.mrb[0].mxu0
    %265 = vmatprep.mubr.f32.mxu0 0.0
    %v266 = vand.u32 %v135, 4294901760
    %v267 = vsub.f32 %v135, %v266
    %v268 = vand.u32 %v267, 4294901760
    %v269 = vsub.f32 %v267, %v268
    %v270 = vand.u32 %v269, 4294901760
    %271 = vmatmul.mubr.f32.gmra.mrb[0].mxu0 %v270
    %v272 = vpop.f32.mrb[0].mxu0
    %v273 = vadd.f32 0.0, %v272
    %v274 = vpop.f32.mrb[0].mxu0
    %275 = vmatprep.mubr.f32.mxu0 0.0
    %v276 = vand.u32 %v138, 4294901760
    %v277 = vsub.f32 %v138, %v276
    %v278 = vand.u32 %v277, 4294901760
    %v279 = vsub.f32 %v277, %v278
    %v280 = vand.u32 %v279, 4294901760
    %281 = vmatmul.mubr.f32.gmra.mrb[0].mxu0 %v280
    %v282 = vpop.f32.mrb[0].mxu0
    %v283 = vadd.f32 0.0, %v282
    %v284 = vpop.f32.mrb[0].mxu0
    %285 = vmatprep.mubr.f32.mxu0 0.0
    %v286 = vand.u32 %v141, 4294901760
    %v287 = vsub.f32 %v141, %v286
    %v288 = vand.u32 %v287, 4294901760
    %v289 = vsub.f32 %v287, %v288
    %v290 = vand.u32 %v289, 4294901760
    %291 = vmatmul.mubr.f32.gmra.mrb[0].mxu0 %v290
    %v292 = vpop.f32.mrb[0].mxu0
    %v293 = vadd.f32 0.0, %v292
    %v294 = vpop.f32.mrb[0].mxu0
    %295 = vmatprep.mubr.f32.mxu0 0.0
    %v296 = vand.u32 %v144, 4294901760
    %v297 = vsub.f32 %v144, %v296
    %v298 = vand.u32 %v297, 4294901760
    %v299 = vsub.f32 %v297, %v298
    %v300 = vand.u32 %v299, 4294901760
    %301 = vmatmul.mubr.f32.gmra.mrb[0].mxu0 %v300
    %v302 = vpop.f32.mrb[0].mxu0
    %v303 = vadd.f32 0.0, %v302
    %v304 = vpop.f32.mrb[0].mxu0
    %305 = vmatprep.mubr.f32.mxu0 0.0
    %v306 = vand.u32 %v147, 4294901760
    %v307 = vsub.f32 %v147, %v306
    %v308 = vand.u32 %v307, 4294901760
    %v309 = vsub.f32 %v307, %v308
    %v310 = vand.u32 %v309, 4294901760
    %311 = vmatmul.mubr.f32.gmra.mrb[0].mxu0 %v310
    %v312 = vpop.f32.mrb[0].mxu0
    %v313 = vadd.f32 0.0, %v312
    %v314 = vpop.f32.mrb[0].mxu0
    %315 = vmatprep.mubr.f32.mxu0 0.0
    %v316 = vand.u32 %v150, 4294901760
    %v317 = vsub.f32 %v150, %v316
    %v318 = vand.u32 %v317, 4294901760
    %v319 = vsub.f32 %v317, %v318
    %v320 = vand.u32 %v319, 4294901760
    %321 = vmatmul.mubr.f32.gmra.mrb[0].mxu0 %v320
    %v322 = vpop.f32.mrb[0].mxu0
    %v323 = vadd.f32 0.0, %v322
    %v324 = vpop.f32.mrb[0].mxu0
    %325 = vmatprep.mubr.f32.mxu0 0.0
    %v326 = vand.u32 %v153, 4294901760
    %v327 = vsub.f32 %v153, %v326
    %v328 = vand.u32 %v327, 4294901760
    %v329 = vsub.f32 %v327, %v328
    %v330 = vand.u32 %v329, 4294901760
    %331 = vmatmul.mubr.f32.gmra.mrb[0].mxu0 %v330
    %v332 = vpop.f32.mrb[0].mxu0
    %v333 = vadd.f32 0.0, %v332
    %v334 = vpop.f32.mrb[0].mxu0
    %335 = vmatprep.mubr.f32.mxu0 0.0
    %v336 = vand.u32 %v156, 4294901760
    %v337 = vsub.f32 %v156, %v336
    %v338 = vand.u32 %v337, 4294901760
    %v339 = vsub.f32 %v337, %v338
    %v340 = vand.u32 %v339, 4294901760
    %341 = vmatmul.mubr.f32.gmra.mrb[0].mxu0 %v340
    %v342 = vpop.f32.mrb[0].mxu0
    %v343 = vadd.f32 0.0, %v342
    %v344 = vpop.f32.mrb[0].mxu0
    %345 = vmatprep.mubr.f32.mxu0 0.0
    %v346 = vand.u32 %v159, 4294901760
    %v347 = vsub.f32 %v159, %v346
    %v348 = vand.u32 %v347, 4294901760
    %v349 = vsub.f32 %v347, %v348
    %v350 = vand.u32 %v349, 4294901760
    %351 = vmatmul.mubr.f32.gmra.mrb[0].mxu0 %v350
    %v352 = vpop.f32.mrb[0].mxu0
    %v353 = vadd.f32 0.0, %v352
    %v354 = vpop.f32.mrb[0].mxu0
    %355 = vmatprep.mubr.f32.mxu0 0.0
    %v356 = vand.u32 %v162, 4294901760
    %v357 = vsub.f32 %v162, %v356
    %v358 = vand.u32 %v357, 4294901760
    %v359 = vsub.f32 %v357, %v358
    %v360 = vand.u32 %v359, 4294901760
    %361 = vmatmul.mubr.f32.gmra.mrb[0].mxu0 %v360
    %v362 = vpop.f32.mrb[0].mxu0
    %v363 = vadd.f32 0.0, %v362
    %v364 = vpop.f32.mrb[0].mxu0
    %365 = vmatprep.mubr.f32.mxu0 0.0
    %v366 = vand.u32 %v165, 4294901760
    %v367 = vsub.f32 %v165, %v366
    %v368 = vand.u32 %v367, 4294901760
    %v369 = vsub.f32 %v367, %v368
    %v370 = vand.u32 %v369, 4294901760
    %371 = vmatmul.mubr.f32.gmra.mrb[0].mxu0 %v370
    %v372 = vpop.f32.mrb[0].mxu0
    %v373 = vadd.f32 0.0, %v372
    %v374 = vpop.f32.mrb[0].mxu0
    %375 = vmatprep.mubr.f32.mxu0 0.0
    %v376 = vand.u32 %v168, 4294901760
    %v377 = vsub.f32 %v168, %v376
    %v378 = vand.u32 %v377, 4294901760
    %v379 = vsub.f32 %v377, %v378
    %v380 = vand.u32 %v379, 4294901760
    %381 = vmatmul.mubr.f32.gmra.mrb[0].mxu0 %v380
    %v382 = vpop.f32.mrb[0].mxu0
    %v383 = vadd.f32 0.0, %v382
    %v384 = vpop.f32.mrb[0].mxu0
    %385 = vmatprep.mubr.f32.mxu0 0.0
    %v386 = vand.u32 %v171, 4294901760
    %v387 = vsub.f32 %v171, %v386
    %v388 = vand.u32 %v387, 4294901760
    %v389 = vsub.f32 %v387, %v388
    %v390 = vand.u32 %v389, 4294901760
    %391 = vmatmul.mubr.f32.gmra.mrb[0].mxu0 %v390
    %v392 = vpop.f32.mrb[0].mxu0
    %v393 = vadd.f32 0.0, %v392
    %v394 = vpop.f32.mrb[0].mxu0
    %395 = vmatprep.mubr.f32.mxu0 0.0
    %v396 = vand.u32 %v174, 4294901760
    %v397 = vsub.f32 %v174, %v396
    %v398 = vand.u32 %v397, 4294901760
    %v399 = vsub.f32 %v397, %v398
    %v400 = vand.u32 %v399, 4294901760
    %401 = vmatmul.mubr.f32.gmra.mrb[0].mxu0 %v400
    %v402 = vpop.f32.mrb[0].mxu0
    %v403 = vadd.f32 0.0, %v402
    %v404 = vpop.f32.mrb[0].mxu0
    %405 = vdwg.mxu0
    %406 = vmatprep.subr.mxu0 0.0
    %v407 = vand.u32 %v178, 4294901760
    %v408 = vsub.f32 %v178, %v407
    %v409 = vand.u32 %v408, 4294901760
    %v410 = vsub.f32 %v408, %v409
    %v411 = vand.u32 %v410, 4294901760
    %412 = vmatpush1.msra.mxu0 %v411
    %413 = vmatprep.subr.mxu0 0.0
    %414 = vmatpush1.msra.mxu0 0.0
    %415 = vmatprep.subr.mxu0 0.0
    %416 = vmatpush1.msra.mxu0 0.0
    %417 = vmatprep.subr.mxu0 0.0
    %418 = vmatpush1.msra.mxu0 0.0
    %419 = vmatprep.subr.mxu0 0.0
    %420 = vmatpush1.msra.mxu0 0.0
    %421 = vmatprep.subr.mxu0 0.0
    %422 = vmatpush1.msra.mxu0 0.0
    %423 = vmatprep.subr.mxu0 0.0
    %424 = vmatpush1.msra.mxu0 0.0
    %425 = vmatprep.subr.mxu0 0.0
    %426 = vmatpush1.msra.mxu0 0.0
    %427 = vmatprep.subr.mxu0 0.0
    %428 = vmatpush1.msra.mxu0 0.0
    %429 = vmatprep.subr.mxu0 0.0
    %430 = vmatpush1.msra.mxu0 0.0
    %431 = vmatprep.subr.mxu0 0.0
    %432 = vmatpush1.msra.mxu0 0.0
    %433 = vmatprep.subr.mxu0 0.0
    %434 = vmatpush1.msra.mxu0 0.0
    %435 = vmatprep.subr.mxu0 0.0
    %436 = vmatpush1.msra.mxu0 0.0
    %437 = vmatprep.subr.mxu0 0.0
    %438 = vmatpush1.msra.mxu0 0.0
    %439 = vmatprep.subr.mxu0 0.0
    %440 = vmatpush1.msra.mxu0 0.0
    %441 = vmatprep.subr.mxu0 0.0
    %442 = vmatpush1.msra.mxu0 0.0
    %443 = vmatprep.subr.mxu0 0.0
    %444 = vmatpush1.msra.mxu0 0.0
    %445 = vmatprep.subr.mxu0 0.0
    %446 = vmatpush1.msra.mxu0 0.0
    %447 = vmatprep.subr.mxu0 0.0
    %448 = vmatpush1.msra.mxu0 0.0
    %449 = vmatprep.subr.mxu0 0.0
    %450 = vmatpush1.msra.mxu0 0.0
    %451 = vmatprep.subr.mxu0 0.0
    %452 = vmatpush1.msra.mxu0 0.0
    %453 = vmatprep.subr.mxu0 0.0
    %454 = vmatpush1.msra.mxu0 0.0
    %455 = vmatprep.subr.mxu0 0.0
    %456 = vmatpush1.msra.mxu0 0.0
    %457 = vmatprep.subr.mxu0 0.0
    %458 = vmatpush1.msra.mxu0 0.0
    %459 = vmatprep.subr.mxu0 0.0
    %460 = vmatpush1.msra.mxu0 0.0
    %461 = vmatprep.subr.mxu0 0.0
    %462 = vmatpush1.msra.mxu0 0.0
    %463 = vmatprep.subr.mxu0 0.0
    %464 = vmatpush1.msra.mxu0 0.0
    %465 = vmatprep.subr.mxu0 0.0
    %466 = vmatpush1.msra.mxu0 0.0
    %467 = vmatprep.subr.mxu0 0.0
    %468 = vmatpush1.msra.mxu0 0.0
    %469 = vmatprep.subr.mxu0 0.0
    %470 = vmatpush1.msra.mxu0 0.0
    %471 = vmatprep.subr.mxu0 0.0
    %472 = vmatpush1.msra.mxu0 0.0
    %473 = vmatprep.subr.mxu0 0.0
    %474 = vmatpush1.msra.mxu0 0.0
    %475 = vmatprep.mubr.f32.mxu0 0.0
    %v476 = vand.u32 %v129, 4294901760
    %477 = vmatmul.mubr.f32.gmra.mrb[0].mxu0 %v476
    %v478 = vpop.f32.mrb[0].mxu0
    %v479 = vadd.f32 %v253, %v478
    %v480 = vpop.f32.mrb[0].mxu0
    %481 = vmatprep.mubr.f32.mxu0 0.0
    %v482 = vand.u32 %v132, 4294901760
    %483 = vmatmul.mubr.f32.gmra.mrb[0].mxu0 %v482
    %v484 = vpop.f32.mrb[0].mxu0
    %v485 = vadd.f32 %v263, %v484
    %v486 = vpop.f32.mrb[0].mxu0
    %487 = vmatprep.mubr.f32.mxu0 0.0
    %v488 = vand.u32 %v135, 4294901760
    %489 = vmatmul.mubr.f32.gmra.mrb[0].mxu0 %v488
    %v490 = vpop.f32.mrb[0].mxu0
    %v491 = vadd.f32 %v273, %v490
    %v492 = vpop.f32.mrb[0].mxu0
    %493 = vmatprep.mubr.f32.mxu0 0.0
    %v494 = vand.u32 %v138, 4294901760
    %495 = vmatmul.mubr.f32.gmra.mrb[0].mxu0 %v494
    %v496 = vpop.f32.mrb[0].mxu0
    %v497 = vadd.f32 %v283, %v496
    %v498 = vpop.f32.mrb[0].mxu0
    %499 = vmatprep.mubr.f32.mxu0 0.0
    %v500 = vand.u32 %v141, 4294901760
    %501 = vmatmul.mubr.f32.gmra.mrb[0].mxu0 %v500
    %v502 = vpop.f32.mrb[0].mxu0
    %v503 = vadd.f32 %v293, %v502
    %v504 = vpop.f32.mrb[0].mxu0
    %505 = vmatprep.mubr.f32.mxu0 0.0
    %v506 = vand.u32 %v144, 4294901760
    %507 = vmatmul.mubr.f32.gmra.mrb[0].mxu0 %v506
    %v508 = vpop.f32.mrb[0].mxu0
    %v509 = vadd.f32 %v303, %v508
    %v510 = vpop.f32.mrb[0].mxu0
    %511 = vmatprep.mubr.f32.mxu0 0.0
    %v512 = vand.u32 %v147, 4294901760
    %513 = vmatmul.mubr.f32.gmra.mrb[0].mxu0 %v512
    %v514 = vpop.f32.mrb[0].mxu0
    %v515 = vadd.f32 %v313, %v514
    %v516 = vpop.f32.mrb[0].mxu0
    %517 = vmatprep.mubr.f32.mxu0 0.0
    %v518 = vand.u32 %v150, 4294901760
    %519 = vmatmul.mubr.f32.gmra.mrb[0].mxu0 %v518
    %v520 = vpop.f32.mrb[0].mxu0
    %v521 = vadd.f32 %v323, %v520
    %v522 = vpop.f32.mrb[0].mxu0
    %523 = vmatprep.mubr.f32.mxu0 0.0
    %v524 = vand.u32 %v153, 4294901760
    %525 = vmatmul.mubr.f32.gmra.mrb[0].mxu0 %v524
    %v526 = vpop.f32.mrb[0].mxu0
    %v527 = vadd.f32 %v333, %v526
    %v528 = vpop.f32.mrb[0].mxu0
    %529 = vmatprep.mubr.f32.mxu0 0.0
    %v530 = vand.u32 %v156, 4294901760
    %531 = vmatmul.mubr.f32.gmra.mrb[0].mxu0 %v530
    %v532 = vpop.f32.mrb[0].mxu0
    %v533 = vadd.f32 %v343, %v532
    %v534 = vpop.f32.mrb[0].mxu0
    %535 = vmatprep.mubr.f32.mxu0 0.0
    %v536 = vand.u32 %v159, 4294901760
    %537 = vmatmul.mubr.f32.gmra.mrb[0].mxu0 %v536
    %v538 = vpop.f32.mrb[0].mxu0
    %v539 = vadd.f32 %v353, %v538
    %v540 = vpop.f32.mrb[0].mxu0
    %541 = vmatprep.mubr.f32.mxu0 0.0
    %v542 = vand.u32 %v162, 4294901760
    %543 = vmatmul.mubr.f32.gmra.mrb[0].mxu0 %v542
    %v544 = vpop.f32.mrb[0].mxu0
    %v545 = vadd.f32 %v363, %v544
    %v546 = vpop.f32.mrb[0].mxu0
    %547 = vmatprep.mubr.f32.mxu0 0.0
    %v548 = vand.u32 %v165, 4294901760
    %549 = vmatmul.mubr.f32.gmra.mrb[0].mxu0 %v548
    %v550 = vpop.f32.mrb[0].mxu0
    %v551 = vadd.f32 %v373, %v550
    %v552 = vpop.f32.mrb[0].mxu0
    %553 = vmatprep.mubr.f32.mxu0 0.0
    %v554 = vand.u32 %v168, 4294901760
    %555 = vmatmul.mubr.f32.gmra.mrb[0].mxu0 %v554
    %v556 = vpop.f32.mrb[0].mxu0
    %v557 = vadd.f32 %v383, %v556
    %v558 = vpop.f32.mrb[0].mxu0
    %559 = vmatprep.mubr.f32.mxu0 0.0
    %v560 = vand.u32 %v171, 4294901760
    %561 = vmatmul.mubr.f32.gmra.mrb[0].mxu0 %v560
    %v562 = vpop.f32.mrb[0].mxu0
    %v563 = vadd.f32 %v393, %v562
    %v564 = vpop.f32.mrb[0].mxu0
    %565 = vmatprep.mubr.f32.mxu0 0.0
    %v566 = vand.u32 %v174, 4294901760
    %567 = vmatmul.mubr.f32.gmra.mrb[0].mxu0 %v566
    %v568 = vpop.f32.mrb[0].mxu0
    %v569 = vadd.f32 %v403, %v568
    %v570 = vpop.f32.mrb[0].mxu0
    %571 = vdwg.mxu0
    %572 = vmatprep.subr.mxu0 0.0
    %v573 = vand.u32 %v178, 4294901760
    %v574 = vsub.f32 %v178, %v573
    %575 = vmatpush1.msra.mxu0 %v574
    %576 = vmatprep.subr.mxu0 0.0
    %577 = vmatpush1.msra.mxu0 0.0
    %578 = vmatprep.subr.mxu0 0.0
    %579 = vmatpush1.msra.mxu0 0.0
    %580 = vmatprep.subr.mxu0 0.0
    %581 = vmatpush1.msra.mxu0 0.0
    %582 = vmatprep.subr.mxu0 0.0
    %583 = vmatpush1.msra.mxu0 0.0
    %584 = vmatprep.subr.mxu0 0.0
    %585 = vmatpush1.msra.mxu0 0.0
    %586 = vmatprep.subr.mxu0 0.0
    %587 = vmatpush1.msra.mxu0 0.0
    %588 = vmatprep.subr.mxu0 0.0
    %589 = vmatpush1.msra.mxu0 0.0
    %590 = vmatprep.subr.mxu0 0.0
    %591 = vmatpush1.msra.mxu0 0.0
    %592 = vmatprep.subr.mxu0 0.0
    %593 = vmatpush1.msra.mxu0 0.0
    %594 = vmatprep.subr.mxu0 0.0
    %595 = vmatpush1.msra.mxu0 0.0
    %596 = vmatprep.subr.mxu0 0.0
    %597 = vmatpush1.msra.mxu0 0.0
    %598 = vmatprep.subr.mxu0 0.0
    %599 = vmatpush1.msra.mxu0 0.0
    %600 = vmatprep.subr.mxu0 0.0
    %601 = vmatpush1.msra.mxu0 0.0
    %602 = vmatprep.subr.mxu0 0.0
    %603 = vmatpush1.msra.mxu0 0.0
    %604 = vmatprep.subr.mxu0 0.0
    %605 = vmatpush1.msra.mxu0 0.0
    %606 = vmatprep.subr.mxu0 0.0
    %607 = vmatpush1.msra.mxu0 0.0
    %608 = vmatprep.subr.mxu0 0.0
    %609 = vmatpush1.msra.mxu0 0.0
    %610 = vmatprep.subr.mxu0 0.0
    %611 = vmatpush1.msra.mxu0 0.0
    %612 = vmatprep.subr.mxu0 0.0
    %613 = vmatpush1.msra.mxu0 0.0
    %614 = vmatprep.subr.mxu0 0.0
    %615 = vmatpush1.msra.mxu0 0.0
    %616 = vmatprep.subr.mxu0 0.0
    %617 = vmatpush1.msra.mxu0 0.0
    %618 = vmatprep.subr.mxu0 0.0
    %619 = vmatpush1.msra.mxu0 0.0
    %620 = vmatprep.subr.mxu0 0.0
    %621 = vmatpush1.msra.mxu0 0.0
    %622 = vmatprep.subr.mxu0 0.0
    %623 = vmatpush1.msra.mxu0 0.0
    %624 = vmatprep.subr.mxu0 0.0
    %625 = vmatpush1.msra.mxu0 0.0
    %626 = vmatprep.subr.mxu0 0.0
    %627 = vmatpush1.msra.mxu0 0.0
    %628 = vmatprep.subr.mxu0 0.0
    %629 = vmatpush1.msra.mxu0 0.0
    %630 = vmatprep.subr.mxu0 0.0
    %631 = vmatpush1.msra.mxu0 0.0
    %632 = vmatprep.subr.mxu0 0.0
    %633 = vmatpush1.msra.mxu0 0.0
    %634 = vmatprep.subr.mxu0 0.0
    %635 = vmatpush1.msra.mxu0 0.0
    %636 = vmatprep.subr.mxu0 0.0
    %637 = vmatpush1.msra.mxu0 0.0
    %638 = vmatprep.mubr.f32.mxu0 0.0
    %v639 = vand.u32 %v129, 4294901760
    %v640 = vsub.f32 %v129, %v639
    %641 = vmatmul.mubr.f32.gmra.mrb[0].mxu0 %v640
    %v642 = vpop.f32.mrb[0].mxu0
    %v643 = vadd.f32 %v479, %v642
    %v644 = vpop.f32.mrb[0].mxu0
    %645 = vmatprep.mubr.f32.mxu0 0.0
    %v646 = vand.u32 %v132, 4294901760
    %v647 = vsub.f32 %v132, %v646
    %648 = vmatmul.mubr.f32.gmra.mrb[0].mxu0 %v647
    %v649 = vpop.f32.mrb[0].mxu0
    %v650 = vadd.f32 %v485, %v649
    %v651 = vpop.f32.mrb[0].mxu0
    %652 = vmatprep.mubr.f32.mxu0 0.0
    %v653 = vand.u32 %v135, 4294901760
    %v654 = vsub.f32 %v135, %v653
    %655 = vmatmul.mubr.f32.gmra.mrb[0].mxu0 %v654
    %v656 = vpop.f32.mrb[0].mxu0
    %v657 = vadd.f32 %v491, %v656
    %v658 = vpop.f32.mrb[0].mxu0
    %659 = vmatprep.mubr.f32.mxu0 0.0
    %v660 = vand.u32 %v138, 4294901760
    %v661 = vsub.f32 %v138, %v660
    %662 = vmatmul.mubr.f32.gmra.mrb[0].mxu0 %v661
    %v663 = vpop.f32.mrb[0].mxu0
    %v664 = vadd.f32 %v497, %v663
    %v665 = vpop.f32.mrb[0].mxu0
    %666 = vmatprep.mubr.f32.mxu0 0.0
    %v667 = vand.u32 %v141, 4294901760
    %v668 = vsub.f32 %v141, %v667
    %669 = vmatmul.mubr.f32.gmra.mrb[0].mxu0 %v668
    %v670 = vpop.f32.mrb[0].mxu0
    %v671 = vadd.f32 %v503, %v670
    %v672 = vpop.f32.mrb[0].mxu0
    %673 = vmatprep.mubr.f32.mxu0 0.0
    %v674 = vand.u32 %v144, 4294901760
    %v675 = vsub.f32 %v144, %v674
    %676 = vmatmul.mubr.f32.gmra.mrb[0].mxu0 %v675
    %v677 = vpop.f32.mrb[0].mxu0
    %v678 = vadd.f32 %v509, %v677
    %v679 = vpop.f32.mrb[0].mxu0
    %680 = vmatprep.mubr.f32.mxu0 0.0
    %v681 = vand.u32 %v147, 4294901760
    %v682 = vsub.f32 %v147, %v681
    %683 = vmatmul.mubr.f32.gmra.mrb[0].mxu0 %v682
    %v684 = vpop.f32.mrb[0].mxu0
    %v685 = vadd.f32 %v515, %v684
    %v686 = vpop.f32.mrb[0].mxu0
    %687 = vmatprep.mubr.f32.mxu0 0.0
    %v688 = vand.u32 %v150, 4294901760
    %v689 = vsub.f32 %v150, %v688
    %690 = vmatmul.mubr.f32.gmra.mrb[0].mxu0 %v689
    %v691 = vpop.f32.mrb[0].mxu0
    %v692 = vadd.f32 %v521, %v691
    %v693 = vpop.f32.mrb[0].mxu0
    %694 = vmatprep.mubr.f32.mxu0 0.0
    %v695 = vand.u32 %v153, 4294901760
    %v696 = vsub.f32 %v153, %v695
    %697 = vmatmul.mubr.f32.gmra.mrb[0].mxu0 %v696
    %v698 = vpop.f32.mrb[0].mxu0
    %v699 = vadd.f32 %v527, %v698
    %v700 = vpop.f32.mrb[0].mxu0
    %701 = vmatprep.mubr.f32.mxu0 0.0
    %v702 = vand.u32 %v156, 4294901760
    %v703 = vsub.f32 %v156, %v702
    %704 = vmatmul.mubr.f32.gmra.mrb[0].mxu0 %v703
    %v705 = vpop.f32.mrb[0].mxu0
    %v706 = vadd.f32 %v533, %v705
    %v707 = vpop.f32.mrb[0].mxu0
    %708 = vmatprep.mubr.f32.mxu0 0.0
    %v709 = vand.u32 %v159, 4294901760
    %v710 = vsub.f32 %v159, %v709
    %711 = vmatmul.mubr.f32.gmra.mrb[0].mxu0 %v710
    %v712 = vpop.f32.mrb[0].mxu0
    %v713 = vadd.f32 %v539, %v712
    %v714 = vpop.f32.mrb[0].mxu0
    %715 = vmatprep.mubr.f32.mxu0 0.0
    %v716 = vand.u32 %v162, 4294901760
    %v717 = vsub.f32 %v162, %v716
    %718 = vmatmul.mubr.f32.gmra.mrb[0].mxu0 %v717
    %v719 = vpop.f32.mrb[0].mxu0
    %v720 = vadd.f32 %v545, %v719
    %v721 = vpop.f32.mrb[0].mxu0
    %722 = vmatprep.mubr.f32.mxu0 0.0
    %v723 = vand.u32 %v165, 4294901760
    %v724 = vsub.f32 %v165, %v723
    %725 = vmatmul.mubr.f32.gmra.mrb[0].mxu0 %v724
    %v726 = vpop.f32.mrb[0].mxu0
    %v727 = vadd.f32 %v551, %v726
    %v728 = vpop.f32.mrb[0].mxu0
    %729 = vmatprep.mubr.f32.mxu0 0.0
    %v730 = vand.u32 %v168, 4294901760
    %v731 = vsub.f32 %v168, %v730
    %732 = vmatmul.mubr.f32.gmra.mrb[0].mxu0 %v731
    %v733 = vpop.f32.mrb[0].mxu0
    %v734 = vadd.f32 %v557, %v733
    %v735 = vpop.f32.mrb[0].mxu0
    %736 = vmatprep.mubr.f32.mxu0 0.0
    %v737 = vand.u32 %v171, 4294901760
    %v738 = vsub.f32 %v171, %v737
    %739 = vmatmul.mubr.f32.gmra.mrb[0].mxu0 %v738
    %v740 = vpop.f32.mrb[0].mxu0
    %v741 = vadd.f32 %v563, %v740
    %v742 = vpop.f32.mrb[0].mxu0
    %743 = vmatprep.mubr.f32.mxu0 0.0
    %v744 = vand.u32 %v174, 4294901760
    %v745 = vsub.f32 %v174, %v744
    %746 = vmatmul.mubr.f32.gmra.mrb[0].mxu0 %v745
    %v747 = vpop.f32.mrb[0].mxu0
    %v748 = vadd.f32 %v569, %v747
    %v749 = vpop.f32.mrb[0].mxu0
    %750 = vdwg.mxu0
    %751 = vmatprep.subr.mxu0 0.0
    %v752 = vand.u32 %v178, 4294901760
    %753 = vmatpush1.msra.mxu0 %v752
    %754 = vmatprep.subr.mxu0 0.0
    %755 = vmatpush1.msra.mxu0 0.0
    %756 = vmatprep.subr.mxu0 0.0
    %757 = vmatpush1.msra.mxu0 0.0
    %758 = vmatprep.subr.mxu0 0.0
    %759 = vmatpush1.msra.mxu0 0.0
    %760 = vmatprep.subr.mxu0 0.0
    %761 = vmatpush1.msra.mxu0 0.0
    %762 = vmatprep.subr.mxu0 0.0
    %763 = vmatpush1.msra.mxu0 0.0
    %764 = vmatprep.subr.mxu0 0.0
    %765 = vmatpush1.msra.mxu0 0.0
    %766 = vmatprep.subr.mxu0 0.0
    %767 = vmatpush1.msra.mxu0 0.0
    %768 = vmatprep.subr.mxu0 0.0
    %769 = vmatpush1.msra.mxu0 0.0
    %770 = vmatprep.subr.mxu0 0.0
    %771 = vmatpush1.msra.mxu0 0.0
    %772 = vmatprep.subr.mxu0 0.0
    %773 = vmatpush1.msra.mxu0 0.0
    %774 = vmatprep.subr.mxu0 0.0
    %775 = vmatpush1.msra.mxu0 0.0
    %776 = vmatprep.subr.mxu0 0.0
    %777 = vmatpush1.msra.mxu0 0.0
    %778 = vmatprep.subr.mxu0 0.0
    %779 = vmatpush1.msra.mxu0 0.0
    %780 = vmatprep.subr.mxu0 0.0
    %781 = vmatpush1.msra.mxu0 0.0
    %782 = vmatprep.subr.mxu0 0.0
    %783 = vmatpush1.msra.mxu0 0.0
    %784 = vmatprep.subr.mxu0 0.0
    %785 = vmatpush1.msra.mxu0 0.0
    %786 = vmatprep.subr.mxu0 0.0
    %787 = vmatpush1.msra.mxu0 0.0
    %788 = vmatprep.subr.mxu0 0.0
    %789 = vmatpush1.msra.mxu0 0.0
    %790 = vmatprep.subr.mxu0 0.0
    %791 = vmatpush1.msra.mxu0 0.0
    %792 = vmatprep.subr.mxu0 0.0
    %793 = vmatpush1.msra.mxu0 0.0
    %794 = vmatprep.subr.mxu0 0.0
    %795 = vmatpush1.msra.mxu0 0.0
    %796 = vmatprep.subr.mxu0 0.0
    %797 = vmatpush1.msra.mxu0 0.0
    %798 = vmatprep.subr.mxu0 0.0
    %799 = vmatpush1.msra.mxu0 0.0
    %800 = vmatprep.subr.mxu0 0.0
    %801 = vmatpush1.msra.mxu0 0.0
    %802 = vmatprep.subr.mxu0 0.0
    %803 = vmatpush1.msra.mxu0 0.0
    %804 = vmatprep.subr.mxu0 0.0
    %805 = vmatpush1.msra.mxu0 0.0
    %806 = vmatprep.subr.mxu0 0.0
    %807 = vmatpush1.msra.mxu0 0.0
    %808 = vmatprep.subr.mxu0 0.0
    %809 = vmatpush1.msra.mxu0 0.0
    %810 = vmatprep.subr.mxu0 0.0
    %811 = vmatpush1.msra.mxu0 0.0
    %812 = vmatprep.subr.mxu0 0.0
    %813 = vmatpush1.msra.mxu0 0.0
    %814 = vmatprep.subr.mxu0 0.0
    %815 = vmatpush1.msra.mxu0 0.0
    %816 = vmatprep.mubr.f32.mxu0 0.0
    %v817 = vand.u32 %v129, 4294901760
    %v818 = vsub.f32 %v129, %v817
    %v819 = vand.u32 %v818, 4294901760
    %820 = vmatmul.mubr.f32.gmra.mrb[0].mxu0 %v819
    %v821 = vpop.f32.mrb[0].mxu0
    %v822 = vadd.f32 %v643, %v821
    %v823 = vpop.f32.mrb[0].mxu0
    %824 = vmatprep.mubr.f32.mxu0 0.0
    %v825 = vand.u32 %v132, 4294901760
    %v826 = vsub.f32 %v132, %v825
    %v827 = vand.u32 %v826, 4294901760
    %828 = vmatmul.mubr.f32.gmra.mrb[0].mxu0 %v827
    %v829 = vpop.f32.mrb[0].mxu0
    %v830 = vadd.f32 %v650, %v829
    %v831 = vpop.f32.mrb[0].mxu0
    %832 = vmatprep.mubr.f32.mxu0 0.0
    %v833 = vand.u32 %v135, 4294901760
    %v834 = vsub.f32 %v135, %v833
    %v835 = vand.u32 %v834, 4294901760
    %836 = vmatmul.mubr.f32.gmra.mrb[0].mxu0 %v835
    %v837 = vpop.f32.mrb[0].mxu0
    %v838 = vadd.f32 %v657, %v837
    %v839 = vpop.f32.mrb[0].mxu0
    %840 = vmatprep.mubr.f32.mxu0 0.0
    %v841 = vand.u32 %v138, 4294901760
    %v842 = vsub.f32 %v138, %v841
    %v843 = vand.u32 %v842, 4294901760
    %844 = vmatmul.mubr.f32.gmra.mrb[0].mxu0 %v843
    %v845 = vpop.f32.mrb[0].mxu0
    %v846 = vadd.f32 %v664, %v845
    %v847 = vpop.f32.mrb[0].mxu0
    %848 = vmatprep.mubr.f32.mxu0 0.0
    %v849 = vand.u32 %v141, 4294901760
    %v850 = vsub.f32 %v141, %v849
    %v851 = vand.u32 %v850, 4294901760
    %852 = vmatmul.mubr.f32.gmra.mrb[0].mxu0 %v851
    %v853 = vpop.f32.mrb[0].mxu0
    %v854 = vadd.f32 %v671, %v853
    %v855 = vpop.f32.mrb[0].mxu0
    %856 = vmatprep.mubr.f32.mxu0 0.0
    %v857 = vand.u32 %v144, 4294901760
    %v858 = vsub.f32 %v144, %v857
    %v859 = vand.u32 %v858, 4294901760
    %860 = vmatmul.mubr.f32.gmra.mrb[0].mxu0 %v859
    %v861 = vpop.f32.mrb[0].mxu0
    %v862 = vadd.f32 %v678, %v861
    %v863 = vpop.f32.mrb[0].mxu0
    %864 = vmatprep.mubr.f32.mxu0 0.0
    %v865 = vand.u32 %v147, 4294901760
    %v866 = vsub.f32 %v147, %v865
    %v867 = vand.u32 %v866, 4294901760
    %868 = vmatmul.mubr.f32.gmra.mrb[0].mxu0 %v867
    %v869 = vpop.f32.mrb[0].mxu0
    %v870 = vadd.f32 %v685, %v869
    %v871 = vpop.f32.mrb[0].mxu0
    %872 = vmatprep.mubr.f32.mxu0 0.0
    %v873 = vand.u32 %v150, 4294901760
    %v874 = vsub.f32 %v150, %v873
    %v875 = vand.u32 %v874, 4294901760
    %876 = vmatmul.mubr.f32.gmra.mrb[0].mxu0 %v875
    %v877 = vpop.f32.mrb[0].mxu0
    %v878 = vadd.f32 %v692, %v877
    %v879 = vpop.f32.mrb[0].mxu0
    %880 = vmatprep.mubr.f32.mxu0 0.0
    %v881 = vand.u32 %v153, 4294901760
    %v882 = vsub.f32 %v153, %v881
    %v883 = vand.u32 %v882, 4294901760
    %884 = vmatmul.mubr.f32.gmra.mrb[0].mxu0 %v883
    %v885 = vpop.f32.mrb[0].mxu0
    %v886 = vadd.f32 %v699, %v885
    %v887 = vpop.f32.mrb[0].mxu0
    %888 = vmatprep.mubr.f32.mxu0 0.0
    %v889 = vand.u32 %v156, 4294901760
    %v890 = vsub.f32 %v156, %v889
    %v891 = vand.u32 %v890, 4294901760
    %892 = vmatmul.mubr.f32.gmra.mrb[0].mxu0 %v891
    %v893 = vpop.f32.mrb[0].mxu0
    %v894 = vadd.f32 %v706, %v893
    %v895 = vpop.f32.mrb[0].mxu0
    %896 = vmatprep.mubr.f32.mxu0 0.0
    %v897 = vand.u32 %v159, 4294901760
    %v898 = vsub.f32 %v159, %v897
    %v899 = vand.u32 %v898, 4294901760
    %900 = vmatmul.mubr.f32.gmra.mrb[0].mxu0 %v899
    %v901 = vpop.f32.mrb[0].mxu0
    %v902 = vadd.f32 %v713, %v901
    %v903 = vpop.f32.mrb[0].mxu0
    %904 = vmatprep.mubr.f32.mxu0 0.0
    %v905 = vand.u32 %v162, 4294901760
    %v906 = vsub.f32 %v162, %v905
    %v907 = vand.u32 %v906, 4294901760
    %908 = vmatmul.mubr.f32.gmra.mrb[0].mxu0 %v907
    %v909 = vpop.f32.mrb[0].mxu0
    %v910 = vadd.f32 %v720, %v909
    %v911 = vpop.f32.mrb[0].mxu0
    %912 = vmatprep.mubr.f32.mxu0 0.0
    %v913 = vand.u32 %v165, 4294901760
    %v914 = vsub.f32 %v165, %v913
    %v915 = vand.u32 %v914, 4294901760
    %916 = vmatmul.mubr.f32.gmra.mrb[0].mxu0 %v915
    %v917 = vpop.f32.mrb[0].mxu0
    %v918 = vadd.f32 %v727, %v917
    %v919 = vpop.f32.mrb[0].mxu0
    %920 = vmatprep.mubr.f32.mxu0 0.0
    %v921 = vand.u32 %v168, 4294901760
    %v922 = vsub.f32 %v168, %v921
    %v923 = vand.u32 %v922, 4294901760
    %924 = vmatmul.mubr.f32.gmra.mrb[0].mxu0 %v923
    %v925 = vpop.f32.mrb[0].mxu0
    %v926 = vadd.f32 %v734, %v925
    %v927 = vpop.f32.mrb[0].mxu0
    %928 = vmatprep.mubr.f32.mxu0 0.0
    %v929 = vand.u32 %v171, 4294901760
    %v930 = vsub.f32 %v171, %v929
    %v931 = vand.u32 %v930, 4294901760
    %932 = vmatmul.mubr.f32.gmra.mrb[0].mxu0 %v931
    %v933 = vpop.f32.mrb[0].mxu0
    %v934 = vadd.f32 %v741, %v933
    %v935 = vpop.f32.mrb[0].mxu0
    %936 = vmatprep.mubr.f32.mxu0 0.0
    %v937 = vand.u32 %v174, 4294901760
    %v938 = vsub.f32 %v174, %v937
    %v939 = vand.u32 %v938, 4294901760
    %940 = vmatmul.mubr.f32.gmra.mrb[0].mxu0 %v939
    %v941 = vpop.f32.mrb[0].mxu0
    %v942 = vadd.f32 %v748, %v941
    %v943 = vpop.f32.mrb[0].mxu0
    %944 = vdwg.mxu0
    %945 = vmatprep.subr.mxu0 0.0
    %v946 = vand.u32 %v178, 4294901760
    %v947 = vsub.f32 %v178, %v946
    %v948 = vand.u32 %v947, 4294901760
    %949 = vmatpush1.msra.mxu0 %v948
    %950 = vmatprep.subr.mxu0 0.0
    %951 = vmatpush1.msra.mxu0 0.0
    %952 = vmatprep.subr.mxu0 0.0
    %953 = vmatpush1.msra.mxu0 0.0
    %954 = vmatprep.subr.mxu0 0.0
    %955 = vmatpush1.msra.mxu0 0.0
    %956 = vmatprep.subr.mxu0 0.0
    %957 = vmatpush1.msra.mxu0 0.0
    %958 = vmatprep.subr.mxu0 0.0
    %959 = vmatpush1.msra.mxu0 0.0
    %960 = vmatprep.subr.mxu0 0.0
    %961 = vmatpush1.msra.mxu0 0.0
    %962 = vmatprep.subr.mxu0 0.0
    %963 = vmatpush1.msra.mxu0 0.0
    %964 = vmatprep.subr.mxu0 0.0
    %965 = vmatpush1.msra.mxu0 0.0
    %966 = vmatprep.subr.mxu0 0.0
    %967 = vmatpush1.msra.mxu0 0.0
    %968 = vmatprep.subr.mxu0 0.0
    %969 = vmatpush1.msra.mxu0 0.0
    %970 = vmatprep.subr.mxu0 0.0
    %971 = vmatpush1.msra.mxu0 0.0
    %972 = vmatprep.subr.mxu0 0.0
    %973 = vmatpush1.msra.mxu0 0.0
    %974 = vmatprep.subr.mxu0 0.0
    %975 = vmatpush1.msra.mxu0 0.0
    %976 = vmatprep.subr.mxu0 0.0
    %977 = vmatpush1.msra.mxu0 0.0
    %978 = vmatprep.subr.mxu0 0.0
    %979 = vmatpush1.msra.mxu0 0.0
    %980 = vmatprep.subr.mxu0 0.0
    %981 = vmatpush1.msra.mxu0 0.0
    %982 = vmatprep.subr.mxu0 0.0
    %983 = vmatpush1.msra.mxu0 0.0
    %984 = vmatprep.subr.mxu0 0.0
    %985 = vmatpush1.msra.mxu0 0.0
    %986 = vmatprep.subr.mxu0 0.0
    %987 = vmatpush1.msra.mxu0 0.0
    %988 = vmatprep.subr.mxu0 0.0
    %989 = vmatpush1.msra.mxu0 0.0
    %990 = vmatprep.subr.mxu0 0.0
    %991 = vmatpush1.msra.mxu0 0.0
    %992 = vmatprep.subr.mxu0 0.0
    %993 = vmatpush1.msra.mxu0 0.0
    %994 = vmatprep.subr.mxu0 0.0
    %995 = vmatpush1.msra.mxu0 0.0
    %996 = vmatprep.subr.mxu0 0.0
    %997 = vmatpush1.msra.mxu0 0.0
    %998 = vmatprep.subr.mxu0 0.0
    %999 = vmatpush1.msra.mxu0 0.0
    %1000 = vmatprep.subr.mxu0 0.0
    %1001 = vmatpush1.msra.mxu0 0.0
    %1002 = vmatprep.subr.mxu0 0.0
    %1003 = vmatpush1.msra.mxu0 0.0
    %1004 = vmatprep.subr.mxu0 0.0
    %1005 = vmatpush1.msra.mxu0 0.0
    %1006 = vmatprep.subr.mxu0 0.0
    %1007 = vmatpush1.msra.mxu0 0.0
    %1008 = vmatprep.subr.mxu0 0.0
    %1009 = vmatpush1.msra.mxu0 0.0
    %1010 = vmatprep.subr.mxu0 0.0
    %1011 = vmatpush1.msra.mxu0 0.0
    %1012 = vmatprep.mubr.f32.mxu0 0.0
    %v1013 = vand.u32 %v129, 4294901760
    %1014 = vmatmul.mubr.f32.gmra.mrb[0].mxu0 %v1013
    %v1015 = vpop.f32.mrb[0].mxu0
    %v1016 = vadd.f32 %v822, %v1015
    %v1017 = vpop.f32.mrb[0].mxu0
    %1018 = vmatprep.mubr.f32.mxu0 0.0
    %v1019 = vand.u32 %v132, 4294901760
    %1020 = vmatmul.mubr.f32.gmra.mrb[0].mxu0 %v1019
    %v1021 = vpop.f32.mrb[0].mxu0
    %v1022 = vadd.f32 %v830, %v1021
    %v1023 = vpop.f32.mrb[0].mxu0
    %1024 = vmatprep.mubr.f32.mxu0 0.0
    %v1025 = vand.u32 %v135, 4294901760
    %1026 = vmatmul.mubr.f32.gmra.mrb[0].mxu0 %v1025
    %v1027 = vpop.f32.mrb[0].mxu0
    %v1028 = vadd.f32 %v838, %v1027
    %v1029 = vpop.f32.mrb[0].mxu0
    %1030 = vmatprep.mubr.f32.mxu0 0.0
    %v1031 = vand.u32 %v138, 4294901760
    %1032 = vmatmul.mubr.f32.gmra.mrb[0].mxu0 %v1031
    %v1033 = vpop.f32.mrb[0].mxu0
    %v1034 = vadd.f32 %v846, %v1033
    %v1035 = vpop.f32.mrb[0].mxu0
    %1036 = vmatprep.mubr.f32.mxu0 0.0
    %v1037 = vand.u32 %v141, 4294901760
    %1038 = vmatmul.mubr.f32.gmra.mrb[0].mxu0 %v1037
    %v1039 = vpop.f32.mrb[0].mxu0
    %v1040 = vadd.f32 %v854, %v1039
    %v1041 = vpop.f32.mrb[0].mxu0
    %1042 = vmatprep.mubr.f32.mxu0 0.0
    %v1043 = vand.u32 %v144, 4294901760
    %1044 = vmatmul.mubr.f32.gmra.mrb[0].mxu0 %v1043
    %v1045 = vpop.f32.mrb[0].mxu0
    %v1046 = vadd.f32 %v862, %v1045
    %v1047 = vpop.f32.mrb[0].mxu0
    %1048 = vmatprep.mubr.f32.mxu0 0.0
    %v1049 = vand.u32 %v147, 4294901760
    %1050 = vmatmul.mubr.f32.gmra.mrb[0].mxu0 %v1049
    %v1051 = vpop.f32.mrb[0].mxu0
    %v1052 = vadd.f32 %v870, %v1051
    %v1053 = vpop.f32.mrb[0].mxu0
    %1054 = vmatprep.mubr.f32.mxu0 0.0
    %v1055 = vand.u32 %v150, 4294901760
    %1056 = vmatmul.mubr.f32.gmra.mrb[0].mxu0 %v1055
    %v1057 = vpop.f32.mrb[0].mxu0
    %v1058 = vadd.f32 %v878, %v1057
    %v1059 = vpop.f32.mrb[0].mxu0
    %1060 = vmatprep.mubr.f32.mxu0 0.0
    %v1061 = vand.u32 %v153, 4294901760
    %1062 = vmatmul.mubr.f32.gmra.mrb[0].mxu0 %v1061
    %v1063 = vpop.f32.mrb[0].mxu0
    %v1064 = vadd.f32 %v886, %v1063
    %v1065 = vpop.f32.mrb[0].mxu0
    %1066 = vmatprep.mubr.f32.mxu0 0.0
    %v1067 = vand.u32 %v156, 4294901760
    %1068 = vmatmul.mubr.f32.gmra.mrb[0].mxu0 %v1067
    %v1069 = vpop.f32.mrb[0].mxu0
    %v1070 = vadd.f32 %v894, %v1069
    %v1071 = vpop.f32.mrb[0].mxu0
    %1072 = vmatprep.mubr.f32.mxu0 0.0
    %v1073 = vand.u32 %v159, 4294901760
    %1074 = vmatmul.mubr.f32.gmra.mrb[0].mxu0 %v1073
    %v1075 = vpop.f32.mrb[0].mxu0
    %v1076 = vadd.f32 %v902, %v1075
    %v1077 = vpop.f32.mrb[0].mxu0
    %1078 = vmatprep.mubr.f32.mxu0 0.0
    %v1079 = vand.u32 %v162, 4294901760
    %1080 = vmatmul.mubr.f32.gmra.mrb[0].mxu0 %v1079
    %v1081 = vpop.f32.mrb[0].mxu0
    %v1082 = vadd.f32 %v910, %v1081
    %v1083 = vpop.f32.mrb[0].mxu0
    %1084 = vmatprep.mubr.f32.mxu0 0.0
    %v1085 = vand.u32 %v165, 4294901760
    %1086 = vmatmul.mubr.f32.gmra.mrb[0].mxu0 %v1085
    %v1087 = vpop.f32.mrb[0].mxu0
    %v1088 = vadd.f32 %v918, %v1087
    %v1089 = vpop.f32.mrb[0].mxu0
    %1090 = vmatprep.mubr.f32.mxu0 0.0
    %v1091 = vand.u32 %v168, 4294901760
    %1092 = vmatmul.mubr.f32.gmra.mrb[0].mxu0 %v1091
    %v1093 = vpop.f32.mrb[0].mxu0
    %v1094 = vadd.f32 %v926, %v1093
    %v1095 = vpop.f32.mrb[0].mxu0
    %1096 = vmatprep.mubr.f32.mxu0 0.0
    %v1097 = vand.u32 %v171, 4294901760
    %1098 = vmatmul.mubr.f32.gmra.mrb[0].mxu0 %v1097
    %v1099 = vpop.f32.mrb[0].mxu0
    %v1100 = vadd.f32 %v934, %v1099
    %v1101 = vpop.f32.mrb[0].mxu0
    %1102 = vmatprep.mubr.f32.mxu0 0.0
    %v1103 = vand.u32 %v174, 4294901760
    %1104 = vmatmul.mubr.f32.gmra.mrb[0].mxu0 %v1103
    %v1105 = vpop.f32.mrb[0].mxu0
    %v1106 = vadd.f32 %v942, %v1105
    %v1107 = vpop.f32.mrb[0].mxu0
    %1108 = vdwg.mxu0
    %1109 = vmatprep.subr.mxu0 0.0
    %v1110 = vand.u32 %v178, 4294901760
    %1111 = vmatpush1.msra.mxu0 %v1110
    %1112 = vmatprep.subr.mxu0 0.0
    %1113 = vmatpush1.msra.mxu0 0.0
    %1114 = vmatprep.subr.mxu0 0.0
    %1115 = vmatpush1.msra.mxu0 0.0
    %1116 = vmatprep.subr.mxu0 0.0
    %1117 = vmatpush1.msra.mxu0 0.0
    %1118 = vmatprep.subr.mxu0 0.0
    %1119 = vmatpush1.msra.mxu0 0.0
    %1120 = vmatprep.subr.mxu0 0.0
    %1121 = vmatpush1.msra.mxu0 0.0
    %1122 = vmatprep.subr.mxu0 0.0
    %1123 = vmatpush1.msra.mxu0 0.0
    %1124 = vmatprep.subr.mxu0 0.0
    %1125 = vmatpush1.msra.mxu0 0.0
    %1126 = vmatprep.subr.mxu0 0.0
    %1127 = vmatpush1.msra.mxu0 0.0
    %1128 = vmatprep.subr.mxu0 0.0
    %1129 = vmatpush1.msra.mxu0 0.0
    %1130 = vmatprep.subr.mxu0 0.0
    %1131 = vmatpush1.msra.mxu0 0.0
    %1132 = vmatprep.subr.mxu0 0.0
    %1133 = vmatpush1.msra.mxu0 0.0
    %1134 = vmatprep.subr.mxu0 0.0
    %1135 = vmatpush1.msra.mxu0 0.0
    %1136 = vmatprep.subr.mxu0 0.0
    %1137 = vmatpush1.msra.mxu0 0.0
    %1138 = vmatprep.subr.mxu0 0.0
    %1139 = vmatpush1.msra.mxu0 0.0
    %1140 = vmatprep.subr.mxu0 0.0
    %1141 = vmatpush1.msra.mxu0 0.0
    %1142 = vmatprep.subr.mxu0 0.0
    %1143 = vmatpush1.msra.mxu0 0.0
    %1144 = vmatprep.subr.mxu0 0.0
    %1145 = vmatpush1.msra.mxu0 0.0
    %1146 = vmatprep.subr.mxu0 0.0
    %1147 = vmatpush1.msra.mxu0 0.0
    %1148 = vmatprep.subr.mxu0 0.0
    %1149 = vmatpush1.msra.mxu0 0.0
    %1150 = vmatprep.subr.mxu0 0.0
    %1151 = vmatpush1.msra.mxu0 0.0
    %1152 = vmatprep.subr.mxu0 0.0
    %1153 = vmatpush1.msra.mxu0 0.0
    %1154 = vmatprep.subr.mxu0 0.0
    %1155 = vmatpush1.msra.mxu0 0.0
    %1156 = vmatprep.subr.mxu0 0.0
    %1157 = vmatpush1.msra.mxu0 0.0
    %1158 = vmatprep.subr.mxu0 0.0
    %1159 = vmatpush1.msra.mxu0 0.0
    %1160 = vmatprep.subr.mxu0 0.0
    %1161 = vmatpush1.msra.mxu0 0.0
    %1162 = vmatprep.subr.mxu0 0.0
    %1163 = vmatpush1.msra.mxu0 0.0
    %1164 = vmatprep.subr.mxu0 0.0
    %1165 = vmatpush1.msra.mxu0 0.0
    %1166 = vmatprep.subr.mxu0 0.0
    %1167 = vmatpush1.msra.mxu0 0.0
    %1168 = vmatprep.subr.mxu0 0.0
    %1169 = vmatpush1.msra.mxu0 0.0
    %1170 = vmatprep.subr.mxu0 0.0
    %1171 = vmatpush1.msra.mxu0 0.0
    %1172 = vmatprep.subr.mxu0 0.0
    %1173 = vmatpush1.msra.mxu0 0.0
    %1174 = vmatprep.mubr.f32.mxu0 0.0
    %v1175 = vand.u32 %v129, 4294901760
    %1176 = vmatmul.mubr.f32.gmra.mrb[0].mxu0 %v1175
    %v1177 = vpop.f32.mrb[0].mxu0
    %v1178 = vadd.f32 %v1016, %v1177
    %v1179 = vpop.f32.mrb[0].mxu0
    %1180 = vmatprep.mubr.f32.mxu0 0.0
    %v1181 = vand.u32 %v132, 4294901760
    %1182 = vmatmul.mubr.f32.gmra.mrb[0].mxu0 %v1181
    %v1183 = vpop.f32.mrb[0].mxu0
    %v1184 = vadd.f32 %v1022, %v1183
    %v1185 = vpop.f32.mrb[0].mxu0
    %1186 = vmatprep.mubr.f32.mxu0 0.0
    %v1187 = vand.u32 %v135, 4294901760
    %1188 = vmatmul.mubr.f32.gmra.mrb[0].mxu0 %v1187
    %v1189 = vpop.f32.mrb[0].mxu0
    %v1190 = vadd.f32 %v1028, %v1189
    %v1191 = vpop.f32.mrb[0].mxu0
    %1192 = vmatprep.mubr.f32.mxu0 0.0
    %v1193 = vand.u32 %v138, 4294901760
    %1194 = vmatmul.mubr.f32.gmra.mrb[0].mxu0 %v1193
    %v1195 = vpop.f32.mrb[0].mxu0
    %v1196 = vadd.f32 %v1034, %v1195
    %v1197 = vpop.f32.mrb[0].mxu0
    %1198 = vmatprep.mubr.f32.mxu0 0.0
    %v1199 = vand.u32 %v141, 4294901760
    %1200 = vmatmul.mubr.f32.gmra.mrb[0].mxu0 %v1199
    %v1201 = vpop.f32.mrb[0].mxu0
    %v1202 = vadd.f32 %v1040, %v1201
    %v1203 = vpop.f32.mrb[0].mxu0
    %1204 = vmatprep.mubr.f32.mxu0 0.0
    %v1205 = vand.u32 %v144, 4294901760
    %1206 = vmatmul.mubr.f32.gmra.mrb[0].mxu0 %v1205
    %v1207 = vpop.f32.mrb[0].mxu0
    %v1208 = vadd.f32 %v1046, %v1207
    %v1209 = vpop.f32.mrb[0].mxu0
    %1210 = vmatprep.mubr.f32.mxu0 0.0
    %v1211 = vand.u32 %v147, 4294901760
    %1212 = vmatmul.mubr.f32.gmra.mrb[0].mxu0 %v1211
    %v1213 = vpop.f32.mrb[0].mxu0
    %v1214 = vadd.f32 %v1052, %v1213
    %v1215 = vpop.f32.mrb[0].mxu0
    %1216 = vmatprep.mubr.f32.mxu0 0.0
    %v1217 = vand.u32 %v150, 4294901760
    %1218 = vmatmul.mubr.f32.gmra.mrb[0].mxu0 %v1217
    %v1219 = vpop.f32.mrb[0].mxu0
    %v1220 = vadd.f32 %v1058, %v1219
    %v1221 = vpop.f32.mrb[0].mxu0
    %1222 = vmatprep.mubr.f32.mxu0 0.0
    %v1223 = vand.u32 %v153, 4294901760
    %1224 = vmatmul.mubr.f32.gmra.mrb[0].mxu0 %v1223
    %v1225 = vpop.f32.mrb[0].mxu0
    %v1226 = vadd.f32 %v1064, %v1225
    %v1227 = vpop.f32.mrb[0].mxu0
    %1228 = vmatprep.mubr.f32.mxu0 0.0
    %v1229 = vand.u32 %v156, 4294901760
    %1230 = vmatmul.mubr.f32.gmra.mrb[0].mxu0 %v1229
    %v1231 = vpop.f32.mrb[0].mxu0
    %v1232 = vadd.f32 %v1070, %v1231
    %v1233 = vpop.f32.mrb[0].mxu0
    %1234 = vmatprep.mubr.f32.mxu0 0.0
    %v1235 = vand.u32 %v159, 4294901760
    %1236 = vmatmul.mubr.f32.gmra.mrb[0].mxu0 %v1235
    %v1237 = vpop.f32.mrb[0].mxu0
    %v1238 = vadd.f32 %v1076, %v1237
    %v1239 = vpop.f32.mrb[0].mxu0
    %1240 = vmatprep.mubr.f32.mxu0 0.0
    %v1241 = vand.u32 %v162, 4294901760
    %1242 = vmatmul.mubr.f32.gmra.mrb[0].mxu0 %v1241
    %v1243 = vpop.f32.mrb[0].mxu0
    %v1244 = vadd.f32 %v1082, %v1243
    %v1245 = vpop.f32.mrb[0].mxu0
    %1246 = vmatprep.mubr.f32.mxu0 0.0
    %v1247 = vand.u32 %v165, 4294901760
    %1248 = vmatmul.mubr.f32.gmra.mrb[0].mxu0 %v1247
    %v1249 = vpop.f32.mrb[0].mxu0
    %v1250 = vadd.f32 %v1088, %v1249
    %v1251 = vpop.f32.mrb[0].mxu0
    %1252 = vmatprep.mubr.f32.mxu0 0.0
    %v1253 = vand.u32 %v168, 4294901760
    %1254 = vmatmul.mubr.f32.gmra.mrb[0].mxu0 %v1253
    %v1255 = vpop.f32.mrb[0].mxu0
    %v1256 = vadd.f32 %v1094, %v1255
    %v1257 = vpop.f32.mrb[0].mxu0
    %1258 = vmatprep.mubr.f32.mxu0 0.0
    %v1259 = vand.u32 %v171, 4294901760
    %1260 = vmatmul.mubr.f32.gmra.mrb[0].mxu0 %v1259
    %v1261 = vpop.f32.mrb[0].mxu0
    %v1262 = vadd.f32 %v1100, %v1261
    %v1263 = vpop.f32.mrb[0].mxu0
    %1264 = vmatprep.mubr.f32.mxu0 0.0
    %v1265 = vand.u32 %v174, 4294901760
    %1266 = vmatmul.mubr.f32.gmra.mrb[0].mxu0 %v1265
    %v1267 = vpop.f32.mrb[0].mxu0
    %v1268 = vadd.f32 %v1106, %v1267
    %v1269 = vpop.f32.mrb[0].mxu0
    %1270 = vdwg.mxu0
    %v1272 = vsel %vm127, %v16, 0
    %v1275 = vsel %vm127, %v18, 0
    %v1278 = vsel %vm127, %v20, 0
    %v1281 = vsel %vm127, %v22, 0
    %v1284 = vsel %vm127, %v24, 0
    %v1287 = vsel %vm127, %v26, 0
    %v1290 = vsel %vm127, %v28, 0
    %v1293 = vsel %vm127, %v30, 0
    %v1296 = vsel %vm127, %v67, 0
    %v1299 = vsel %vm127, %v69, 0
    %v1302 = vsel %vm127, %v71, 0
    %v1305 = vsel %vm127, %v73, 0
    %v1308 = vsel %vm127, %v75, 0
    %v1311 = vsel %vm127, %v77, 0
    %v1314 = vsel %vm127, %v79, 0
    %v1317 = vsel %vm127, %v81, 0
    %v1320 = vsel %vm176, %v118, 0
    %1322 = vmatprep.subr.mxu0 0.0
    %v1323 = vand.u32 %v1320, 4294901760
    %1324 = vmatpush1.msra.mxu0 %v1323
    %1325 = vmatprep.subr.mxu0 0.0
    %1326 = vmatpush1.msra.mxu0 0.0
    %1327 = vmatprep.subr.mxu0 0.0
    %1328 = vmatpush1.msra.mxu0 0.0
    %1329 = vmatprep.subr.mxu0 0.0
    %1330 = vmatpush1.msra.mxu0 0.0
    %1331 = vmatprep.subr.mxu0 0.0
    %1332 = vmatpush1.msra.mxu0 0.0
    %1333 = vmatprep.subr.mxu0 0.0
    %1334 = vmatpush1.msra.mxu0 0.0
    %1335 = vmatprep.subr.mxu0 0.0
    %1336 = vmatpush1.msra.mxu0 0.0
    %1337 = vmatprep.subr.mxu0 0.0
    %1338 = vmatpush1.msra.mxu0 0.0
    %1339 = vmatprep.subr.mxu0 0.0
    %1340 = vmatpush1.msra.mxu0 0.0
    %1341 = vmatprep.subr.mxu0 0.0
    %1342 = vmatpush1.msra.mxu0 0.0
    %1343 = vmatprep.subr.mxu0 0.0
    %1344 = vmatpush1.msra.mxu0 0.0
    %1345 = vmatprep.subr.mxu0 0.0
    %1346 = vmatpush1.msra.mxu0 0.0
    %1347 = vmatprep.subr.mxu0 0.0
    %1348 = vmatpush1.msra.mxu0 0.0
    %1349 = vmatprep.subr.mxu0 0.0
    %1350 = vmatpush1.msra.mxu0 0.0
    %1351 = vmatprep.subr.mxu0 0.0
    %1352 = vmatpush1.msra.mxu0 0.0
    %1353 = vmatprep.subr.mxu0 0.0
    %1354 = vmatpush1.msra.mxu0 0.0
    %1355 = vmatprep.subr.mxu0 0.0
    %1356 = vmatpush1.msra.mxu0 0.0
    %1357 = vmatprep.subr.mxu0 0.0
    %1358 = vmatpush1.msra.mxu0 0.0
    %1359 = vmatprep.subr.mxu0 0.0
    %1360 = vmatpush1.msra.mxu0 0.0
    %1361 = vmatprep.subr.mxu0 0.0
    %1362 = vmatpush1.msra.mxu0 0.0
    %1363 = vmatprep.subr.mxu0 0.0
    %1364 = vmatpush1.msra.mxu0 0.0
    %1365 = vmatprep.subr.mxu0 0.0
    %1366 = vmatpush1.msra.mxu0 0.0
    %1367 = vmatprep.subr.mxu0 0.0
    %1368 = vmatpush1.msra.mxu0 0.0
    %1369 = vmatprep.subr.mxu0 0.0
    %1370 = vmatpush1.msra.mxu0 0.0
    %1371 = vmatprep.subr.mxu0 0.0
    %1372 = vmatpush1.msra.mxu0 0.0
    %1373 = vmatprep.subr.mxu0 0.0
    %1374 = vmatpush1.msra.mxu0 0.0
    %1375 = vmatprep.subr.mxu0 0.0
    %1376 = vmatpush1.msra.mxu0 0.0
    %1377 = vmatprep.subr.mxu0 0.0
    %1378 = vmatpush1.msra.mxu0 0.0
    %1379 = vmatprep.subr.mxu0 0.0
    %1380 = vmatpush1.msra.mxu0 0.0
    %1381 = vmatprep.subr.mxu0 0.0
    %1382 = vmatpush1.msra.mxu0 0.0
    %1383 = vmatprep.subr.mxu0 0.0
    %1384 = vmatpush1.msra.mxu0 0.0
    %1385 = vmatprep.subr.mxu0 0.0
    %1386 = vmatpush1.msra.mxu0 0.0
    %1387 = vmatprep.mubr.f32.mxu0 0.0
    %v1388 = vand.u32 %v1272, 4294901760
    %v1389 = vsub.f32 %v1272, %v1388
    %v1390 = vand.u32 %v1389, 4294901760
    %v1391 = vsub.f32 %v1389, %v1390
    %v1392 = vand.u32 %v1391, 4294901760
    %1393 = vmatmul.mubr.f32.gmra.mrb[0].mxu0 %v1392
    %v1394 = vpop.f32.mrb[0].mxu0
    %v1395 = vadd.f32 %v1178, %v1394
    %v1396 = vpop.f32.mrb[0].mxu0
    %1397 = vmatprep.mubr.f32.mxu0 0.0
    %v1398 = vand.u32 %v1275, 4294901760
    %v1399 = vsub.f32 %v1275, %v1398
    %v1400 = vand.u32 %v1399, 4294901760
    %v1401 = vsub.f32 %v1399, %v1400
    %v1402 = vand.u32 %v1401, 4294901760
    %1403 = vmatmul.mubr.f32.gmra.mrb[0].mxu0 %v1402
    %v1404 = vpop.f32.mrb[0].mxu0
    %v1405 = vadd.f32 %v1184, %v1404
    %v1406 = vpop.f32.mrb[0].mxu0
    %1407 = vmatprep.mubr.f32.mxu0 0.0
    %v1408 = vand.u32 %v1278, 4294901760
    %v1409 = vsub.f32 %v1278, %v1408
    %v1410 = vand.u32 %v1409, 4294901760
    %v1411 = vsub.f32 %v1409, %v1410
    %v1412 = vand.u32 %v1411, 4294901760
    %1413 = vmatmul.mubr.f32.gmra.mrb[0].mxu0 %v1412
    %v1414 = vpop.f32.mrb[0].mxu0
    %v1415 = vadd.f32 %v1190, %v1414
    %v1416 = vpop.f32.mrb[0].mxu0
    %1417 = vmatprep.mubr.f32.mxu0 0.0
    %v1418 = vand.u32 %v1281, 4294901760
    %v1419 = vsub.f32 %v1281, %v1418
    %v1420 = vand.u32 %v1419, 4294901760
    %v1421 = vsub.f32 %v1419, %v1420
    %v1422 = vand.u32 %v1421, 4294901760
    %1423 = vmatmul.mubr.f32.gmra.mrb[0].mxu0 %v1422
    %v1424 = vpop.f32.mrb[0].mxu0
    %v1425 = vadd.f32 %v1196, %v1424
    %v1426 = vpop.f32.mrb[0].mxu0
    %1427 = vmatprep.mubr.f32.mxu0 0.0
    %v1428 = vand.u32 %v1284, 4294901760
    %v1429 = vsub.f32 %v1284, %v1428
    %v1430 = vand.u32 %v1429, 4294901760
    %v1431 = vsub.f32 %v1429, %v1430
    %v1432 = vand.u32 %v1431, 4294901760
    %1433 = vmatmul.mubr.f32.gmra.mrb[0].mxu0 %v1432
    %v1434 = vpop.f32.mrb[0].mxu0
    %v1435 = vadd.f32 %v1202, %v1434
    %v1436 = vpop.f32.mrb[0].mxu0
    %1437 = vmatprep.mubr.f32.mxu0 0.0
    %v1438 = vand.u32 %v1287, 4294901760
    %v1439 = vsub.f32 %v1287, %v1438
    %v1440 = vand.u32 %v1439, 4294901760
    %v1441 = vsub.f32 %v1439, %v1440
    %v1442 = vand.u32 %v1441, 4294901760
    %1443 = vmatmul.mubr.f32.gmra.mrb[0].mxu0 %v1442
    %v1444 = vpop.f32.mrb[0].mxu0
    %v1445 = vadd.f32 %v1208, %v1444
    %v1446 = vpop.f32.mrb[0].mxu0
    %1447 = vmatprep.mubr.f32.mxu0 0.0
    %v1448 = vand.u32 %v1290, 4294901760
    %v1449 = vsub.f32 %v1290, %v1448
    %v1450 = vand.u32 %v1449, 4294901760
    %v1451 = vsub.f32 %v1449, %v1450
    %v1452 = vand.u32 %v1451, 4294901760
    %1453 = vmatmul.mubr.f32.gmra.mrb[0].mxu0 %v1452
    %v1454 = vpop.f32.mrb[0].mxu0
    %v1455 = vadd.f32 %v1214, %v1454
    %v1456 = vpop.f32.mrb[0].mxu0
    %1457 = vmatprep.mubr.f32.mxu0 0.0
    %v1458 = vand.u32 %v1293, 4294901760
    %v1459 = vsub.f32 %v1293, %v1458
    %v1460 = vand.u32 %v1459, 4294901760
    %v1461 = vsub.f32 %v1459, %v1460
    %v1462 = vand.u32 %v1461, 4294901760
    %1463 = vmatmul.mubr.f32.gmra.mrb[0].mxu0 %v1462
    %v1464 = vpop.f32.mrb[0].mxu0
    %v1465 = vadd.f32 %v1220, %v1464
    %v1466 = vpop.f32.mrb[0].mxu0
    %1467 = vmatprep.mubr.f32.mxu0 0.0
    %v1468 = vand.u32 %v1296, 4294901760
    %v1469 = vsub.f32 %v1296, %v1468
    %v1470 = vand.u32 %v1469, 4294901760
    %v1471 = vsub.f32 %v1469, %v1470
    %v1472 = vand.u32 %v1471, 4294901760
    %1473 = vmatmul.mubr.f32.gmra.mrb[0].mxu0 %v1472
    %v1474 = vpop.f32.mrb[0].mxu0
    %v1475 = vadd.f32 %v1226, %v1474
    %v1476 = vpop.f32.mrb[0].mxu0
    %1477 = vmatprep.mubr.f32.mxu0 0.0
    %v1478 = vand.u32 %v1299, 4294901760
    %v1479 = vsub.f32 %v1299, %v1478
    %v1480 = vand.u32 %v1479, 4294901760
    %v1481 = vsub.f32 %v1479, %v1480
    %v1482 = vand.u32 %v1481, 4294901760
    %1483 = vmatmul.mubr.f32.gmra.mrb[0].mxu0 %v1482
    %v1484 = vpop.f32.mrb[0].mxu0
    %v1485 = vadd.f32 %v1232, %v1484
    %v1486 = vpop.f32.mrb[0].mxu0
    %1487 = vmatprep.mubr.f32.mxu0 0.0
    %v1488 = vand.u32 %v1302, 4294901760
    %v1489 = vsub.f32 %v1302, %v1488
    %v1490 = vand.u32 %v1489, 4294901760
    %v1491 = vsub.f32 %v1489, %v1490
    %v1492 = vand.u32 %v1491, 4294901760
    %1493 = vmatmul.mubr.f32.gmra.mrb[0].mxu0 %v1492
    %v1494 = vpop.f32.mrb[0].mxu0
    %v1495 = vadd.f32 %v1238, %v1494
    %v1496 = vpop.f32.mrb[0].mxu0
    %1497 = vmatprep.mubr.f32.mxu0 0.0
    %v1498 = vand.u32 %v1305, 4294901760
    %v1499 = vsub.f32 %v1305, %v1498
    %v1500 = vand.u32 %v1499, 4294901760
    %v1501 = vsub.f32 %v1499, %v1500
    %v1502 = vand.u32 %v1501, 4294901760
    %1503 = vmatmul.mubr.f32.gmra.mrb[0].mxu0 %v1502
    %v1504 = vpop.f32.mrb[0].mxu0
    %v1505 = vadd.f32 %v1244, %v1504
    %v1506 = vpop.f32.mrb[0].mxu0
    %1507 = vmatprep.mubr.f32.mxu0 0.0
    %v1508 = vand.u32 %v1308, 4294901760
    %v1509 = vsub.f32 %v1308, %v1508
    %v1510 = vand.u32 %v1509, 4294901760
    %v1511 = vsub.f32 %v1509, %v1510
    %v1512 = vand.u32 %v1511, 4294901760
    %1513 = vmatmul.mubr.f32.gmra.mrb[0].mxu0 %v1512
    %v1514 = vpop.f32.mrb[0].mxu0
    %v1515 = vadd.f32 %v1250, %v1514
    %v1516 = vpop.f32.mrb[0].mxu0
    %1517 = vmatprep.mubr.f32.mxu0 0.0
    %v1518 = vand.u32 %v1311, 4294901760
    %v1519 = vsub.f32 %v1311, %v1518
    %v1520 = vand.u32 %v1519, 4294901760
    %v1521 = vsub.f32 %v1519, %v1520
    %v1522 = vand.u32 %v1521, 4294901760
    %1523 = vmatmul.mubr.f32.gmra.mrb[0].mxu0 %v1522
    %v1524 = vpop.f32.mrb[0].mxu0
    %v1525 = vadd.f32 %v1256, %v1524
    %v1526 = vpop.f32.mrb[0].mxu0
    %1527 = vmatprep.mubr.f32.mxu0 0.0
    %v1528 = vand.u32 %v1314, 4294901760
    %v1529 = vsub.f32 %v1314, %v1528
    %v1530 = vand.u32 %v1529, 4294901760
    %v1531 = vsub.f32 %v1529, %v1530
    %v1532 = vand.u32 %v1531, 4294901760
    %1533 = vmatmul.mubr.f32.gmra.mrb[0].mxu0 %v1532
    %v1534 = vpop.f32.mrb[0].mxu0
    %v1535 = vadd.f32 %v1262, %v1534
    %v1536 = vpop.f32.mrb[0].mxu0
    %1537 = vmatprep.mubr.f32.mxu0 0.0
    %v1538 = vand.u32 %v1317, 4294901760
    %v1539 = vsub.f32 %v1317, %v1538
    %v1540 = vand.u32 %v1539, 4294901760
    %v1541 = vsub.f32 %v1539, %v1540
    %v1542 = vand.u32 %v1541, 4294901760
    %1543 = vmatmul.mubr.f32.gmra.mrb[0].mxu0 %v1542
    %v1544 = vpop.f32.mrb[0].mxu0
    %v1545 = vadd.f32 %v1268, %v1544
    %v1546 = vpop.f32.mrb[0].mxu0
    %1547 = vdwg.mxu0
    %1548 = vmatprep.subr.mxu0 0.0
    %v1549 = vand.u32 %v1320, 4294901760
    %v1550 = vsub.f32 %v1320, %v1549
    %v1551 = vand.u32 %v1550, 4294901760
    %v1552 = vsub.f32 %v1550, %v1551
    %v1553 = vand.u32 %v1552, 4294901760
    %1554 = vmatpush1.msra.mxu0 %v1553
    %1555 = vmatprep.subr.mxu0 0.0
    %1556 = vmatpush1.msra.mxu0 0.0
    %1557 = vmatprep.subr.mxu0 0.0
    %1558 = vmatpush1.msra.mxu0 0.0
    %1559 = vmatprep.subr.mxu0 0.0
    %1560 = vmatpush1.msra.mxu0 0.0
    %1561 = vmatprep.subr.mxu0 0.0
    %1562 = vmatpush1.msra.mxu0 0.0
    %1563 = vmatprep.subr.mxu0 0.0
    %1564 = vmatpush1.msra.mxu0 0.0
    %1565 = vmatprep.subr.mxu0 0.0
    %1566 = vmatpush1.msra.mxu0 0.0
    %1567 = vmatprep.subr.mxu0 0.0
    %1568 = vmatpush1.msra.mxu0 0.0
    %1569 = vmatprep.subr.mxu0 0.0
    %1570 = vmatpush1.msra.mxu0 0.0
    %1571 = vmatprep.subr.mxu0 0.0
    %1572 = vmatpush1.msra.mxu0 0.0
    %1573 = vmatprep.subr.mxu0 0.0
    %1574 = vmatpush1.msra.mxu0 0.0
    %1575 = vmatprep.subr.mxu0 0.0
    %1576 = vmatpush1.msra.mxu0 0.0
    %1577 = vmatprep.subr.mxu0 0.0
    %1578 = vmatpush1.msra.mxu0 0.0
    %1579 = vmatprep.subr.mxu0 0.0
    %1580 = vmatpush1.msra.mxu0 0.0
    %1581 = vmatprep.subr.mxu0 0.0
    %1582 = vmatpush1.msra.mxu0 0.0
    %1583 = vmatprep.subr.mxu0 0.0
    %1584 = vmatpush1.msra.mxu0 0.0
    %1585 = vmatprep.subr.mxu0 0.0
    %1586 = vmatpush1.msra.mxu0 0.0
    %1587 = vmatprep.subr.mxu0 0.0
    %1588 = vmatpush1.msra.mxu0 0.0
    %1589 = vmatprep.subr.mxu0 0.0
    %1590 = vmatpush1.msra.mxu0 0.0
    %1591 = vmatprep.subr.mxu0 0.0
    %1592 = vmatpush1.msra.mxu0 0.0
    %1593 = vmatprep.subr.mxu0 0.0
    %1594 = vmatpush1.msra.mxu0 0.0
    %1595 = vmatprep.subr.mxu0 0.0
    %1596 = vmatpush1.msra.mxu0 0.0
    %1597 = vmatprep.subr.mxu0 0.0
    %1598 = vmatpush1.msra.mxu0 0.0
    %1599 = vmatprep.subr.mxu0 0.0
    %1600 = vmatpush1.msra.mxu0 0.0
    %1601 = vmatprep.subr.mxu0 0.0
    %1602 = vmatpush1.msra.mxu0 0.0
    %1603 = vmatprep.subr.mxu0 0.0
    %1604 = vmatpush1.msra.mxu0 0.0
    %1605 = vmatprep.subr.mxu0 0.0
    %1606 = vmatpush1.msra.mxu0 0.0
    %1607 = vmatprep.subr.mxu0 0.0
    %1608 = vmatpush1.msra.mxu0 0.0
    %1609 = vmatprep.subr.mxu0 0.0
    %1610 = vmatpush1.msra.mxu0 0.0
    %1611 = vmatprep.subr.mxu0 0.0
    %1612 = vmatpush1.msra.mxu0 0.0
    %1613 = vmatprep.subr.mxu0 0.0
    %1614 = vmatpush1.msra.mxu0 0.0
    %1615 = vmatprep.subr.mxu0 0.0
    %1616 = vmatpush1.msra.mxu0 0.0
    %1617 = vmatprep.mubr.f32.mxu0 0.0
    %v1618 = vand.u32 %v1272, 4294901760
    %1619 = vmatmul.mubr.f32.gmra.mrb[0].mxu0 %v1618
    %v1620 = vpop.f32.mrb[0].mxu0
    %v1621 = vadd.f32 %v1395, %v1620
    %v1622 = vpop.f32.mrb[0].mxu0
    %1623 = vmatprep.mubr.f32.mxu0 0.0
    %v1624 = vand.u32 %v1275, 4294901760
    %1625 = vmatmul.mubr.f32.gmra.mrb[0].mxu0 %v1624
    %v1626 = vpop.f32.mrb[0].mxu0
    %v1627 = vadd.f32 %v1405, %v1626
    %v1628 = vpop.f32.mrb[0].mxu0
    %1629 = vmatprep.mubr.f32.mxu0 0.0
    %v1630 = vand.u32 %v1278, 4294901760
    %1631 = vmatmul.mubr.f32.gmra.mrb[0].mxu0 %v1630
    %v1632 = vpop.f32.mrb[0].mxu0
    %v1633 = vadd.f32 %v1415, %v1632
    %v1634 = vpop.f32.mrb[0].mxu0
    %1635 = vmatprep.mubr.f32.mxu0 0.0
    %v1636 = vand.u32 %v1281, 4294901760
    %1637 = vmatmul.mubr.f32.gmra.mrb[0].mxu0 %v1636
    %v1638 = vpop.f32.mrb[0].mxu0
    %v1639 = vadd.f32 %v1425, %v1638
    %v1640 = vpop.f32.mrb[0].mxu0
    %1641 = vmatprep.mubr.f32.mxu0 0.0
    %v1642 = vand.u32 %v1284, 4294901760
    %1643 = vmatmul.mubr.f32.gmra.mrb[0].mxu0 %v1642
    %v1644 = vpop.f32.mrb[0].mxu0
    %v1645 = vadd.f32 %v1435, %v1644
    %v1646 = vpop.f32.mrb[0].mxu0
    %1647 = vmatprep.mubr.f32.mxu0 0.0
    %v1648 = vand.u32 %v1287, 4294901760
    %1649 = vmatmul.mubr.f32.gmra.mrb[0].mxu0 %v1648
    %v1650 = vpop.f32.mrb[0].mxu0
    %v1651 = vadd.f32 %v1445, %v1650
    %v1652 = vpop.f32.mrb[0].mxu0
    %1653 = vmatprep.mubr.f32.mxu0 0.0
    %v1654 = vand.u32 %v1290, 4294901760
    %1655 = vmatmul.mubr.f32.gmra.mrb[0].mxu0 %v1654
    %v1656 = vpop.f32.mrb[0].mxu0
    %v1657 = vadd.f32 %v1455, %v1656
    %v1658 = vpop.f32.mrb[0].mxu0
    %1659 = vmatprep.mubr.f32.mxu0 0.0
    %v1660 = vand.u32 %v1293, 4294901760
    %1661 = vmatmul.mubr.f32.gmra.mrb[0].mxu0 %v1660
    %v1662 = vpop.f32.mrb[0].mxu0
    %v1663 = vadd.f32 %v1465, %v1662
    %v1664 = vpop.f32.mrb[0].mxu0
    %1665 = vmatprep.mubr.f32.mxu0 0.0
    %v1666 = vand.u32 %v1296, 4294901760
    %1667 = vmatmul.mubr.f32.gmra.mrb[0].mxu0 %v1666
    %v1668 = vpop.f32.mrb[0].mxu0
    %v1669 = vadd.f32 %v1475, %v1668
    %v1670 = vpop.f32.mrb[0].mxu0
    %1671 = vmatprep.mubr.f32.mxu0 0.0
    %v1672 = vand.u32 %v1299, 4294901760
    %1673 = vmatmul.mubr.f32.gmra.mrb[0].mxu0 %v1672
    %v1674 = vpop.f32.mrb[0].mxu0
    %v1675 = vadd.f32 %v1485, %v1674
    %v1676 = vpop.f32.mrb[0].mxu0
    %1677 = vmatprep.mubr.f32.mxu0 0.0
    %v1678 = vand.u32 %v1302, 4294901760
    %1679 = vmatmul.mubr.f32.gmra.mrb[0].mxu0 %v1678
    %v1680 = vpop.f32.mrb[0].mxu0
    %v1681 = vadd.f32 %v1495, %v1680
    %v1682 = vpop.f32.mrb[0].mxu0
    %1683 = vmatprep.mubr.f32.mxu0 0.0
    %v1684 = vand.u32 %v1305, 4294901760
    %1685 = vmatmul.mubr.f32.gmra.mrb[0].mxu0 %v1684
    %v1686 = vpop.f32.mrb[0].mxu0
    %v1687 = vadd.f32 %v1505, %v1686
    %v1688 = vpop.f32.mrb[0].mxu0
    %1689 = vmatprep.mubr.f32.mxu0 0.0
    %v1690 = vand.u32 %v1308, 4294901760
    %1691 = vmatmul.mubr.f32.gmra.mrb[0].mxu0 %v1690
    %v1692 = vpop.f32.mrb[0].mxu0
    %v1693 = vadd.f32 %v1515, %v1692
    %v1694 = vpop.f32.mrb[0].mxu0
    %1695 = vmatprep.mubr.f32.mxu0 0.0
    %v1696 = vand.u32 %v1311, 4294901760
    %1697 = vmatmul.mubr.f32.gmra.mrb[0].mxu0 %v1696
    %v1698 = vpop.f32.mrb[0].mxu0
    %v1699 = vadd.f32 %v1525, %v1698
    %v1700 = vpop.f32.mrb[0].mxu0
    %1701 = vmatprep.mubr.f32.mxu0 0.0
    %v1702 = vand.u32 %v1314, 4294901760
    %1703 = vmatmul.mubr.f32.gmra.mrb[0].mxu0 %v1702
    %v1704 = vpop.f32.mrb[0].mxu0
    %v1705 = vadd.f32 %v1535, %v1704
    %v1706 = vpop.f32.mrb[0].mxu0
    %1707 = vmatprep.mubr.f32.mxu0 0.0
    %v1708 = vand.u32 %v1317, 4294901760
    %1709 = vmatmul.mubr.f32.gmra.mrb[0].mxu0 %v1708
    %v1710 = vpop.f32.mrb[0].mxu0
    %v1711 = vadd.f32 %v1545, %v1710
    %v1712 = vpop.f32.mrb[0].mxu0
    %1713 = vdwg.mxu0
    %1714 = vmatprep.subr.mxu0 0.0
    %v1715 = vand.u32 %v1320, 4294901760
    %v1716 = vsub.f32 %v1320, %v1715
    %1717 = vmatpush1.msra.mxu0 %v1716
    %1718 = vmatprep.subr.mxu0 0.0
    %1719 = vmatpush1.msra.mxu0 0.0
    %1720 = vmatprep.subr.mxu0 0.0
    %1721 = vmatpush1.msra.mxu0 0.0
    %1722 = vmatprep.subr.mxu0 0.0
    %1723 = vmatpush1.msra.mxu0 0.0
    %1724 = vmatprep.subr.mxu0 0.0
    %1725 = vmatpush1.msra.mxu0 0.0
    %1726 = vmatprep.subr.mxu0 0.0
    %1727 = vmatpush1.msra.mxu0 0.0
    %1728 = vmatprep.subr.mxu0 0.0
    %1729 = vmatpush1.msra.mxu0 0.0
    %1730 = vmatprep.subr.mxu0 0.0
    %1731 = vmatpush1.msra.mxu0 0.0
    %1732 = vmatprep.subr.mxu0 0.0
    %1733 = vmatpush1.msra.mxu0 0.0
    %1734 = vmatprep.subr.mxu0 0.0
    %1735 = vmatpush1.msra.mxu0 0.0
    %1736 = vmatprep.subr.mxu0 0.0
    %1737 = vmatpush1.msra.mxu0 0.0
    %1738 = vmatprep.subr.mxu0 0.0
    %1739 = vmatpush1.msra.mxu0 0.0
    %1740 = vmatprep.subr.mxu0 0.0
    %1741 = vmatpush1.msra.mxu0 0.0
    %1742 = vmatprep.subr.mxu0 0.0
    %1743 = vmatpush1.msra.mxu0 0.0
    %1744 = vmatprep.subr.mxu0 0.0
    %1745 = vmatpush1.msra.mxu0 0.0
    %1746 = vmatprep.subr.mxu0 0.0
    %1747 = vmatpush1.msra.mxu0 0.0
    %1748 = vmatprep.subr.mxu0 0.0
    %1749 = vmatpush1.msra.mxu0 0.0
    %1750 = vmatprep.subr.mxu0 0.0
    %1751 = vmatpush1.msra.mxu0 0.0
    %1752 = vmatprep.subr.mxu0 0.0
    %1753 = vmatpush1.msra.mxu0 0.0
    %1754 = vmatprep.subr.mxu0 0.0
    %1755 = vmatpush1.msra.mxu0 0.0
    %1756 = vmatprep.subr.mxu0 0.0
    %1757 = vmatpush1.msra.mxu0 0.0
    %1758 = vmatprep.subr.mxu0 0.0
    %1759 = vmatpush1.msra.mxu0 0.0
    %1760 = vmatprep.subr.mxu0 0.0
    %1761 = vmatpush1.msra.mxu0 0.0
    %1762 = vmatprep.subr.mxu0 0.0
    %1763 = vmatpush1.msra.mxu0 0.0
    %1764 = vmatprep.subr.mxu0 0.0
    %1765 = vmatpush1.msra.mxu0 0.0
    %1766 = vmatprep.subr.mxu0 0.0
    %1767 = vmatpush1.msra.mxu0 0.0
    %1768 = vmatprep.subr.mxu0 0.0
    %1769 = vmatpush1.msra.mxu0 0.0
    %1770 = vmatprep.subr.mxu0 0.0
    %1771 = vmatpush1.msra.mxu0 0.0
    %1772 = vmatprep.subr.mxu0 0.0
    %1773 = vmatpush1.msra.mxu0 0.0
    %1774 = vmatprep.subr.mxu0 0.0
    %1775 = vmatpush1.msra.mxu0 0.0
    %1776 = vmatprep.subr.mxu0 0.0
    %1777 = vmatpush1.msra.mxu0 0.0
    %1778 = vmatprep.subr.mxu0 0.0
    %1779 = vmatpush1.msra.mxu0 0.0
    %1780 = vmatprep.mubr.f32.mxu0 0.0
    %v1781 = vand.u32 %v1272, 4294901760
    %v1782 = vsub.f32 %v1272, %v1781
    %1783 = vmatmul.mubr.f32.gmra.mrb[0].mxu0 %v1782
    %v1784 = vpop.f32.mrb[0].mxu0
    %v1785 = vadd.f32 %v1621, %v1784
    %v1786 = vpop.f32.mrb[0].mxu0
    %1787 = vmatprep.mubr.f32.mxu0 0.0
    %v1788 = vand.u32 %v1275, 4294901760
    %v1789 = vsub.f32 %v1275, %v1788
    %1790 = vmatmul.mubr.f32.gmra.mrb[0].mxu0 %v1789
    %v1791 = vpop.f32.mrb[0].mxu0
    %v1792 = vadd.f32 %v1627, %v1791
    %v1793 = vpop.f32.mrb[0].mxu0
    %1794 = vmatprep.mubr.f32.mxu0 0.0
    %v1795 = vand.u32 %v1278, 4294901760
    %v1796 = vsub.f32 %v1278, %v1795
    %1797 = vmatmul.mubr.f32.gmra.mrb[0].mxu0 %v1796
    %v1798 = vpop.f32.mrb[0].mxu0
    %v1799 = vadd.f32 %v1633, %v1798
    %v1800 = vpop.f32.mrb[0].mxu0
    %1801 = vmatprep.mubr.f32.mxu0 0.0
    %v1802 = vand.u32 %v1281, 4294901760
    %v1803 = vsub.f32 %v1281, %v1802
    %1804 = vmatmul.mubr.f32.gmra.mrb[0].mxu0 %v1803
    %v1805 = vpop.f32.mrb[0].mxu0
    %v1806 = vadd.f32 %v1639, %v1805
    %v1807 = vpop.f32.mrb[0].mxu0
    %1808 = vmatprep.mubr.f32.mxu0 0.0
    %v1809 = vand.u32 %v1284, 4294901760
    %v1810 = vsub.f32 %v1284, %v1809
    %1811 = vmatmul.mubr.f32.gmra.mrb[0].mxu0 %v1810
    %v1812 = vpop.f32.mrb[0].mxu0
    %v1813 = vadd.f32 %v1645, %v1812
    %v1814 = vpop.f32.mrb[0].mxu0
    %1815 = vmatprep.mubr.f32.mxu0 0.0
    %v1816 = vand.u32 %v1287, 4294901760
    %v1817 = vsub.f32 %v1287, %v1816
    %1818 = vmatmul.mubr.f32.gmra.mrb[0].mxu0 %v1817
    %v1819 = vpop.f32.mrb[0].mxu0
    %v1820 = vadd.f32 %v1651, %v1819
    %v1821 = vpop.f32.mrb[0].mxu0
    %1822 = vmatprep.mubr.f32.mxu0 0.0
    %v1823 = vand.u32 %v1290, 4294901760
    %v1824 = vsub.f32 %v1290, %v1823
    %1825 = vmatmul.mubr.f32.gmra.mrb[0].mxu0 %v1824
    %v1826 = vpop.f32.mrb[0].mxu0
    %v1827 = vadd.f32 %v1657, %v1826
    %v1828 = vpop.f32.mrb[0].mxu0
    %1829 = vmatprep.mubr.f32.mxu0 0.0
    %v1830 = vand.u32 %v1293, 4294901760
    %v1831 = vsub.f32 %v1293, %v1830
    %1832 = vmatmul.mubr.f32.gmra.mrb[0].mxu0 %v1831
    %v1833 = vpop.f32.mrb[0].mxu0
    %v1834 = vadd.f32 %v1663, %v1833
    %v1835 = vpop.f32.mrb[0].mxu0
    %1836 = vmatprep.mubr.f32.mxu0 0.0
    %v1837 = vand.u32 %v1296, 4294901760
    %v1838 = vsub.f32 %v1296, %v1837
    %1839 = vmatmul.mubr.f32.gmra.mrb[0].mxu0 %v1838
    %v1840 = vpop.f32.mrb[0].mxu0
    %v1841 = vadd.f32 %v1669, %v1840
    %v1842 = vpop.f32.mrb[0].mxu0
    %1843 = vmatprep.mubr.f32.mxu0 0.0
    %v1844 = vand.u32 %v1299, 4294901760
    %v1845 = vsub.f32 %v1299, %v1844
    %1846 = vmatmul.mubr.f32.gmra.mrb[0].mxu0 %v1845
    %v1847 = vpop.f32.mrb[0].mxu0
    %v1848 = vadd.f32 %v1675, %v1847
    %v1849 = vpop.f32.mrb[0].mxu0
    %1850 = vmatprep.mubr.f32.mxu0 0.0
    %v1851 = vand.u32 %v1302, 4294901760
    %v1852 = vsub.f32 %v1302, %v1851
    %1853 = vmatmul.mubr.f32.gmra.mrb[0].mxu0 %v1852
    %v1854 = vpop.f32.mrb[0].mxu0
    %v1855 = vadd.f32 %v1681, %v1854
    %v1856 = vpop.f32.mrb[0].mxu0
    %1857 = vmatprep.mubr.f32.mxu0 0.0
    %v1858 = vand.u32 %v1305, 4294901760
    %v1859 = vsub.f32 %v1305, %v1858
    %1860 = vmatmul.mubr.f32.gmra.mrb[0].mxu0 %v1859
    %v1861 = vpop.f32.mrb[0].mxu0
    %v1862 = vadd.f32 %v1687, %v1861
    %v1863 = vpop.f32.mrb[0].mxu0
    %1864 = vmatprep.mubr.f32.mxu0 0.0
    %v1865 = vand.u32 %v1308, 4294901760
    %v1866 = vsub.f32 %v1308, %v1865
    %1867 = vmatmul.mubr.f32.gmra.mrb[0].mxu0 %v1866
    %v1868 = vpop.f32.mrb[0].mxu0
    %v1869 = vadd.f32 %v1693, %v1868
    %v1870 = vpop.f32.mrb[0].mxu0
    %1871 = vmatprep.mubr.f32.mxu0 0.0
    %v1872 = vand.u32 %v1311, 4294901760
    %v1873 = vsub.f32 %v1311, %v1872
    %1874 = vmatmul.mubr.f32.gmra.mrb[0].mxu0 %v1873
    %v1875 = vpop.f32.mrb[0].mxu0
    %v1876 = vadd.f32 %v1699, %v1875
    %v1877 = vpop.f32.mrb[0].mxu0
    %1878 = vmatprep.mubr.f32.mxu0 0.0
    %v1879 = vand.u32 %v1314, 4294901760
    %v1880 = vsub.f32 %v1314, %v1879
    %1881 = vmatmul.mubr.f32.gmra.mrb[0].mxu0 %v1880
    %v1882 = vpop.f32.mrb[0].mxu0
    %v1883 = vadd.f32 %v1705, %v1882
    %v1884 = vpop.f32.mrb[0].mxu0
    %1885 = vmatprep.mubr.f32.mxu0 0.0
    %v1886 = vand.u32 %v1317, 4294901760
    %v1887 = vsub.f32 %v1317, %v1886
    %1888 = vmatmul.mubr.f32.gmra.mrb[0].mxu0 %v1887
    %v1889 = vpop.f32.mrb[0].mxu0
    %v1890 = vadd.f32 %v1711, %v1889
    %v1891 = vpop.f32.mrb[0].mxu0
    %1892 = vdwg.mxu0
    %1893 = vmatprep.subr.mxu0 0.0
    %v1894 = vand.u32 %v1320, 4294901760
    %1895 = vmatpush1.msra.mxu0 %v1894
    %1896 = vmatprep.subr.mxu0 0.0
    %1897 = vmatpush1.msra.mxu0 0.0
    %1898 = vmatprep.subr.mxu0 0.0
    %1899 = vmatpush1.msra.mxu0 0.0
    %1900 = vmatprep.subr.mxu0 0.0
    %1901 = vmatpush1.msra.mxu0 0.0
    %1902 = vmatprep.subr.mxu0 0.0
    %1903 = vmatpush1.msra.mxu0 0.0
    %1904 = vmatprep.subr.mxu0 0.0
    %1905 = vmatpush1.msra.mxu0 0.0
    %1906 = vmatprep.subr.mxu0 0.0
    %1907 = vmatpush1.msra.mxu0 0.0
    %1908 = vmatprep.subr.mxu0 0.0
    %1909 = vmatpush1.msra.mxu0 0.0
    %1910 = vmatprep.subr.mxu0 0.0
    %1911 = vmatpush1.msra.mxu0 0.0
    %1912 = vmatprep.subr.mxu0 0.0
    %1913 = vmatpush1.msra.mxu0 0.0
    %1914 = vmatprep.subr.mxu0 0.0
    %1915 = vmatpush1.msra.mxu0 0.0
    %1916 = vmatprep.subr.mxu0 0.0
    %1917 = vmatpush1.msra.mxu0 0.0
    %1918 = vmatprep.subr.mxu0 0.0
    %1919 = vmatpush1.msra.mxu0 0.0
    %1920 = vmatprep.subr.mxu0 0.0
    %1921 = vmatpush1.msra.mxu0 0.0
    %1922 = vmatprep.subr.mxu0 0.0
    %1923 = vmatpush1.msra.mxu0 0.0
    %1924 = vmatprep.subr.mxu0 0.0
    %1925 = vmatpush1.msra.mxu0 0.0
    %1926 = vmatprep.subr.mxu0 0.0
    %1927 = vmatpush1.msra.mxu0 0.0
    %1928 = vmatprep.subr.mxu0 0.0
    %1929 = vmatpush1.msra.mxu0 0.0
    %1930 = vmatprep.subr.mxu0 0.0
    %1931 = vmatpush1.msra.mxu0 0.0
    %1932 = vmatprep.subr.mxu0 0.0
    %1933 = vmatpush1.msra.mxu0 0.0
    %1934 = vmatprep.subr.mxu0 0.0
    %1935 = vmatpush1.msra.mxu0 0.0
    %1936 = vmatprep.subr.mxu0 0.0
    %1937 = vmatpush1.msra.mxu0 0.0
    %1938 = vmatprep.subr.mxu0 0.0
    %1939 = vmatpush1.msra.mxu0 0.0
    %1940 = vmatprep.subr.mxu0 0.0
    %1941 = vmatpush1.msra.mxu0 0.0
    %1942 = vmatprep.subr.mxu0 0.0
    %1943 = vmatpush1.msra.mxu0 0.0
    %1944 = vmatprep.subr.mxu0 0.0
    %1945 = vmatpush1.msra.mxu0 0.0
    %1946 = vmatprep.subr.mxu0 0.0
    %1947 = vmatpush1.msra.mxu0 0.0
    %1948 = vmatprep.subr.mxu0 0.0
    %1949 = vmatpush1.msra.mxu0 0.0
    %1950 = vmatprep.subr.mxu0 0.0
    %1951 = vmatpush1.msra.mxu0 0.0
    %1952 = vmatprep.subr.mxu0 0.0
    %1953 = vmatpush1.msra.mxu0 0.0
    %1954 = vmatprep.subr.mxu0 0.0
    %1955 = vmatpush1.msra.mxu0 0.0
    %1956 = vmatprep.subr.mxu0 0.0
    %1957 = vmatpush1.msra.mxu0 0.0
    %1958 = vmatprep.mubr.f32.mxu0 0.0
    %v1959 = vand.u32 %v1272, 4294901760
    %v1960 = vsub.f32 %v1272, %v1959
    %v1961 = vand.u32 %v1960, 4294901760
    %1962 = vmatmul.mubr.f32.gmra.mrb[0].mxu0 %v1961
    %v1963 = vpop.f32.mrb[0].mxu0
    %v1964 = vadd.f32 %v1785, %v1963
    %v1965 = vpop.f32.mrb[0].mxu0
    %1966 = vmatprep.mubr.f32.mxu0 0.0
    %v1967 = vand.u32 %v1275, 4294901760
    %v1968 = vsub.f32 %v1275, %v1967
    %v1969 = vand.u32 %v1968, 4294901760
    %1970 = vmatmul.mubr.f32.gmra.mrb[0].mxu0 %v1969
    %v1971 = vpop.f32.mrb[0].mxu0
    %v1972 = vadd.f32 %v1792, %v1971
    %v1973 = vpop.f32.mrb[0].mxu0
    %1974 = vmatprep.mubr.f32.mxu0 0.0
    %v1975 = vand.u32 %v1278, 4294901760
    %v1976 = vsub.f32 %v1278, %v1975
    %v1977 = vand.u32 %v1976, 4294901760
    %1978 = vmatmul.mubr.f32.gmra.mrb[0].mxu0 %v1977
    %v1979 = vpop.f32.mrb[0].mxu0
    %v1980 = vadd.f32 %v1799, %v1979
    %v1981 = vpop.f32.mrb[0].mxu0
    %1982 = vmatprep.mubr.f32.mxu0 0.0
    %v1983 = vand.u32 %v1281, 4294901760
    %v1984 = vsub.f32 %v1281, %v1983
    %v1985 = vand.u32 %v1984, 4294901760
    %1986 = vmatmul.mubr.f32.gmra.mrb[0].mxu0 %v1985
    %v1987 = vpop.f32.mrb[0].mxu0
    %v1988 = vadd.f32 %v1806, %v1987
    %v1989 = vpop.f32.mrb[0].mxu0
    %1990 = vmatprep.mubr.f32.mxu0 0.0
    %v1991 = vand.u32 %v1284, 4294901760
    %v1992 = vsub.f32 %v1284, %v1991
    %v1993 = vand.u32 %v1992, 4294901760
    %1994 = vmatmul.mubr.f32.gmra.mrb[0].mxu0 %v1993
    %v1995 = vpop.f32.mrb[0].mxu0
    %v1996 = vadd.f32 %v1813, %v1995
    %v1997 = vpop.f32.mrb[0].mxu0
    %1998 = vmatprep.mubr.f32.mxu0 0.0
    %v1999 = vand.u32 %v1287, 4294901760
    %v2000 = vsub.f32 %v1287, %v1999
    %v2001 = vand.u32 %v2000, 4294901760
    %2002 = vmatmul.mubr.f32.gmra.mrb[0].mxu0 %v2001
    %v2003 = vpop.f32.mrb[0].mxu0
    %v2004 = vadd.f32 %v1820, %v2003
    %v2005 = vpop.f32.mrb[0].mxu0
    %2006 = vmatprep.mubr.f32.mxu0 0.0
    %v2007 = vand.u32 %v1290, 4294901760
    %v2008 = vsub.f32 %v1290, %v2007
    %v2009 = vand.u32 %v2008, 4294901760
    %2010 = vmatmul.mubr.f32.gmra.mrb[0].mxu0 %v2009
    %v2011 = vpop.f32.mrb[0].mxu0
    %v2012 = vadd.f32 %v1827, %v2011
    %v2013 = vpop.f32.mrb[0].mxu0
    %2014 = vmatprep.mubr.f32.mxu0 0.0
    %v2015 = vand.u32 %v1293, 4294901760
    %v2016 = vsub.f32 %v1293, %v2015
    %v2017 = vand.u32 %v2016, 4294901760
    %2018 = vmatmul.mubr.f32.gmra.mrb[0].mxu0 %v2017
    %v2019 = vpop.f32.mrb[0].mxu0
    %v2020 = vadd.f32 %v1834, %v2019
    %v2021 = vpop.f32.mrb[0].mxu0
    %2022 = vmatprep.mubr.f32.mxu0 0.0
    %v2023 = vand.u32 %v1296, 4294901760
    %v2024 = vsub.f32 %v1296, %v2023
    %v2025 = vand.u32 %v2024, 4294901760
    %2026 = vmatmul.mubr.f32.gmra.mrb[0].mxu0 %v2025
    %v2027 = vpop.f32.mrb[0].mxu0
    %v2028 = vadd.f32 %v1841, %v2027
    %v2029 = vpop.f32.mrb[0].mxu0
    %2030 = vmatprep.mubr.f32.mxu0 0.0
    %v2031 = vand.u32 %v1299, 4294901760
    %v2032 = vsub.f32 %v1299, %v2031
    %v2033 = vand.u32 %v2032, 4294901760
    %2034 = vmatmul.mubr.f32.gmra.mrb[0].mxu0 %v2033
    %v2035 = vpop.f32.mrb[0].mxu0
    %v2036 = vadd.f32 %v1848, %v2035
    %v2037 = vpop.f32.mrb[0].mxu0
    %2038 = vmatprep.mubr.f32.mxu0 0.0
    %v2039 = vand.u32 %v1302, 4294901760
    %v2040 = vsub.f32 %v1302, %v2039
    %v2041 = vand.u32 %v2040, 4294901760
    %2042 = vmatmul.mubr.f32.gmra.mrb[0].mxu0 %v2041
    %v2043 = vpop.f32.mrb[0].mxu0
    %v2044 = vadd.f32 %v1855, %v2043
    %v2045 = vpop.f32.mrb[0].mxu0
    %2046 = vmatprep.mubr.f32.mxu0 0.0
    %v2047 = vand.u32 %v1305, 4294901760
    %v2048 = vsub.f32 %v1305, %v2047
    %v2049 = vand.u32 %v2048, 4294901760
    %2050 = vmatmul.mubr.f32.gmra.mrb[0].mxu0 %v2049
    %v2051 = vpop.f32.mrb[0].mxu0
    %v2052 = vadd.f32 %v1862, %v2051
    %v2053 = vpop.f32.mrb[0].mxu0
    %2054 = vmatprep.mubr.f32.mxu0 0.0
    %v2055 = vand.u32 %v1308, 4294901760
    %v2056 = vsub.f32 %v1308, %v2055
    %v2057 = vand.u32 %v2056, 4294901760
    %2058 = vmatmul.mubr.f32.gmra.mrb[0].mxu0 %v2057
    %v2059 = vpop.f32.mrb[0].mxu0
    %v2060 = vadd.f32 %v1869, %v2059
    %v2061 = vpop.f32.mrb[0].mxu0
    %2062 = vmatprep.mubr.f32.mxu0 0.0
    %v2063 = vand.u32 %v1311, 4294901760
    %v2064 = vsub.f32 %v1311, %v2063
    %v2065 = vand.u32 %v2064, 4294901760
    %2066 = vmatmul.mubr.f32.gmra.mrb[0].mxu0 %v2065
    %v2067 = vpop.f32.mrb[0].mxu0
    %v2068 = vadd.f32 %v1876, %v2067
    %v2069 = vpop.f32.mrb[0].mxu0
    %2070 = vmatprep.mubr.f32.mxu0 0.0
    %v2071 = vand.u32 %v1314, 4294901760
    %v2072 = vsub.f32 %v1314, %v2071
    %v2073 = vand.u32 %v2072, 4294901760
    %2074 = vmatmul.mubr.f32.gmra.mrb[0].mxu0 %v2073
    %v2075 = vpop.f32.mrb[0].mxu0
    %v2076 = vadd.f32 %v1883, %v2075
    %v2077 = vpop.f32.mrb[0].mxu0
    %2078 = vmatprep.mubr.f32.mxu0 0.0
    %v2079 = vand.u32 %v1317, 4294901760
    %v2080 = vsub.f32 %v1317, %v2079
    %v2081 = vand.u32 %v2080, 4294901760
    %2082 = vmatmul.mubr.f32.gmra.mrb[0].mxu0 %v2081
    %v2083 = vpop.f32.mrb[0].mxu0
    %v2084 = vadd.f32 %v1890, %v2083
    %v2085 = vpop.f32.mrb[0].mxu0
    %2086 = vdwg.mxu0
    %2087 = vmatprep.subr.mxu0 0.0
    %v2088 = vand.u32 %v1320, 4294901760
    %v2089 = vsub.f32 %v1320, %v2088
    %v2090 = vand.u32 %v2089, 4294901760
    %2091 = vmatpush1.msra.mxu0 %v2090
    %2092 = vmatprep.subr.mxu0 0.0
    %2093 = vmatpush1.msra.mxu0 0.0
    %2094 = vmatprep.subr.mxu0 0.0
    %2095 = vmatpush1.msra.mxu0 0.0
    %2096 = vmatprep.subr.mxu0 0.0
    %2097 = vmatpush1.msra.mxu0 0.0
    %2098 = vmatprep.subr.mxu0 0.0
    %2099 = vmatpush1.msra.mxu0 0.0
    %2100 = vmatprep.subr.mxu0 0.0
    %2101 = vmatpush1.msra.mxu0 0.0
    %2102 = vmatprep.subr.mxu0 0.0
    %2103 = vmatpush1.msra.mxu0 0.0
    %2104 = vmatprep.subr.mxu0 0.0
    %2105 = vmatpush1.msra.mxu0 0.0
    %2106 = vmatprep.subr.mxu0 0.0
    %2107 = vmatpush1.msra.mxu0 0.0
    %2108 = vmatprep.subr.mxu0 0.0
    %2109 = vmatpush1.msra.mxu0 0.0
    %2110 = vmatprep.subr.mxu0 0.0
    %2111 = vmatpush1.msra.mxu0 0.0
    %2112 = vmatprep.subr.mxu0 0.0
    %2113 = vmatpush1.msra.mxu0 0.0
    %2114 = vmatprep.subr.mxu0 0.0
    %2115 = vmatpush1.msra.mxu0 0.0
    %2116 = vmatprep.subr.mxu0 0.0
    %2117 = vmatpush1.msra.mxu0 0.0
    %2118 = vmatprep.subr.mxu0 0.0
    %2119 = vmatpush1.msra.mxu0 0.0
    %2120 = vmatprep.subr.mxu0 0.0
    %2121 = vmatpush1.msra.mxu0 0.0
    %2122 = vmatprep.subr.mxu0 0.0
    %2123 = vmatpush1.msra.mxu0 0.0
    %2124 = vmatprep.subr.mxu0 0.0
    %2125 = vmatpush1.msra.mxu0 0.0
    %2126 = vmatprep.subr.mxu0 0.0
    %2127 = vmatpush1.msra.mxu0 0.0
    %2128 = vmatprep.subr.mxu0 0.0
    %2129 = vmatpush1.msra.mxu0 0.0
    %2130 = vmatprep.subr.mxu0 0.0
    %2131 = vmatpush1.msra.mxu0 0.0
    %2132 = vmatprep.subr.mxu0 0.0
    %2133 = vmatpush1.msra.mxu0 0.0
    %2134 = vmatprep.subr.mxu0 0.0
    %2135 = vmatpush1.msra.mxu0 0.0
    %2136 = vmatprep.subr.mxu0 0.0
    %2137 = vmatpush1.msra.mxu0 0.0
    %2138 = vmatprep.subr.mxu0 0.0
    %2139 = vmatpush1.msra.mxu0 0.0
    %2140 = vmatprep.subr.mxu0 0.0
    %2141 = vmatpush1.msra.mxu0 0.0
    %2142 = vmatprep.subr.mxu0 0.0
    %2143 = vmatpush1.msra.mxu0 0.0
    %2144 = vmatprep.subr.mxu0 0.0
    %2145 = vmatpush1.msra.mxu0 0.0
    %2146 = vmatprep.subr.mxu0 0.0
    %2147 = vmatpush1.msra.mxu0 0.0
    %2148 = vmatprep.subr.mxu0 0.0
    %2149 = vmatpush1.msra.mxu0 0.0
    %2150 = vmatprep.subr.mxu0 0.0
    %2151 = vmatpush1.msra.mxu0 0.0
    %2152 = vmatprep.subr.mxu0 0.0
    %2153 = vmatpush1.msra.mxu0 0.0
    %2154 = vmatprep.mubr.f32.mxu0 0.0
    %v2155 = vand.u32 %v1272, 4294901760
    %2156 = vmatmul.mubr.f32.gmra.mrb[0].mxu0 %v2155
    %v2157 = vpop.f32.mrb[0].mxu0
    %v2158 = vadd.f32 %v1964, %v2157
    %v2159 = vpop.f32.mrb[0].mxu0
    %2160 = vmatprep.mubr.f32.mxu0 0.0
    %v2161 = vand.u32 %v1275, 4294901760
    %2162 = vmatmul.mubr.f32.gmra.mrb[0].mxu0 %v2161
    %v2163 = vpop.f32.mrb[0].mxu0
    %v2164 = vadd.f32 %v1972, %v2163
    %v2165 = vpop.f32.mrb[0].mxu0
    %2166 = vmatprep.mubr.f32.mxu0 0.0
    %v2167 = vand.u32 %v1278, 4294901760
    %2168 = vmatmul.mubr.f32.gmra.mrb[0].mxu0 %v2167
    %v2169 = vpop.f32.mrb[0].mxu0
    %v2170 = vadd.f32 %v1980, %v2169
    %v2171 = vpop.f32.mrb[0].mxu0
    %2172 = vmatprep.mubr.f32.mxu0 0.0
    %v2173 = vand.u32 %v1281, 4294901760
    %2174 = vmatmul.mubr.f32.gmra.mrb[0].mxu0 %v2173
    %v2175 = vpop.f32.mrb[0].mxu0
    %v2176 = vadd.f32 %v1988, %v2175
    %v2177 = vpop.f32.mrb[0].mxu0
    %2178 = vmatprep.mubr.f32.mxu0 0.0
    %v2179 = vand.u32 %v1284, 4294901760
    %2180 = vmatmul.mubr.f32.gmra.mrb[0].mxu0 %v2179
    %v2181 = vpop.f32.mrb[0].mxu0
    %v2182 = vadd.f32 %v1996, %v2181
    %v2183 = vpop.f32.mrb[0].mxu0
    %2184 = vmatprep.mubr.f32.mxu0 0.0
    %v2185 = vand.u32 %v1287, 4294901760
    %2186 = vmatmul.mubr.f32.gmra.mrb[0].mxu0 %v2185
    %v2187 = vpop.f32.mrb[0].mxu0
    %v2188 = vadd.f32 %v2004, %v2187
    %v2189 = vpop.f32.mrb[0].mxu0
    %2190 = vmatprep.mubr.f32.mxu0 0.0
    %v2191 = vand.u32 %v1290, 4294901760
    %2192 = vmatmul.mubr.f32.gmra.mrb[0].mxu0 %v2191
    %v2193 = vpop.f32.mrb[0].mxu0
    %v2194 = vadd.f32 %v2012, %v2193
    %v2195 = vpop.f32.mrb[0].mxu0
    %2196 = vmatprep.mubr.f32.mxu0 0.0
    %v2197 = vand.u32 %v1293, 4294901760
    %2198 = vmatmul.mubr.f32.gmra.mrb[0].mxu0 %v2197
    %v2199 = vpop.f32.mrb[0].mxu0
    %v2200 = vadd.f32 %v2020, %v2199
    %v2201 = vpop.f32.mrb[0].mxu0
    %2202 = vmatprep.mubr.f32.mxu0 0.0
    %v2203 = vand.u32 %v1296, 4294901760
    %2204 = vmatmul.mubr.f32.gmra.mrb[0].mxu0 %v2203
    %v2205 = vpop.f32.mrb[0].mxu0
    %v2206 = vadd.f32 %v2028, %v2205
    %v2207 = vpop.f32.mrb[0].mxu0
    %2208 = vmatprep.mubr.f32.mxu0 0.0
    %v2209 = vand.u32 %v1299, 4294901760
    %2210 = vmatmul.mubr.f32.gmra.mrb[0].mxu0 %v2209
    %v2211 = vpop.f32.mrb[0].mxu0
    %v2212 = vadd.f32 %v2036, %v2211
    %v2213 = vpop.f32.mrb[0].mxu0
    %2214 = vmatprep.mubr.f32.mxu0 0.0
    %v2215 = vand.u32 %v1302, 4294901760
    %2216 = vmatmul.mubr.f32.gmra.mrb[0].mxu0 %v2215
    %v2217 = vpop.f32.mrb[0].mxu0
    %v2218 = vadd.f32 %v2044, %v2217
    %v2219 = vpop.f32.mrb[0].mxu0
    %2220 = vmatprep.mubr.f32.mxu0 0.0
    %v2221 = vand.u32 %v1305, 4294901760
    %2222 = vmatmul.mubr.f32.gmra.mrb[0].mxu0 %v2221
    %v2223 = vpop.f32.mrb[0].mxu0
    %v2224 = vadd.f32 %v2052, %v2223
    %v2225 = vpop.f32.mrb[0].mxu0
    %2226 = vmatprep.mubr.f32.mxu0 0.0
    %v2227 = vand.u32 %v1308, 4294901760
    %2228 = vmatmul.mubr.f32.gmra.mrb[0].mxu0 %v2227
    %v2229 = vpop.f32.mrb[0].mxu0
    %v2230 = vadd.f32 %v2060, %v2229
    %v2231 = vpop.f32.mrb[0].mxu0
    %2232 = vmatprep.mubr.f32.mxu0 0.0
    %v2233 = vand.u32 %v1311, 4294901760
    %2234 = vmatmul.mubr.f32.gmra.mrb[0].mxu0 %v2233
    %v2235 = vpop.f32.mrb[0].mxu0
    %v2236 = vadd.f32 %v2068, %v2235
    %v2237 = vpop.f32.mrb[0].mxu0
    %2238 = vmatprep.mubr.f32.mxu0 0.0
    %v2239 = vand.u32 %v1314, 4294901760
    %2240 = vmatmul.mubr.f32.gmra.mrb[0].mxu0 %v2239
    %v2241 = vpop.f32.mrb[0].mxu0
    %v2242 = vadd.f32 %v2076, %v2241
    %v2243 = vpop.f32.mrb[0].mxu0
    %2244 = vmatprep.mubr.f32.mxu0 0.0
    %v2245 = vand.u32 %v1317, 4294901760
    %2246 = vmatmul.mubr.f32.gmra.mrb[0].mxu0 %v2245
    %v2247 = vpop.f32.mrb[0].mxu0
    %v2248 = vadd.f32 %v2084, %v2247
    %v2249 = vpop.f32.mrb[0].mxu0
    %2250 = vdwg.mxu0
    %2251 = vmatprep.subr.mxu0 0.0
    %v2252 = vand.u32 %v1320, 4294901760
    %2253 = vmatpush1.msra.mxu0 %v2252
    %2254 = vmatprep.subr.mxu0 0.0
    %2255 = vmatpush1.msra.mxu0 0.0
    %2256 = vmatprep.subr.mxu0 0.0
    %2257 = vmatpush1.msra.mxu0 0.0
    %2258 = vmatprep.subr.mxu0 0.0
    %2259 = vmatpush1.msra.mxu0 0.0
    %2260 = vmatprep.subr.mxu0 0.0
    %2261 = vmatpush1.msra.mxu0 0.0
    %2262 = vmatprep.subr.mxu0 0.0
    %2263 = vmatpush1.msra.mxu0 0.0
    %2264 = vmatprep.subr.mxu0 0.0
    %2265 = vmatpush1.msra.mxu0 0.0
    %2266 = vmatprep.subr.mxu0 0.0
    %2267 = vmatpush1.msra.mxu0 0.0
    %2268 = vmatprep.subr.mxu0 0.0
    %2269 = vmatpush1.msra.mxu0 0.0
    %2270 = vmatprep.subr.mxu0 0.0
    %2271 = vmatpush1.msra.mxu0 0.0
    %2272 = vmatprep.subr.mxu0 0.0
    %2273 = vmatpush1.msra.mxu0 0.0
    %2274 = vmatprep.subr.mxu0 0.0
    %2275 = vmatpush1.msra.mxu0 0.0
    %2276 = vmatprep.subr.mxu0 0.0
    %2277 = vmatpush1.msra.mxu0 0.0
    %2278 = vmatprep.subr.mxu0 0.0
    %2279 = vmatpush1.msra.mxu0 0.0
    %2280 = vmatprep.subr.mxu0 0.0
    %2281 = vmatpush1.msra.mxu0 0.0
    %2282 = vmatprep.subr.mxu0 0.0
    %2283 = vmatpush1.msra.mxu0 0.0
    %2284 = vmatprep.subr.mxu0 0.0
    %2285 = vmatpush1.msra.mxu0 0.0
    %2286 = vmatprep.subr.mxu0 0.0
    %2287 = vmatpush1.msra.mxu0 0.0
    %2288 = vmatprep.subr.mxu0 0.0
    %2289 = vmatpush1.msra.mxu0 0.0
    %2290 = vmatprep.subr.mxu0 0.0
    %2291 = vmatpush1.msra.mxu0 0.0
    %2292 = vmatprep.subr.mxu0 0.0
    %2293 = vmatpush1.msra.mxu0 0.0
    %2294 = vmatprep.subr.mxu0 0.0
    %2295 = vmatpush1.msra.mxu0 0.0
    %2296 = vmatprep.subr.mxu0 0.0
    %2297 = vmatpush1.msra.mxu0 0.0
    %2298 = vmatprep.subr.mxu0 0.0
    %2299 = vmatpush1.msra.mxu0 0.0
    %2300 = vmatprep.subr.mxu0 0.0
    %2301 = vmatpush1.msra.mxu0 0.0
    %2302 = vmatprep.subr.mxu0 0.0
    %2303 = vmatpush1.msra.mxu0 0.0
    %2304 = vmatprep.subr.mxu0 0.0
    %2305 = vmatpush1.msra.mxu0 0.0
    %2306 = vmatprep.subr.mxu0 0.0
    %2307 = vmatpush1.msra.mxu0 0.0
    %2308 = vmatprep.subr.mxu0 0.0
    %2309 = vmatpush1.msra.mxu0 0.0
    %2310 = vmatprep.subr.mxu0 0.0
    %2311 = vmatpush1.msra.mxu0 0.0
    %2312 = vmatprep.subr.mxu0 0.0
    %2313 = vmatpush1.msra.mxu0 0.0
    %2314 = vmatprep.subr.mxu0 0.0
    %2315 = vmatpush1.msra.mxu0 0.0
    %2316 = vmatprep.mubr.f32.mxu0 0.0
    %v2317 = vand.u32 %v1272, 4294901760
    %2318 = vmatmul.mubr.f32.gmra.mrb[0].mxu0 %v2317
    %v2319 = vpop.f32.mrb[0].mxu0
    %v2320 = vadd.f32 %v2158, %v2319
    %v2321 = vpop.f32.mrb[0].mxu0
    %2322 = vmatprep.mubr.f32.mxu0 0.0
    %v2323 = vand.u32 %v1275, 4294901760
    %2324 = vmatmul.mubr.f32.gmra.mrb[0].mxu0 %v2323
    %v2325 = vpop.f32.mrb[0].mxu0
    %v2326 = vadd.f32 %v2164, %v2325
    %v2327 = vpop.f32.mrb[0].mxu0
    %2328 = vmatprep.mubr.f32.mxu0 0.0
    %v2329 = vand.u32 %v1278, 4294901760
    %2330 = vmatmul.mubr.f32.gmra.mrb[0].mxu0 %v2329
    %v2331 = vpop.f32.mrb[0].mxu0
    %v2332 = vadd.f32 %v2170, %v2331
    %v2333 = vpop.f32.mrb[0].mxu0
    %2334 = vmatprep.mubr.f32.mxu0 0.0
    %v2335 = vand.u32 %v1281, 4294901760
    %2336 = vmatmul.mubr.f32.gmra.mrb[0].mxu0 %v2335
    %v2337 = vpop.f32.mrb[0].mxu0
    %v2338 = vadd.f32 %v2176, %v2337
    %v2339 = vpop.f32.mrb[0].mxu0
    %2340 = vmatprep.mubr.f32.mxu0 0.0
    %v2341 = vand.u32 %v1284, 4294901760
    %2342 = vmatmul.mubr.f32.gmra.mrb[0].mxu0 %v2341
    %v2343 = vpop.f32.mrb[0].mxu0
    %v2344 = vadd.f32 %v2182, %v2343
    %v2345 = vpop.f32.mrb[0].mxu0
    %2346 = vmatprep.mubr.f32.mxu0 0.0
    %v2347 = vand.u32 %v1287, 4294901760
    %2348 = vmatmul.mubr.f32.gmra.mrb[0].mxu0 %v2347
    %v2349 = vpop.f32.mrb[0].mxu0
    %v2350 = vadd.f32 %v2188, %v2349
    %v2351 = vpop.f32.mrb[0].mxu0
    %2352 = vmatprep.mubr.f32.mxu0 0.0
    %v2353 = vand.u32 %v1290, 4294901760
    %2354 = vmatmul.mubr.f32.gmra.mrb[0].mxu0 %v2353
    %v2355 = vpop.f32.mrb[0].mxu0
    %v2356 = vadd.f32 %v2194, %v2355
    %v2357 = vpop.f32.mrb[0].mxu0
    %2358 = vmatprep.mubr.f32.mxu0 0.0
    %v2359 = vand.u32 %v1293, 4294901760
    %2360 = vmatmul.mubr.f32.gmra.mrb[0].mxu0 %v2359
    %v2361 = vpop.f32.mrb[0].mxu0
    %v2362 = vadd.f32 %v2200, %v2361
    %v2363 = vpop.f32.mrb[0].mxu0
    %2364 = vmatprep.mubr.f32.mxu0 0.0
    %v2365 = vand.u32 %v1296, 4294901760
    %2366 = vmatmul.mubr.f32.gmra.mrb[0].mxu0 %v2365
    %v2367 = vpop.f32.mrb[0].mxu0
    %v2368 = vadd.f32 %v2206, %v2367
    %v2369 = vpop.f32.mrb[0].mxu0
    %2370 = vmatprep.mubr.f32.mxu0 0.0
    %v2371 = vand.u32 %v1299, 4294901760
    %2372 = vmatmul.mubr.f32.gmra.mrb[0].mxu0 %v2371
    %v2373 = vpop.f32.mrb[0].mxu0
    %v2374 = vadd.f32 %v2212, %v2373
    %v2375 = vpop.f32.mrb[0].mxu0
    %2376 = vmatprep.mubr.f32.mxu0 0.0
    %v2377 = vand.u32 %v1302, 4294901760
    %2378 = vmatmul.mubr.f32.gmra.mrb[0].mxu0 %v2377
    %v2379 = vpop.f32.mrb[0].mxu0
    %v2380 = vadd.f32 %v2218, %v2379
    %v2381 = vpop.f32.mrb[0].mxu0
    %2382 = vmatprep.mubr.f32.mxu0 0.0
    %v2383 = vand.u32 %v1305, 4294901760
    %2384 = vmatmul.mubr.f32.gmra.mrb[0].mxu0 %v2383
    %v2385 = vpop.f32.mrb[0].mxu0
    %v2386 = vadd.f32 %v2224, %v2385
    %v2387 = vpop.f32.mrb[0].mxu0
    %2388 = vmatprep.mubr.f32.mxu0 0.0
    %v2389 = vand.u32 %v1308, 4294901760
    %2390 = vmatmul.mubr.f32.gmra.mrb[0].mxu0 %v2389
    %v2391 = vpop.f32.mrb[0].mxu0
    %v2392 = vadd.f32 %v2230, %v2391
    %v2393 = vpop.f32.mrb[0].mxu0
    %2394 = vmatprep.mubr.f32.mxu0 0.0
    %v2395 = vand.u32 %v1311, 4294901760
    %2396 = vmatmul.mubr.f32.gmra.mrb[0].mxu0 %v2395
    %v2397 = vpop.f32.mrb[0].mxu0
    %v2398 = vadd.f32 %v2236, %v2397
    %v2399 = vpop.f32.mrb[0].mxu0
    %2400 = vmatprep.mubr.f32.mxu0 0.0
    %v2401 = vand.u32 %v1314, 4294901760
    %2402 = vmatmul.mubr.f32.gmra.mrb[0].mxu0 %v2401
    %v2403 = vpop.f32.mrb[0].mxu0
    %v2404 = vadd.f32 %v2242, %v2403
    %v2405 = vpop.f32.mrb[0].mxu0
    %2406 = vmatprep.mubr.f32.mxu0 0.0
    %v2407 = vand.u32 %v1317, 4294901760
    %2408 = vmatmul.mubr.f32.gmra.mrb[0].mxu0 %v2407
    %v2409 = vpop.f32.mrb[0].mxu0
    %v2410 = vadd.f32 %v2248, %v2409
    %v2411 = vpop.f32.mrb[0].mxu0
    %2412 = vdwg.mxu0
    %vm2429 = vcmask 1046528
    %v2430 = vrot.slane %v16, 1
    %v2431 = vrot.slane %v17, 1
    %v2432 = vsel %vm2429, %v2430, %v2431
    %v2433 = vrot.slane %v18, 1
    %v2434 = vrot.slane %v19, 1
    %v2435 = vsel %vm2429, %v2433, %v2434
    %v2436 = vrot.slane %v20, 1
    %v2437 = vrot.slane %v21, 1
    %v2438 = vsel %vm2429, %v2436, %v2437
    %v2439 = vrot.slane %v22, 1
    %v2440 = vrot.slane %v23, 1
    %v2441 = vsel %vm2429, %v2439, %v2440
    %v2442 = vrot.slane %v24, 1
    %v2443 = vrot.slane %v25, 1
    %v2444 = vsel %vm2429, %v2442, %v2443
    %v2445 = vrot.slane %v26, 1
    %v2446 = vrot.slane %v27, 1
    %v2447 = vsel %vm2429, %v2445, %v2446
    %v2448 = vrot.slane %v28, 1
    %v2449 = vrot.slane %v29, 1
    %v2450 = vsel %vm2429, %v2448, %v2449
    %v2451 = vrot.slane %v30, 1
    %v2452 = vrot.slane %v31, 1
    %v2453 = vsel %vm2429, %v2451, %v2452
    %v2454 = vrot.slane %v67, 1
    %v2455 = vrot.slane %v68, 1
    %v2456 = vsel %vm2429, %v2454, %v2455
    %v2457 = vrot.slane %v69, 1
    %v2458 = vrot.slane %v70, 1
    %v2459 = vsel %vm2429, %v2457, %v2458
    %v2460 = vrot.slane %v71, 1
    %v2461 = vrot.slane %v72, 1
    %v2462 = vsel %vm2429, %v2460, %v2461
    %v2463 = vrot.slane %v73, 1
    %v2464 = vrot.slane %v74, 1
    %v2465 = vsel %vm2429, %v2463, %v2464
    %v2466 = vrot.slane %v75, 1
    %v2467 = vrot.slane %v76, 1
    %v2468 = vsel %vm2429, %v2466, %v2467
    %v2469 = vrot.slane %v77, 1
    %v2470 = vrot.slane %v78, 1
    %v2471 = vsel %vm2429, %v2469, %v2470
    %v2472 = vrot.slane %v79, 1
    %v2473 = vrot.slane %v80, 1
    %v2474 = vsel %vm2429, %v2472, %v2473
    %v2475 = vrot.slane %v81, 1
    %v2476 = vrot.slane %v82, 1
    %v2477 = vsel %vm2429, %v2475, %v2476
    %v2478 = vsel %vm127, %v2432, 0
    %v2480 = vsel %vm127, %v2435, 0
    %v2482 = vsel %vm127, %v2438, 0
    %v2484 = vsel %vm127, %v2441, 0
    %v2486 = vsel %vm127, %v2444, 0
    %v2488 = vsel %vm127, %v2447, 0
    %v2490 = vsel %vm127, %v2450, 0
    %v2492 = vsel %vm127, %v2453, 0
    %v2494 = vsel %vm127, %v2456, 0
    %v2496 = vsel %vm127, %v2459, 0
    %v2498 = vsel %vm127, %v2462, 0
    %v2500 = vsel %vm127, %v2465, 0
    %v2502 = vsel %vm127, %v2468, 0
    %v2504 = vsel %vm127, %v2471, 0
    %v2506 = vsel %vm127, %v2474, 0
    %v2508 = vsel %vm127, %v2477, 0
    %v2511 = vsel %vm176, %v120, 0
    %2513 = vmatprep.subr.mxu0 0.0
    %v2514 = vand.u32 %v2511, 4294901760
    %2515 = vmatpush1.msra.mxu0 %v2514
    %2516 = vmatprep.subr.mxu0 0.0
    %2517 = vmatpush1.msra.mxu0 0.0
    %2518 = vmatprep.subr.mxu0 0.0
    %2519 = vmatpush1.msra.mxu0 0.0
    %2520 = vmatprep.subr.mxu0 0.0
    %2521 = vmatpush1.msra.mxu0 0.0
    %2522 = vmatprep.subr.mxu0 0.0
    %2523 = vmatpush1.msra.mxu0 0.0
    %2524 = vmatprep.subr.mxu0 0.0
    %2525 = vmatpush1.msra.mxu0 0.0
    %2526 = vmatprep.subr.mxu0 0.0
    %2527 = vmatpush1.msra.mxu0 0.0
    %2528 = vmatprep.subr.mxu0 0.0
    %2529 = vmatpush1.msra.mxu0 0.0
    %2530 = vmatprep.subr.mxu0 0.0
    %2531 = vmatpush1.msra.mxu0 0.0
    %2532 = vmatprep.subr.mxu0 0.0
    %2533 = vmatpush1.msra.mxu0 0.0
    %2534 = vmatprep.subr.mxu0 0.0
    %2535 = vmatpush1.msra.mxu0 0.0
    %2536 = vmatprep.subr.mxu0 0.0
    %2537 = vmatpush1.msra.mxu0 0.0
    %2538 = vmatprep.subr.mxu0 0.0
    %2539 = vmatpush1.msra.mxu0 0.0
    %2540 = vmatprep.subr.mxu0 0.0
    %2541 = vmatpush1.msra.mxu0 0.0
    %2542 = vmatprep.subr.mxu0 0.0
    %2543 = vmatpush1.msra.mxu0 0.0
    %2544 = vmatprep.subr.mxu0 0.0
    %2545 = vmatpush1.msra.mxu0 0.0
    %2546 = vmatprep.subr.mxu0 0.0
    %2547 = vmatpush1.msra.mxu0 0.0
    %2548 = vmatprep.subr.mxu0 0.0
    %2549 = vmatpush1.msra.mxu0 0.0
    %2550 = vmatprep.subr.mxu0 0.0
    %2551 = vmatpush1.msra.mxu0 0.0
    %2552 = vmatprep.subr.mxu0 0.0
    %2553 = vmatpush1.msra.mxu0 0.0
    %2554 = vmatprep.subr.mxu0 0.0
    %2555 = vmatpush1.msra.mxu0 0.0
    %2556 = vmatprep.subr.mxu0 0.0
    %2557 = vmatpush1.msra.mxu0 0.0
    %2558 = vmatprep.subr.mxu0 0.0
    %2559 = vmatpush1.msra.mxu0 0.0
    %2560 = vmatprep.subr.mxu0 0.0
    %2561 = vmatpush1.msra.mxu0 0.0
    %2562 = vmatprep.subr.mxu0 0.0
    %2563 = vmatpush1.msra.mxu0 0.0
    %2564 = vmatprep.subr.mxu0 0.0
    %2565 = vmatpush1.msra.mxu0 0.0
    %2566 = vmatprep.subr.mxu0 0.0
    %2567 = vmatpush1.msra.mxu0 0.0
    %2568 = vmatprep.subr.mxu0 0.0
    %2569 = vmatpush1.msra.mxu0 0.0
    %2570 = vmatprep.subr.mxu0 0.0
    %2571 = vmatpush1.msra.mxu0 0.0
    %2572 = vmatprep.subr.mxu0 0.0
    %2573 = vmatpush1.msra.mxu0 0.0
    %2574 = vmatprep.subr.mxu0 0.0
    %2575 = vmatpush1.msra.mxu0 0.0
    %2576 = vmatprep.subr.mxu0 0.0
    %2577 = vmatpush1.msra.mxu0 0.0
    %2578 = vmatprep.mubr.f32.mxu0 0.0
    %v2579 = vand.u32 %v2478, 4294901760
    %v2580 = vsub.f32 %v2478, %v2579
    %v2581 = vand.u32 %v2580, 4294901760
    %v2582 = vsub.f32 %v2580, %v2581
    %v2583 = vand.u32 %v2582, 4294901760
    %2584 = vmatmul.mubr.f32.gmra.mrb[0].mxu0 %v2583
    %v2585 = vpop.f32.mrb[0].mxu0
    %v2586 = vadd.f32 0.0, %v2585
    %v2587 = vpop.f32.mrb[0].mxu0
    %2588 = vmatprep.mubr.f32.mxu0 0.0
    %v2589 = vand.u32 %v2480, 4294901760
    %v2590 = vsub.f32 %v2480, %v2589
    %v2591 = vand.u32 %v2590, 4294901760
    %v2592 = vsub.f32 %v2590, %v2591
    %v2593 = vand.u32 %v2592, 4294901760
    %2594 = vmatmul.mubr.f32.gmra.mrb[0].mxu0 %v2593
    %v2595 = vpop.f32.mrb[0].mxu0
    %v2596 = vadd.f32 0.0, %v2595
    %v2597 = vpop.f32.mrb[0].mxu0
    %2598 = vmatprep.mubr.f32.mxu0 0.0
    %v2599 = vand.u32 %v2482, 4294901760
    %v2600 = vsub.f32 %v2482, %v2599
    %v2601 = vand.u32 %v2600, 4294901760
    %v2602 = vsub.f32 %v2600, %v2601
    %v2603 = vand.u32 %v2602, 4294901760
    %2604 = vmatmul.mubr.f32.gmra.mrb[0].mxu0 %v2603
    %v2605 = vpop.f32.mrb[0].mxu0
    %v2606 = vadd.f32 0.0, %v2605
    %v2607 = vpop.f32.mrb[0].mxu0
    %2608 = vmatprep.mubr.f32.mxu0 0.0
    %v2609 = vand.u32 %v2484, 4294901760
    %v2610 = vsub.f32 %v2484, %v2609
    %v2611 = vand.u32 %v2610, 4294901760
    %v2612 = vsub.f32 %v2610, %v2611
    %v2613 = vand.u32 %v2612, 4294901760
    %2614 = vmatmul.mubr.f32.gmra.mrb[0].mxu0 %v2613
    %v2615 = vpop.f32.mrb[0].mxu0
    %v2616 = vadd.f32 0.0, %v2615
    %v2617 = vpop.f32.mrb[0].mxu0
    %2618 = vmatprep.mubr.f32.mxu0 0.0
    %v2619 = vand.u32 %v2486, 4294901760
    %v2620 = vsub.f32 %v2486, %v2619
    %v2621 = vand.u32 %v2620, 4294901760
    %v2622 = vsub.f32 %v2620, %v2621
    %v2623 = vand.u32 %v2622, 4294901760
    %2624 = vmatmul.mubr.f32.gmra.mrb[0].mxu0 %v2623
    %v2625 = vpop.f32.mrb[0].mxu0
    %v2626 = vadd.f32 0.0, %v2625
    %v2627 = vpop.f32.mrb[0].mxu0
    %2628 = vmatprep.mubr.f32.mxu0 0.0
    %v2629 = vand.u32 %v2488, 4294901760
    %v2630 = vsub.f32 %v2488, %v2629
    %v2631 = vand.u32 %v2630, 4294901760
    %v2632 = vsub.f32 %v2630, %v2631
    %v2633 = vand.u32 %v2632, 4294901760
    %2634 = vmatmul.mubr.f32.gmra.mrb[0].mxu0 %v2633
    %v2635 = vpop.f32.mrb[0].mxu0
    %v2636 = vadd.f32 0.0, %v2635
    %v2637 = vpop.f32.mrb[0].mxu0
    %2638 = vmatprep.mubr.f32.mxu0 0.0
    %v2639 = vand.u32 %v2490, 4294901760
    %v2640 = vsub.f32 %v2490, %v2639
    %v2641 = vand.u32 %v2640, 4294901760
    %v2642 = vsub.f32 %v2640, %v2641
    %v2643 = vand.u32 %v2642, 4294901760
    %2644 = vmatmul.mubr.f32.gmra.mrb[0].mxu0 %v2643
    %v2645 = vpop.f32.mrb[0].mxu0
    %v2646 = vadd.f32 0.0, %v2645
    %v2647 = vpop.f32.mrb[0].mxu0
    %2648 = vmatprep.mubr.f32.mxu0 0.0
    %v2649 = vand.u32 %v2492, 4294901760
    %v2650 = vsub.f32 %v2492, %v2649
    %v2651 = vand.u32 %v2650, 4294901760
    %v2652 = vsub.f32 %v2650, %v2651
    %v2653 = vand.u32 %v2652, 4294901760
    %2654 = vmatmul.mubr.f32.gmra.mrb[0].mxu0 %v2653
    %v2655 = vpop.f32.mrb[0].mxu0
    %v2656 = vadd.f32 0.0, %v2655
    %v2657 = vpop.f32.mrb[0].mxu0
    %2658 = vmatprep.mubr.f32.mxu0 0.0
    %v2659 = vand.u32 %v2494, 4294901760
    %v2660 = vsub.f32 %v2494, %v2659
    %v2661 = vand.u32 %v2660, 4294901760
    %v2662 = vsub.f32 %v2660, %v2661
    %v2663 = vand.u32 %v2662, 4294901760
    %2664 = vmatmul.mubr.f32.gmra.mrb[0].mxu0 %v2663
    %v2665 = vpop.f32.mrb[0].mxu0
    %v2666 = vadd.f32 0.0, %v2665
    %v2667 = vpop.f32.mrb[0].mxu0
    %2668 = vmatprep.mubr.f32.mxu0 0.0
    %v2669 = vand.u32 %v2496, 4294901760
    %v2670 = vsub.f32 %v2496, %v2669
    %v2671 = vand.u32 %v2670, 4294901760
    %v2672 = vsub.f32 %v2670, %v2671
    %v2673 = vand.u32 %v2672, 4294901760
    %2674 = vmatmul.mubr.f32.gmra.mrb[0].mxu0 %v2673
    %v2675 = vpop.f32.mrb[0].mxu0
    %v2676 = vadd.f32 0.0, %v2675
    %v2677 = vpop.f32.mrb[0].mxu0
    %2678 = vmatprep.mubr.f32.mxu0 0.0
    %v2679 = vand.u32 %v2498, 4294901760
    %v2680 = vsub.f32 %v2498, %v2679
    %v2681 = vand.u32 %v2680, 4294901760
    %v2682 = vsub.f32 %v2680, %v2681
    %v2683 = vand.u32 %v2682, 4294901760
    %2684 = vmatmul.mubr.f32.gmra.mrb[0].mxu0 %v2683
    %v2685 = vpop.f32.mrb[0].mxu0
    %v2686 = vadd.f32 0.0, %v2685
    %v2687 = vpop.f32.mrb[0].mxu0
    %2688 = vmatprep.mubr.f32.mxu0 0.0
    %v2689 = vand.u32 %v2500, 4294901760
    %v2690 = vsub.f32 %v2500, %v2689
    %v2691 = vand.u32 %v2690, 4294901760
    %v2692 = vsub.f32 %v2690, %v2691
    %v2693 = vand.u32 %v2692, 4294901760
    %2694 = vmatmul.mubr.f32.gmra.mrb[0].mxu0 %v2693
    %v2695 = vpop.f32.mrb[0].mxu0
    %v2696 = vadd.f32 0.0, %v2695
    %v2697 = vpop.f32.mrb[0].mxu0
    %2698 = vmatprep.mubr.f32.mxu0 0.0
    %v2699 = vand.u32 %v2502, 4294901760
    %v2700 = vsub.f32 %v2502, %v2699
    %v2701 = vand.u32 %v2700, 4294901760
    %v2702 = vsub.f32 %v2700, %v2701
    %v2703 = vand.u32 %v2702, 4294901760
    %2704 = vmatmul.mubr.f32.gmra.mrb[0].mxu0 %v2703
    %v2705 = vpop.f32.mrb[0].mxu0
    %v2706 = vadd.f32 0.0, %v2705
    %v2707 = vpop.f32.mrb[0].mxu0
    %2708 = vmatprep.mubr.f32.mxu0 0.0
    %v2709 = vand.u32 %v2504, 4294901760
    %v2710 = vsub.f32 %v2504, %v2709
    %v2711 = vand.u32 %v2710, 4294901760
    %v2712 = vsub.f32 %v2710, %v2711
    %v2713 = vand.u32 %v2712, 4294901760
    %2714 = vmatmul.mubr.f32.gmra.mrb[0].mxu0 %v2713
    %v2715 = vpop.f32.mrb[0].mxu0
    %v2716 = vadd.f32 0.0, %v2715
    %v2717 = vpop.f32.mrb[0].mxu0
    %2718 = vmatprep.mubr.f32.mxu0 0.0
    %v2719 = vand.u32 %v2506, 4294901760
    %v2720 = vsub.f32 %v2506, %v2719
    %v2721 = vand.u32 %v2720, 4294901760
    %v2722 = vsub.f32 %v2720, %v2721
    %v2723 = vand.u32 %v2722, 4294901760
    %2724 = vmatmul.mubr.f32.gmra.mrb[0].mxu0 %v2723
    %v2725 = vpop.f32.mrb[0].mxu0
    %v2726 = vadd.f32 0.0, %v2725
    %v2727 = vpop.f32.mrb[0].mxu0
    %2728 = vmatprep.mubr.f32.mxu0 0.0
    %v2729 = vand.u32 %v2508, 4294901760
    %v2730 = vsub.f32 %v2508, %v2729
    %v2731 = vand.u32 %v2730, 4294901760
    %v2732 = vsub.f32 %v2730, %v2731
    %v2733 = vand.u32 %v2732, 4294901760
    %2734 = vmatmul.mubr.f32.gmra.mrb[0].mxu0 %v2733
    %v2735 = vpop.f32.mrb[0].mxu0
    %v2736 = vadd.f32 0.0, %v2735
    %v2737 = vpop.f32.mrb[0].mxu0
    %2738 = vdwg.mxu0
    %2739 = vmatprep.subr.mxu0 0.0
    %v2740 = vand.u32 %v2511, 4294901760
    %v2741 = vsub.f32 %v2511, %v2740
    %v2742 = vand.u32 %v2741, 4294901760
    %v2743 = vsub.f32 %v2741, %v2742
    %v2744 = vand.u32 %v2743, 4294901760
    %2745 = vmatpush1.msra.mxu0 %v2744
    %2746 = vmatprep.subr.mxu0 0.0
    %2747 = vmatpush1.msra.mxu0 0.0
    %2748 = vmatprep.subr.mxu0 0.0
    %2749 = vmatpush1.msra.mxu0 0.0
    %2750 = vmatprep.subr.mxu0 0.0
    %2751 = vmatpush1.msra.mxu0 0.0
    %2752 = vmatprep.subr.mxu0 0.0
    %2753 = vmatpush1.msra.mxu0 0.0
    %2754 = vmatprep.subr.mxu0 0.0
    %2755 = vmatpush1.msra.mxu0 0.0
    %2756 = vmatprep.subr.mxu0 0.0
    %2757 = vmatpush1.msra.mxu0 0.0
    %2758 = vmatprep.subr.mxu0 0.0
    %2759 = vmatpush1.msra.mxu0 0.0
    %2760 = vmatprep.subr.mxu0 0.0
    %2761 = vmatpush1.msra.mxu0 0.0
    %2762 = vmatprep.subr.mxu0 0.0
    %2763 = vmatpush1.msra.mxu0 0.0
    %2764 = vmatprep.subr.mxu0 0.0
    %2765 = vmatpush1.msra.mxu0 0.0
    %2766 = vmatprep.subr.mxu0 0.0
    %2767 = vmatpush1.msra.mxu0 0.0
    %2768 = vmatprep.subr.mxu0 0.0
    %2769 = vmatpush1.msra.mxu0 0.0
    %2770 = vmatprep.subr.mxu0 0.0
    %2771 = vmatpush1.msra.mxu0 0.0
    %2772 = vmatprep.subr.mxu0 0.0
    %2773 = vmatpush1.msra.mxu0 0.0
    %2774 = vmatprep.subr.mxu0 0.0
    %2775 = vmatpush1.msra.mxu0 0.0
    %2776 = vmatprep.subr.mxu0 0.0
    %2777 = vmatpush1.msra.mxu0 0.0
    %2778 = vmatprep.subr.mxu0 0.0
    %2779 = vmatpush1.msra.mxu0 0.0
    %2780 = vmatprep.subr.mxu0 0.0
    %2781 = vmatpush1.msra.mxu0 0.0
    %2782 = vmatprep.subr.mxu0 0.0
    %2783 = vmatpush1.msra.mxu0 0.0
    %2784 = vmatprep.subr.mxu0 0.0
    %2785 = vmatpush1.msra.mxu0 0.0
    %2786 = vmatprep.subr.mxu0 0.0
    %2787 = vmatpush1.msra.mxu0 0.0
    %2788 = vmatprep.subr.mxu0 0.0
    %2789 = vmatpush1.msra.mxu0 0.0
    %2790 = vmatprep.subr.mxu0 0.0
    %2791 = vmatpush1.msra.mxu0 0.0
    %2792 = vmatprep.subr.mxu0 0.0
    %2793 = vmatpush1.msra.mxu0 0.0
    %2794 = vmatprep.subr.mxu0 0.0
    %2795 = vmatpush1.msra.mxu0 0.0
    %2796 = vmatprep.subr.mxu0 0.0
    %2797 = vmatpush1.msra.mxu0 0.0
    %2798 = vmatprep.subr.mxu0 0.0
    %2799 = vmatpush1.msra.mxu0 0.0
    %2800 = vmatprep.subr.mxu0 0.0
    %2801 = vmatpush1.msra.mxu0 0.0
    %2802 = vmatprep.subr.mxu0 0.0
    %2803 = vmatpush1.msra.mxu0 0.0
    %2804 = vmatprep.subr.mxu0 0.0
    %2805 = vmatpush1.msra.mxu0 0.0
    %2806 = vmatprep.subr.mxu0 0.0
    %2807 = vmatpush1.msra.mxu0 0.0
    %2808 = vmatprep.mubr.f32.mxu0 0.0
    %v2809 = vand.u32 %v2478, 4294901760
    %2810 = vmatmul.mubr.f32.gmra.mrb[0].mxu0 %v2809
    %v2811 = vpop.f32.mrb[0].mxu0
    %v2812 = vadd.f32 %v2586, %v2811
    %v2813 = vpop.f32.mrb[0].mxu0
    %2814 = vmatprep.mubr.f32.mxu0 0.0
    %v2815 = vand.u32 %v2480, 4294901760
    %2816 = vmatmul.mubr.f32.gmra.mrb[0].mxu0 %v2815
    %v2817 = vpop.f32.mrb[0].mxu0
    %v2818 = vadd.f32 %v2596, %v2817
    %v2819 = vpop.f32.mrb[0].mxu0
    %2820 = vmatprep.mubr.f32.mxu0 0.0
    %v2821 = vand.u32 %v2482, 4294901760
    %2822 = vmatmul.mubr.f32.gmra.mrb[0].mxu0 %v2821
    %v2823 = vpop.f32.mrb[0].mxu0
    %v2824 = vadd.f32 %v2606, %v2823
    %v2825 = vpop.f32.mrb[0].mxu0
    %2826 = vmatprep.mubr.f32.mxu0 0.0
    %v2827 = vand.u32 %v2484, 4294901760
    %2828 = vmatmul.mubr.f32.gmra.mrb[0].mxu0 %v2827
    %v2829 = vpop.f32.mrb[0].mxu0
    %v2830 = vadd.f32 %v2616, %v2829
    %v2831 = vpop.f32.mrb[0].mxu0
    %2832 = vmatprep.mubr.f32.mxu0 0.0
    %v2833 = vand.u32 %v2486, 4294901760
    %2834 = vmatmul.mubr.f32.gmra.mrb[0].mxu0 %v2833
    %v2835 = vpop.f32.mrb[0].mxu0
    %v2836 = vadd.f32 %v2626, %v2835
    %v2837 = vpop.f32.mrb[0].mxu0
    %2838 = vmatprep.mubr.f32.mxu0 0.0
    %v2839 = vand.u32 %v2488, 4294901760
    %2840 = vmatmul.mubr.f32.gmra.mrb[0].mxu0 %v2839
    %v2841 = vpop.f32.mrb[0].mxu0
    %v2842 = vadd.f32 %v2636, %v2841
    %v2843 = vpop.f32.mrb[0].mxu0
    %2844 = vmatprep.mubr.f32.mxu0 0.0
    %v2845 = vand.u32 %v2490, 4294901760
    %2846 = vmatmul.mubr.f32.gmra.mrb[0].mxu0 %v2845
    %v2847 = vpop.f32.mrb[0].mxu0
    %v2848 = vadd.f32 %v2646, %v2847
    %v2849 = vpop.f32.mrb[0].mxu0
    %2850 = vmatprep.mubr.f32.mxu0 0.0
    %v2851 = vand.u32 %v2492, 4294901760
    %2852 = vmatmul.mubr.f32.gmra.mrb[0].mxu0 %v2851
    %v2853 = vpop.f32.mrb[0].mxu0
    %v2854 = vadd.f32 %v2656, %v2853
    %v2855 = vpop.f32.mrb[0].mxu0
    %2856 = vmatprep.mubr.f32.mxu0 0.0
    %v2857 = vand.u32 %v2494, 4294901760
    %2858 = vmatmul.mubr.f32.gmra.mrb[0].mxu0 %v2857
    %v2859 = vpop.f32.mrb[0].mxu0
    %v2860 = vadd.f32 %v2666, %v2859
    %v2861 = vpop.f32.mrb[0].mxu0
    %2862 = vmatprep.mubr.f32.mxu0 0.0
    %v2863 = vand.u32 %v2496, 4294901760
    %2864 = vmatmul.mubr.f32.gmra.mrb[0].mxu0 %v2863
    %v2865 = vpop.f32.mrb[0].mxu0
    %v2866 = vadd.f32 %v2676, %v2865
    %v2867 = vpop.f32.mrb[0].mxu0
    %2868 = vmatprep.mubr.f32.mxu0 0.0
    %v2869 = vand.u32 %v2498, 4294901760
    %2870 = vmatmul.mubr.f32.gmra.mrb[0].mxu0 %v2869
    %v2871 = vpop.f32.mrb[0].mxu0
    %v2872 = vadd.f32 %v2686, %v2871
    %v2873 = vpop.f32.mrb[0].mxu0
    %2874 = vmatprep.mubr.f32.mxu0 0.0
    %v2875 = vand.u32 %v2500, 4294901760
    %2876 = vmatmul.mubr.f32.gmra.mrb[0].mxu0 %v2875
    %v2877 = vpop.f32.mrb[0].mxu0
    %v2878 = vadd.f32 %v2696, %v2877
    %v2879 = vpop.f32.mrb[0].mxu0
    %2880 = vmatprep.mubr.f32.mxu0 0.0
    %v2881 = vand.u32 %v2502, 4294901760
    %2882 = vmatmul.mubr.f32.gmra.mrb[0].mxu0 %v2881
    %v2883 = vpop.f32.mrb[0].mxu0
    %v2884 = vadd.f32 %v2706, %v2883
    %v2885 = vpop.f32.mrb[0].mxu0
    %2886 = vmatprep.mubr.f32.mxu0 0.0
    %v2887 = vand.u32 %v2504, 4294901760
    %2888 = vmatmul.mubr.f32.gmra.mrb[0].mxu0 %v2887
    %v2889 = vpop.f32.mrb[0].mxu0
    %v2890 = vadd.f32 %v2716, %v2889
    %v2891 = vpop.f32.mrb[0].mxu0
    %2892 = vmatprep.mubr.f32.mxu0 0.0
    %v2893 = vand.u32 %v2506, 4294901760
    %2894 = vmatmul.mubr.f32.gmra.mrb[0].mxu0 %v2893
    %v2895 = vpop.f32.mrb[0].mxu0
    %v2896 = vadd.f32 %v2726, %v2895
    %v2897 = vpop.f32.mrb[0].mxu0
    %2898 = vmatprep.mubr.f32.mxu0 0.0
    %v2899 = vand.u32 %v2508, 4294901760
    %2900 = vmatmul.mubr.f32.gmra.mrb[0].mxu0 %v2899
    %v2901 = vpop.f32.mrb[0].mxu0
    %v2902 = vadd.f32 %v2736, %v2901
    %v2903 = vpop.f32.mrb[0].mxu0
    %2904 = vdwg.mxu0
    %2905 = vmatprep.subr.mxu0 0.0
    %v2906 = vand.u32 %v2511, 4294901760
    %v2907 = vsub.f32 %v2511, %v2906
    %2908 = vmatpush1.msra.mxu0 %v2907
    %2909 = vmatprep.subr.mxu0 0.0
    %2910 = vmatpush1.msra.mxu0 0.0
    %2911 = vmatprep.subr.mxu0 0.0
    %2912 = vmatpush1.msra.mxu0 0.0
    %2913 = vmatprep.subr.mxu0 0.0
    %2914 = vmatpush1.msra.mxu0 0.0
    %2915 = vmatprep.subr.mxu0 0.0
    %2916 = vmatpush1.msra.mxu0 0.0
    %2917 = vmatprep.subr.mxu0 0.0
    %2918 = vmatpush1.msra.mxu0 0.0
    %2919 = vmatprep.subr.mxu0 0.0
    %2920 = vmatpush1.msra.mxu0 0.0
    %2921 = vmatprep.subr.mxu0 0.0
    %2922 = vmatpush1.msra.mxu0 0.0
    %2923 = vmatprep.subr.mxu0 0.0
    %2924 = vmatpush1.msra.mxu0 0.0
    %2925 = vmatprep.subr.mxu0 0.0
    %2926 = vmatpush1.msra.mxu0 0.0
    %2927 = vmatprep.subr.mxu0 0.0
    %2928 = vmatpush1.msra.mxu0 0.0
    %2929 = vmatprep.subr.mxu0 0.0
    %2930 = vmatpush1.msra.mxu0 0.0
    %2931 = vmatprep.subr.mxu0 0.0
    %2932 = vmatpush1.msra.mxu0 0.0
    %2933 = vmatprep.subr.mxu0 0.0
    %2934 = vmatpush1.msra.mxu0 0.0
    %2935 = vmatprep.subr.mxu0 0.0
    %2936 = vmatpush1.msra.mxu0 0.0
    %2937 = vmatprep.subr.mxu0 0.0
    %2938 = vmatpush1.msra.mxu0 0.0
    %2939 = vmatprep.subr.mxu0 0.0
    %2940 = vmatpush1.msra.mxu0 0.0
    %2941 = vmatprep.subr.mxu0 0.0
    %2942 = vmatpush1.msra.mxu0 0.0
    %2943 = vmatprep.subr.mxu0 0.0
    %2944 = vmatpush1.msra.mxu0 0.0
    %2945 = vmatprep.subr.mxu0 0.0
    %2946 = vmatpush1.msra.mxu0 0.0
    %2947 = vmatprep.subr.mxu0 0.0
    %2948 = vmatpush1.msra.mxu0 0.0
    %2949 = vmatprep.subr.mxu0 0.0
    %2950 = vmatpush1.msra.mxu0 0.0
    %2951 = vmatprep.subr.mxu0 0.0
    %2952 = vmatpush1.msra.mxu0 0.0
    %2953 = vmatprep.subr.mxu0 0.0
    %2954 = vmatpush1.msra.mxu0 0.0
    %2955 = vmatprep.subr.mxu0 0.0
    %2956 = vmatpush1.msra.mxu0 0.0
    %2957 = vmatprep.subr.mxu0 0.0
    %2958 = vmatpush1.msra.mxu0 0.0
    %2959 = vmatprep.subr.mxu0 0.0
    %2960 = vmatpush1.msra.mxu0 0.0
    %2961 = vmatprep.subr.mxu0 0.0
    %2962 = vmatpush1.msra.mxu0 0.0
    %2963 = vmatprep.subr.mxu0 0.0
    %2964 = vmatpush1.msra.mxu0 0.0
    %2965 = vmatprep.subr.mxu0 0.0
    %2966 = vmatpush1.msra.mxu0 0.0
    %2967 = vmatprep.subr.mxu0 0.0
    %2968 = vmatpush1.msra.mxu0 0.0
    %2969 = vmatprep.subr.mxu0 0.0
    %2970 = vmatpush1.msra.mxu0 0.0
    %2971 = vmatprep.mubr.f32.mxu0 0.0
    %v2972 = vand.u32 %v2478, 4294901760
    %v2973 = vsub.f32 %v2478, %v2972
    %2974 = vmatmul.mubr.f32.gmra.mrb[0].mxu0 %v2973
    %v2975 = vpop.f32.mrb[0].mxu0
    %v2976 = vadd.f32 %v2812, %v2975
    %v2977 = vpop.f32.mrb[0].mxu0
    %2978 = vmatprep.mubr.f32.mxu0 0.0
    %v2979 = vand.u32 %v2480, 4294901760
    %v2980 = vsub.f32 %v2480, %v2979
    %2981 = vmatmul.mubr.f32.gmra.mrb[0].mxu0 %v2980
    %v2982 = vpop.f32.mrb[0].mxu0
    %v2983 = vadd.f32 %v2818, %v2982
    %v2984 = vpop.f32.mrb[0].mxu0
    %2985 = vmatprep.mubr.f32.mxu0 0.0
    %v2986 = vand.u32 %v2482, 4294901760
    %v2987 = vsub.f32 %v2482, %v2986
    %2988 = vmatmul.mubr.f32.gmra.mrb[0].mxu0 %v2987
    %v2989 = vpop.f32.mrb[0].mxu0
    %v2990 = vadd.f32 %v2824, %v2989
    %v2991 = vpop.f32.mrb[0].mxu0
    %2992 = vmatprep.mubr.f32.mxu0 0.0
    %v2993 = vand.u32 %v2484, 4294901760
    %v2994 = vsub.f32 %v2484, %v2993
    %2995 = vmatmul.mubr.f32.gmra.mrb[0].mxu0 %v2994
    %v2996 = vpop.f32.mrb[0].mxu0
    %v2997 = vadd.f32 %v2830, %v2996
    %v2998 = vpop.f32.mrb[0].mxu0
    %2999 = vmatprep.mubr.f32.mxu0 0.0
    %v3000 = vand.u32 %v2486, 4294901760
    %v3001 = vsub.f32 %v2486, %v3000
    %3002 = vmatmul.mubr.f32.gmra.mrb[0].mxu0 %v3001
    %v3003 = vpop.f32.mrb[0].mxu0
    %v3004 = vadd.f32 %v2836, %v3003
    %v3005 = vpop.f32.mrb[0].mxu0
    %3006 = vmatprep.mubr.f32.mxu0 0.0
    %v3007 = vand.u32 %v2488, 4294901760
    %v3008 = vsub.f32 %v2488, %v3007
    %3009 = vmatmul.mubr.f32.gmra.mrb[0].mxu0 %v3008
    %v3010 = vpop.f32.mrb[0].mxu0
    %v3011 = vadd.f32 %v2842, %v3010
    %v3012 = vpop.f32.mrb[0].mxu0
    %3013 = vmatprep.mubr.f32.mxu0 0.0
    %v3014 = vand.u32 %v2490, 4294901760
    %v3015 = vsub.f32 %v2490, %v3014
    %3016 = vmatmul.mubr.f32.gmra.mrb[0].mxu0 %v3015
    %v3017 = vpop.f32.mrb[0].mxu0
    %v3018 = vadd.f32 %v2848, %v3017
    %v3019 = vpop.f32.mrb[0].mxu0
    %3020 = vmatprep.mubr.f32.mxu0 0.0
    %v3021 = vand.u32 %v2492, 4294901760
    %v3022 = vsub.f32 %v2492, %v3021
    %3023 = vmatmul.mubr.f32.gmra.mrb[0].mxu0 %v3022
    %v3024 = vpop.f32.mrb[0].mxu0
    %v3025 = vadd.f32 %v2854, %v3024
    %v3026 = vpop.f32.mrb[0].mxu0
    %3027 = vmatprep.mubr.f32.mxu0 0.0
    %v3028 = vand.u32 %v2494, 4294901760
    %v3029 = vsub.f32 %v2494, %v3028
    %3030 = vmatmul.mubr.f32.gmra.mrb[0].mxu0 %v3029
    %v3031 = vpop.f32.mrb[0].mxu0
    %v3032 = vadd.f32 %v2860, %v3031
    %v3033 = vpop.f32.mrb[0].mxu0
    %3034 = vmatprep.mubr.f32.mxu0 0.0
    %v3035 = vand.u32 %v2496, 4294901760
    %v3036 = vsub.f32 %v2496, %v3035
    %3037 = vmatmul.mubr.f32.gmra.mrb[0].mxu0 %v3036
    %v3038 = vpop.f32.mrb[0].mxu0
    %v3039 = vadd.f32 %v2866, %v3038
    %v3040 = vpop.f32.mrb[0].mxu0
    %3041 = vmatprep.mubr.f32.mxu0 0.0
    %v3042 = vand.u32 %v2498, 4294901760
    %v3043 = vsub.f32 %v2498, %v3042
    %3044 = vmatmul.mubr.f32.gmra.mrb[0].mxu0 %v3043
    %v3045 = vpop.f32.mrb[0].mxu0
    %v3046 = vadd.f32 %v2872, %v3045
    %v3047 = vpop.f32.mrb[0].mxu0
    %3048 = vmatprep.mubr.f32.mxu0 0.0
    %v3049 = vand.u32 %v2500, 4294901760
    %v3050 = vsub.f32 %v2500, %v3049
    %3051 = vmatmul.mubr.f32.gmra.mrb[0].mxu0 %v3050
    %v3052 = vpop.f32.mrb[0].mxu0
    %v3053 = vadd.f32 %v2878, %v3052
    %v3054 = vpop.f32.mrb[0].mxu0
    %3055 = vmatprep.mubr.f32.mxu0 0.0
    %v3056 = vand.u32 %v2502, 4294901760
    %v3057 = vsub.f32 %v2502, %v3056
    %3058 = vmatmul.mubr.f32.gmra.mrb[0].mxu0 %v3057
    %v3059 = vpop.f32.mrb[0].mxu0
    %v3060 = vadd.f32 %v2884, %v3059
    %v3061 = vpop.f32.mrb[0].mxu0
    %3062 = vmatprep.mubr.f32.mxu0 0.0
    %v3063 = vand.u32 %v2504, 4294901760
    %v3064 = vsub.f32 %v2504, %v3063
    %3065 = vmatmul.mubr.f32.gmra.mrb[0].mxu0 %v3064
    %v3066 = vpop.f32.mrb[0].mxu0
    %v3067 = vadd.f32 %v2890, %v3066
    %v3068 = vpop.f32.mrb[0].mxu0
    %3069 = vmatprep.mubr.f32.mxu0 0.0
    %v3070 = vand.u32 %v2506, 4294901760
    %v3071 = vsub.f32 %v2506, %v3070
    %3072 = vmatmul.mubr.f32.gmra.mrb[0].mxu0 %v3071
    %v3073 = vpop.f32.mrb[0].mxu0
    %v3074 = vadd.f32 %v2896, %v3073
    %v3075 = vpop.f32.mrb[0].mxu0
    %3076 = vmatprep.mubr.f32.mxu0 0.0
    %v3077 = vand.u32 %v2508, 4294901760
    %v3078 = vsub.f32 %v2508, %v3077
    %3079 = vmatmul.mubr.f32.gmra.mrb[0].mxu0 %v3078
    %v3080 = vpop.f32.mrb[0].mxu0
    %v3081 = vadd.f32 %v2902, %v3080
    %v3082 = vpop.f32.mrb[0].mxu0
    %3083 = vdwg.mxu0
    %3084 = vmatprep.subr.mxu0 0.0
    %v3085 = vand.u32 %v2511, 4294901760
    %3086 = vmatpush1.msra.mxu0 %v3085
    %3087 = vmatprep.subr.mxu0 0.0
    %3088 = vmatpush1.msra.mxu0 0.0
    %3089 = vmatprep.subr.mxu0 0.0
    %3090 = vmatpush1.msra.mxu0 0.0
    %3091 = vmatprep.subr.mxu0 0.0
    %3092 = vmatpush1.msra.mxu0 0.0
    %3093 = vmatprep.subr.mxu0 0.0
    %3094 = vmatpush1.msra.mxu0 0.0
    %3095 = vmatprep.subr.mxu0 0.0
    %3096 = vmatpush1.msra.mxu0 0.0
    %3097 = vmatprep.subr.mxu0 0.0
    %3098 = vmatpush1.msra.mxu0 0.0
    %3099 = vmatprep.subr.mxu0 0.0
    %3100 = vmatpush1.msra.mxu0 0.0
    %3101 = vmatprep.subr.mxu0 0.0
    %3102 = vmatpush1.msra.mxu0 0.0
    %3103 = vmatprep.subr.mxu0 0.0
    %3104 = vmatpush1.msra.mxu0 0.0
    %3105 = vmatprep.subr.mxu0 0.0
    %3106 = vmatpush1.msra.mxu0 0.0
    %3107 = vmatprep.subr.mxu0 0.0
    %3108 = vmatpush1.msra.mxu0 0.0
    %3109 = vmatprep.subr.mxu0 0.0
    %3110 = vmatpush1.msra.mxu0 0.0
    %3111 = vmatprep.subr.mxu0 0.0
    %3112 = vmatpush1.msra.mxu0 0.0
    %3113 = vmatprep.subr.mxu0 0.0
    %3114 = vmatpush1.msra.mxu0 0.0
    %3115 = vmatprep.subr.mxu0 0.0
    %3116 = vmatpush1.msra.mxu0 0.0
    %3117 = vmatprep.subr.mxu0 0.0
    %3118 = vmatpush1.msra.mxu0 0.0
    %3119 = vmatprep.subr.mxu0 0.0
    %3120 = vmatpush1.msra.mxu0 0.0
    %3121 = vmatprep.subr.mxu0 0.0
    %3122 = vmatpush1.msra.mxu0 0.0
    %3123 = vmatprep.subr.mxu0 0.0
    %3124 = vmatpush1.msra.mxu0 0.0
    %3125 = vmatprep.subr.mxu0 0.0
    %3126 = vmatpush1.msra.mxu0 0.0
    %3127 = vmatprep.subr.mxu0 0.0
    %3128 = vmatpush1.msra.mxu0 0.0
    %3129 = vmatprep.subr.mxu0 0.0
    %3130 = vmatpush1.msra.mxu0 0.0
    %3131 = vmatprep.subr.mxu0 0.0
    %3132 = vmatpush1.msra.mxu0 0.0
    %3133 = vmatprep.subr.mxu0 0.0
    %3134 = vmatpush1.msra.mxu0 0.0
    %3135 = vmatprep.subr.mxu0 0.0
    %3136 = vmatpush1.msra.mxu0 0.0
    %3137 = vmatprep.subr.mxu0 0.0
    %3138 = vmatpush1.msra.mxu0 0.0
    %3139 = vmatprep.subr.mxu0 0.0
    %3140 = vmatpush1.msra.mxu0 0.0
    %3141 = vmatprep.subr.mxu0 0.0
    %3142 = vmatpush1.msra.mxu0 0.0
    %3143 = vmatprep.subr.mxu0 0.0
    %3144 = vmatpush1.msra.mxu0 0.0
    %3145 = vmatprep.subr.mxu0 0.0
    %3146 = vmatpush1.msra.mxu0 0.0
    %3147 = vmatprep.subr.mxu0 0.0
    %3148 = vmatpush1.msra.mxu0 0.0
    %3149 = vmatprep.mubr.f32.mxu0 0.0
    %v3150 = vand.u32 %v2478, 4294901760
    %v3151 = vsub.f32 %v2478, %v3150
    %v3152 = vand.u32 %v3151, 4294901760
    %3153 = vmatmul.mubr.f32.gmra.mrb[0].mxu0 %v3152
    %v3154 = vpop.f32.mrb[0].mxu0
    %v3155 = vadd.f32 %v2976, %v3154
    %v3156 = vpop.f32.mrb[0].mxu0
    %3157 = vmatprep.mubr.f32.mxu0 0.0
    %v3158 = vand.u32 %v2480, 4294901760
    %v3159 = vsub.f32 %v2480, %v3158
    %v3160 = vand.u32 %v3159, 4294901760
    %3161 = vmatmul.mubr.f32.gmra.mrb[0].mxu0 %v3160
    %v3162 = vpop.f32.mrb[0].mxu0
    %v3163 = vadd.f32 %v2983, %v3162
    %v3164 = vpop.f32.mrb[0].mxu0
    %3165 = vmatprep.mubr.f32.mxu0 0.0
    %v3166 = vand.u32 %v2482, 4294901760
    %v3167 = vsub.f32 %v2482, %v3166
    %v3168 = vand.u32 %v3167, 4294901760
    %3169 = vmatmul.mubr.f32.gmra.mrb[0].mxu0 %v3168
    %v3170 = vpop.f32.mrb[0].mxu0
    %v3171 = vadd.f32 %v2990, %v3170
    %v3172 = vpop.f32.mrb[0].mxu0
    %3173 = vmatprep.mubr.f32.mxu0 0.0
    %v3174 = vand.u32 %v2484, 4294901760
    %v3175 = vsub.f32 %v2484, %v3174
    %v3176 = vand.u32 %v3175, 4294901760
    %3177 = vmatmul.mubr.f32.gmra.mrb[0].mxu0 %v3176
    %v3178 = vpop.f32.mrb[0].mxu0
    %v3179 = vadd.f32 %v2997, %v3178
    %v3180 = vpop.f32.mrb[0].mxu0
    %3181 = vmatprep.mubr.f32.mxu0 0.0
    %v3182 = vand.u32 %v2486, 4294901760
    %v3183 = vsub.f32 %v2486, %v3182
    %v3184 = vand.u32 %v3183, 4294901760
    %3185 = vmatmul.mubr.f32.gmra.mrb[0].mxu0 %v3184
    %v3186 = vpop.f32.mrb[0].mxu0
    %v3187 = vadd.f32 %v3004, %v3186
    %v3188 = vpop.f32.mrb[0].mxu0
    %3189 = vmatprep.mubr.f32.mxu0 0.0
    %v3190 = vand.u32 %v2488, 4294901760
    %v3191 = vsub.f32 %v2488, %v3190
    %v3192 = vand.u32 %v3191, 4294901760
    %3193 = vmatmul.mubr.f32.gmra.mrb[0].mxu0 %v3192
    %v3194 = vpop.f32.mrb[0].mxu0
    %v3195 = vadd.f32 %v3011, %v3194
    %v3196 = vpop.f32.mrb[0].mxu0
    %3197 = vmatprep.mubr.f32.mxu0 0.0
    %v3198 = vand.u32 %v2490, 4294901760
    %v3199 = vsub.f32 %v2490, %v3198
    %v3200 = vand.u32 %v3199, 4294901760
    %3201 = vmatmul.mubr.f32.gmra.mrb[0].mxu0 %v3200
    %v3202 = vpop.f32.mrb[0].mxu0
    %v3203 = vadd.f32 %v3018, %v3202
    %v3204 = vpop.f32.mrb[0].mxu0
    %3205 = vmatprep.mubr.f32.mxu0 0.0
    %v3206 = vand.u32 %v2492, 4294901760
    %v3207 = vsub.f32 %v2492, %v3206
    %v3208 = vand.u32 %v3207, 4294901760
    %3209 = vmatmul.mubr.f32.gmra.mrb[0].mxu0 %v3208
    %v3210 = vpop.f32.mrb[0].mxu0
    %v3211 = vadd.f32 %v3025, %v3210
    %v3212 = vpop.f32.mrb[0].mxu0
    %3213 = vmatprep.mubr.f32.mxu0 0.0
    %v3214 = vand.u32 %v2494, 4294901760
    %v3215 = vsub.f32 %v2494, %v3214
    %v3216 = vand.u32 %v3215, 4294901760
    %3217 = vmatmul.mubr.f32.gmra.mrb[0].mxu0 %v3216
    %v3218 = vpop.f32.mrb[0].mxu0
    %v3219 = vadd.f32 %v3032, %v3218
    %v3220 = vpop.f32.mrb[0].mxu0
    %3221 = vmatprep.mubr.f32.mxu0 0.0
    %v3222 = vand.u32 %v2496, 4294901760
    %v3223 = vsub.f32 %v2496, %v3222
    %v3224 = vand.u32 %v3223, 4294901760
    %3225 = vmatmul.mubr.f32.gmra.mrb[0].mxu0 %v3224
    %v3226 = vpop.f32.mrb[0].mxu0
    %v3227 = vadd.f32 %v3039, %v3226
    %v3228 = vpop.f32.mrb[0].mxu0
    %3229 = vmatprep.mubr.f32.mxu0 0.0
    %v3230 = vand.u32 %v2498, 4294901760
    %v3231 = vsub.f32 %v2498, %v3230
    %v3232 = vand.u32 %v3231, 4294901760
    %3233 = vmatmul.mubr.f32.gmra.mrb[0].mxu0 %v3232
    %v3234 = vpop.f32.mrb[0].mxu0
    %v3235 = vadd.f32 %v3046, %v3234
    %v3236 = vpop.f32.mrb[0].mxu0
    %3237 = vmatprep.mubr.f32.mxu0 0.0
    %v3238 = vand.u32 %v2500, 4294901760
    %v3239 = vsub.f32 %v2500, %v3238
    %v3240 = vand.u32 %v3239, 4294901760
    %3241 = vmatmul.mubr.f32.gmra.mrb[0].mxu0 %v3240
    %v3242 = vpop.f32.mrb[0].mxu0
    %v3243 = vadd.f32 %v3053, %v3242
    %v3244 = vpop.f32.mrb[0].mxu0
    %3245 = vmatprep.mubr.f32.mxu0 0.0
    %v3246 = vand.u32 %v2502, 4294901760
    %v3247 = vsub.f32 %v2502, %v3246
    %v3248 = vand.u32 %v3247, 4294901760
    %3249 = vmatmul.mubr.f32.gmra.mrb[0].mxu0 %v3248
    %v3250 = vpop.f32.mrb[0].mxu0
    %v3251 = vadd.f32 %v3060, %v3250
    %v3252 = vpop.f32.mrb[0].mxu0
    %3253 = vmatprep.mubr.f32.mxu0 0.0
    %v3254 = vand.u32 %v2504, 4294901760
    %v3255 = vsub.f32 %v2504, %v3254
    %v3256 = vand.u32 %v3255, 4294901760
    %3257 = vmatmul.mubr.f32.gmra.mrb[0].mxu0 %v3256
    %v3258 = vpop.f32.mrb[0].mxu0
    %v3259 = vadd.f32 %v3067, %v3258
    %v3260 = vpop.f32.mrb[0].mxu0
    %3261 = vmatprep.mubr.f32.mxu0 0.0
    %v3262 = vand.u32 %v2506, 4294901760
    %v3263 = vsub.f32 %v2506, %v3262
    %v3264 = vand.u32 %v3263, 4294901760
    %3265 = vmatmul.mubr.f32.gmra.mrb[0].mxu0 %v3264
    %v3266 = vpop.f32.mrb[0].mxu0
    %v3267 = vadd.f32 %v3074, %v3266
    %v3268 = vpop.f32.mrb[0].mxu0
    %3269 = vmatprep.mubr.f32.mxu0 0.0
    %v3270 = vand.u32 %v2508, 4294901760
    %v3271 = vsub.f32 %v2508, %v3270
    %v3272 = vand.u32 %v3271, 4294901760
    %3273 = vmatmul.mubr.f32.gmra.mrb[0].mxu0 %v3272
    %v3274 = vpop.f32.mrb[0].mxu0
    %v3275 = vadd.f32 %v3081, %v3274
    %v3276 = vpop.f32.mrb[0].mxu0
    %3277 = vdwg.mxu0
    %3278 = vmatprep.subr.mxu0 0.0
    %v3279 = vand.u32 %v2511, 4294901760
    %v3280 = vsub.f32 %v2511, %v3279
    %v3281 = vand.u32 %v3280, 4294901760
    %3282 = vmatpush1.msra.mxu0 %v3281
    %3283 = vmatprep.subr.mxu0 0.0
    %3284 = vmatpush1.msra.mxu0 0.0
    %3285 = vmatprep.subr.mxu0 0.0
    %3286 = vmatpush1.msra.mxu0 0.0
    %3287 = vmatprep.subr.mxu0 0.0
    %3288 = vmatpush1.msra.mxu0 0.0
    %3289 = vmatprep.subr.mxu0 0.0
    %3290 = vmatpush1.msra.mxu0 0.0
    %3291 = vmatprep.subr.mxu0 0.0
    %3292 = vmatpush1.msra.mxu0 0.0
    %3293 = vmatprep.subr.mxu0 0.0
    %3294 = vmatpush1.msra.mxu0 0.0
    %3295 = vmatprep.subr.mxu0 0.0
    %3296 = vmatpush1.msra.mxu0 0.0
    %3297 = vmatprep.subr.mxu0 0.0
    %3298 = vmatpush1.msra.mxu0 0.0
    %3299 = vmatprep.subr.mxu0 0.0
    %3300 = vmatpush1.msra.mxu0 0.0
    %3301 = vmatprep.subr.mxu0 0.0
    %3302 = vmatpush1.msra.mxu0 0.0
    %3303 = vmatprep.subr.mxu0 0.0
    %3304 = vmatpush1.msra.mxu0 0.0
    %3305 = vmatprep.subr.mxu0 0.0
    %3306 = vmatpush1.msra.mxu0 0.0
    %3307 = vmatprep.subr.mxu0 0.0
    %3308 = vmatpush1.msra.mxu0 0.0
    %3309 = vmatprep.subr.mxu0 0.0
    %3310 = vmatpush1.msra.mxu0 0.0
    %3311 = vmatprep.subr.mxu0 0.0
    %3312 = vmatpush1.msra.mxu0 0.0
    %3313 = vmatprep.subr.mxu0 0.0
    %3314 = vmatpush1.msra.mxu0 0.0
    %3315 = vmatprep.subr.mxu0 0.0
    %3316 = vmatpush1.msra.mxu0 0.0
    %3317 = vmatprep.subr.mxu0 0.0
    %3318 = vmatpush1.msra.mxu0 0.0
    %3319 = vmatprep.subr.mxu0 0.0
    %3320 = vmatpush1.msra.mxu0 0.0
    %3321 = vmatprep.subr.mxu0 0.0
    %3322 = vmatpush1.msra.mxu0 0.0
    %3323 = vmatprep.subr.mxu0 0.0
    %3324 = vmatpush1.msra.mxu0 0.0
    %3325 = vmatprep.subr.mxu0 0.0
    %3326 = vmatpush1.msra.mxu0 0.0
    %3327 = vmatprep.subr.mxu0 0.0
    %3328 = vmatpush1.msra.mxu0 0.0
    %3329 = vmatprep.subr.mxu0 0.0
    %3330 = vmatpush1.msra.mxu0 0.0
    %3331 = vmatprep.subr.mxu0 0.0
    %3332 = vmatpush1.msra.mxu0 0.0
    %3333 = vmatprep.subr.mxu0 0.0
    %3334 = vmatpush1.msra.mxu0 0.0
    %3335 = vmatprep.subr.mxu0 0.0
    %3336 = vmatpush1.msra.mxu0 0.0
    %3337 = vmatprep.subr.mxu0 0.0
    %3338 = vmatpush1.msra.mxu0 0.0
    %3339 = vmatprep.subr.mxu0 0.0
    %3340 = vmatpush1.msra.mxu0 0.0
    %3341 = vmatprep.subr.mxu0 0.0
    %3342 = vmatpush1.msra.mxu0 0.0
    %3343 = vmatprep.subr.mxu0 0.0
    %3344 = vmatpush1.msra.mxu0 0.0
    %3345 = vmatprep.mubr.f32.mxu0 0.0
    %v3346 = vand.u32 %v2478, 4294901760
    %3347 = vmatmul.mubr.f32.gmra.mrb[0].mxu0 %v3346
    %v3348 = vpop.f32.mrb[0].mxu0
    %v3349 = vadd.f32 %v3155, %v3348
    %v3350 = vpop.f32.mrb[0].mxu0
    %3351 = vmatprep.mubr.f32.mxu0 0.0
    %v3352 = vand.u32 %v2480, 4294901760
    %3353 = vmatmul.mubr.f32.gmra.mrb[0].mxu0 %v3352
    %v3354 = vpop.f32.mrb[0].mxu0
    %v3355 = vadd.f32 %v3163, %v3354
    %v3356 = vpop.f32.mrb[0].mxu0
    %3357 = vmatprep.mubr.f32.mxu0 0.0
    %v3358 = vand.u32 %v2482, 4294901760
    %3359 = vmatmul.mubr.f32.gmra.mrb[0].mxu0 %v3358
    %v3360 = vpop.f32.mrb[0].mxu0
    %v3361 = vadd.f32 %v3171, %v3360
    %v3362 = vpop.f32.mrb[0].mxu0
    %3363 = vmatprep.mubr.f32.mxu0 0.0
    %v3364 = vand.u32 %v2484, 4294901760
    %3365 = vmatmul.mubr.f32.gmra.mrb[0].mxu0 %v3364
    %v3366 = vpop.f32.mrb[0].mxu0
    %v3367 = vadd.f32 %v3179, %v3366
    %v3368 = vpop.f32.mrb[0].mxu0
    %3369 = vmatprep.mubr.f32.mxu0 0.0
    %v3370 = vand.u32 %v2486, 4294901760
    %3371 = vmatmul.mubr.f32.gmra.mrb[0].mxu0 %v3370
    %v3372 = vpop.f32.mrb[0].mxu0
    %v3373 = vadd.f32 %v3187, %v3372
    %v3374 = vpop.f32.mrb[0].mxu0
    %3375 = vmatprep.mubr.f32.mxu0 0.0
    %v3376 = vand.u32 %v2488, 4294901760
    %3377 = vmatmul.mubr.f32.gmra.mrb[0].mxu0 %v3376
    %v3378 = vpop.f32.mrb[0].mxu0
    %v3379 = vadd.f32 %v3195, %v3378
    %v3380 = vpop.f32.mrb[0].mxu0
    %3381 = vmatprep.mubr.f32.mxu0 0.0
    %v3382 = vand.u32 %v2490, 4294901760
    %3383 = vmatmul.mubr.f32.gmra.mrb[0].mxu0 %v3382
    %v3384 = vpop.f32.mrb[0].mxu0
    %v3385 = vadd.f32 %v3203, %v3384
    %v3386 = vpop.f32.mrb[0].mxu0
    %3387 = vmatprep.mubr.f32.mxu0 0.0
    %v3388 = vand.u32 %v2492, 4294901760
    %3389 = vmatmul.mubr.f32.gmra.mrb[0].mxu0 %v3388
    %v3390 = vpop.f32.mrb[0].mxu0
    %v3391 = vadd.f32 %v3211, %v3390
    %v3392 = vpop.f32.mrb[0].mxu0
    %3393 = vmatprep.mubr.f32.mxu0 0.0
    %v3394 = vand.u32 %v2494, 4294901760
    %3395 = vmatmul.mubr.f32.gmra.mrb[0].mxu0 %v3394
    %v3396 = vpop.f32.mrb[0].mxu0
    %v3397 = vadd.f32 %v3219, %v3396
    %v3398 = vpop.f32.mrb[0].mxu0
    %3399 = vmatprep.mubr.f32.mxu0 0.0
    %v3400 = vand.u32 %v2496, 4294901760
    %3401 = vmatmul.mubr.f32.gmra.mrb[0].mxu0 %v3400
    %v3402 = vpop.f32.mrb[0].mxu0
    %v3403 = vadd.f32 %v3227, %v3402
    %v3404 = vpop.f32.mrb[0].mxu0
    %3405 = vmatprep.mubr.f32.mxu0 0.0
    %v3406 = vand.u32 %v2498, 4294901760
    %3407 = vmatmul.mubr.f32.gmra.mrb[0].mxu0 %v3406
    %v3408 = vpop.f32.mrb[0].mxu0
    %v3409 = vadd.f32 %v3235, %v3408
    %v3410 = vpop.f32.mrb[0].mxu0
    %3411 = vmatprep.mubr.f32.mxu0 0.0
    %v3412 = vand.u32 %v2500, 4294901760
    %3413 = vmatmul.mubr.f32.gmra.mrb[0].mxu0 %v3412
    %v3414 = vpop.f32.mrb[0].mxu0
    %v3415 = vadd.f32 %v3243, %v3414
    %v3416 = vpop.f32.mrb[0].mxu0
    %3417 = vmatprep.mubr.f32.mxu0 0.0
    %v3418 = vand.u32 %v2502, 4294901760
    %3419 = vmatmul.mubr.f32.gmra.mrb[0].mxu0 %v3418
    %v3420 = vpop.f32.mrb[0].mxu0
    %v3421 = vadd.f32 %v3251, %v3420
    %v3422 = vpop.f32.mrb[0].mxu0
    %3423 = vmatprep.mubr.f32.mxu0 0.0
    %v3424 = vand.u32 %v2504, 4294901760
    %3425 = vmatmul.mubr.f32.gmra.mrb[0].mxu0 %v3424
    %v3426 = vpop.f32.mrb[0].mxu0
    %v3427 = vadd.f32 %v3259, %v3426
    %v3428 = vpop.f32.mrb[0].mxu0
    %3429 = vmatprep.mubr.f32.mxu0 0.0
    %v3430 = vand.u32 %v2506, 4294901760
    %3431 = vmatmul.mubr.f32.gmra.mrb[0].mxu0 %v3430
    %v3432 = vpop.f32.mrb[0].mxu0
    %v3433 = vadd.f32 %v3267, %v3432
    %v3434 = vpop.f32.mrb[0].mxu0
    %3435 = vmatprep.mubr.f32.mxu0 0.0
    %v3436 = vand.u32 %v2508, 4294901760
    %3437 = vmatmul.mubr.f32.gmra.mrb[0].mxu0 %v3436
    %v3438 = vpop.f32.mrb[0].mxu0
    %v3439 = vadd.f32 %v3275, %v3438
    %v3440 = vpop.f32.mrb[0].mxu0
    %3441 = vdwg.mxu0
    %3442 = vmatprep.subr.mxu0 0.0
    %v3443 = vand.u32 %v2511, 4294901760
    %3444 = vmatpush1.msra.mxu0 %v3443
    %3445 = vmatprep.subr.mxu0 0.0
    %3446 = vmatpush1.msra.mxu0 0.0
    %3447 = vmatprep.subr.mxu0 0.0
    %3448 = vmatpush1.msra.mxu0 0.0
    %3449 = vmatprep.subr.mxu0 0.0
    %3450 = vmatpush1.msra.mxu0 0.0
    %3451 = vmatprep.subr.mxu0 0.0
    %3452 = vmatpush1.msra.mxu0 0.0
    %3453 = vmatprep.subr.mxu0 0.0
    %3454 = vmatpush1.msra.mxu0 0.0
    %3455 = vmatprep.subr.mxu0 0.0
    %3456 = vmatpush1.msra.mxu0 0.0
    %3457 = vmatprep.subr.mxu0 0.0
    %3458 = vmatpush1.msra.mxu0 0.0
    %3459 = vmatprep.subr.mxu0 0.0
    %3460 = vmatpush1.msra.mxu0 0.0
    %3461 = vmatprep.subr.mxu0 0.0
    %3462 = vmatpush1.msra.mxu0 0.0
    %3463 = vmatprep.subr.mxu0 0.0
    %3464 = vmatpush1.msra.mxu0 0.0
    %3465 = vmatprep.subr.mxu0 0.0
    %3466 = vmatpush1.msra.mxu0 0.0
    %3467 = vmatprep.subr.mxu0 0.0
    %3468 = vmatpush1.msra.mxu0 0.0
    %3469 = vmatprep.subr.mxu0 0.0
    %3470 = vmatpush1.msra.mxu0 0.0
    %3471 = vmatprep.subr.mxu0 0.0
    %3472 = vmatpush1.msra.mxu0 0.0
    %3473 = vmatprep.subr.mxu0 0.0
    %3474 = vmatpush1.msra.mxu0 0.0
    %3475 = vmatprep.subr.mxu0 0.0
    %3476 = vmatpush1.msra.mxu0 0.0
    %3477 = vmatprep.subr.mxu0 0.0
    %3478 = vmatpush1.msra.mxu0 0.0
    %3479 = vmatprep.subr.mxu0 0.0
    %3480 = vmatpush1.msra.mxu0 0.0
    %3481 = vmatprep.subr.mxu0 0.0
    %3482 = vmatpush1.msra.mxu0 0.0
    %3483 = vmatprep.subr.mxu0 0.0
    %3484 = vmatpush1.msra.mxu0 0.0
    %3485 = vmatprep.subr.mxu0 0.0
    %3486 = vmatpush1.msra.mxu0 0.0
    %3487 = vmatprep.subr.mxu0 0.0
    %3488 = vmatpush1.msra.mxu0 0.0
    %3489 = vmatprep.subr.mxu0 0.0
    %3490 = vmatpush1.msra.mxu0 0.0
    %3491 = vmatprep.subr.mxu0 0.0
    %3492 = vmatpush1.msra.mxu0 0.0
    %3493 = vmatprep.subr.mxu0 0.0
    %3494 = vmatpush1.msra.mxu0 0.0
    %3495 = vmatprep.subr.mxu0 0.0
    %3496 = vmatpush1.msra.mxu0 0.0
    %3497 = vmatprep.subr.mxu0 0.0
    %3498 = vmatpush1.msra.mxu0 0.0
    %3499 = vmatprep.subr.mxu0 0.0
    %3500 = vmatpush1.msra.mxu0 0.0
    %3501 = vmatprep.subr.mxu0 0.0
    %3502 = vmatpush1.msra.mxu0 0.0
    %3503 = vmatprep.subr.mxu0 0.0
    %3504 = vmatpush1.msra.mxu0 0.0
    %3505 = vmatprep.subr.mxu0 0.0
    %3506 = vmatpush1.msra.mxu0 0.0
    %3507 = vmatprep.mubr.f32.mxu0 0.0
    %v3508 = vand.u32 %v2478, 4294901760
    %3509 = vmatmul.mubr.f32.gmra.mrb[0].mxu0 %v3508
    %v3510 = vpop.f32.mrb[0].mxu0
    %v3511 = vadd.f32 %v3349, %v3510
    %v3512 = vpop.f32.mrb[0].mxu0
    %3513 = vmatprep.mubr.f32.mxu0 0.0
    %v3514 = vand.u32 %v2480, 4294901760
    %3515 = vmatmul.mubr.f32.gmra.mrb[0].mxu0 %v3514
    %v3516 = vpop.f32.mrb[0].mxu0
    %v3517 = vadd.f32 %v3355, %v3516
    %v3518 = vpop.f32.mrb[0].mxu0
    %3519 = vmatprep.mubr.f32.mxu0 0.0
    %v3520 = vand.u32 %v2482, 4294901760
    %3521 = vmatmul.mubr.f32.gmra.mrb[0].mxu0 %v3520
    %v3522 = vpop.f32.mrb[0].mxu0
    %v3523 = vadd.f32 %v3361, %v3522
    %v3524 = vpop.f32.mrb[0].mxu0
    %3525 = vmatprep.mubr.f32.mxu0 0.0
    %v3526 = vand.u32 %v2484, 4294901760
    %3527 = vmatmul.mubr.f32.gmra.mrb[0].mxu0 %v3526
    %v3528 = vpop.f32.mrb[0].mxu0
    %v3529 = vadd.f32 %v3367, %v3528
    %v3530 = vpop.f32.mrb[0].mxu0
    %3531 = vmatprep.mubr.f32.mxu0 0.0
    %v3532 = vand.u32 %v2486, 4294901760
    %3533 = vmatmul.mubr.f32.gmra.mrb[0].mxu0 %v3532
    %v3534 = vpop.f32.mrb[0].mxu0
    %v3535 = vadd.f32 %v3373, %v3534
    %v3536 = vpop.f32.mrb[0].mxu0
    %3537 = vmatprep.mubr.f32.mxu0 0.0
    %v3538 = vand.u32 %v2488, 4294901760
    %3539 = vmatmul.mubr.f32.gmra.mrb[0].mxu0 %v3538
    %v3540 = vpop.f32.mrb[0].mxu0
    %v3541 = vadd.f32 %v3379, %v3540
    %v3542 = vpop.f32.mrb[0].mxu0
    %3543 = vmatprep.mubr.f32.mxu0 0.0
    %v3544 = vand.u32 %v2490, 4294901760
    %3545 = vmatmul.mubr.f32.gmra.mrb[0].mxu0 %v3544
    %v3546 = vpop.f32.mrb[0].mxu0
    %v3547 = vadd.f32 %v3385, %v3546
    %v3548 = vpop.f32.mrb[0].mxu0
    %3549 = vmatprep.mubr.f32.mxu0 0.0
    %v3550 = vand.u32 %v2492, 4294901760
    %3551 = vmatmul.mubr.f32.gmra.mrb[0].mxu0 %v3550
    %v3552 = vpop.f32.mrb[0].mxu0
    %v3553 = vadd.f32 %v3391, %v3552
    %v3554 = vpop.f32.mrb[0].mxu0
    %3555 = vmatprep.mubr.f32.mxu0 0.0
    %v3556 = vand.u32 %v2494, 4294901760
    %3557 = vmatmul.mubr.f32.gmra.mrb[0].mxu0 %v3556
    %v3558 = vpop.f32.mrb[0].mxu0
    %v3559 = vadd.f32 %v3397, %v3558
    %v3560 = vpop.f32.mrb[0].mxu0
    %3561 = vmatprep.mubr.f32.mxu0 0.0
    %v3562 = vand.u32 %v2496, 4294901760
    %3563 = vmatmul.mubr.f32.gmra.mrb[0].mxu0 %v3562
    %v3564 = vpop.f32.mrb[0].mxu0
    %v3565 = vadd.f32 %v3403, %v3564
    %v3566 = vpop.f32.mrb[0].mxu0
    %3567 = vmatprep.mubr.f32.mxu0 0.0
    %v3568 = vand.u32 %v2498, 4294901760
    %3569 = vmatmul.mubr.f32.gmra.mrb[0].mxu0 %v3568
    %v3570 = vpop.f32.mrb[0].mxu0
    %v3571 = vadd.f32 %v3409, %v3570
    %v3572 = vpop.f32.mrb[0].mxu0
    %3573 = vmatprep.mubr.f32.mxu0 0.0
    %v3574 = vand.u32 %v2500, 4294901760
    %3575 = vmatmul.mubr.f32.gmra.mrb[0].mxu0 %v3574
    %v3576 = vpop.f32.mrb[0].mxu0
    %v3577 = vadd.f32 %v3415, %v3576
    %v3578 = vpop.f32.mrb[0].mxu0
    %3579 = vmatprep.mubr.f32.mxu0 0.0
    %v3580 = vand.u32 %v2502, 4294901760
    %3581 = vmatmul.mubr.f32.gmra.mrb[0].mxu0 %v3580
    %v3582 = vpop.f32.mrb[0].mxu0
    %v3583 = vadd.f32 %v3421, %v3582
    %v3584 = vpop.f32.mrb[0].mxu0
    %3585 = vmatprep.mubr.f32.mxu0 0.0
    %v3586 = vand.u32 %v2504, 4294901760
    %3587 = vmatmul.mubr.f32.gmra.mrb[0].mxu0 %v3586
    %v3588 = vpop.f32.mrb[0].mxu0
    %v3589 = vadd.f32 %v3427, %v3588
    %v3590 = vpop.f32.mrb[0].mxu0
    %3591 = vmatprep.mubr.f32.mxu0 0.0
    %v3592 = vand.u32 %v2506, 4294901760
    %3593 = vmatmul.mubr.f32.gmra.mrb[0].mxu0 %v3592
    %v3594 = vpop.f32.mrb[0].mxu0
    %v3595 = vadd.f32 %v3433, %v3594
    %v3596 = vpop.f32.mrb[0].mxu0
    %3597 = vmatprep.mubr.f32.mxu0 0.0
    %v3598 = vand.u32 %v2508, 4294901760
    %3599 = vmatmul.mubr.f32.gmra.mrb[0].mxu0 %v3598
    %v3600 = vpop.f32.mrb[0].mxu0
    %v3601 = vadd.f32 %v3439, %v3600
    %v3602 = vpop.f32.mrb[0].mxu0
    %3603 = vdwg.mxu0
    %v3604 = vadd.f32 %v2320, %v3511
    %v3605 = vadd.f32 %v2326, %v3517
    %v3606 = vadd.f32 %v2332, %v3523
    %v3607 = vadd.f32 %v2338, %v3529
    %v3608 = vadd.f32 %v2344, %v3535
    %v3609 = vadd.f32 %v2350, %v3541
    %v3610 = vadd.f32 %v2356, %v3547
    %v3611 = vadd.f32 %v2362, %v3553
    %v3612 = vadd.f32 %v2368, %v3559
    %v3613 = vadd.f32 %v2374, %v3565
    %v3614 = vadd.f32 %v2380, %v3571
    %v3615 = vadd.f32 %v2386, %v3577
    %v3616 = vadd.f32 %v2392, %v3583
    %v3617 = vadd.f32 %v2398, %v3589
    %v3618 = vadd.f32 %v2404, %v3595
    %v3619 = vadd.f32 %v2410, %v3601
    %v3621 = vsel %vm127, %v43, 0
    %v3624 = vsel %vm127, %v45, 0
    %v3627 = vsel %vm127, %v47, 0
    %v3630 = vsel %vm127, %v49, 0
    %v3633 = vsel %vm127, %v51, 0
    %v3636 = vsel %vm127, %v53, 0
    %v3639 = vsel %vm127, %v55, 0
    %v3642 = vsel %vm127, %v57, 0
    %v3645 = vsel %vm127, %v94, 0
    %v3648 = vsel %vm127, %v96, 0
    %v3651 = vsel %vm127, %v98, 0
    %v3654 = vsel %vm127, %v100, 0
    %v3657 = vsel %vm127, %v102, 0
    %v3660 = vsel %vm127, %v104, 0
    %v3663 = vsel %vm127, %v106, 0
    %v3666 = vsel %vm127, %v108, 0
    %v3669 = vsel %vm176, %v121, 0
    %3671 = vmatprep.subr.mxu0 0.0
    %v3672 = vand.u32 %v3669, 4294901760
    %3673 = vmatpush1.msra.mxu0 %v3672
    %3674 = vmatprep.subr.mxu0 0.0
    %3675 = vmatpush1.msra.mxu0 0.0
    %3676 = vmatprep.subr.mxu0 0.0
    %3677 = vmatpush1.msra.mxu0 0.0
    %3678 = vmatprep.subr.mxu0 0.0
    %3679 = vmatpush1.msra.mxu0 0.0
    %3680 = vmatprep.subr.mxu0 0.0
    %3681 = vmatpush1.msra.mxu0 0.0
    %3682 = vmatprep.subr.mxu0 0.0
    %3683 = vmatpush1.msra.mxu0 0.0
    %3684 = vmatprep.subr.mxu0 0.0
    %3685 = vmatpush1.msra.mxu0 0.0
    %3686 = vmatprep.subr.mxu0 0.0
    %3687 = vmatpush1.msra.mxu0 0.0
    %3688 = vmatprep.subr.mxu0 0.0
    %3689 = vmatpush1.msra.mxu0 0.0
    %3690 = vmatprep.subr.mxu0 0.0
    %3691 = vmatpush1.msra.mxu0 0.0
    %3692 = vmatprep.subr.mxu0 0.0
    %3693 = vmatpush1.msra.mxu0 0.0
    %3694 = vmatprep.subr.mxu0 0.0
    %3695 = vmatpush1.msra.mxu0 0.0
    %3696 = vmatprep.subr.mxu0 0.0
    %3697 = vmatpush1.msra.mxu0 0.0
    %3698 = vmatprep.subr.mxu0 0.0
    %3699 = vmatpush1.msra.mxu0 0.0
    %3700 = vmatprep.subr.mxu0 0.0
    %3701 = vmatpush1.msra.mxu0 0.0
    %3702 = vmatprep.subr.mxu0 0.0
    %3703 = vmatpush1.msra.mxu0 0.0
    %3704 = vmatprep.subr.mxu0 0.0
    %3705 = vmatpush1.msra.mxu0 0.0
    %3706 = vmatprep.subr.mxu0 0.0
    %3707 = vmatpush1.msra.mxu0 0.0
    %3708 = vmatprep.subr.mxu0 0.0
    %3709 = vmatpush1.msra.mxu0 0.0
    %3710 = vmatprep.subr.mxu0 0.0
    %3711 = vmatpush1.msra.mxu0 0.0
    %3712 = vmatprep.subr.mxu0 0.0
    %3713 = vmatpush1.msra.mxu0 0.0
    %3714 = vmatprep.subr.mxu0 0.0
    %3715 = vmatpush1.msra.mxu0 0.0
    %3716 = vmatprep.subr.mxu0 0.0
    %3717 = vmatpush1.msra.mxu0 0.0
    %3718 = vmatprep.subr.mxu0 0.0
    %3719 = vmatpush1.msra.mxu0 0.0
    %3720 = vmatprep.subr.mxu0 0.0
    %3721 = vmatpush1.msra.mxu0 0.0
    %3722 = vmatprep.subr.mxu0 0.0
    %3723 = vmatpush1.msra.mxu0 0.0
    %3724 = vmatprep.subr.mxu0 0.0
    %3725 = vmatpush1.msra.mxu0 0.0
    %3726 = vmatprep.subr.mxu0 0.0
    %3727 = vmatpush1.msra.mxu0 0.0
    %3728 = vmatprep.subr.mxu0 0.0
    %3729 = vmatpush1.msra.mxu0 0.0
    %3730 = vmatprep.subr.mxu0 0.0
    %3731 = vmatpush1.msra.mxu0 0.0
    %3732 = vmatprep.subr.mxu0 0.0
    %3733 = vmatpush1.msra.mxu0 0.0
    %3734 = vmatprep.subr.mxu0 0.0
    %3735 = vmatpush1.msra.mxu0 0.0
    %3736 = vmatprep.mubr.f32.mxu0 0.0
    %v3737 = vand.u32 %v3621, 4294901760
    %v3738 = vsub.f32 %v3621, %v3737
    %v3739 = vand.u32 %v3738, 4294901760
    %v3740 = vsub.f32 %v3738, %v3739
    %v3741 = vand.u32 %v3740, 4294901760
    %3742 = vmatmul.mubr.f32.gmra.mrb[0].mxu0 %v3741
    %v3743 = vpop.f32.mrb[0].mxu0
    %v3744 = vadd.f32 0.0, %v3743
    %v3745 = vpop.f32.mrb[0].mxu0
    %3746 = vmatprep.mubr.f32.mxu0 0.0
    %v3747 = vand.u32 %v3624, 4294901760
    %v3748 = vsub.f32 %v3624, %v3747
    %v3749 = vand.u32 %v3748, 4294901760
    %v3750 = vsub.f32 %v3748, %v3749
    %v3751 = vand.u32 %v3750, 4294901760
    %3752 = vmatmul.mubr.f32.gmra.mrb[0].mxu0 %v3751
    %v3753 = vpop.f32.mrb[0].mxu0
    %v3754 = vadd.f32 0.0, %v3753
    %v3755 = vpop.f32.mrb[0].mxu0
    %3756 = vmatprep.mubr.f32.mxu0 0.0
    %v3757 = vand.u32 %v3627, 4294901760
    %v3758 = vsub.f32 %v3627, %v3757
    %v3759 = vand.u32 %v3758, 4294901760
    %v3760 = vsub.f32 %v3758, %v3759
    %v3761 = vand.u32 %v3760, 4294901760
    %3762 = vmatmul.mubr.f32.gmra.mrb[0].mxu0 %v3761
    %v3763 = vpop.f32.mrb[0].mxu0
    %v3764 = vadd.f32 0.0, %v3763
    %v3765 = vpop.f32.mrb[0].mxu0
    %3766 = vmatprep.mubr.f32.mxu0 0.0
    %v3767 = vand.u32 %v3630, 4294901760
    %v3768 = vsub.f32 %v3630, %v3767
    %v3769 = vand.u32 %v3768, 4294901760
    %v3770 = vsub.f32 %v3768, %v3769
    %v3771 = vand.u32 %v3770, 4294901760
    %3772 = vmatmul.mubr.f32.gmra.mrb[0].mxu0 %v3771
    %v3773 = vpop.f32.mrb[0].mxu0
    %v3774 = vadd.f32 0.0, %v3773
    %v3775 = vpop.f32.mrb[0].mxu0
    %3776 = vmatprep.mubr.f32.mxu0 0.0
    %v3777 = vand.u32 %v3633, 4294901760
    %v3778 = vsub.f32 %v3633, %v3777
    %v3779 = vand.u32 %v3778, 4294901760
    %v3780 = vsub.f32 %v3778, %v3779
    %v3781 = vand.u32 %v3780, 4294901760
    %3782 = vmatmul.mubr.f32.gmra.mrb[0].mxu0 %v3781
    %v3783 = vpop.f32.mrb[0].mxu0
    %v3784 = vadd.f32 0.0, %v3783
    %v3785 = vpop.f32.mrb[0].mxu0
    %3786 = vmatprep.mubr.f32.mxu0 0.0
    %v3787 = vand.u32 %v3636, 4294901760
    %v3788 = vsub.f32 %v3636, %v3787
    %v3789 = vand.u32 %v3788, 4294901760
    %v3790 = vsub.f32 %v3788, %v3789
    %v3791 = vand.u32 %v3790, 4294901760
    %3792 = vmatmul.mubr.f32.gmra.mrb[0].mxu0 %v3791
    %v3793 = vpop.f32.mrb[0].mxu0
    %v3794 = vadd.f32 0.0, %v3793
    %v3795 = vpop.f32.mrb[0].mxu0
    %3796 = vmatprep.mubr.f32.mxu0 0.0
    %v3797 = vand.u32 %v3639, 4294901760
    %v3798 = vsub.f32 %v3639, %v3797
    %v3799 = vand.u32 %v3798, 4294901760
    %v3800 = vsub.f32 %v3798, %v3799
    %v3801 = vand.u32 %v3800, 4294901760
    %3802 = vmatmul.mubr.f32.gmra.mrb[0].mxu0 %v3801
    %v3803 = vpop.f32.mrb[0].mxu0
    %v3804 = vadd.f32 0.0, %v3803
    %v3805 = vpop.f32.mrb[0].mxu0
    %3806 = vmatprep.mubr.f32.mxu0 0.0
    %v3807 = vand.u32 %v3642, 4294901760
    %v3808 = vsub.f32 %v3642, %v3807
    %v3809 = vand.u32 %v3808, 4294901760
    %v3810 = vsub.f32 %v3808, %v3809
    %v3811 = vand.u32 %v3810, 4294901760
    %3812 = vmatmul.mubr.f32.gmra.mrb[0].mxu0 %v3811
    %v3813 = vpop.f32.mrb[0].mxu0
    %v3814 = vadd.f32 0.0, %v3813
    %v3815 = vpop.f32.mrb[0].mxu0
    %3816 = vmatprep.mubr.f32.mxu0 0.0
    %v3817 = vand.u32 %v3645, 4294901760
    %v3818 = vsub.f32 %v3645, %v3817
    %v3819 = vand.u32 %v3818, 4294901760
    %v3820 = vsub.f32 %v3818, %v3819
    %v3821 = vand.u32 %v3820, 4294901760
    %3822 = vmatmul.mubr.f32.gmra.mrb[0].mxu0 %v3821
    %v3823 = vpop.f32.mrb[0].mxu0
    %v3824 = vadd.f32 0.0, %v3823
    %v3825 = vpop.f32.mrb[0].mxu0
    %3826 = vmatprep.mubr.f32.mxu0 0.0
    %v3827 = vand.u32 %v3648, 4294901760
    %v3828 = vsub.f32 %v3648, %v3827
    %v3829 = vand.u32 %v3828, 4294901760
    %v3830 = vsub.f32 %v3828, %v3829
    %v3831 = vand.u32 %v3830, 4294901760
    %3832 = vmatmul.mubr.f32.gmra.mrb[0].mxu0 %v3831
    %v3833 = vpop.f32.mrb[0].mxu0
    %v3834 = vadd.f32 0.0, %v3833
    %v3835 = vpop.f32.mrb[0].mxu0
    %3836 = vmatprep.mubr.f32.mxu0 0.0
    %v3837 = vand.u32 %v3651, 4294901760
    %v3838 = vsub.f32 %v3651, %v3837
    %v3839 = vand.u32 %v3838, 4294901760
    %v3840 = vsub.f32 %v3838, %v3839
    %v3841 = vand.u32 %v3840, 4294901760
    %3842 = vmatmul.mubr.f32.gmra.mrb[0].mxu0 %v3841
    %v3843 = vpop.f32.mrb[0].mxu0
    %v3844 = vadd.f32 0.0, %v3843
    %v3845 = vpop.f32.mrb[0].mxu0
    %3846 = vmatprep.mubr.f32.mxu0 0.0
    %v3847 = vand.u32 %v3654, 4294901760
    %v3848 = vsub.f32 %v3654, %v3847
    %v3849 = vand.u32 %v3848, 4294901760
    %v3850 = vsub.f32 %v3848, %v3849
    %v3851 = vand.u32 %v3850, 4294901760
    %3852 = vmatmul.mubr.f32.gmra.mrb[0].mxu0 %v3851
    %v3853 = vpop.f32.mrb[0].mxu0
    %v3854 = vadd.f32 0.0, %v3853
    %v3855 = vpop.f32.mrb[0].mxu0
    %3856 = vmatprep.mubr.f32.mxu0 0.0
    %v3857 = vand.u32 %v3657, 4294901760
    %v3858 = vsub.f32 %v3657, %v3857
    %v3859 = vand.u32 %v3858, 4294901760
    %v3860 = vsub.f32 %v3858, %v3859
    %v3861 = vand.u32 %v3860, 4294901760
    %3862 = vmatmul.mubr.f32.gmra.mrb[0].mxu0 %v3861
    %v3863 = vpop.f32.mrb[0].mxu0
    %v3864 = vadd.f32 0.0, %v3863
    %v3865 = vpop.f32.mrb[0].mxu0
    %3866 = vmatprep.mubr.f32.mxu0 0.0
    %v3867 = vand.u32 %v3660, 4294901760
    %v3868 = vsub.f32 %v3660, %v3867
    %v3869 = vand.u32 %v3868, 4294901760
    %v3870 = vsub.f32 %v3868, %v3869
    %v3871 = vand.u32 %v3870, 4294901760
    %3872 = vmatmul.mubr.f32.gmra.mrb[0].mxu0 %v3871
    %v3873 = vpop.f32.mrb[0].mxu0
    %v3874 = vadd.f32 0.0, %v3873
    %v3875 = vpop.f32.mrb[0].mxu0
    %3876 = vmatprep.mubr.f32.mxu0 0.0
    %v3877 = vand.u32 %v3663, 4294901760
    %v3878 = vsub.f32 %v3663, %v3877
    %v3879 = vand.u32 %v3878, 4294901760
    %v3880 = vsub.f32 %v3878, %v3879
    %v3881 = vand.u32 %v3880, 4294901760
    %3882 = vmatmul.mubr.f32.gmra.mrb[0].mxu0 %v3881
    %v3883 = vpop.f32.mrb[0].mxu0
    %v3884 = vadd.f32 0.0, %v3883
    %v3885 = vpop.f32.mrb[0].mxu0
    %3886 = vmatprep.mubr.f32.mxu0 0.0
    %v3887 = vand.u32 %v3666, 4294901760
    %v3888 = vsub.f32 %v3666, %v3887
    %v3889 = vand.u32 %v3888, 4294901760
    %v3890 = vsub.f32 %v3888, %v3889
    %v3891 = vand.u32 %v3890, 4294901760
    %3892 = vmatmul.mubr.f32.gmra.mrb[0].mxu0 %v3891
    %v3893 = vpop.f32.mrb[0].mxu0
    %v3894 = vadd.f32 0.0, %v3893
    %v3895 = vpop.f32.mrb[0].mxu0
    %3896 = vdwg.mxu0
    %3897 = vmatprep.subr.mxu0 0.0
    %v3898 = vand.u32 %v3669, 4294901760
    %v3899 = vsub.f32 %v3669, %v3898
    %v3900 = vand.u32 %v3899, 4294901760
    %v3901 = vsub.f32 %v3899, %v3900
    %v3902 = vand.u32 %v3901, 4294901760
    %3903 = vmatpush1.msra.mxu0 %v3902
    %3904 = vmatprep.subr.mxu0 0.0
    %3905 = vmatpush1.msra.mxu0 0.0
    %3906 = vmatprep.subr.mxu0 0.0
    %3907 = vmatpush1.msra.mxu0 0.0
    %3908 = vmatprep.subr.mxu0 0.0
    %3909 = vmatpush1.msra.mxu0 0.0
    %3910 = vmatprep.subr.mxu0 0.0
    %3911 = vmatpush1.msra.mxu0 0.0
    %3912 = vmatprep.subr.mxu0 0.0
    %3913 = vmatpush1.msra.mxu0 0.0
    %3914 = vmatprep.subr.mxu0 0.0
    %3915 = vmatpush1.msra.mxu0 0.0
    %3916 = vmatprep.subr.mxu0 0.0
    %3917 = vmatpush1.msra.mxu0 0.0
    %3918 = vmatprep.subr.mxu0 0.0
    %3919 = vmatpush1.msra.mxu0 0.0
    %3920 = vmatprep.subr.mxu0 0.0
    %3921 = vmatpush1.msra.mxu0 0.0
    %3922 = vmatprep.subr.mxu0 0.0
    %3923 = vmatpush1.msra.mxu0 0.0
    %3924 = vmatprep.subr.mxu0 0.0
    %3925 = vmatpush1.msra.mxu0 0.0
    %3926 = vmatprep.subr.mxu0 0.0
    %3927 = vmatpush1.msra.mxu0 0.0
    %3928 = vmatprep.subr.mxu0 0.0
    %3929 = vmatpush1.msra.mxu0 0.0
    %3930 = vmatprep.subr.mxu0 0.0
    %3931 = vmatpush1.msra.mxu0 0.0
    %3932 = vmatprep.subr.mxu0 0.0
    %3933 = vmatpush1.msra.mxu0 0.0
    %3934 = vmatprep.subr.mxu0 0.0
    %3935 = vmatpush1.msra.mxu0 0.0
    %3936 = vmatprep.subr.mxu0 0.0
    %3937 = vmatpush1.msra.mxu0 0.0
    %3938 = vmatprep.subr.mxu0 0.0
    %3939 = vmatpush1.msra.mxu0 0.0
    %3940 = vmatprep.subr.mxu0 0.0
    %3941 = vmatpush1.msra.mxu0 0.0
    %3942 = vmatprep.subr.mxu0 0.0
    %3943 = vmatpush1.msra.mxu0 0.0
    %3944 = vmatprep.subr.mxu0 0.0
    %3945 = vmatpush1.msra.mxu0 0.0
    %3946 = vmatprep.subr.mxu0 0.0
    %3947 = vmatpush1.msra.mxu0 0.0
    %3948 = vmatprep.subr.mxu0 0.0
    %3949 = vmatpush1.msra.mxu0 0.0
    %3950 = vmatprep.subr.mxu0 0.0
    %3951 = vmatpush1.msra.mxu0 0.0
    %3952 = vmatprep.subr.mxu0 0.0
    %3953 = vmatpush1.msra.mxu0 0.0
    %3954 = vmatprep.subr.mxu0 0.0
    %3955 = vmatpush1.msra.mxu0 0.0
    %3956 = vmatprep.subr.mxu0 0.0
    %3957 = vmatpush1.msra.mxu0 0.0
    %3958 = vmatprep.subr.mxu0 0.0
    %3959 = vmatpush1.msra.mxu0 0.0
    %3960 = vmatprep.subr.mxu0 0.0
    %3961 = vmatpush1.msra.mxu0 0.0
    %3962 = vmatprep.subr.mxu0 0.0
    %3963 = vmatpush1.msra.mxu0 0.0
    %3964 = vmatprep.subr.mxu0 0.0
    %3965 = vmatpush1.msra.mxu0 0.0
    %3966 = vmatprep.mubr.f32.mxu0 0.0
    %v3967 = vand.u32 %v3621, 4294901760
    %3968 = vmatmul.mubr.f32.gmra.mrb[0].mxu0 %v3967
    %v3969 = vpop.f32.mrb[0].mxu0
    %v3970 = vadd.f32 %v3744, %v3969
    %v3971 = vpop.f32.mrb[0].mxu0
    %3972 = vmatprep.mubr.f32.mxu0 0.0
    %v3973 = vand.u32 %v3624, 4294901760
    %3974 = vmatmul.mubr.f32.gmra.mrb[0].mxu0 %v3973
    %v3975 = vpop.f32.mrb[0].mxu0
    %v3976 = vadd.f32 %v3754, %v3975
    %v3977 = vpop.f32.mrb[0].mxu0
    %3978 = vmatprep.mubr.f32.mxu0 0.0
    %v3979 = vand.u32 %v3627, 4294901760
    %3980 = vmatmul.mubr.f32.gmra.mrb[0].mxu0 %v3979
    %v3981 = vpop.f32.mrb[0].mxu0
    %v3982 = vadd.f32 %v3764, %v3981
    %v3983 = vpop.f32.mrb[0].mxu0
    %3984 = vmatprep.mubr.f32.mxu0 0.0
    %v3985 = vand.u32 %v3630, 4294901760
    %3986 = vmatmul.mubr.f32.gmra.mrb[0].mxu0 %v3985
    %v3987 = vpop.f32.mrb[0].mxu0
    %v3988 = vadd.f32 %v3774, %v3987
    %v3989 = vpop.f32.mrb[0].mxu0
    %3990 = vmatprep.mubr.f32.mxu0 0.0
    %v3991 = vand.u32 %v3633, 4294901760
    %3992 = vmatmul.mubr.f32.gmra.mrb[0].mxu0 %v3991
    %v3993 = vpop.f32.mrb[0].mxu0
    %v3994 = vadd.f32 %v3784, %v3993
    %v3995 = vpop.f32.mrb[0].mxu0
    %3996 = vmatprep.mubr.f32.mxu0 0.0
    %v3997 = vand.u32 %v3636, 4294901760
    %3998 = vmatmul.mubr.f32.gmra.mrb[0].mxu0 %v3997
    %v3999 = vpop.f32.mrb[0].mxu0
    %v4000 = vadd.f32 %v3794, %v3999
    %v4001 = vpop.f32.mrb[0].mxu0
    %4002 = vmatprep.mubr.f32.mxu0 0.0
    %v4003 = vand.u32 %v3639, 4294901760
    %4004 = vmatmul.mubr.f32.gmra.mrb[0].mxu0 %v4003
    %v4005 = vpop.f32.mrb[0].mxu0
    %v4006 = vadd.f32 %v3804, %v4005
    %v4007 = vpop.f32.mrb[0].mxu0
    %4008 = vmatprep.mubr.f32.mxu0 0.0
    %v4009 = vand.u32 %v3642, 4294901760
    %4010 = vmatmul.mubr.f32.gmra.mrb[0].mxu0 %v4009
    %v4011 = vpop.f32.mrb[0].mxu0
    %v4012 = vadd.f32 %v3814, %v4011
    %v4013 = vpop.f32.mrb[0].mxu0
    %4014 = vmatprep.mubr.f32.mxu0 0.0
    %v4015 = vand.u32 %v3645, 4294901760
    %4016 = vmatmul.mubr.f32.gmra.mrb[0].mxu0 %v4015
    %v4017 = vpop.f32.mrb[0].mxu0
    %v4018 = vadd.f32 %v3824, %v4017
    %v4019 = vpop.f32.mrb[0].mxu0
    %4020 = vmatprep.mubr.f32.mxu0 0.0
    %v4021 = vand.u32 %v3648, 4294901760
    %4022 = vmatmul.mubr.f32.gmra.mrb[0].mxu0 %v4021
    %v4023 = vpop.f32.mrb[0].mxu0
    %v4024 = vadd.f32 %v3834, %v4023
    %v4025 = vpop.f32.mrb[0].mxu0
    %4026 = vmatprep.mubr.f32.mxu0 0.0
    %v4027 = vand.u32 %v3651, 4294901760
    %4028 = vmatmul.mubr.f32.gmra.mrb[0].mxu0 %v4027
    %v4029 = vpop.f32.mrb[0].mxu0
    %v4030 = vadd.f32 %v3844, %v4029
    %v4031 = vpop.f32.mrb[0].mxu0
    %4032 = vmatprep.mubr.f32.mxu0 0.0
    %v4033 = vand.u32 %v3654, 4294901760
    %4034 = vmatmul.mubr.f32.gmra.mrb[0].mxu0 %v4033
    %v4035 = vpop.f32.mrb[0].mxu0
    %v4036 = vadd.f32 %v3854, %v4035
    %v4037 = vpop.f32.mrb[0].mxu0
    %4038 = vmatprep.mubr.f32.mxu0 0.0
    %v4039 = vand.u32 %v3657, 4294901760
    %4040 = vmatmul.mubr.f32.gmra.mrb[0].mxu0 %v4039
    %v4041 = vpop.f32.mrb[0].mxu0
    %v4042 = vadd.f32 %v3864, %v4041
    %v4043 = vpop.f32.mrb[0].mxu0
    %4044 = vmatprep.mubr.f32.mxu0 0.0
    %v4045 = vand.u32 %v3660, 4294901760
    %4046 = vmatmul.mubr.f32.gmra.mrb[0].mxu0 %v4045
    %v4047 = vpop.f32.mrb[0].mxu0
    %v4048 = vadd.f32 %v3874, %v4047
    %v4049 = vpop.f32.mrb[0].mxu0
    %4050 = vmatprep.mubr.f32.mxu0 0.0
    %v4051 = vand.u32 %v3663, 4294901760
    %4052 = vmatmul.mubr.f32.gmra.mrb[0].mxu0 %v4051
    %v4053 = vpop.f32.mrb[0].mxu0
    %v4054 = vadd.f32 %v3884, %v4053
    %v4055 = vpop.f32.mrb[0].mxu0
    %4056 = vmatprep.mubr.f32.mxu0 0.0
    %v4057 = vand.u32 %v3666, 4294901760
    %4058 = vmatmul.mubr.f32.gmra.mrb[0].mxu0 %v4057
    %v4059 = vpop.f32.mrb[0].mxu0
    %v4060 = vadd.f32 %v3894, %v4059
    %v4061 = vpop.f32.mrb[0].mxu0
    %4062 = vdwg.mxu0
    %4063 = vmatprep.subr.mxu0 0.0
    %v4064 = vand.u32 %v3669, 4294901760
    %v4065 = vsub.f32 %v3669, %v4064
    %4066 = vmatpush1.msra.mxu0 %v4065
    %4067 = vmatprep.subr.mxu0 0.0
    %4068 = vmatpush1.msra.mxu0 0.0
    %4069 = vmatprep.subr.mxu0 0.0
    %4070 = vmatpush1.msra.mxu0 0.0
    %4071 = vmatprep.subr.mxu0 0.0
    %4072 = vmatpush1.msra.mxu0 0.0
    %4073 = vmatprep.subr.mxu0 0.0
    %4074 = vmatpush1.msra.mxu0 0.0
    %4075 = vmatprep.subr.mxu0 0.0
    %4076 = vmatpush1.msra.mxu0 0.0
    %4077 = vmatprep.subr.mxu0 0.0
    %4078 = vmatpush1.msra.mxu0 0.0
    %4079 = vmatprep.subr.mxu0 0.0
    %4080 = vmatpush1.msra.mxu0 0.0
    %4081 = vmatprep.subr.mxu0 0.0
    %4082 = vmatpush1.msra.mxu0 0.0
    %4083 = vmatprep.subr.mxu0 0.0
    %4084 = vmatpush1.msra.mxu0 0.0
    %4085 = vmatprep.subr.mxu0 0.0
    %4086 = vmatpush1.msra.mxu0 0.0
    %4087 = vmatprep.subr.mxu0 0.0
    %4088 = vmatpush1.msra.mxu0 0.0
    %4089 = vmatprep.subr.mxu0 0.0
    %4090 = vmatpush1.msra.mxu0 0.0
    %4091 = vmatprep.subr.mxu0 0.0
    %4092 = vmatpush1.msra.mxu0 0.0
    %4093 = vmatprep.subr.mxu0 0.0
    %4094 = vmatpush1.msra.mxu0 0.0
    %4095 = vmatprep.subr.mxu0 0.0
    %4096 = vmatpush1.msra.mxu0 0.0
    %4097 = vmatprep.subr.mxu0 0.0
    %4098 = vmatpush1.msra.mxu0 0.0
    %4099 = vmatprep.subr.mxu0 0.0
    %4100 = vmatpush1.msra.mxu0 0.0
    %4101 = vmatprep.subr.mxu0 0.0
    %4102 = vmatpush1.msra.mxu0 0.0
    %4103 = vmatprep.subr.mxu0 0.0
    %4104 = vmatpush1.msra.mxu0 0.0
    %4105 = vmatprep.subr.mxu0 0.0
    %4106 = vmatpush1.msra.mxu0 0.0
    %4107 = vmatprep.subr.mxu0 0.0
    %4108 = vmatpush1.msra.mxu0 0.0
    %4109 = vmatprep.subr.mxu0 0.0
    %4110 = vmatpush1.msra.mxu0 0.0
    %4111 = vmatprep.subr.mxu0 0.0
    %4112 = vmatpush1.msra.mxu0 0.0
    %4113 = vmatprep.subr.mxu0 0.0
    %4114 = vmatpush1.msra.mxu0 0.0
    %4115 = vmatprep.subr.mxu0 0.0
    %4116 = vmatpush1.msra.mxu0 0.0
    %4117 = vmatprep.subr.mxu0 0.0
    %4118 = vmatpush1.msra.mxu0 0.0
    %4119 = vmatprep.subr.mxu0 0.0
    %4120 = vmatpush1.msra.mxu0 0.0
    %4121 = vmatprep.subr.mxu0 0.0
    %4122 = vmatpush1.msra.mxu0 0.0
    %4123 = vmatprep.subr.mxu0 0.0
    %4124 = vmatpush1.msra.mxu0 0.0
    %4125 = vmatprep.subr.mxu0 0.0
    %4126 = vmatpush1.msra.mxu0 0.0
    %4127 = vmatprep.subr.mxu0 0.0
    %4128 = vmatpush1.msra.mxu0 0.0
    %4129 = vmatprep.mubr.f32.mxu0 0.0
    %v4130 = vand.u32 %v3621, 4294901760
    %v4131 = vsub.f32 %v3621, %v4130
    %4132 = vmatmul.mubr.f32.gmra.mrb[0].mxu0 %v4131
    %v4133 = vpop.f32.mrb[0].mxu0
    %v4134 = vadd.f32 %v3970, %v4133
    %v4135 = vpop.f32.mrb[0].mxu0
    %4136 = vmatprep.mubr.f32.mxu0 0.0
    %v4137 = vand.u32 %v3624, 4294901760
    %v4138 = vsub.f32 %v3624, %v4137
    %4139 = vmatmul.mubr.f32.gmra.mrb[0].mxu0 %v4138
    %v4140 = vpop.f32.mrb[0].mxu0
    %v4141 = vadd.f32 %v3976, %v4140
    %v4142 = vpop.f32.mrb[0].mxu0
    %4143 = vmatprep.mubr.f32.mxu0 0.0
    %v4144 = vand.u32 %v3627, 4294901760
    %v4145 = vsub.f32 %v3627, %v4144
    %4146 = vmatmul.mubr.f32.gmra.mrb[0].mxu0 %v4145
    %v4147 = vpop.f32.mrb[0].mxu0
    %v4148 = vadd.f32 %v3982, %v4147
    %v4149 = vpop.f32.mrb[0].mxu0
    %4150 = vmatprep.mubr.f32.mxu0 0.0
    %v4151 = vand.u32 %v3630, 4294901760
    %v4152 = vsub.f32 %v3630, %v4151
    %4153 = vmatmul.mubr.f32.gmra.mrb[0].mxu0 %v4152
    %v4154 = vpop.f32.mrb[0].mxu0
    %v4155 = vadd.f32 %v3988, %v4154
    %v4156 = vpop.f32.mrb[0].mxu0
    %4157 = vmatprep.mubr.f32.mxu0 0.0
    %v4158 = vand.u32 %v3633, 4294901760
    %v4159 = vsub.f32 %v3633, %v4158
    %4160 = vmatmul.mubr.f32.gmra.mrb[0].mxu0 %v4159
    %v4161 = vpop.f32.mrb[0].mxu0
    %v4162 = vadd.f32 %v3994, %v4161
    %v4163 = vpop.f32.mrb[0].mxu0
    %4164 = vmatprep.mubr.f32.mxu0 0.0
    %v4165 = vand.u32 %v3636, 4294901760
    %v4166 = vsub.f32 %v3636, %v4165
    %4167 = vmatmul.mubr.f32.gmra.mrb[0].mxu0 %v4166
    %v4168 = vpop.f32.mrb[0].mxu0
    %v4169 = vadd.f32 %v4000, %v4168
    %v4170 = vpop.f32.mrb[0].mxu0
    %4171 = vmatprep.mubr.f32.mxu0 0.0
    %v4172 = vand.u32 %v3639, 4294901760
    %v4173 = vsub.f32 %v3639, %v4172
    %4174 = vmatmul.mubr.f32.gmra.mrb[0].mxu0 %v4173
    %v4175 = vpop.f32.mrb[0].mxu0
    %v4176 = vadd.f32 %v4006, %v4175
    %v4177 = vpop.f32.mrb[0].mxu0
    %4178 = vmatprep.mubr.f32.mxu0 0.0
    %v4179 = vand.u32 %v3642, 4294901760
    %v4180 = vsub.f32 %v3642, %v4179
    %4181 = vmatmul.mubr.f32.gmra.mrb[0].mxu0 %v4180
    %v4182 = vpop.f32.mrb[0].mxu0
    %v4183 = vadd.f32 %v4012, %v4182
    %v4184 = vpop.f32.mrb[0].mxu0
    %4185 = vmatprep.mubr.f32.mxu0 0.0
    %v4186 = vand.u32 %v3645, 4294901760
    %v4187 = vsub.f32 %v3645, %v4186
    %4188 = vmatmul.mubr.f32.gmra.mrb[0].mxu0 %v4187
    %v4189 = vpop.f32.mrb[0].mxu0
    %v4190 = vadd.f32 %v4018, %v4189
    %v4191 = vpop.f32.mrb[0].mxu0
    %4192 = vmatprep.mubr.f32.mxu0 0.0
    %v4193 = vand.u32 %v3648, 4294901760
    %v4194 = vsub.f32 %v3648, %v4193
    %4195 = vmatmul.mubr.f32.gmra.mrb[0].mxu0 %v4194
    %v4196 = vpop.f32.mrb[0].mxu0
    %v4197 = vadd.f32 %v4024, %v4196
    %v4198 = vpop.f32.mrb[0].mxu0
    %4199 = vmatprep.mubr.f32.mxu0 0.0
    %v4200 = vand.u32 %v3651, 4294901760
    %v4201 = vsub.f32 %v3651, %v4200
    %4202 = vmatmul.mubr.f32.gmra.mrb[0].mxu0 %v4201
    %v4203 = vpop.f32.mrb[0].mxu0
    %v4204 = vadd.f32 %v4030, %v4203
    %v4205 = vpop.f32.mrb[0].mxu0
    %4206 = vmatprep.mubr.f32.mxu0 0.0
    %v4207 = vand.u32 %v3654, 4294901760
    %v4208 = vsub.f32 %v3654, %v4207
    %4209 = vmatmul.mubr.f32.gmra.mrb[0].mxu0 %v4208
    %v4210 = vpop.f32.mrb[0].mxu0
    %v4211 = vadd.f32 %v4036, %v4210
    %v4212 = vpop.f32.mrb[0].mxu0
    %4213 = vmatprep.mubr.f32.mxu0 0.0
    %v4214 = vand.u32 %v3657, 4294901760
    %v4215 = vsub.f32 %v3657, %v4214
    %4216 = vmatmul.mubr.f32.gmra.mrb[0].mxu0 %v4215
    %v4217 = vpop.f32.mrb[0].mxu0
    %v4218 = vadd.f32 %v4042, %v4217
    %v4219 = vpop.f32.mrb[0].mxu0
    %4220 = vmatprep.mubr.f32.mxu0 0.0
    %v4221 = vand.u32 %v3660, 4294901760
    %v4222 = vsub.f32 %v3660, %v4221
    %4223 = vmatmul.mubr.f32.gmra.mrb[0].mxu0 %v4222
    %v4224 = vpop.f32.mrb[0].mxu0
    %v4225 = vadd.f32 %v4048, %v4224
    %v4226 = vpop.f32.mrb[0].mxu0
    %4227 = vmatprep.mubr.f32.mxu0 0.0
    %v4228 = vand.u32 %v3663, 4294901760
    %v4229 = vsub.f32 %v3663, %v4228
    %4230 = vmatmul.mubr.f32.gmra.mrb[0].mxu0 %v4229
    %v4231 = vpop.f32.mrb[0].mxu0
    %v4232 = vadd.f32 %v4054, %v4231
    %v4233 = vpop.f32.mrb[0].mxu0
    %4234 = vmatprep.mubr.f32.mxu0 0.0
    %v4235 = vand.u32 %v3666, 4294901760
    %v4236 = vsub.f32 %v3666, %v4235
    %4237 = vmatmul.mubr.f32.gmra.mrb[0].mxu0 %v4236
    %v4238 = vpop.f32.mrb[0].mxu0
    %v4239 = vadd.f32 %v4060, %v4238
    %v4240 = vpop.f32.mrb[0].mxu0
    %4241 = vdwg.mxu0
    %4242 = vmatprep.subr.mxu0 0.0
    %v4243 = vand.u32 %v3669, 4294901760
    %4244 = vmatpush1.msra.mxu0 %v4243
    %4245 = vmatprep.subr.mxu0 0.0
    %4246 = vmatpush1.msra.mxu0 0.0
    %4247 = vmatprep.subr.mxu0 0.0
    %4248 = vmatpush1.msra.mxu0 0.0
    %4249 = vmatprep.subr.mxu0 0.0
    %4250 = vmatpush1.msra.mxu0 0.0
    %4251 = vmatprep.subr.mxu0 0.0
    %4252 = vmatpush1.msra.mxu0 0.0
    %4253 = vmatprep.subr.mxu0 0.0
    %4254 = vmatpush1.msra.mxu0 0.0
    %4255 = vmatprep.subr.mxu0 0.0
    %4256 = vmatpush1.msra.mxu0 0.0
    %4257 = vmatprep.subr.mxu0 0.0
    %4258 = vmatpush1.msra.mxu0 0.0
    %4259 = vmatprep.subr.mxu0 0.0
    %4260 = vmatpush1.msra.mxu0 0.0
    %4261 = vmatprep.subr.mxu0 0.0
    %4262 = vmatpush1.msra.mxu0 0.0
    %4263 = vmatprep.subr.mxu0 0.0
    %4264 = vmatpush1.msra.mxu0 0.0
    %4265 = vmatprep.subr.mxu0 0.0
    %4266 = vmatpush1.msra.mxu0 0.0
    %4267 = vmatprep.subr.mxu0 0.0
    %4268 = vmatpush1.msra.mxu0 0.0
    %4269 = vmatprep.subr.mxu0 0.0
    %4270 = vmatpush1.msra.mxu0 0.0
    %4271 = vmatprep.subr.mxu0 0.0
    %4272 = vmatpush1.msra.mxu0 0.0
    %4273 = vmatprep.subr.mxu0 0.0
    %4274 = vmatpush1.msra.mxu0 0.0
    %4275 = vmatprep.subr.mxu0 0.0
    %4276 = vmatpush1.msra.mxu0 0.0
    %4277 = vmatprep.subr.mxu0 0.0
    %4278 = vmatpush1.msra.mxu0 0.0
    %4279 = vmatprep.subr.mxu0 0.0
    %4280 = vmatpush1.msra.mxu0 0.0
    %4281 = vmatprep.subr.mxu0 0.0
    %4282 = vmatpush1.msra.mxu0 0.0
    %4283 = vmatprep.subr.mxu0 0.0
    %4284 = vmatpush1.msra.mxu0 0.0
    %4285 = vmatprep.subr.mxu0 0.0
    %4286 = vmatpush1.msra.mxu0 0.0
    %4287 = vmatprep.subr.mxu0 0.0
    %4288 = vmatpush1.msra.mxu0 0.0
    %4289 = vmatprep.subr.mxu0 0.0
    %4290 = vmatpush1.msra.mxu0 0.0
    %4291 = vmatprep.subr.mxu0 0.0
    %4292 = vmatpush1.msra.mxu0 0.0
    %4293 = vmatprep.subr.mxu0 0.0
    %4294 = vmatpush1.msra.mxu0 0.0
    %4295 = vmatprep.subr.mxu0 0.0
    %4296 = vmatpush1.msra.mxu0 0.0
    %4297 = vmatprep.subr.mxu0 0.0
    %4298 = vmatpush1.msra.mxu0 0.0
    %4299 = vmatprep.subr.mxu0 0.0
    %4300 = vmatpush1.msra.mxu0 0.0
    %4301 = vmatprep.subr.mxu0 0.0
    %4302 = vmatpush1.msra.mxu0 0.0
    %4303 = vmatprep.subr.mxu0 0.0
    %4304 = vmatpush1.msra.mxu0 0.0
    %4305 = vmatprep.subr.mxu0 0.0
    %4306 = vmatpush1.msra.mxu0 0.0
    %4307 = vmatprep.mubr.f32.mxu0 0.0
    %v4308 = vand.u32 %v3621, 4294901760
    %v4309 = vsub.f32 %v3621, %v4308
    %v4310 = vand.u32 %v4309, 4294901760
    %4311 = vmatmul.mubr.f32.gmra.mrb[0].mxu0 %v4310
    %v4312 = vpop.f32.mrb[0].mxu0
    %v4313 = vadd.f32 %v4134, %v4312
    %v4314 = vpop.f32.mrb[0].mxu0
    %4315 = vmatprep.mubr.f32.mxu0 0.0
    %v4316 = vand.u32 %v3624, 4294901760
    %v4317 = vsub.f32 %v3624, %v4316
    %v4318 = vand.u32 %v4317, 4294901760
    %4319 = vmatmul.mubr.f32.gmra.mrb[0].mxu0 %v4318
    %v4320 = vpop.f32.mrb[0].mxu0
    %v4321 = vadd.f32 %v4141, %v4320
    %v4322 = vpop.f32.mrb[0].mxu0
    %4323 = vmatprep.mubr.f32.mxu0 0.0
    %v4324 = vand.u32 %v3627, 4294901760
    %v4325 = vsub.f32 %v3627, %v4324
    %v4326 = vand.u32 %v4325, 4294901760
    %4327 = vmatmul.mubr.f32.gmra.mrb[0].mxu0 %v4326
    %v4328 = vpop.f32.mrb[0].mxu0
    %v4329 = vadd.f32 %v4148, %v4328
    %v4330 = vpop.f32.mrb[0].mxu0
    %4331 = vmatprep.mubr.f32.mxu0 0.0
    %v4332 = vand.u32 %v3630, 4294901760
    %v4333 = vsub.f32 %v3630, %v4332
    %v4334 = vand.u32 %v4333, 4294901760
    %4335 = vmatmul.mubr.f32.gmra.mrb[0].mxu0 %v4334
    %v4336 = vpop.f32.mrb[0].mxu0
    %v4337 = vadd.f32 %v4155, %v4336
    %v4338 = vpop.f32.mrb[0].mxu0
    %4339 = vmatprep.mubr.f32.mxu0 0.0
    %v4340 = vand.u32 %v3633, 4294901760
    %v4341 = vsub.f32 %v3633, %v4340
    %v4342 = vand.u32 %v4341, 4294901760
    %4343 = vmatmul.mubr.f32.gmra.mrb[0].mxu0 %v4342
    %v4344 = vpop.f32.mrb[0].mxu0
    %v4345 = vadd.f32 %v4162, %v4344
    %v4346 = vpop.f32.mrb[0].mxu0
    %4347 = vmatprep.mubr.f32.mxu0 0.0
    %v4348 = vand.u32 %v3636, 4294901760
    %v4349 = vsub.f32 %v3636, %v4348
    %v4350 = vand.u32 %v4349, 4294901760
    %4351 = vmatmul.mubr.f32.gmra.mrb[0].mxu0 %v4350
    %v4352 = vpop.f32.mrb[0].mxu0
    %v4353 = vadd.f32 %v4169, %v4352
    %v4354 = vpop.f32.mrb[0].mxu0
    %4355 = vmatprep.mubr.f32.mxu0 0.0
    %v4356 = vand.u32 %v3639, 4294901760
    %v4357 = vsub.f32 %v3639, %v4356
    %v4358 = vand.u32 %v4357, 4294901760
    %4359 = vmatmul.mubr.f32.gmra.mrb[0].mxu0 %v4358
    %v4360 = vpop.f32.mrb[0].mxu0
    %v4361 = vadd.f32 %v4176, %v4360
    %v4362 = vpop.f32.mrb[0].mxu0
    %4363 = vmatprep.mubr.f32.mxu0 0.0
    %v4364 = vand.u32 %v3642, 4294901760
    %v4365 = vsub.f32 %v3642, %v4364
    %v4366 = vand.u32 %v4365, 4294901760
    %4367 = vmatmul.mubr.f32.gmra.mrb[0].mxu0 %v4366
    %v4368 = vpop.f32.mrb[0].mxu0
    %v4369 = vadd.f32 %v4183, %v4368
    %v4370 = vpop.f32.mrb[0].mxu0
    %4371 = vmatprep.mubr.f32.mxu0 0.0
    %v4372 = vand.u32 %v3645, 4294901760
    %v4373 = vsub.f32 %v3645, %v4372
    %v4374 = vand.u32 %v4373, 4294901760
    %4375 = vmatmul.mubr.f32.gmra.mrb[0].mxu0 %v4374
    %v4376 = vpop.f32.mrb[0].mxu0
    %v4377 = vadd.f32 %v4190, %v4376
    %v4378 = vpop.f32.mrb[0].mxu0
    %4379 = vmatprep.mubr.f32.mxu0 0.0
    %v4380 = vand.u32 %v3648, 4294901760
    %v4381 = vsub.f32 %v3648, %v4380
    %v4382 = vand.u32 %v4381, 4294901760
    %4383 = vmatmul.mubr.f32.gmra.mrb[0].mxu0 %v4382
    %v4384 = vpop.f32.mrb[0].mxu0
    %v4385 = vadd.f32 %v4197, %v4384
    %v4386 = vpop.f32.mrb[0].mxu0
    %4387 = vmatprep.mubr.f32.mxu0 0.0
    %v4388 = vand.u32 %v3651, 4294901760
    %v4389 = vsub.f32 %v3651, %v4388
    %v4390 = vand.u32 %v4389, 4294901760
    %4391 = vmatmul.mubr.f32.gmra.mrb[0].mxu0 %v4390
    %v4392 = vpop.f32.mrb[0].mxu0
    %v4393 = vadd.f32 %v4204, %v4392
    %v4394 = vpop.f32.mrb[0].mxu0
    %4395 = vmatprep.mubr.f32.mxu0 0.0
    %v4396 = vand.u32 %v3654, 4294901760
    %v4397 = vsub.f32 %v3654, %v4396
    %v4398 = vand.u32 %v4397, 4294901760
    %4399 = vmatmul.mubr.f32.gmra.mrb[0].mxu0 %v4398
    %v4400 = vpop.f32.mrb[0].mxu0
    %v4401 = vadd.f32 %v4211, %v4400
    %v4402 = vpop.f32.mrb[0].mxu0
    %4403 = vmatprep.mubr.f32.mxu0 0.0
    %v4404 = vand.u32 %v3657, 4294901760
    %v4405 = vsub.f32 %v3657, %v4404
    %v4406 = vand.u32 %v4405, 4294901760
    %4407 = vmatmul.mubr.f32.gmra.mrb[0].mxu0 %v4406
    %v4408 = vpop.f32.mrb[0].mxu0
    %v4409 = vadd.f32 %v4218, %v4408
    %v4410 = vpop.f32.mrb[0].mxu0
    %4411 = vmatprep.mubr.f32.mxu0 0.0
    %v4412 = vand.u32 %v3660, 4294901760
    %v4413 = vsub.f32 %v3660, %v4412
    %v4414 = vand.u32 %v4413, 4294901760
    %4415 = vmatmul.mubr.f32.gmra.mrb[0].mxu0 %v4414
    %v4416 = vpop.f32.mrb[0].mxu0
    %v4417 = vadd.f32 %v4225, %v4416
    %v4418 = vpop.f32.mrb[0].mxu0
    %4419 = vmatprep.mubr.f32.mxu0 0.0
    %v4420 = vand.u32 %v3663, 4294901760
    %v4421 = vsub.f32 %v3663, %v4420
    %v4422 = vand.u32 %v4421, 4294901760
    %4423 = vmatmul.mubr.f32.gmra.mrb[0].mxu0 %v4422
    %v4424 = vpop.f32.mrb[0].mxu0
    %v4425 = vadd.f32 %v4232, %v4424
    %v4426 = vpop.f32.mrb[0].mxu0
    %4427 = vmatprep.mubr.f32.mxu0 0.0
    %v4428 = vand.u32 %v3666, 4294901760
    %v4429 = vsub.f32 %v3666, %v4428
    %v4430 = vand.u32 %v4429, 4294901760
    %4431 = vmatmul.mubr.f32.gmra.mrb[0].mxu0 %v4430
    %v4432 = vpop.f32.mrb[0].mxu0
    %v4433 = vadd.f32 %v4239, %v4432
    %v4434 = vpop.f32.mrb[0].mxu0
    %4435 = vdwg.mxu0
    %4436 = vmatprep.subr.mxu0 0.0
    %v4437 = vand.u32 %v3669, 4294901760
    %v4438 = vsub.f32 %v3669, %v4437
    %v4439 = vand.u32 %v4438, 4294901760
    %4440 = vmatpush1.msra.mxu0 %v4439
    %4441 = vmatprep.subr.mxu0 0.0
    %4442 = vmatpush1.msra.mxu0 0.0
    %4443 = vmatprep.subr.mxu0 0.0
    %4444 = vmatpush1.msra.mxu0 0.0
    %4445 = vmatprep.subr.mxu0 0.0
    %4446 = vmatpush1.msra.mxu0 0.0
    %4447 = vmatprep.subr.mxu0 0.0
    %4448 = vmatpush1.msra.mxu0 0.0
    %4449 = vmatprep.subr.mxu0 0.0
    %4450 = vmatpush1.msra.mxu0 0.0
    %4451 = vmatprep.subr.mxu0 0.0
    %4452 = vmatpush1.msra.mxu0 0.0
    %4453 = vmatprep.subr.mxu0 0.0
    %4454 = vmatpush1.msra.mxu0 0.0
    %4455 = vmatprep.subr.mxu0 0.0
    %4456 = vmatpush1.msra.mxu0 0.0
    %4457 = vmatprep.subr.mxu0 0.0
    %4458 = vmatpush1.msra.mxu0 0.0
    %4459 = vmatprep.subr.mxu0 0.0
    %4460 = vmatpush1.msra.mxu0 0.0
    %4461 = vmatprep.subr.mxu0 0.0
    %4462 = vmatpush1.msra.mxu0 0.0
    %4463 = vmatprep.subr.mxu0 0.0
    %4464 = vmatpush1.msra.mxu0 0.0
    %4465 = vmatprep.subr.mxu0 0.0
    %4466 = vmatpush1.msra.mxu0 0.0
    %4467 = vmatprep.subr.mxu0 0.0
    %4468 = vmatpush1.msra.mxu0 0.0
    %4469 = vmatprep.subr.mxu0 0.0
    %4470 = vmatpush1.msra.mxu0 0.0
    %4471 = vmatprep.subr.mxu0 0.0
    %4472 = vmatpush1.msra.mxu0 0.0
    %4473 = vmatprep.subr.mxu0 0.0
    %4474 = vmatpush1.msra.mxu0 0.0
    %4475 = vmatprep.subr.mxu0 0.0
    %4476 = vmatpush1.msra.mxu0 0.0
    %4477 = vmatprep.subr.mxu0 0.0
    %4478 = vmatpush1.msra.mxu0 0.0
    %4479 = vmatprep.subr.mxu0 0.0
    %4480 = vmatpush1.msra.mxu0 0.0
    %4481 = vmatprep.subr.mxu0 0.0
    %4482 = vmatpush1.msra.mxu0 0.0
    %4483 = vmatprep.subr.mxu0 0.0
    %4484 = vmatpush1.msra.mxu0 0.0
    %4485 = vmatprep.subr.mxu0 0.0
    %4486 = vmatpush1.msra.mxu0 0.0
    %4487 = vmatprep.subr.mxu0 0.0
    %4488 = vmatpush1.msra.mxu0 0.0
    %4489 = vmatprep.subr.mxu0 0.0
    %4490 = vmatpush1.msra.mxu0 0.0
    %4491 = vmatprep.subr.mxu0 0.0
    %4492 = vmatpush1.msra.mxu0 0.0
    %4493 = vmatprep.subr.mxu0 0.0
    %4494 = vmatpush1.msra.mxu0 0.0
    %4495 = vmatprep.subr.mxu0 0.0
    %4496 = vmatpush1.msra.mxu0 0.0
    %4497 = vmatprep.subr.mxu0 0.0
    %4498 = vmatpush1.msra.mxu0 0.0
    %4499 = vmatprep.subr.mxu0 0.0
    %4500 = vmatpush1.msra.mxu0 0.0
    %4501 = vmatprep.subr.mxu0 0.0
    %4502 = vmatpush1.msra.mxu0 0.0
    %4503 = vmatprep.mubr.f32.mxu0 0.0
    %v4504 = vand.u32 %v3621, 4294901760
    %4505 = vmatmul.mubr.f32.gmra.mrb[0].mxu0 %v4504
    %v4506 = vpop.f32.mrb[0].mxu0
    %v4507 = vadd.f32 %v4313, %v4506
    %v4508 = vpop.f32.mrb[0].mxu0
    %4509 = vmatprep.mubr.f32.mxu0 0.0
    %v4510 = vand.u32 %v3624, 4294901760
    %4511 = vmatmul.mubr.f32.gmra.mrb[0].mxu0 %v4510
    %v4512 = vpop.f32.mrb[0].mxu0
    %v4513 = vadd.f32 %v4321, %v4512
    %v4514 = vpop.f32.mrb[0].mxu0
    %4515 = vmatprep.mubr.f32.mxu0 0.0
    %v4516 = vand.u32 %v3627, 4294901760
    %4517 = vmatmul.mubr.f32.gmra.mrb[0].mxu0 %v4516
    %v4518 = vpop.f32.mrb[0].mxu0
    %v4519 = vadd.f32 %v4329, %v4518
    %v4520 = vpop.f32.mrb[0].mxu0
    %4521 = vmatprep.mubr.f32.mxu0 0.0
    %v4522 = vand.u32 %v3630, 4294901760
    %4523 = vmatmul.mubr.f32.gmra.mrb[0].mxu0 %v4522
    %v4524 = vpop.f32.mrb[0].mxu0
    %v4525 = vadd.f32 %v4337, %v4524
    %v4526 = vpop.f32.mrb[0].mxu0
    %4527 = vmatprep.mubr.f32.mxu0 0.0
    %v4528 = vand.u32 %v3633, 4294901760
    %4529 = vmatmul.mubr.f32.gmra.mrb[0].mxu0 %v4528
    %v4530 = vpop.f32.mrb[0].mxu0
    %v4531 = vadd.f32 %v4345, %v4530
    %v4532 = vpop.f32.mrb[0].mxu0
    %4533 = vmatprep.mubr.f32.mxu0 0.0
    %v4534 = vand.u32 %v3636, 4294901760
    %4535 = vmatmul.mubr.f32.gmra.mrb[0].mxu0 %v4534
    %v4536 = vpop.f32.mrb[0].mxu0
    %v4537 = vadd.f32 %v4353, %v4536
    %v4538 = vpop.f32.mrb[0].mxu0
    %4539 = vmatprep.mubr.f32.mxu0 0.0
    %v4540 = vand.u32 %v3639, 4294901760
    %4541 = vmatmul.mubr.f32.gmra.mrb[0].mxu0 %v4540
    %v4542 = vpop.f32.mrb[0].mxu0
    %v4543 = vadd.f32 %v4361, %v4542
    %v4544 = vpop.f32.mrb[0].mxu0
    %4545 = vmatprep.mubr.f32.mxu0 0.0
    %v4546 = vand.u32 %v3642, 4294901760
    %4547 = vmatmul.mubr.f32.gmra.mrb[0].mxu0 %v4546
    %v4548 = vpop.f32.mrb[0].mxu0
    %v4549 = vadd.f32 %v4369, %v4548
    %v4550 = vpop.f32.mrb[0].mxu0
    %4551 = vmatprep.mubr.f32.mxu0 0.0
    %v4552 = vand.u32 %v3645, 4294901760
    %4553 = vmatmul.mubr.f32.gmra.mrb[0].mxu0 %v4552
    %v4554 = vpop.f32.mrb[0].mxu0
    %v4555 = vadd.f32 %v4377, %v4554
    %v4556 = vpop.f32.mrb[0].mxu0
    %4557 = vmatprep.mubr.f32.mxu0 0.0
    %v4558 = vand.u32 %v3648, 4294901760
    %4559 = vmatmul.mubr.f32.gmra.mrb[0].mxu0 %v4558
    %v4560 = vpop.f32.mrb[0].mxu0
    %v4561 = vadd.f32 %v4385, %v4560
    %v4562 = vpop.f32.mrb[0].mxu0
    %4563 = vmatprep.mubr.f32.mxu0 0.0
    %v4564 = vand.u32 %v3651, 4294901760
    %4565 = vmatmul.mubr.f32.gmra.mrb[0].mxu0 %v4564
    %v4566 = vpop.f32.mrb[0].mxu0
    %v4567 = vadd.f32 %v4393, %v4566
    %v4568 = vpop.f32.mrb[0].mxu0
    %4569 = vmatprep.mubr.f32.mxu0 0.0
    %v4570 = vand.u32 %v3654, 4294901760
    %4571 = vmatmul.mubr.f32.gmra.mrb[0].mxu0 %v4570
    %v4572 = vpop.f32.mrb[0].mxu0
    %v4573 = vadd.f32 %v4401, %v4572
    %v4574 = vpop.f32.mrb[0].mxu0
    %4575 = vmatprep.mubr.f32.mxu0 0.0
    %v4576 = vand.u32 %v3657, 4294901760
    %4577 = vmatmul.mubr.f32.gmra.mrb[0].mxu0 %v4576
    %v4578 = vpop.f32.mrb[0].mxu0
    %v4579 = vadd.f32 %v4409, %v4578
    %v4580 = vpop.f32.mrb[0].mxu0
    %4581 = vmatprep.mubr.f32.mxu0 0.0
    %v4582 = vand.u32 %v3660, 4294901760
    %4583 = vmatmul.mubr.f32.gmra.mrb[0].mxu0 %v4582
    %v4584 = vpop.f32.mrb[0].mxu0
    %v4585 = vadd.f32 %v4417, %v4584
    %v4586 = vpop.f32.mrb[0].mxu0
    %4587 = vmatprep.mubr.f32.mxu0 0.0
    %v4588 = vand.u32 %v3663, 4294901760
    %4589 = vmatmul.mubr.f32.gmra.mrb[0].mxu0 %v4588
    %v4590 = vpop.f32.mrb[0].mxu0
    %v4591 = vadd.f32 %v4425, %v4590
    %v4592 = vpop.f32.mrb[0].mxu0
    %4593 = vmatprep.mubr.f32.mxu0 0.0
    %v4594 = vand.u32 %v3666, 4294901760
    %4595 = vmatmul.mubr.f32.gmra.mrb[0].mxu0 %v4594
    %v4596 = vpop.f32.mrb[0].mxu0
    %v4597 = vadd.f32 %v4433, %v4596
    %v4598 = vpop.f32.mrb[0].mxu0
    %4599 = vdwg.mxu0
    %4600 = vmatprep.subr.mxu0 0.0
    %v4601 = vand.u32 %v3669, 4294901760
    %4602 = vmatpush1.msra.mxu0 %v4601
    %4603 = vmatprep.subr.mxu0 0.0
    %4604 = vmatpush1.msra.mxu0 0.0
    %4605 = vmatprep.subr.mxu0 0.0
    %4606 = vmatpush1.msra.mxu0 0.0
    %4607 = vmatprep.subr.mxu0 0.0
    %4608 = vmatpush1.msra.mxu0 0.0
    %4609 = vmatprep.subr.mxu0 0.0
    %4610 = vmatpush1.msra.mxu0 0.0
    %4611 = vmatprep.subr.mxu0 0.0
    %4612 = vmatpush1.msra.mxu0 0.0
    %4613 = vmatprep.subr.mxu0 0.0
    %4614 = vmatpush1.msra.mxu0 0.0
    %4615 = vmatprep.subr.mxu0 0.0
    %4616 = vmatpush1.msra.mxu0 0.0
    %4617 = vmatprep.subr.mxu0 0.0
    %4618 = vmatpush1.msra.mxu0 0.0
    %4619 = vmatprep.subr.mxu0 0.0
    %4620 = vmatpush1.msra.mxu0 0.0
    %4621 = vmatprep.subr.mxu0 0.0
    %4622 = vmatpush1.msra.mxu0 0.0
    %4623 = vmatprep.subr.mxu0 0.0
    %4624 = vmatpush1.msra.mxu0 0.0
    %4625 = vmatprep.subr.mxu0 0.0
    %4626 = vmatpush1.msra.mxu0 0.0
    %4627 = vmatprep.subr.mxu0 0.0
    %4628 = vmatpush1.msra.mxu0 0.0
    %4629 = vmatprep.subr.mxu0 0.0
    %4630 = vmatpush1.msra.mxu0 0.0
    %4631 = vmatprep.subr.mxu0 0.0
    %4632 = vmatpush1.msra.mxu0 0.0
    %4633 = vmatprep.subr.mxu0 0.0
    %4634 = vmatpush1.msra.mxu0 0.0
    %4635 = vmatprep.subr.mxu0 0.0
    %4636 = vmatpush1.msra.mxu0 0.0
    %4637 = vmatprep.subr.mxu0 0.0
    %4638 = vmatpush1.msra.mxu0 0.0
    %4639 = vmatprep.subr.mxu0 0.0
    %4640 = vmatpush1.msra.mxu0 0.0
    %4641 = vmatprep.subr.mxu0 0.0
    %4642 = vmatpush1.msra.mxu0 0.0
    %4643 = vmatprep.subr.mxu0 0.0
    %4644 = vmatpush1.msra.mxu0 0.0
    %4645 = vmatprep.subr.mxu0 0.0
    %4646 = vmatpush1.msra.mxu0 0.0
    %4647 = vmatprep.subr.mxu0 0.0
    %4648 = vmatpush1.msra.mxu0 0.0
    %4649 = vmatprep.subr.mxu0 0.0
    %4650 = vmatpush1.msra.mxu0 0.0
    %4651 = vmatprep.subr.mxu0 0.0
    %4652 = vmatpush1.msra.mxu0 0.0
    %4653 = vmatprep.subr.mxu0 0.0
    %4654 = vmatpush1.msra.mxu0 0.0
    %4655 = vmatprep.subr.mxu0 0.0
    %4656 = vmatpush1.msra.mxu0 0.0
    %4657 = vmatprep.subr.mxu0 0.0
    %4658 = vmatpush1.msra.mxu0 0.0
    %4659 = vmatprep.subr.mxu0 0.0
    %4660 = vmatpush1.msra.mxu0 0.0
    %4661 = vmatprep.subr.mxu0 0.0
    %4662 = vmatpush1.msra.mxu0 0.0
    %4663 = vmatprep.subr.mxu0 0.0
    %4664 = vmatpush1.msra.mxu0 0.0
    %4665 = vmatprep.mubr.f32.mxu0 0.0
    %v4666 = vand.u32 %v3621, 4294901760
    %4667 = vmatmul.mubr.f32.gmra.mrb[0].mxu0 %v4666
    %v4668 = vpop.f32.mrb[0].mxu0
    %v4669 = vadd.f32 %v4507, %v4668
    %v4670 = vpop.f32.mrb[0].mxu0
    %4671 = vmatprep.mubr.f32.mxu0 0.0
    %v4672 = vand.u32 %v3624, 4294901760
    %4673 = vmatmul.mubr.f32.gmra.mrb[0].mxu0 %v4672
    %v4674 = vpop.f32.mrb[0].mxu0
    %v4675 = vadd.f32 %v4513, %v4674
    %v4676 = vpop.f32.mrb[0].mxu0
    %4677 = vmatprep.mubr.f32.mxu0 0.0
    %v4678 = vand.u32 %v3627, 4294901760
    %4679 = vmatmul.mubr.f32.gmra.mrb[0].mxu0 %v4678
    %v4680 = vpop.f32.mrb[0].mxu0
    %v4681 = vadd.f32 %v4519, %v4680
    %v4682 = vpop.f32.mrb[0].mxu0
    %4683 = vmatprep.mubr.f32.mxu0 0.0
    %v4684 = vand.u32 %v3630, 4294901760
    %4685 = vmatmul.mubr.f32.gmra.mrb[0].mxu0 %v4684
    %v4686 = vpop.f32.mrb[0].mxu0
    %v4687 = vadd.f32 %v4525, %v4686
    %v4688 = vpop.f32.mrb[0].mxu0
    %4689 = vmatprep.mubr.f32.mxu0 0.0
    %v4690 = vand.u32 %v3633, 4294901760
    %4691 = vmatmul.mubr.f32.gmra.mrb[0].mxu0 %v4690
    %v4692 = vpop.f32.mrb[0].mxu0
    %v4693 = vadd.f32 %v4531, %v4692
    %v4694 = vpop.f32.mrb[0].mxu0
    %4695 = vmatprep.mubr.f32.mxu0 0.0
    %v4696 = vand.u32 %v3636, 4294901760
    %4697 = vmatmul.mubr.f32.gmra.mrb[0].mxu0 %v4696
    %v4698 = vpop.f32.mrb[0].mxu0
    %v4699 = vadd.f32 %v4537, %v4698
    %v4700 = vpop.f32.mrb[0].mxu0
    %4701 = vmatprep.mubr.f32.mxu0 0.0
    %v4702 = vand.u32 %v3639, 4294901760
    %4703 = vmatmul.mubr.f32.gmra.mrb[0].mxu0 %v4702
    %v4704 = vpop.f32.mrb[0].mxu0
    %v4705 = vadd.f32 %v4543, %v4704
    %v4706 = vpop.f32.mrb[0].mxu0
    %4707 = vmatprep.mubr.f32.mxu0 0.0
    %v4708 = vand.u32 %v3642, 4294901760
    %4709 = vmatmul.mubr.f32.gmra.mrb[0].mxu0 %v4708
    %v4710 = vpop.f32.mrb[0].mxu0
    %v4711 = vadd.f32 %v4549, %v4710
    %v4712 = vpop.f32.mrb[0].mxu0
    %4713 = vmatprep.mubr.f32.mxu0 0.0
    %v4714 = vand.u32 %v3645, 4294901760
    %4715 = vmatmul.mubr.f32.gmra.mrb[0].mxu0 %v4714
    %v4716 = vpop.f32.mrb[0].mxu0
    %v4717 = vadd.f32 %v4555, %v4716
    %v4718 = vpop.f32.mrb[0].mxu0
    %4719 = vmatprep.mubr.f32.mxu0 0.0
    %v4720 = vand.u32 %v3648, 4294901760
    %4721 = vmatmul.mubr.f32.gmra.mrb[0].mxu0 %v4720
    %v4722 = vpop.f32.mrb[0].mxu0
    %v4723 = vadd.f32 %v4561, %v4722
    %v4724 = vpop.f32.mrb[0].mxu0
    %4725 = vmatprep.mubr.f32.mxu0 0.0
    %v4726 = vand.u32 %v3651, 4294901760
    %4727 = vmatmul.mubr.f32.gmra.mrb[0].mxu0 %v4726
    %v4728 = vpop.f32.mrb[0].mxu0
    %v4729 = vadd.f32 %v4567, %v4728
    %v4730 = vpop.f32.mrb[0].mxu0
    %4731 = vmatprep.mubr.f32.mxu0 0.0
    %v4732 = vand.u32 %v3654, 4294901760
    %4733 = vmatmul.mubr.f32.gmra.mrb[0].mxu0 %v4732
    %v4734 = vpop.f32.mrb[0].mxu0
    %v4735 = vadd.f32 %v4573, %v4734
    %v4736 = vpop.f32.mrb[0].mxu0
    %4737 = vmatprep.mubr.f32.mxu0 0.0
    %v4738 = vand.u32 %v3657, 4294901760
    %4739 = vmatmul.mubr.f32.gmra.mrb[0].mxu0 %v4738
    %v4740 = vpop.f32.mrb[0].mxu0
    %v4741 = vadd.f32 %v4579, %v4740
    %v4742 = vpop.f32.mrb[0].mxu0
    %4743 = vmatprep.mubr.f32.mxu0 0.0
    %v4744 = vand.u32 %v3660, 4294901760
    %4745 = vmatmul.mubr.f32.gmra.mrb[0].mxu0 %v4744
    %v4746 = vpop.f32.mrb[0].mxu0
    %v4747 = vadd.f32 %v4585, %v4746
    %v4748 = vpop.f32.mrb[0].mxu0
    %4749 = vmatprep.mubr.f32.mxu0 0.0
    %v4750 = vand.u32 %v3663, 4294901760
    %4751 = vmatmul.mubr.f32.gmra.mrb[0].mxu0 %v4750
    %v4752 = vpop.f32.mrb[0].mxu0
    %v4753 = vadd.f32 %v4591, %v4752
    %v4754 = vpop.f32.mrb[0].mxu0
    %4755 = vmatprep.mubr.f32.mxu0 0.0
    %v4756 = vand.u32 %v3666, 4294901760
    %4757 = vmatmul.mubr.f32.gmra.mrb[0].mxu0 %v4756
    %v4758 = vpop.f32.mrb[0].mxu0
    %v4759 = vadd.f32 %v4597, %v4758
    %v4760 = vpop.f32.mrb[0].mxu0
    %4761 = vdwg.mxu0
    %v4762 = vadd.f32 %v3604, %v4669
    %v4763 = vadd.f32 %v3605, %v4675
    %v4764 = vadd.f32 %v3606, %v4681
    %v4765 = vadd.f32 %v3607, %v4687
    %v4766 = vadd.f32 %v3608, %v4693
    %v4767 = vadd.f32 %v3609, %v4699
    %v4768 = vadd.f32 %v3610, %v4705
    %v4769 = vadd.f32 %v3611, %v4711
    %v4770 = vadd.f32 %v3612, %v4717
    %v4771 = vadd.f32 %v3613, %v4723
    %v4772 = vadd.f32 %v3614, %v4729
    %v4773 = vadd.f32 %v3615, %v4735
    %v4774 = vadd.f32 %v3616, %v4741
    %v4775 = vadd.f32 %v3617, %v4747
    %v4776 = vadd.f32 %v3618, %v4753
    %v4777 = vadd.f32 %v3619, %v4759
    %v4779 = vsel %vm127, %v59, 0
    %v4782 = vsel %vm127, %v60, 0
    %v4785 = vsel %vm127, %v61, 0
    %v4788 = vsel %vm127, %v62, 0
    %v4791 = vsel %vm127, %v63, 0
    %v4794 = vsel %vm127, %v64, 0
    %v4797 = vsel %vm127, %v65, 0
    %v4800 = vsel %vm127, %v66, 0
    %v4803 = vsel %vm127, %v110, 0
    %v4806 = vsel %vm127, %v111, 0
    %v4809 = vsel %vm127, %v112, 0
    %v4812 = vsel %vm127, %v113, 0
    %v4815 = vsel %vm127, %v114, 0
    %v4818 = vsel %vm127, %v115, 0
    %v4821 = vsel %vm127, %v116, 0
    %v4824 = vsel %vm127, %v117, 0
    %v4827 = vsel %vm176, %v122, 0
    %4829 = vmatprep.subr.mxu0 0.0
    %v4830 = vand.u32 %v4827, 4294901760
    %4831 = vmatpush1.msra.mxu0 %v4830
    %4832 = vmatprep.subr.mxu0 0.0
    %4833 = vmatpush1.msra.mxu0 0.0
    %4834 = vmatprep.subr.mxu0 0.0
    %4835 = vmatpush1.msra.mxu0 0.0
    %4836 = vmatprep.subr.mxu0 0.0
    %4837 = vmatpush1.msra.mxu0 0.0
    %4838 = vmatprep.subr.mxu0 0.0
    %4839 = vmatpush1.msra.mxu0 0.0
    %4840 = vmatprep.subr.mxu0 0.0
    %4841 = vmatpush1.msra.mxu0 0.0
    %4842 = vmatprep.subr.mxu0 0.0
    %4843 = vmatpush1.msra.mxu0 0.0
    %4844 = vmatprep.subr.mxu0 0.0
    %4845 = vmatpush1.msra.mxu0 0.0
    %4846 = vmatprep.subr.mxu0 0.0
    %4847 = vmatpush1.msra.mxu0 0.0
    %4848 = vmatprep.subr.mxu0 0.0
    %4849 = vmatpush1.msra.mxu0 0.0
    %4850 = vmatprep.subr.mxu0 0.0
    %4851 = vmatpush1.msra.mxu0 0.0
    %4852 = vmatprep.subr.mxu0 0.0
    %4853 = vmatpush1.msra.mxu0 0.0
    %4854 = vmatprep.subr.mxu0 0.0
    %4855 = vmatpush1.msra.mxu0 0.0
    %4856 = vmatprep.subr.mxu0 0.0
    %4857 = vmatpush1.msra.mxu0 0.0
    %4858 = vmatprep.subr.mxu0 0.0
    %4859 = vmatpush1.msra.mxu0 0.0
    %4860 = vmatprep.subr.mxu0 0.0
    %4861 = vmatpush1.msra.mxu0 0.0
    %4862 = vmatprep.subr.mxu0 0.0
    %4863 = vmatpush1.msra.mxu0 0.0
    %4864 = vmatprep.subr.mxu0 0.0
    %4865 = vmatpush1.msra.mxu0 0.0
    %4866 = vmatprep.subr.mxu0 0.0
    %4867 = vmatpush1.msra.mxu0 0.0
    %4868 = vmatprep.subr.mxu0 0.0
    %4869 = vmatpush1.msra.mxu0 0.0
    %4870 = vmatprep.subr.mxu0 0.0
    %4871 = vmatpush1.msra.mxu0 0.0
    %4872 = vmatprep.subr.mxu0 0.0
    %4873 = vmatpush1.msra.mxu0 0.0
    %4874 = vmatprep.subr.mxu0 0.0
    %4875 = vmatpush1.msra.mxu0 0.0
    %4876 = vmatprep.subr.mxu0 0.0
    %4877 = vmatpush1.msra.mxu0 0.0
    %4878 = vmatprep.subr.mxu0 0.0
    %4879 = vmatpush1.msra.mxu0 0.0
    %4880 = vmatprep.subr.mxu0 0.0
    %4881 = vmatpush1.msra.mxu0 0.0
    %4882 = vmatprep.subr.mxu0 0.0
    %4883 = vmatpush1.msra.mxu0 0.0
    %4884 = vmatprep.subr.mxu0 0.0
    %4885 = vmatpush1.msra.mxu0 0.0
    %4886 = vmatprep.subr.mxu0 0.0
    %4887 = vmatpush1.msra.mxu0 0.0
    %4888 = vmatprep.subr.mxu0 0.0
    %4889 = vmatpush1.msra.mxu0 0.0
    %4890 = vmatprep.subr.mxu0 0.0
    %4891 = vmatpush1.msra.mxu0 0.0
    %4892 = vmatprep.subr.mxu0 0.0
    %4893 = vmatpush1.msra.mxu0 0.0
    %4894 = vmatprep.mubr.f32.mxu0 0.0
    %v4895 = vand.u32 %v4779, 4294901760
    %v4896 = vsub.f32 %v4779, %v4895
    %v4897 = vand.u32 %v4896, 4294901760
    %v4898 = vsub.f32 %v4896, %v4897
    %v4899 = vand.u32 %v4898, 4294901760
    %4900 = vmatmul.mubr.f32.gmra.mrb[0].mxu0 %v4899
    %v4901 = vpop.f32.mrb[0].mxu0
    %v4902 = vadd.f32 0.0, %v4901
    %v4903 = vpop.f32.mrb[0].mxu0
    %4904 = vmatprep.mubr.f32.mxu0 0.0
    %v4905 = vand.u32 %v4782, 4294901760
    %v4906 = vsub.f32 %v4782, %v4905
    %v4907 = vand.u32 %v4906, 4294901760
    %v4908 = vsub.f32 %v4906, %v4907
    %v4909 = vand.u32 %v4908, 4294901760
    %4910 = vmatmul.mubr.f32.gmra.mrb[0].mxu0 %v4909
    %v4911 = vpop.f32.mrb[0].mxu0
    %v4912 = vadd.f32 0.0, %v4911
    %v4913 = vpop.f32.mrb[0].mxu0
    %4914 = vmatprep.mubr.f32.mxu0 0.0
    %v4915 = vand.u32 %v4785, 4294901760
    %v4916 = vsub.f32 %v4785, %v4915
    %v4917 = vand.u32 %v4916, 4294901760
    %v4918 = vsub.f32 %v4916, %v4917
    %v4919 = vand.u32 %v4918, 4294901760
    %4920 = vmatmul.mubr.f32.gmra.mrb[0].mxu0 %v4919
    %v4921 = vpop.f32.mrb[0].mxu0
    %v4922 = vadd.f32 0.0, %v4921
    %v4923 = vpop.f32.mrb[0].mxu0
    %4924 = vmatprep.mubr.f32.mxu0 0.0
    %v4925 = vand.u32 %v4788, 4294901760
    %v4926 = vsub.f32 %v4788, %v4925
    %v4927 = vand.u32 %v4926, 4294901760
    %v4928 = vsub.f32 %v4926, %v4927
    %v4929 = vand.u32 %v4928, 4294901760
    %4930 = vmatmul.mubr.f32.gmra.mrb[0].mxu0 %v4929
    %v4931 = vpop.f32.mrb[0].mxu0
    %v4932 = vadd.f32 0.0, %v4931
    %v4933 = vpop.f32.mrb[0].mxu0
    %4934 = vmatprep.mubr.f32.mxu0 0.0
    %v4935 = vand.u32 %v4791, 4294901760
    %v4936 = vsub.f32 %v4791, %v4935
    %v4937 = vand.u32 %v4936, 4294901760
    %v4938 = vsub.f32 %v4936, %v4937
    %v4939 = vand.u32 %v4938, 4294901760
    %4940 = vmatmul.mubr.f32.gmra.mrb[0].mxu0 %v4939
    %v4941 = vpop.f32.mrb[0].mxu0
    %v4942 = vadd.f32 0.0, %v4941
    %v4943 = vpop.f32.mrb[0].mxu0
    %4944 = vmatprep.mubr.f32.mxu0 0.0
    %v4945 = vand.u32 %v4794, 4294901760
    %v4946 = vsub.f32 %v4794, %v4945
    %v4947 = vand.u32 %v4946, 4294901760
    %v4948 = vsub.f32 %v4946, %v4947
    %v4949 = vand.u32 %v4948, 4294901760
    %4950 = vmatmul.mubr.f32.gmra.mrb[0].mxu0 %v4949
    %v4951 = vpop.f32.mrb[0].mxu0
    %v4952 = vadd.f32 0.0, %v4951
    %v4953 = vpop.f32.mrb[0].mxu0
    %4954 = vmatprep.mubr.f32.mxu0 0.0
    %v4955 = vand.u32 %v4797, 4294901760
    %v4956 = vsub.f32 %v4797, %v4955
    %v4957 = vand.u32 %v4956, 4294901760
    %v4958 = vsub.f32 %v4956, %v4957
    %v4959 = vand.u32 %v4958, 4294901760
    %4960 = vmatmul.mubr.f32.gmra.mrb[0].mxu0 %v4959
    %v4961 = vpop.f32.mrb[0].mxu0
    %v4962 = vadd.f32 0.0, %v4961
    %v4963 = vpop.f32.mrb[0].mxu0
    %4964 = vmatprep.mubr.f32.mxu0 0.0
    %v4965 = vand.u32 %v4800, 4294901760
    %v4966 = vsub.f32 %v4800, %v4965
    %v4967 = vand.u32 %v4966, 4294901760
    %v4968 = vsub.f32 %v4966, %v4967
    %v4969 = vand.u32 %v4968, 4294901760
    %4970 = vmatmul.mubr.f32.gmra.mrb[0].mxu0 %v4969
    %v4971 = vpop.f32.mrb[0].mxu0
    %v4972 = vadd.f32 0.0, %v4971
    %v4973 = vpop.f32.mrb[0].mxu0
    %4974 = vmatprep.mubr.f32.mxu0 0.0
    %v4975 = vand.u32 %v4803, 4294901760
    %v4976 = vsub.f32 %v4803, %v4975
    %v4977 = vand.u32 %v4976, 4294901760
    %v4978 = vsub.f32 %v4976, %v4977
    %v4979 = vand.u32 %v4978, 4294901760
    %4980 = vmatmul.mubr.f32.gmra.mrb[0].mxu0 %v4979
    %v4981 = vpop.f32.mrb[0].mxu0
    %v4982 = vadd.f32 0.0, %v4981
    %v4983 = vpop.f32.mrb[0].mxu0
    %4984 = vmatprep.mubr.f32.mxu0 0.0
    %v4985 = vand.u32 %v4806, 4294901760
    %v4986 = vsub.f32 %v4806, %v4985
    %v4987 = vand.u32 %v4986, 4294901760
    %v4988 = vsub.f32 %v4986, %v4987
    %v4989 = vand.u32 %v4988, 4294901760
    %4990 = vmatmul.mubr.f32.gmra.mrb[0].mxu0 %v4989
    %v4991 = vpop.f32.mrb[0].mxu0
    %v4992 = vadd.f32 0.0, %v4991
    %v4993 = vpop.f32.mrb[0].mxu0
    %4994 = vmatprep.mubr.f32.mxu0 0.0
    %v4995 = vand.u32 %v4809, 4294901760
    %v4996 = vsub.f32 %v4809, %v4995
    %v4997 = vand.u32 %v4996, 4294901760
    %v4998 = vsub.f32 %v4996, %v4997
    %v4999 = vand.u32 %v4998, 4294901760
    %5000 = vmatmul.mubr.f32.gmra.mrb[0].mxu0 %v4999
    %v5001 = vpop.f32.mrb[0].mxu0
    %v5002 = vadd.f32 0.0, %v5001
    %v5003 = vpop.f32.mrb[0].mxu0
    %5004 = vmatprep.mubr.f32.mxu0 0.0
    %v5005 = vand.u32 %v4812, 4294901760
    %v5006 = vsub.f32 %v4812, %v5005
    %v5007 = vand.u32 %v5006, 4294901760
    %v5008 = vsub.f32 %v5006, %v5007
    %v5009 = vand.u32 %v5008, 4294901760
    %5010 = vmatmul.mubr.f32.gmra.mrb[0].mxu0 %v5009
    %v5011 = vpop.f32.mrb[0].mxu0
    %v5012 = vadd.f32 0.0, %v5011
    %v5013 = vpop.f32.mrb[0].mxu0
    %5014 = vmatprep.mubr.f32.mxu0 0.0
    %v5015 = vand.u32 %v4815, 4294901760
    %v5016 = vsub.f32 %v4815, %v5015
    %v5017 = vand.u32 %v5016, 4294901760
    %v5018 = vsub.f32 %v5016, %v5017
    %v5019 = vand.u32 %v5018, 4294901760
    %5020 = vmatmul.mubr.f32.gmra.mrb[0].mxu0 %v5019
    %v5021 = vpop.f32.mrb[0].mxu0
    %v5022 = vadd.f32 0.0, %v5021
    %v5023 = vpop.f32.mrb[0].mxu0
    %5024 = vmatprep.mubr.f32.mxu0 0.0
    %v5025 = vand.u32 %v4818, 4294901760
    %v5026 = vsub.f32 %v4818, %v5025
    %v5027 = vand.u32 %v5026, 4294901760
    %v5028 = vsub.f32 %v5026, %v5027
    %v5029 = vand.u32 %v5028, 4294901760
    %5030 = vmatmul.mubr.f32.gmra.mrb[0].mxu0 %v5029
    %v5031 = vpop.f32.mrb[0].mxu0
    %v5032 = vadd.f32 0.0, %v5031
    %v5033 = vpop.f32.mrb[0].mxu0
    %5034 = vmatprep.mubr.f32.mxu0 0.0
    %v5035 = vand.u32 %v4821, 4294901760
    %v5036 = vsub.f32 %v4821, %v5035
    %v5037 = vand.u32 %v5036, 4294901760
    %v5038 = vsub.f32 %v5036, %v5037
    %v5039 = vand.u32 %v5038, 4294901760
    %5040 = vmatmul.mubr.f32.gmra.mrb[0].mxu0 %v5039
    %v5041 = vpop.f32.mrb[0].mxu0
    %v5042 = vadd.f32 0.0, %v5041
    %v5043 = vpop.f32.mrb[0].mxu0
    %5044 = vmatprep.mubr.f32.mxu0 0.0
    %v5045 = vand.u32 %v4824, 4294901760
    %v5046 = vsub.f32 %v4824, %v5045
    %v5047 = vand.u32 %v5046, 4294901760
    %v5048 = vsub.f32 %v5046, %v5047
    %v5049 = vand.u32 %v5048, 4294901760
    %5050 = vmatmul.mubr.f32.gmra.mrb[0].mxu0 %v5049
    %v5051 = vpop.f32.mrb[0].mxu0
    %v5052 = vadd.f32 0.0, %v5051
    %v5053 = vpop.f32.mrb[0].mxu0
    %5054 = vdwg.mxu0
    %5055 = vmatprep.subr.mxu0 0.0
    %v5056 = vand.u32 %v4827, 4294901760
    %v5057 = vsub.f32 %v4827, %v5056
    %v5058 = vand.u32 %v5057, 4294901760
    %v5059 = vsub.f32 %v5057, %v5058
    %v5060 = vand.u32 %v5059, 4294901760
    %5061 = vmatpush1.msra.mxu0 %v5060
    %5062 = vmatprep.subr.mxu0 0.0
    %5063 = vmatpush1.msra.mxu0 0.0
    %5064 = vmatprep.subr.mxu0 0.0
    %5065 = vmatpush1.msra.mxu0 0.0
    %5066 = vmatprep.subr.mxu0 0.0
    %5067 = vmatpush1.msra.mxu0 0.0
    %5068 = vmatprep.subr.mxu0 0.0
    %5069 = vmatpush1.msra.mxu0 0.0
    %5070 = vmatprep.subr.mxu0 0.0
    %5071 = vmatpush1.msra.mxu0 0.0
    %5072 = vmatprep.subr.mxu0 0.0
    %5073 = vmatpush1.msra.mxu0 0.0
    %5074 = vmatprep.subr.mxu0 0.0
    %5075 = vmatpush1.msra.mxu0 0.0
    %5076 = vmatprep.subr.mxu0 0.0
    %5077 = vmatpush1.msra.mxu0 0.0
    %5078 = vmatprep.subr.mxu0 0.0
    %5079 = vmatpush1.msra.mxu0 0.0
    %5080 = vmatprep.subr.mxu0 0.0
    %5081 = vmatpush1.msra.mxu0 0.0
    %5082 = vmatprep.subr.mxu0 0.0
    %5083 = vmatpush1.msra.mxu0 0.0
    %5084 = vmatprep.subr.mxu0 0.0
    %5085 = vmatpush1.msra.mxu0 0.0
    %5086 = vmatprep.subr.mxu0 0.0
    %5087 = vmatpush1.msra.mxu0 0.0
    %5088 = vmatprep.subr.mxu0 0.0
    %5089 = vmatpush1.msra.mxu0 0.0
    %5090 = vmatprep.subr.mxu0 0.0
    %5091 = vmatpush1.msra.mxu0 0.0
    %5092 = vmatprep.subr.mxu0 0.0
    %5093 = vmatpush1.msra.mxu0 0.0
    %5094 = vmatprep.subr.mxu0 0.0
    %5095 = vmatpush1.msra.mxu0 0.0
    %5096 = vmatprep.subr.mxu0 0.0
    %5097 = vmatpush1.msra.mxu0 0.0
    %5098 = vmatprep.subr.mxu0 0.0
    %5099 = vmatpush1.msra.mxu0 0.0
    %5100 = vmatprep.subr.mxu0 0.0
    %5101 = vmatpush1.msra.mxu0 0.0
    %5102 = vmatprep.subr.mxu0 0.0
    %5103 = vmatpush1.msra.mxu0 0.0
    %5104 = vmatprep.subr.mxu0 0.0
    %5105 = vmatpush1.msra.mxu0 0.0
    %5106 = vmatprep.subr.mxu0 0.0
    %5107 = vmatpush1.msra.mxu0 0.0
    %5108 = vmatprep.subr.mxu0 0.0
    %5109 = vmatpush1.msra.mxu0 0.0
    %5110 = vmatprep.subr.mxu0 0.0
    %5111 = vmatpush1.msra.mxu0 0.0
    %5112 = vmatprep.subr.mxu0 0.0
    %5113 = vmatpush1.msra.mxu0 0.0
    %5114 = vmatprep.subr.mxu0 0.0
    %5115 = vmatpush1.msra.mxu0 0.0
    %5116 = vmatprep.subr.mxu0 0.0
    %5117 = vmatpush1.msra.mxu0 0.0
    %5118 = vmatprep.subr.mxu0 0.0
    %5119 = vmatpush1.msra.mxu0 0.0
    %5120 = vmatprep.subr.mxu0 0.0
    %5121 = vmatpush1.msra.mxu0 0.0
    %5122 = vmatprep.subr.mxu0 0.0
    %5123 = vmatpush1.msra.mxu0 0.0
    %5124 = vmatprep.mubr.f32.mxu0 0.0
    %v5125 = vand.u32 %v4779, 4294901760
    %5126 = vmatmul.mubr.f32.gmra.mrb[0].mxu0 %v5125
    %v5127 = vpop.f32.mrb[0].mxu0
    %v5128 = vadd.f32 %v4902, %v5127
    %v5129 = vpop.f32.mrb[0].mxu0
    %5130 = vmatprep.mubr.f32.mxu0 0.0
    %v5131 = vand.u32 %v4782, 4294901760
    %5132 = vmatmul.mubr.f32.gmra.mrb[0].mxu0 %v5131
    %v5133 = vpop.f32.mrb[0].mxu0
    %v5134 = vadd.f32 %v4912, %v5133
    %v5135 = vpop.f32.mrb[0].mxu0
    %5136 = vmatprep.mubr.f32.mxu0 0.0
    %v5137 = vand.u32 %v4785, 4294901760
    %5138 = vmatmul.mubr.f32.gmra.mrb[0].mxu0 %v5137
    %v5139 = vpop.f32.mrb[0].mxu0
    %v5140 = vadd.f32 %v4922, %v5139
    %v5141 = vpop.f32.mrb[0].mxu0
    %5142 = vmatprep.mubr.f32.mxu0 0.0
    %v5143 = vand.u32 %v4788, 4294901760
    %5144 = vmatmul.mubr.f32.gmra.mrb[0].mxu0 %v5143
    %v5145 = vpop.f32.mrb[0].mxu0
    %v5146 = vadd.f32 %v4932, %v5145
    %v5147 = vpop.f32.mrb[0].mxu0
    %5148 = vmatprep.mubr.f32.mxu0 0.0
    %v5149 = vand.u32 %v4791, 4294901760
    %5150 = vmatmul.mubr.f32.gmra.mrb[0].mxu0 %v5149
    %v5151 = vpop.f32.mrb[0].mxu0
    %v5152 = vadd.f32 %v4942, %v5151
    %v5153 = vpop.f32.mrb[0].mxu0
    %5154 = vmatprep.mubr.f32.mxu0 0.0
    %v5155 = vand.u32 %v4794, 4294901760
    %5156 = vmatmul.mubr.f32.gmra.mrb[0].mxu0 %v5155
    %v5157 = vpop.f32.mrb[0].mxu0
    %v5158 = vadd.f32 %v4952, %v5157
    %v5159 = vpop.f32.mrb[0].mxu0
    %5160 = vmatprep.mubr.f32.mxu0 0.0
    %v5161 = vand.u32 %v4797, 4294901760
    %5162 = vmatmul.mubr.f32.gmra.mrb[0].mxu0 %v5161
    %v5163 = vpop.f32.mrb[0].mxu0
    %v5164 = vadd.f32 %v4962, %v5163
    %v5165 = vpop.f32.mrb[0].mxu0
    %5166 = vmatprep.mubr.f32.mxu0 0.0
    %v5167 = vand.u32 %v4800, 4294901760
    %5168 = vmatmul.mubr.f32.gmra.mrb[0].mxu0 %v5167
    %v5169 = vpop.f32.mrb[0].mxu0
    %v5170 = vadd.f32 %v4972, %v5169
    %v5171 = vpop.f32.mrb[0].mxu0
    %5172 = vmatprep.mubr.f32.mxu0 0.0
    %v5173 = vand.u32 %v4803, 4294901760
    %5174 = vmatmul.mubr.f32.gmra.mrb[0].mxu0 %v5173
    %v5175 = vpop.f32.mrb[0].mxu0
    %v5176 = vadd.f32 %v4982, %v5175
    %v5177 = vpop.f32.mrb[0].mxu0
    %5178 = vmatprep.mubr.f32.mxu0 0.0
    %v5179 = vand.u32 %v4806, 4294901760
    %5180 = vmatmul.mubr.f32.gmra.mrb[0].mxu0 %v5179
    %v5181 = vpop.f32.mrb[0].mxu0
    %v5182 = vadd.f32 %v4992, %v5181
    %v5183 = vpop.f32.mrb[0].mxu0
    %5184 = vmatprep.mubr.f32.mxu0 0.0
    %v5185 = vand.u32 %v4809, 4294901760
    %5186 = vmatmul.mubr.f32.gmra.mrb[0].mxu0 %v5185
    %v5187 = vpop.f32.mrb[0].mxu0
    %v5188 = vadd.f32 %v5002, %v5187
    %v5189 = vpop.f32.mrb[0].mxu0
    %5190 = vmatprep.mubr.f32.mxu0 0.0
    %v5191 = vand.u32 %v4812, 4294901760
    %5192 = vmatmul.mubr.f32.gmra.mrb[0].mxu0 %v5191
    %v5193 = vpop.f32.mrb[0].mxu0
    %v5194 = vadd.f32 %v5012, %v5193
    %v5195 = vpop.f32.mrb[0].mxu0
    %5196 = vmatprep.mubr.f32.mxu0 0.0
    %v5197 = vand.u32 %v4815, 4294901760
    %5198 = vmatmul.mubr.f32.gmra.mrb[0].mxu0 %v5197
    %v5199 = vpop.f32.mrb[0].mxu0
    %v5200 = vadd.f32 %v5022, %v5199
    %v5201 = vpop.f32.mrb[0].mxu0
    %5202 = vmatprep.mubr.f32.mxu0 0.0
    %v5203 = vand.u32 %v4818, 4294901760
    %5204 = vmatmul.mubr.f32.gmra.mrb[0].mxu0 %v5203
    %v5205 = vpop.f32.mrb[0].mxu0
    %v5206 = vadd.f32 %v5032, %v5205
    %v5207 = vpop.f32.mrb[0].mxu0
    %5208 = vmatprep.mubr.f32.mxu0 0.0
    %v5209 = vand.u32 %v4821, 4294901760
    %5210 = vmatmul.mubr.f32.gmra.mrb[0].mxu0 %v5209
    %v5211 = vpop.f32.mrb[0].mxu0
    %v5212 = vadd.f32 %v5042, %v5211
    %v5213 = vpop.f32.mrb[0].mxu0
    %5214 = vmatprep.mubr.f32.mxu0 0.0
    %v5215 = vand.u32 %v4824, 4294901760
    %5216 = vmatmul.mubr.f32.gmra.mrb[0].mxu0 %v5215
    %v5217 = vpop.f32.mrb[0].mxu0
    %v5218 = vadd.f32 %v5052, %v5217
    %v5219 = vpop.f32.mrb[0].mxu0
    %5220 = vdwg.mxu0
    %5221 = vmatprep.subr.mxu0 0.0
    %v5222 = vand.u32 %v4827, 4294901760
    %v5223 = vsub.f32 %v4827, %v5222
    %5224 = vmatpush1.msra.mxu0 %v5223
    %5225 = vmatprep.subr.mxu0 0.0
    %5226 = vmatpush1.msra.mxu0 0.0
    %5227 = vmatprep.subr.mxu0 0.0
    %5228 = vmatpush1.msra.mxu0 0.0
    %5229 = vmatprep.subr.mxu0 0.0
    %5230 = vmatpush1.msra.mxu0 0.0
    %5231 = vmatprep.subr.mxu0 0.0
    %5232 = vmatpush1.msra.mxu0 0.0
    %5233 = vmatprep.subr.mxu0 0.0
    %5234 = vmatpush1.msra.mxu0 0.0
    %5235 = vmatprep.subr.mxu0 0.0
    %5236 = vmatpush1.msra.mxu0 0.0
    %5237 = vmatprep.subr.mxu0 0.0
    %5238 = vmatpush1.msra.mxu0 0.0
    %5239 = vmatprep.subr.mxu0 0.0
    %5240 = vmatpush1.msra.mxu0 0.0
    %5241 = vmatprep.subr.mxu0 0.0
    %5242 = vmatpush1.msra.mxu0 0.0
    %5243 = vmatprep.subr.mxu0 0.0
    %5244 = vmatpush1.msra.mxu0 0.0
    %5245 = vmatprep.subr.mxu0 0.0
    %5246 = vmatpush1.msra.mxu0 0.0
    %5247 = vmatprep.subr.mxu0 0.0
    %5248 = vmatpush1.msra.mxu0 0.0
    %5249 = vmatprep.subr.mxu0 0.0
    %5250 = vmatpush1.msra.mxu0 0.0
    %5251 = vmatprep.subr.mxu0 0.0
    %5252 = vmatpush1.msra.mxu0 0.0
    %5253 = vmatprep.subr.mxu0 0.0
    %5254 = vmatpush1.msra.mxu0 0.0
    %5255 = vmatprep.subr.mxu0 0.0
    %5256 = vmatpush1.msra.mxu0 0.0
    %5257 = vmatprep.subr.mxu0 0.0
    %5258 = vmatpush1.msra.mxu0 0.0
    %5259 = vmatprep.subr.mxu0 0.0
    %5260 = vmatpush1.msra.mxu0 0.0
    %5261 = vmatprep.subr.mxu0 0.0
    %5262 = vmatpush1.msra.mxu0 0.0
    %5263 = vmatprep.subr.mxu0 0.0
    %5264 = vmatpush1.msra.mxu0 0.0
    %5265 = vmatprep.subr.mxu0 0.0
    %5266 = vmatpush1.msra.mxu0 0.0
    %5267 = vmatprep.subr.mxu0 0.0
    %5268 = vmatpush1.msra.mxu0 0.0
    %5269 = vmatprep.subr.mxu0 0.0
    %5270 = vmatpush1.msra.mxu0 0.0
    %5271 = vmatprep.subr.mxu0 0.0
    %5272 = vmatpush1.msra.mxu0 0.0
    %5273 = vmatprep.subr.mxu0 0.0
    %5274 = vmatpush1.msra.mxu0 0.0
    %5275 = vmatprep.subr.mxu0 0.0
    %5276 = vmatpush1.msra.mxu0 0.0
    %5277 = vmatprep.subr.mxu0 0.0
    %5278 = vmatpush1.msra.mxu0 0.0
    %5279 = vmatprep.subr.mxu0 0.0
    %5280 = vmatpush1.msra.mxu0 0.0
    %5281 = vmatprep.subr.mxu0 0.0
    %5282 = vmatpush1.msra.mxu0 0.0
    %5283 = vmatprep.subr.mxu0 0.0
    %5284 = vmatpush1.msra.mxu0 0.0
    %5285 = vmatprep.subr.mxu0 0.0
    %5286 = vmatpush1.msra.mxu0 0.0
    %5287 = vmatprep.mubr.f32.mxu0 0.0
    %v5288 = vand.u32 %v4779, 4294901760
    %v5289 = vsub.f32 %v4779, %v5288
    %5290 = vmatmul.mubr.f32.gmra.mrb[0].mxu0 %v5289
    %v5291 = vpop.f32.mrb[0].mxu0
    %v5292 = vadd.f32 %v5128, %v5291
    %v5293 = vpop.f32.mrb[0].mxu0
    %5294 = vmatprep.mubr.f32.mxu0 0.0
    %v5295 = vand.u32 %v4782, 4294901760
    %v5296 = vsub.f32 %v4782, %v5295
    %5297 = vmatmul.mubr.f32.gmra.mrb[0].mxu0 %v5296
    %v5298 = vpop.f32.mrb[0].mxu0
    %v5299 = vadd.f32 %v5134, %v5298
    %v5300 = vpop.f32.mrb[0].mxu0
    %5301 = vmatprep.mubr.f32.mxu0 0.0
    %v5302 = vand.u32 %v4785, 4294901760
    %v5303 = vsub.f32 %v4785, %v5302
    %5304 = vmatmul.mubr.f32.gmra.mrb[0].mxu0 %v5303
    %v5305 = vpop.f32.mrb[0].mxu0
    %v5306 = vadd.f32 %v5140, %v5305
    %v5307 = vpop.f32.mrb[0].mxu0
    %5308 = vmatprep.mubr.f32.mxu0 0.0
    %v5309 = vand.u32 %v4788, 4294901760
    %v5310 = vsub.f32 %v4788, %v5309
    %5311 = vmatmul.mubr.f32.gmra.mrb[0].mxu0 %v5310
    %v5312 = vpop.f32.mrb[0].mxu0
    %v5313 = vadd.f32 %v5146, %v5312
    %v5314 = vpop.f32.mrb[0].mxu0
    %5315 = vmatprep.mubr.f32.mxu0 0.0
    %v5316 = vand.u32 %v4791, 4294901760
    %v5317 = vsub.f32 %v4791, %v5316
    %5318 = vmatmul.mubr.f32.gmra.mrb[0].mxu0 %v5317
    %v5319 = vpop.f32.mrb[0].mxu0
    %v5320 = vadd.f32 %v5152, %v5319
    %v5321 = vpop.f32.mrb[0].mxu0
    %5322 = vmatprep.mubr.f32.mxu0 0.0
    %v5323 = vand.u32 %v4794, 4294901760
    %v5324 = vsub.f32 %v4794, %v5323
    %5325 = vmatmul.mubr.f32.gmra.mrb[0].mxu0 %v5324
    %v5326 = vpop.f32.mrb[0].mxu0
    %v5327 = vadd.f32 %v5158, %v5326
    %v5328 = vpop.f32.mrb[0].mxu0
    %5329 = vmatprep.mubr.f32.mxu0 0.0
    %v5330 = vand.u32 %v4797, 4294901760
    %v5331 = vsub.f32 %v4797, %v5330
    %5332 = vmatmul.mubr.f32.gmra.mrb[0].mxu0 %v5331
    %v5333 = vpop.f32.mrb[0].mxu0
    %v5334 = vadd.f32 %v5164, %v5333
    %v5335 = vpop.f32.mrb[0].mxu0
    %5336 = vmatprep.mubr.f32.mxu0 0.0
    %v5337 = vand.u32 %v4800, 4294901760
    %v5338 = vsub.f32 %v4800, %v5337
    %5339 = vmatmul.mubr.f32.gmra.mrb[0].mxu0 %v5338
    %v5340 = vpop.f32.mrb[0].mxu0
    %v5341 = vadd.f32 %v5170, %v5340
    %v5342 = vpop.f32.mrb[0].mxu0
    %5343 = vmatprep.mubr.f32.mxu0 0.0
    %v5344 = vand.u32 %v4803, 4294901760
    %v5345 = vsub.f32 %v4803, %v5344
    %5346 = vmatmul.mubr.f32.gmra.mrb[0].mxu0 %v5345
    %v5347 = vpop.f32.mrb[0].mxu0
    %v5348 = vadd.f32 %v5176, %v5347
    %v5349 = vpop.f32.mrb[0].mxu0
    %5350 = vmatprep.mubr.f32.mxu0 0.0
    %v5351 = vand.u32 %v4806, 4294901760
    %v5352 = vsub.f32 %v4806, %v5351
    %5353 = vmatmul.mubr.f32.gmra.mrb[0].mxu0 %v5352
    %v5354 = vpop.f32.mrb[0].mxu0
    %v5355 = vadd.f32 %v5182, %v5354
    %v5356 = vpop.f32.mrb[0].mxu0
    %5357 = vmatprep.mubr.f32.mxu0 0.0
    %v5358 = vand.u32 %v4809, 4294901760
    %v5359 = vsub.f32 %v4809, %v5358
    %5360 = vmatmul.mubr.f32.gmra.mrb[0].mxu0 %v5359
    %v5361 = vpop.f32.mrb[0].mxu0
    %v5362 = vadd.f32 %v5188, %v5361
    %v5363 = vpop.f32.mrb[0].mxu0
    %5364 = vmatprep.mubr.f32.mxu0 0.0
    %v5365 = vand.u32 %v4812, 4294901760
    %v5366 = vsub.f32 %v4812, %v5365
    %5367 = vmatmul.mubr.f32.gmra.mrb[0].mxu0 %v5366
    %v5368 = vpop.f32.mrb[0].mxu0
    %v5369 = vadd.f32 %v5194, %v5368
    %v5370 = vpop.f32.mrb[0].mxu0
    %5371 = vmatprep.mubr.f32.mxu0 0.0
    %v5372 = vand.u32 %v4815, 4294901760
    %v5373 = vsub.f32 %v4815, %v5372
    %5374 = vmatmul.mubr.f32.gmra.mrb[0].mxu0 %v5373
    %v5375 = vpop.f32.mrb[0].mxu0
    %v5376 = vadd.f32 %v5200, %v5375
    %v5377 = vpop.f32.mrb[0].mxu0
    %5378 = vmatprep.mubr.f32.mxu0 0.0
    %v5379 = vand.u32 %v4818, 4294901760
    %v5380 = vsub.f32 %v4818, %v5379
    %5381 = vmatmul.mubr.f32.gmra.mrb[0].mxu0 %v5380
    %v5382 = vpop.f32.mrb[0].mxu0
    %v5383 = vadd.f32 %v5206, %v5382
    %v5384 = vpop.f32.mrb[0].mxu0
    %5385 = vmatprep.mubr.f32.mxu0 0.0
    %v5386 = vand.u32 %v4821, 4294901760
    %v5387 = vsub.f32 %v4821, %v5386
    %5388 = vmatmul.mubr.f32.gmra.mrb[0].mxu0 %v5387
    %v5389 = vpop.f32.mrb[0].mxu0
    %v5390 = vadd.f32 %v5212, %v5389
    %v5391 = vpop.f32.mrb[0].mxu0
    %5392 = vmatprep.mubr.f32.mxu0 0.0
    %v5393 = vand.u32 %v4824, 4294901760
    %v5394 = vsub.f32 %v4824, %v5393
    %5395 = vmatmul.mubr.f32.gmra.mrb[0].mxu0 %v5394
    %v5396 = vpop.f32.mrb[0].mxu0
    %v5397 = vadd.f32 %v5218, %v5396
    %v5398 = vpop.f32.mrb[0].mxu0
    %5399 = vdwg.mxu0
    %5400 = vmatprep.subr.mxu0 0.0
    %v5401 = vand.u32 %v4827, 4294901760
    %5402 = vmatpush1.msra.mxu0 %v5401
    %5403 = vmatprep.subr.mxu0 0.0
    %5404 = vmatpush1.msra.mxu0 0.0
    %5405 = vmatprep.subr.mxu0 0.0
    %5406 = vmatpush1.msra.mxu0 0.0
    %5407 = vmatprep.subr.mxu0 0.0
    %5408 = vmatpush1.msra.mxu0 0.0
    %5409 = vmatprep.subr.mxu0 0.0
    %5410 = vmatpush1.msra.mxu0 0.0
    %5411 = vmatprep.subr.mxu0 0.0
    %5412 = vmatpush1.msra.mxu0 0.0
    %5413 = vmatprep.subr.mxu0 0.0
    %5414 = vmatpush1.msra.mxu0 0.0
    %5415 = vmatprep.subr.mxu0 0.0
    %5416 = vmatpush1.msra.mxu0 0.0
    %5417 = vmatprep.subr.mxu0 0.0
    %5418 = vmatpush1.msra.mxu0 0.0
    %5419 = vmatprep.subr.mxu0 0.0
    %5420 = vmatpush1.msra.mxu0 0.0
    %5421 = vmatprep.subr.mxu0 0.0
    %5422 = vmatpush1.msra.mxu0 0.0
    %5423 = vmatprep.subr.mxu0 0.0
    %5424 = vmatpush1.msra.mxu0 0.0
    %5425 = vmatprep.subr.mxu0 0.0
    %5426 = vmatpush1.msra.mxu0 0.0
    %5427 = vmatprep.subr.mxu0 0.0
    %5428 = vmatpush1.msra.mxu0 0.0
    %5429 = vmatprep.subr.mxu0 0.0
    %5430 = vmatpush1.msra.mxu0 0.0
    %5431 = vmatprep.subr.mxu0 0.0
    %5432 = vmatpush1.msra.mxu0 0.0
    %5433 = vmatprep.subr.mxu0 0.0
    %5434 = vmatpush1.msra.mxu0 0.0
    %5435 = vmatprep.subr.mxu0 0.0
    %5436 = vmatpush1.msra.mxu0 0.0
    %5437 = vmatprep.subr.mxu0 0.0
    %5438 = vmatpush1.msra.mxu0 0.0
    %5439 = vmatprep.subr.mxu0 0.0
    %5440 = vmatpush1.msra.mxu0 0.0
    %5441 = vmatprep.subr.mxu0 0.0
    %5442 = vmatpush1.msra.mxu0 0.0
    %5443 = vmatprep.subr.mxu0 0.0
    %5444 = vmatpush1.msra.mxu0 0.0
    %5445 = vmatprep.subr.mxu0 0.0
    %5446 = vmatpush1.msra.mxu0 0.0
    %5447 = vmatprep.subr.mxu0 0.0
    %5448 = vmatpush1.msra.mxu0 0.0
    %5449 = vmatprep.subr.mxu0 0.0
    %5450 = vmatpush1.msra.mxu0 0.0
    %5451 = vmatprep.subr.mxu0 0.0
    %5452 = vmatpush1.msra.mxu0 0.0
    %5453 = vmatprep.subr.mxu0 0.0
    %5454 = vmatpush1.msra.mxu0 0.0
    %5455 = vmatprep.subr.mxu0 0.0
    %5456 = vmatpush1.msra.mxu0 0.0
    %5457 = vmatprep.subr.mxu0 0.0
    %5458 = vmatpush1.msra.mxu0 0.0
    %5459 = vmatprep.subr.mxu0 0.0
    %5460 = vmatpush1.msra.mxu0 0.0
    %5461 = vmatprep.subr.mxu0 0.0
    %5462 = vmatpush1.msra.mxu0 0.0
    %5463 = vmatprep.subr.mxu0 0.0
    %5464 = vmatpush1.msra.mxu0 0.0
    %5465 = vmatprep.mubr.f32.mxu0 0.0
    %v5466 = vand.u32 %v4779, 4294901760
    %v5467 = vsub.f32 %v4779, %v5466
    %v5468 = vand.u32 %v5467, 4294901760
    %5469 = vmatmul.mubr.f32.gmra.mrb[0].mxu0 %v5468
    %v5470 = vpop.f32.mrb[0].mxu0
    %v5471 = vadd.f32 %v5292, %v5470
    %v5472 = vpop.f32.mrb[0].mxu0
    %5473 = vmatprep.mubr.f32.mxu0 0.0
    %v5474 = vand.u32 %v4782, 4294901760
    %v5475 = vsub.f32 %v4782, %v5474
    %v5476 = vand.u32 %v5475, 4294901760
    %5477 = vmatmul.mubr.f32.gmra.mrb[0].mxu0 %v5476
    %v5478 = vpop.f32.mrb[0].mxu0
    %v5479 = vadd.f32 %v5299, %v5478
    %v5480 = vpop.f32.mrb[0].mxu0
    %5481 = vmatprep.mubr.f32.mxu0 0.0
    %v5482 = vand.u32 %v4785, 4294901760
    %v5483 = vsub.f32 %v4785, %v5482
    %v5484 = vand.u32 %v5483, 4294901760
    %5485 = vmatmul.mubr.f32.gmra.mrb[0].mxu0 %v5484
    %v5486 = vpop.f32.mrb[0].mxu0
    %v5487 = vadd.f32 %v5306, %v5486
    %v5488 = vpop.f32.mrb[0].mxu0
    %5489 = vmatprep.mubr.f32.mxu0 0.0
    %v5490 = vand.u32 %v4788, 4294901760
    %v5491 = vsub.f32 %v4788, %v5490
    %v5492 = vand.u32 %v5491, 4294901760
    %5493 = vmatmul.mubr.f32.gmra.mrb[0].mxu0 %v5492
    %v5494 = vpop.f32.mrb[0].mxu0
    %v5495 = vadd.f32 %v5313, %v5494
    %v5496 = vpop.f32.mrb[0].mxu0
    %5497 = vmatprep.mubr.f32.mxu0 0.0
    %v5498 = vand.u32 %v4791, 4294901760
    %v5499 = vsub.f32 %v4791, %v5498
    %v5500 = vand.u32 %v5499, 4294901760
    %5501 = vmatmul.mubr.f32.gmra.mrb[0].mxu0 %v5500
    %v5502 = vpop.f32.mrb[0].mxu0
    %v5503 = vadd.f32 %v5320, %v5502
    %v5504 = vpop.f32.mrb[0].mxu0
    %5505 = vmatprep.mubr.f32.mxu0 0.0
    %v5506 = vand.u32 %v4794, 4294901760
    %v5507 = vsub.f32 %v4794, %v5506
    %v5508 = vand.u32 %v5507, 4294901760
    %5509 = vmatmul.mubr.f32.gmra.mrb[0].mxu0 %v5508
    %v5510 = vpop.f32.mrb[0].mxu0
    %v5511 = vadd.f32 %v5327, %v5510
    %v5512 = vpop.f32.mrb[0].mxu0
    %5513 = vmatprep.mubr.f32.mxu0 0.0
    %v5514 = vand.u32 %v4797, 4294901760
    %v5515 = vsub.f32 %v4797, %v5514
    %v5516 = vand.u32 %v5515, 4294901760
    %5517 = vmatmul.mubr.f32.gmra.mrb[0].mxu0 %v5516
    %v5518 = vpop.f32.mrb[0].mxu0
    %v5519 = vadd.f32 %v5334, %v5518
    %v5520 = vpop.f32.mrb[0].mxu0
    %5521 = vmatprep.mubr.f32.mxu0 0.0
    %v5522 = vand.u32 %v4800, 4294901760
    %v5523 = vsub.f32 %v4800, %v5522
    %v5524 = vand.u32 %v5523, 4294901760
    %5525 = vmatmul.mubr.f32.gmra.mrb[0].mxu0 %v5524
    %v5526 = vpop.f32.mrb[0].mxu0
    %v5527 = vadd.f32 %v5341, %v5526
    %v5528 = vpop.f32.mrb[0].mxu0
    %5529 = vmatprep.mubr.f32.mxu0 0.0
    %v5530 = vand.u32 %v4803, 4294901760
    %v5531 = vsub.f32 %v4803, %v5530
    %v5532 = vand.u32 %v5531, 4294901760
    %5533 = vmatmul.mubr.f32.gmra.mrb[0].mxu0 %v5532
    %v5534 = vpop.f32.mrb[0].mxu0
    %v5535 = vadd.f32 %v5348, %v5534
    %v5536 = vpop.f32.mrb[0].mxu0
    %5537 = vmatprep.mubr.f32.mxu0 0.0
    %v5538 = vand.u32 %v4806, 4294901760
    %v5539 = vsub.f32 %v4806, %v5538
    %v5540 = vand.u32 %v5539, 4294901760
    %5541 = vmatmul.mubr.f32.gmra.mrb[0].mxu0 %v5540
    %v5542 = vpop.f32.mrb[0].mxu0
    %v5543 = vadd.f32 %v5355, %v5542
    %v5544 = vpop.f32.mrb[0].mxu0
    %5545 = vmatprep.mubr.f32.mxu0 0.0
    %v5546 = vand.u32 %v4809, 4294901760
    %v5547 = vsub.f32 %v4809, %v5546
    %v5548 = vand.u32 %v5547, 4294901760
    %5549 = vmatmul.mubr.f32.gmra.mrb[0].mxu0 %v5548
    %v5550 = vpop.f32.mrb[0].mxu0
    %v5551 = vadd.f32 %v5362, %v5550
    %v5552 = vpop.f32.mrb[0].mxu0
    %5553 = vmatprep.mubr.f32.mxu0 0.0
    %v5554 = vand.u32 %v4812, 4294901760
    %v5555 = vsub.f32 %v4812, %v5554
    %v5556 = vand.u32 %v5555, 4294901760
    %5557 = vmatmul.mubr.f32.gmra.mrb[0].mxu0 %v5556
    %v5558 = vpop.f32.mrb[0].mxu0
    %v5559 = vadd.f32 %v5369, %v5558
    %v5560 = vpop.f32.mrb[0].mxu0
    %5561 = vmatprep.mubr.f32.mxu0 0.0
    %v5562 = vand.u32 %v4815, 4294901760
    %v5563 = vsub.f32 %v4815, %v5562
    %v5564 = vand.u32 %v5563, 4294901760
    %5565 = vmatmul.mubr.f32.gmra.mrb[0].mxu0 %v5564
    %v5566 = vpop.f32.mrb[0].mxu0
    %v5567 = vadd.f32 %v5376, %v5566
    %v5568 = vpop.f32.mrb[0].mxu0
    %5569 = vmatprep.mubr.f32.mxu0 0.0
    %v5570 = vand.u32 %v4818, 4294901760
    %v5571 = vsub.f32 %v4818, %v5570
    %v5572 = vand.u32 %v5571, 4294901760
    %5573 = vmatmul.mubr.f32.gmra.mrb[0].mxu0 %v5572
    %v5574 = vpop.f32.mrb[0].mxu0
    %v5575 = vadd.f32 %v5383, %v5574
    %v5576 = vpop.f32.mrb[0].mxu0
    %5577 = vmatprep.mubr.f32.mxu0 0.0
    %v5578 = vand.u32 %v4821, 4294901760
    %v5579 = vsub.f32 %v4821, %v5578
    %v5580 = vand.u32 %v5579, 4294901760
    %5581 = vmatmul.mubr.f32.gmra.mrb[0].mxu0 %v5580
    %v5582 = vpop.f32.mrb[0].mxu0
    %v5583 = vadd.f32 %v5390, %v5582
    %v5584 = vpop.f32.mrb[0].mxu0
    %5585 = vmatprep.mubr.f32.mxu0 0.0
    %v5586 = vand.u32 %v4824, 4294901760
    %v5587 = vsub.f32 %v4824, %v5586
    %v5588 = vand.u32 %v5587, 4294901760
    %5589 = vmatmul.mubr.f32.gmra.mrb[0].mxu0 %v5588
    %v5590 = vpop.f32.mrb[0].mxu0
    %v5591 = vadd.f32 %v5397, %v5590
    %v5592 = vpop.f32.mrb[0].mxu0
    %5593 = vdwg.mxu0
    %5594 = vmatprep.subr.mxu0 0.0
    %v5595 = vand.u32 %v4827, 4294901760
    %v5596 = vsub.f32 %v4827, %v5595
    %v5597 = vand.u32 %v5596, 4294901760
    %5598 = vmatpush1.msra.mxu0 %v5597
    %5599 = vmatprep.subr.mxu0 0.0
    %5600 = vmatpush1.msra.mxu0 0.0
    %5601 = vmatprep.subr.mxu0 0.0
    %5602 = vmatpush1.msra.mxu0 0.0
    %5603 = vmatprep.subr.mxu0 0.0
    %5604 = vmatpush1.msra.mxu0 0.0
    %5605 = vmatprep.subr.mxu0 0.0
    %5606 = vmatpush1.msra.mxu0 0.0
    %5607 = vmatprep.subr.mxu0 0.0
    %5608 = vmatpush1.msra.mxu0 0.0
    %5609 = vmatprep.subr.mxu0 0.0
    %5610 = vmatpush1.msra.mxu0 0.0
    %5611 = vmatprep.subr.mxu0 0.0
    %5612 = vmatpush1.msra.mxu0 0.0
    %5613 = vmatprep.subr.mxu0 0.0
    %5614 = vmatpush1.msra.mxu0 0.0
    %5615 = vmatprep.subr.mxu0 0.0
    %5616 = vmatpush1.msra.mxu0 0.0
    %5617 = vmatprep.subr.mxu0 0.0
    %5618 = vmatpush1.msra.mxu0 0.0
    %5619 = vmatprep.subr.mxu0 0.0
    %5620 = vmatpush1.msra.mxu0 0.0
    %5621 = vmatprep.subr.mxu0 0.0
    %5622 = vmatpush1.msra.mxu0 0.0
    %5623 = vmatprep.subr.mxu0 0.0
    %5624 = vmatpush1.msra.mxu0 0.0
    %5625 = vmatprep.subr.mxu0 0.0
    %5626 = vmatpush1.msra.mxu0 0.0
    %5627 = vmatprep.subr.mxu0 0.0
    %5628 = vmatpush1.msra.mxu0 0.0
    %5629 = vmatprep.subr.mxu0 0.0
    %5630 = vmatpush1.msra.mxu0 0.0
    %5631 = vmatprep.subr.mxu0 0.0
    %5632 = vmatpush1.msra.mxu0 0.0
    %5633 = vmatprep.subr.mxu0 0.0
    %5634 = vmatpush1.msra.mxu0 0.0
    %5635 = vmatprep.subr.mxu0 0.0
    %5636 = vmatpush1.msra.mxu0 0.0
    %5637 = vmatprep.subr.mxu0 0.0
    %5638 = vmatpush1.msra.mxu0 0.0
    %5639 = vmatprep.subr.mxu0 0.0
    %5640 = vmatpush1.msra.mxu0 0.0
    %5641 = vmatprep.subr.mxu0 0.0
    %5642 = vmatpush1.msra.mxu0 0.0
    %5643 = vmatprep.subr.mxu0 0.0
    %5644 = vmatpush1.msra.mxu0 0.0
    %5645 = vmatprep.subr.mxu0 0.0
    %5646 = vmatpush1.msra.mxu0 0.0
    %5647 = vmatprep.subr.mxu0 0.0
    %5648 = vmatpush1.msra.mxu0 0.0
    %5649 = vmatprep.subr.mxu0 0.0
    %5650 = vmatpush1.msra.mxu0 0.0
    %5651 = vmatprep.subr.mxu0 0.0
    %5652 = vmatpush1.msra.mxu0 0.0
    %5653 = vmatprep.subr.mxu0 0.0
    %5654 = vmatpush1.msra.mxu0 0.0
    %5655 = vmatprep.subr.mxu0 0.0
    %5656 = vmatpush1.msra.mxu0 0.0
    %5657 = vmatprep.subr.mxu0 0.0
    %5658 = vmatpush1.msra.mxu0 0.0
    %5659 = vmatprep.subr.mxu0 0.0
    %5660 = vmatpush1.msra.mxu0 0.0
    %5661 = vmatprep.mubr.f32.mxu0 0.0
    %v5662 = vand.u32 %v4779, 4294901760
    %5663 = vmatmul.mubr.f32.gmra.mrb[0].mxu0 %v5662
    %v5664 = vpop.f32.mrb[0].mxu0
    %v5665 = vadd.f32 %v5471, %v5664
    %v5666 = vpop.f32.mrb[0].mxu0
    %5667 = vmatprep.mubr.f32.mxu0 0.0
    %v5668 = vand.u32 %v4782, 4294901760
    %5669 = vmatmul.mubr.f32.gmra.mrb[0].mxu0 %v5668
    %v5670 = vpop.f32.mrb[0].mxu0
    %v5671 = vadd.f32 %v5479, %v5670
    %v5672 = vpop.f32.mrb[0].mxu0
    %5673 = vmatprep.mubr.f32.mxu0 0.0
    %v5674 = vand.u32 %v4785, 4294901760
    %5675 = vmatmul.mubr.f32.gmra.mrb[0].mxu0 %v5674
    %v5676 = vpop.f32.mrb[0].mxu0
    %v5677 = vadd.f32 %v5487, %v5676
    %v5678 = vpop.f32.mrb[0].mxu0
    %5679 = vmatprep.mubr.f32.mxu0 0.0
    %v5680 = vand.u32 %v4788, 4294901760
    %5681 = vmatmul.mubr.f32.gmra.mrb[0].mxu0 %v5680
    %v5682 = vpop.f32.mrb[0].mxu0
    %v5683 = vadd.f32 %v5495, %v5682
    %v5684 = vpop.f32.mrb[0].mxu0
    %5685 = vmatprep.mubr.f32.mxu0 0.0
    %v5686 = vand.u32 %v4791, 4294901760
    %5687 = vmatmul.mubr.f32.gmra.mrb[0].mxu0 %v5686
    %v5688 = vpop.f32.mrb[0].mxu0
    %v5689 = vadd.f32 %v5503, %v5688
    %v5690 = vpop.f32.mrb[0].mxu0
    %5691 = vmatprep.mubr.f32.mxu0 0.0
    %v5692 = vand.u32 %v4794, 4294901760
    %5693 = vmatmul.mubr.f32.gmra.mrb[0].mxu0 %v5692
    %v5694 = vpop.f32.mrb[0].mxu0
    %v5695 = vadd.f32 %v5511, %v5694
    %v5696 = vpop.f32.mrb[0].mxu0
    %5697 = vmatprep.mubr.f32.mxu0 0.0
    %v5698 = vand.u32 %v4797, 4294901760
    %5699 = vmatmul.mubr.f32.gmra.mrb[0].mxu0 %v5698
    %v5700 = vpop.f32.mrb[0].mxu0
    %v5701 = vadd.f32 %v5519, %v5700
    %v5702 = vpop.f32.mrb[0].mxu0
    %5703 = vmatprep.mubr.f32.mxu0 0.0
    %v5704 = vand.u32 %v4800, 4294901760
    %5705 = vmatmul.mubr.f32.gmra.mrb[0].mxu0 %v5704
    %v5706 = vpop.f32.mrb[0].mxu0
    %v5707 = vadd.f32 %v5527, %v5706
    %v5708 = vpop.f32.mrb[0].mxu0
    %5709 = vmatprep.mubr.f32.mxu0 0.0
    %v5710 = vand.u32 %v4803, 4294901760
    %5711 = vmatmul.mubr.f32.gmra.mrb[0].mxu0 %v5710
    %v5712 = vpop.f32.mrb[0].mxu0
    %v5713 = vadd.f32 %v5535, %v5712
    %v5714 = vpop.f32.mrb[0].mxu0
    %5715 = vmatprep.mubr.f32.mxu0 0.0
    %v5716 = vand.u32 %v4806, 4294901760
    %5717 = vmatmul.mubr.f32.gmra.mrb[0].mxu0 %v5716
    %v5718 = vpop.f32.mrb[0].mxu0
    %v5719 = vadd.f32 %v5543, %v5718
    %v5720 = vpop.f32.mrb[0].mxu0
    %5721 = vmatprep.mubr.f32.mxu0 0.0
    %v5722 = vand.u32 %v4809, 4294901760
    %5723 = vmatmul.mubr.f32.gmra.mrb[0].mxu0 %v5722
    %v5724 = vpop.f32.mrb[0].mxu0
    %v5725 = vadd.f32 %v5551, %v5724
    %v5726 = vpop.f32.mrb[0].mxu0
    %5727 = vmatprep.mubr.f32.mxu0 0.0
    %v5728 = vand.u32 %v4812, 4294901760
    %5729 = vmatmul.mubr.f32.gmra.mrb[0].mxu0 %v5728
    %v5730 = vpop.f32.mrb[0].mxu0
    %v5731 = vadd.f32 %v5559, %v5730
    %v5732 = vpop.f32.mrb[0].mxu0
    %5733 = vmatprep.mubr.f32.mxu0 0.0
    %v5734 = vand.u32 %v4815, 4294901760
    %5735 = vmatmul.mubr.f32.gmra.mrb[0].mxu0 %v5734
    %v5736 = vpop.f32.mrb[0].mxu0
    %v5737 = vadd.f32 %v5567, %v5736
    %v5738 = vpop.f32.mrb[0].mxu0
    %5739 = vmatprep.mubr.f32.mxu0 0.0
    %v5740 = vand.u32 %v4818, 4294901760
    %5741 = vmatmul.mubr.f32.gmra.mrb[0].mxu0 %v5740
    %v5742 = vpop.f32.mrb[0].mxu0
    %v5743 = vadd.f32 %v5575, %v5742
    %v5744 = vpop.f32.mrb[0].mxu0
    %5745 = vmatprep.mubr.f32.mxu0 0.0
    %v5746 = vand.u32 %v4821, 4294901760
    %5747 = vmatmul.mubr.f32.gmra.mrb[0].mxu0 %v5746
    %v5748 = vpop.f32.mrb[0].mxu0
    %v5749 = vadd.f32 %v5583, %v5748
    %v5750 = vpop.f32.mrb[0].mxu0
    %5751 = vmatprep.mubr.f32.mxu0 0.0
    %v5752 = vand.u32 %v4824, 4294901760
    %5753 = vmatmul.mubr.f32.gmra.mrb[0].mxu0 %v5752
    %v5754 = vpop.f32.mrb[0].mxu0
    %v5755 = vadd.f32 %v5591, %v5754
    %v5756 = vpop.f32.mrb[0].mxu0
    %5757 = vdwg.mxu0
    %5758 = vmatprep.subr.mxu0 0.0
    %v5759 = vand.u32 %v4827, 4294901760
    %5760 = vmatpush1.msra.mxu0 %v5759
    %5761 = vmatprep.subr.mxu0 0.0
    %5762 = vmatpush1.msra.mxu0 0.0
    %5763 = vmatprep.subr.mxu0 0.0
    %5764 = vmatpush1.msra.mxu0 0.0
    %5765 = vmatprep.subr.mxu0 0.0
    %5766 = vmatpush1.msra.mxu0 0.0
    %5767 = vmatprep.subr.mxu0 0.0
    %5768 = vmatpush1.msra.mxu0 0.0
    %5769 = vmatprep.subr.mxu0 0.0
    %5770 = vmatpush1.msra.mxu0 0.0
    %5771 = vmatprep.subr.mxu0 0.0
    %5772 = vmatpush1.msra.mxu0 0.0
    %5773 = vmatprep.subr.mxu0 0.0
    %5774 = vmatpush1.msra.mxu0 0.0
    %5775 = vmatprep.subr.mxu0 0.0
    %5776 = vmatpush1.msra.mxu0 0.0
    %5777 = vmatprep.subr.mxu0 0.0
    %5778 = vmatpush1.msra.mxu0 0.0
    %5779 = vmatprep.subr.mxu0 0.0
    %5780 = vmatpush1.msra.mxu0 0.0
    %5781 = vmatprep.subr.mxu0 0.0
    %5782 = vmatpush1.msra.mxu0 0.0
    %5783 = vmatprep.subr.mxu0 0.0
    %5784 = vmatpush1.msra.mxu0 0.0
    %5785 = vmatprep.subr.mxu0 0.0
    %5786 = vmatpush1.msra.mxu0 0.0
    %5787 = vmatprep.subr.mxu0 0.0
    %5788 = vmatpush1.msra.mxu0 0.0
    %5789 = vmatprep.subr.mxu0 0.0
    %5790 = vmatpush1.msra.mxu0 0.0
    %5791 = vmatprep.subr.mxu0 0.0
    %5792 = vmatpush1.msra.mxu0 0.0
    %5793 = vmatprep.subr.mxu0 0.0
    %5794 = vmatpush1.msra.mxu0 0.0
    %5795 = vmatprep.subr.mxu0 0.0
    %5796 = vmatpush1.msra.mxu0 0.0
    %5797 = vmatprep.subr.mxu0 0.0
    %5798 = vmatpush1.msra.mxu0 0.0
    %5799 = vmatprep.subr.mxu0 0.0
    %5800 = vmatpush1.msra.mxu0 0.0
    %5801 = vmatprep.subr.mxu0 0.0
    %5802 = vmatpush1.msra.mxu0 0.0
    %5803 = vmatprep.subr.mxu0 0.0
    %5804 = vmatpush1.msra.mxu0 0.0
    %5805 = vmatprep.subr.mxu0 0.0
    %5806 = vmatpush1.msra.mxu0 0.0
    %5807 = vmatprep.subr.mxu0 0.0
    %5808 = vmatpush1.msra.mxu0 0.0
    %5809 = vmatprep.subr.mxu0 0.0
    %5810 = vmatpush1.msra.mxu0 0.0
    %5811 = vmatprep.subr.mxu0 0.0
    %5812 = vmatpush1.msra.mxu0 0.0
    %5813 = vmatprep.subr.mxu0 0.0
    %5814 = vmatpush1.msra.mxu0 0.0
    %5815 = vmatprep.subr.mxu0 0.0
    %5816 = vmatpush1.msra.mxu0 0.0
    %5817 = vmatprep.subr.mxu0 0.0
    %5818 = vmatpush1.msra.mxu0 0.0
    %5819 = vmatprep.subr.mxu0 0.0
    %5820 = vmatpush1.msra.mxu0 0.0
    %5821 = vmatprep.subr.mxu0 0.0
    %5822 = vmatpush1.msra.mxu0 0.0
    %5823 = vmatprep.mubr.f32.mxu0 0.0
    %v5824 = vand.u32 %v4779, 4294901760
    %5825 = vmatmul.mubr.f32.gmra.mrb[0].mxu0 %v5824
    %v5826 = vpop.f32.mrb[0].mxu0
    %v5827 = vadd.f32 %v5665, %v5826
    %v5828 = vpop.f32.mrb[0].mxu0
    %5829 = vmatprep.mubr.f32.mxu0 0.0
    %v5830 = vand.u32 %v4782, 4294901760
    %5831 = vmatmul.mubr.f32.gmra.mrb[0].mxu0 %v5830
    %v5832 = vpop.f32.mrb[0].mxu0
    %v5833 = vadd.f32 %v5671, %v5832
    %v5834 = vpop.f32.mrb[0].mxu0
    %5835 = vmatprep.mubr.f32.mxu0 0.0
    %v5836 = vand.u32 %v4785, 4294901760
    %5837 = vmatmul.mubr.f32.gmra.mrb[0].mxu0 %v5836
    %v5838 = vpop.f32.mrb[0].mxu0
    %v5839 = vadd.f32 %v5677, %v5838
    %v5840 = vpop.f32.mrb[0].mxu0
    %5841 = vmatprep.mubr.f32.mxu0 0.0
    %v5842 = vand.u32 %v4788, 4294901760
    %5843 = vmatmul.mubr.f32.gmra.mrb[0].mxu0 %v5842
    %v5844 = vpop.f32.mrb[0].mxu0
    %v5845 = vadd.f32 %v5683, %v5844
    %v5846 = vpop.f32.mrb[0].mxu0
    %5847 = vmatprep.mubr.f32.mxu0 0.0
    %v5848 = vand.u32 %v4791, 4294901760
    %5849 = vmatmul.mubr.f32.gmra.mrb[0].mxu0 %v5848
    %v5850 = vpop.f32.mrb[0].mxu0
    %v5851 = vadd.f32 %v5689, %v5850
    %v5852 = vpop.f32.mrb[0].mxu0
    %5853 = vmatprep.mubr.f32.mxu0 0.0
    %v5854 = vand.u32 %v4794, 4294901760
    %5855 = vmatmul.mubr.f32.gmra.mrb[0].mxu0 %v5854
    %v5856 = vpop.f32.mrb[0].mxu0
    %v5857 = vadd.f32 %v5695, %v5856
    %v5858 = vpop.f32.mrb[0].mxu0
    %5859 = vmatprep.mubr.f32.mxu0 0.0
    %v5860 = vand.u32 %v4797, 4294901760
    %5861 = vmatmul.mubr.f32.gmra.mrb[0].mxu0 %v5860
    %v5862 = vpop.f32.mrb[0].mxu0
    %v5863 = vadd.f32 %v5701, %v5862
    %v5864 = vpop.f32.mrb[0].mxu0
    %5865 = vmatprep.mubr.f32.mxu0 0.0
    %v5866 = vand.u32 %v4800, 4294901760
    %5867 = vmatmul.mubr.f32.gmra.mrb[0].mxu0 %v5866
    %v5868 = vpop.f32.mrb[0].mxu0
    %v5869 = vadd.f32 %v5707, %v5868
    %v5870 = vpop.f32.mrb[0].mxu0
    %5871 = vmatprep.mubr.f32.mxu0 0.0
    %v5872 = vand.u32 %v4803, 4294901760
    %5873 = vmatmul.mubr.f32.gmra.mrb[0].mxu0 %v5872
    %v5874 = vpop.f32.mrb[0].mxu0
    %v5875 = vadd.f32 %v5713, %v5874
    %v5876 = vpop.f32.mrb[0].mxu0
    %5877 = vmatprep.mubr.f32.mxu0 0.0
    %v5878 = vand.u32 %v4806, 4294901760
    %5879 = vmatmul.mubr.f32.gmra.mrb[0].mxu0 %v5878
    %v5880 = vpop.f32.mrb[0].mxu0
    %v5881 = vadd.f32 %v5719, %v5880
    %v5882 = vpop.f32.mrb[0].mxu0
    %5883 = vmatprep.mubr.f32.mxu0 0.0
    %v5884 = vand.u32 %v4809, 4294901760
    %5885 = vmatmul.mubr.f32.gmra.mrb[0].mxu0 %v5884
    %v5886 = vpop.f32.mrb[0].mxu0
    %v5887 = vadd.f32 %v5725, %v5886
    %v5888 = vpop.f32.mrb[0].mxu0
    %5889 = vmatprep.mubr.f32.mxu0 0.0
    %v5890 = vand.u32 %v4812, 4294901760
    %5891 = vmatmul.mubr.f32.gmra.mrb[0].mxu0 %v5890
    %v5892 = vpop.f32.mrb[0].mxu0
    %v5893 = vadd.f32 %v5731, %v5892
    %v5894 = vpop.f32.mrb[0].mxu0
    %5895 = vmatprep.mubr.f32.mxu0 0.0
    %v5896 = vand.u32 %v4815, 4294901760
    %5897 = vmatmul.mubr.f32.gmra.mrb[0].mxu0 %v5896
    %v5898 = vpop.f32.mrb[0].mxu0
    %v5899 = vadd.f32 %v5737, %v5898
    %v5900 = vpop.f32.mrb[0].mxu0
    %5901 = vmatprep.mubr.f32.mxu0 0.0
    %v5902 = vand.u32 %v4818, 4294901760
    %5903 = vmatmul.mubr.f32.gmra.mrb[0].mxu0 %v5902
    %v5904 = vpop.f32.mrb[0].mxu0
    %v5905 = vadd.f32 %v5743, %v5904
    %v5906 = vpop.f32.mrb[0].mxu0
    %5907 = vmatprep.mubr.f32.mxu0 0.0
    %v5908 = vand.u32 %v4821, 4294901760
    %5909 = vmatmul.mubr.f32.gmra.mrb[0].mxu0 %v5908
    %v5910 = vpop.f32.mrb[0].mxu0
    %v5911 = vadd.f32 %v5749, %v5910
    %v5912 = vpop.f32.mrb[0].mxu0
    %5913 = vmatprep.mubr.f32.mxu0 0.0
    %v5914 = vand.u32 %v4824, 4294901760
    %5915 = vmatmul.mubr.f32.gmra.mrb[0].mxu0 %v5914
    %v5916 = vpop.f32.mrb[0].mxu0
    %v5917 = vadd.f32 %v5755, %v5916
    %v5918 = vpop.f32.mrb[0].mxu0
    %5919 = vdwg.mxu0
    %v5920 = vadd.f32 %v4762, %v5827
    %v5921 = vadd.f32 %v4763, %v5833
    %v5922 = vadd.f32 %v4764, %v5839
    %v5923 = vadd.f32 %v4765, %v5845
    %v5924 = vadd.f32 %v4766, %v5851
    %v5925 = vadd.f32 %v4767, %v5857
    %v5926 = vadd.f32 %v4768, %v5863
    %v5927 = vadd.f32 %v4769, %v5869
    %v5928 = vadd.f32 %v4770, %v5875
    %v5929 = vadd.f32 %v4771, %v5881
    %v5930 = vadd.f32 %v4772, %v5887
    %v5931 = vadd.f32 %v4773, %v5893
    %v5932 = vadd.f32 %v4774, %v5899
    %v5933 = vadd.f32 %v4775, %v5905
    %v5934 = vadd.f32 %v4776, %v5911
    %v5935 = vadd.f32 %v4777, %v5917
    %v5952 = vrot.slane %v43, 1
    %v5953 = vrot.slane %v44, 1
    %v5954 = vsel %vm2429, %v5952, %v5953
    %v5955 = vrot.slane %v45, 1
    %v5956 = vrot.slane %v46, 1
    %v5957 = vsel %vm2429, %v5955, %v5956
    %v5958 = vrot.slane %v47, 1
    %v5959 = vrot.slane %v48, 1
    %v5960 = vsel %vm2429, %v5958, %v5959
    %v5961 = vrot.slane %v49, 1
    %v5962 = vrot.slane %v50, 1
    %v5963 = vsel %vm2429, %v5961, %v5962
    %v5964 = vrot.slane %v51, 1
    %v5965 = vrot.slane %v52, 1
    %v5966 = vsel %vm2429, %v5964, %v5965
    %v5967 = vrot.slane %v53, 1
    %v5968 = vrot.slane %v54, 1
    %v5969 = vsel %vm2429, %v5967, %v5968
    %v5970 = vrot.slane %v55, 1
    %v5971 = vrot.slane %v56, 1
    %v5972 = vsel %vm2429, %v5970, %v5971
    %v5973 = vrot.slane %v57, 1
    %v5974 = vrot.slane %v58, 1
    %v5975 = vsel %vm2429, %v5973, %v5974
    %v5976 = vrot.slane %v94, 1
    %v5977 = vrot.slane %v95, 1
    %v5978 = vsel %vm2429, %v5976, %v5977
    %v5979 = vrot.slane %v96, 1
    %v5980 = vrot.slane %v97, 1
    %v5981 = vsel %vm2429, %v5979, %v5980
    %v5982 = vrot.slane %v98, 1
    %v5983 = vrot.slane %v99, 1
    %v5984 = vsel %vm2429, %v5982, %v5983
    %v5985 = vrot.slane %v100, 1
    %v5986 = vrot.slane %v101, 1
    %v5987 = vsel %vm2429, %v5985, %v5986
    %v5988 = vrot.slane %v102, 1
    %v5989 = vrot.slane %v103, 1
    %v5990 = vsel %vm2429, %v5988, %v5989
    %v5991 = vrot.slane %v104, 1
    %v5992 = vrot.slane %v105, 1
    %v5993 = vsel %vm2429, %v5991, %v5992
    %v5994 = vrot.slane %v106, 1
    %v5995 = vrot.slane %v107, 1
    %v5996 = vsel %vm2429, %v5994, %v5995
    %v5997 = vrot.slane %v108, 1
    %v5998 = vrot.slane %v109, 1
    %v5999 = vsel %vm2429, %v5997, %v5998
    %v6000 = vsel %vm127, %v5954, 0
    %v6002 = vsel %vm127, %v5957, 0
    %v6004 = vsel %vm127, %v5960, 0
    %v6006 = vsel %vm127, %v5963, 0
    %v6008 = vsel %vm127, %v5966, 0
    %v6010 = vsel %vm127, %v5969, 0
    %v6012 = vsel %vm127, %v5972, 0
    %v6014 = vsel %vm127, %v5975, 0
    %v6016 = vsel %vm127, %v5978, 0
    %v6018 = vsel %vm127, %v5981, 0
    %v6020 = vsel %vm127, %v5984, 0
    %v6022 = vsel %vm127, %v5987, 0
    %v6024 = vsel %vm127, %v5990, 0
    %v6026 = vsel %vm127, %v5993, 0
    %v6028 = vsel %vm127, %v5996, 0
    %v6030 = vsel %vm127, %v5999, 0
    %v6033 = vsel %vm176, %v123, 0
    %6035 = vmatprep.subr.mxu0 0.0
    %v6036 = vand.u32 %v6033, 4294901760
    %6037 = vmatpush1.msra.mxu0 %v6036
    %6038 = vmatprep.subr.mxu0 0.0
    %6039 = vmatpush1.msra.mxu0 0.0
    %6040 = vmatprep.subr.mxu0 0.0
    %6041 = vmatpush1.msra.mxu0 0.0
    %6042 = vmatprep.subr.mxu0 0.0
    %6043 = vmatpush1.msra.mxu0 0.0
    %6044 = vmatprep.subr.mxu0 0.0
    %6045 = vmatpush1.msra.mxu0 0.0
    %6046 = vmatprep.subr.mxu0 0.0
    %6047 = vmatpush1.msra.mxu0 0.0
    %6048 = vmatprep.subr.mxu0 0.0
    %6049 = vmatpush1.msra.mxu0 0.0
    %6050 = vmatprep.subr.mxu0 0.0
    %6051 = vmatpush1.msra.mxu0 0.0
    %6052 = vmatprep.subr.mxu0 0.0
    %6053 = vmatpush1.msra.mxu0 0.0
    %6054 = vmatprep.subr.mxu0 0.0
    %6055 = vmatpush1.msra.mxu0 0.0
    %6056 = vmatprep.subr.mxu0 0.0
    %6057 = vmatpush1.msra.mxu0 0.0
    %6058 = vmatprep.subr.mxu0 0.0
    %6059 = vmatpush1.msra.mxu0 0.0
    %6060 = vmatprep.subr.mxu0 0.0
    %6061 = vmatpush1.msra.mxu0 0.0
    %6062 = vmatprep.subr.mxu0 0.0
    %6063 = vmatpush1.msra.mxu0 0.0
    %6064 = vmatprep.subr.mxu0 0.0
    %6065 = vmatpush1.msra.mxu0 0.0
    %6066 = vmatprep.subr.mxu0 0.0
    %6067 = vmatpush1.msra.mxu0 0.0
    %6068 = vmatprep.subr.mxu0 0.0
    %6069 = vmatpush1.msra.mxu0 0.0
    %6070 = vmatprep.subr.mxu0 0.0
    %6071 = vmatpush1.msra.mxu0 0.0
    %6072 = vmatprep.subr.mxu0 0.0
    %6073 = vmatpush1.msra.mxu0 0.0
    %6074 = vmatprep.subr.mxu0 0.0
    %6075 = vmatpush1.msra.mxu0 0.0
    %6076 = vmatprep.subr.mxu0 0.0
    %6077 = vmatpush1.msra.mxu0 0.0
    %6078 = vmatprep.subr.mxu0 0.0
    %6079 = vmatpush1.msra.mxu0 0.0
    %6080 = vmatprep.subr.mxu0 0.0
    %6081 = vmatpush1.msra.mxu0 0.0
    %6082 = vmatprep.subr.mxu0 0.0
    %6083 = vmatpush1.msra.mxu0 0.0
    %6084 = vmatprep.subr.mxu0 0.0
    %6085 = vmatpush1.msra.mxu0 0.0
    %6086 = vmatprep.subr.mxu0 0.0
    %6087 = vmatpush1.msra.mxu0 0.0
    %6088 = vmatprep.subr.mxu0 0.0
    %6089 = vmatpush1.msra.mxu0 0.0
    %6090 = vmatprep.subr.mxu0 0.0
    %6091 = vmatpush1.msra.mxu0 0.0
    %6092 = vmatprep.subr.mxu0 0.0
    %6093 = vmatpush1.msra.mxu0 0.0
    %6094 = vmatprep.subr.mxu0 0.0
    %6095 = vmatpush1.msra.mxu0 0.0
    %6096 = vmatprep.subr.mxu0 0.0
    %6097 = vmatpush1.msra.mxu0 0.0
    %6098 = vmatprep.subr.mxu0 0.0
    %6099 = vmatpush1.msra.mxu0 0.0
    %6100 = vmatprep.mubr.f32.mxu0 0.0
    %v6101 = vand.u32 %v6000, 4294901760
    %v6102 = vsub.f32 %v6000, %v6101
    %v6103 = vand.u32 %v6102, 4294901760
    %v6104 = vsub.f32 %v6102, %v6103
    %v6105 = vand.u32 %v6104, 4294901760
    %6106 = vmatmul.mubr.f32.gmra.mrb[0].mxu0 %v6105
    %v6107 = vpop.f32.mrb[0].mxu0
    %v6108 = vadd.f32 0.0, %v6107
    %v6109 = vpop.f32.mrb[0].mxu0
    %6110 = vmatprep.mubr.f32.mxu0 0.0
    %v6111 = vand.u32 %v6002, 4294901760
    %v6112 = vsub.f32 %v6002, %v6111
    %v6113 = vand.u32 %v6112, 4294901760
    %v6114 = vsub.f32 %v6112, %v6113
    %v6115 = vand.u32 %v6114, 4294901760
    %6116 = vmatmul.mubr.f32.gmra.mrb[0].mxu0 %v6115
    %v6117 = vpop.f32.mrb[0].mxu0
    %v6118 = vadd.f32 0.0, %v6117
    %v6119 = vpop.f32.mrb[0].mxu0
    %6120 = vmatprep.mubr.f32.mxu0 0.0
    %v6121 = vand.u32 %v6004, 4294901760
    %v6122 = vsub.f32 %v6004, %v6121
    %v6123 = vand.u32 %v6122, 4294901760
    %v6124 = vsub.f32 %v6122, %v6123
    %v6125 = vand.u32 %v6124, 4294901760
    %6126 = vmatmul.mubr.f32.gmra.mrb[0].mxu0 %v6125
    %v6127 = vpop.f32.mrb[0].mxu0
    %v6128 = vadd.f32 0.0, %v6127
    %v6129 = vpop.f32.mrb[0].mxu0
    %6130 = vmatprep.mubr.f32.mxu0 0.0
    %v6131 = vand.u32 %v6006, 4294901760
    %v6132 = vsub.f32 %v6006, %v6131
    %v6133 = vand.u32 %v6132, 4294901760
    %v6134 = vsub.f32 %v6132, %v6133
    %v6135 = vand.u32 %v6134, 4294901760
    %6136 = vmatmul.mubr.f32.gmra.mrb[0].mxu0 %v6135
    %v6137 = vpop.f32.mrb[0].mxu0
    %v6138 = vadd.f32 0.0, %v6137
    %v6139 = vpop.f32.mrb[0].mxu0
    %6140 = vmatprep.mubr.f32.mxu0 0.0
    %v6141 = vand.u32 %v6008, 4294901760
    %v6142 = vsub.f32 %v6008, %v6141
    %v6143 = vand.u32 %v6142, 4294901760
    %v6144 = vsub.f32 %v6142, %v6143
    %v6145 = vand.u32 %v6144, 4294901760
    %6146 = vmatmul.mubr.f32.gmra.mrb[0].mxu0 %v6145
    %v6147 = vpop.f32.mrb[0].mxu0
    %v6148 = vadd.f32 0.0, %v6147
    %v6149 = vpop.f32.mrb[0].mxu0
    %6150 = vmatprep.mubr.f32.mxu0 0.0
    %v6151 = vand.u32 %v6010, 4294901760
    %v6152 = vsub.f32 %v6010, %v6151
    %v6153 = vand.u32 %v6152, 4294901760
    %v6154 = vsub.f32 %v6152, %v6153
    %v6155 = vand.u32 %v6154, 4294901760
    %6156 = vmatmul.mubr.f32.gmra.mrb[0].mxu0 %v6155
    %v6157 = vpop.f32.mrb[0].mxu0
    %v6158 = vadd.f32 0.0, %v6157
    %v6159 = vpop.f32.mrb[0].mxu0
    %6160 = vmatprep.mubr.f32.mxu0 0.0
    %v6161 = vand.u32 %v6012, 4294901760
    %v6162 = vsub.f32 %v6012, %v6161
    %v6163 = vand.u32 %v6162, 4294901760
    %v6164 = vsub.f32 %v6162, %v6163
    %v6165 = vand.u32 %v6164, 4294901760
    %6166 = vmatmul.mubr.f32.gmra.mrb[0].mxu0 %v6165
    %v6167 = vpop.f32.mrb[0].mxu0
    %v6168 = vadd.f32 0.0, %v6167
    %v6169 = vpop.f32.mrb[0].mxu0
    %6170 = vmatprep.mubr.f32.mxu0 0.0
    %v6171 = vand.u32 %v6014, 4294901760
    %v6172 = vsub.f32 %v6014, %v6171
    %v6173 = vand.u32 %v6172, 4294901760
    %v6174 = vsub.f32 %v6172, %v6173
    %v6175 = vand.u32 %v6174, 4294901760
    %6176 = vmatmul.mubr.f32.gmra.mrb[0].mxu0 %v6175
    %v6177 = vpop.f32.mrb[0].mxu0
    %v6178 = vadd.f32 0.0, %v6177
    %v6179 = vpop.f32.mrb[0].mxu0
    %6180 = vmatprep.mubr.f32.mxu0 0.0
    %v6181 = vand.u32 %v6016, 4294901760
    %v6182 = vsub.f32 %v6016, %v6181
    %v6183 = vand.u32 %v6182, 4294901760
    %v6184 = vsub.f32 %v6182, %v6183
    %v6185 = vand.u32 %v6184, 4294901760
    %6186 = vmatmul.mubr.f32.gmra.mrb[0].mxu0 %v6185
    %v6187 = vpop.f32.mrb[0].mxu0
    %v6188 = vadd.f32 0.0, %v6187
    %v6189 = vpop.f32.mrb[0].mxu0
    %6190 = vmatprep.mubr.f32.mxu0 0.0
    %v6191 = vand.u32 %v6018, 4294901760
    %v6192 = vsub.f32 %v6018, %v6191
    %v6193 = vand.u32 %v6192, 4294901760
    %v6194 = vsub.f32 %v6192, %v6193
    %v6195 = vand.u32 %v6194, 4294901760
    %6196 = vmatmul.mubr.f32.gmra.mrb[0].mxu0 %v6195
    %v6197 = vpop.f32.mrb[0].mxu0
    %v6198 = vadd.f32 0.0, %v6197
    %v6199 = vpop.f32.mrb[0].mxu0
    %6200 = vmatprep.mubr.f32.mxu0 0.0
    %v6201 = vand.u32 %v6020, 4294901760
    %v6202 = vsub.f32 %v6020, %v6201
    %v6203 = vand.u32 %v6202, 4294901760
    %v6204 = vsub.f32 %v6202, %v6203
    %v6205 = vand.u32 %v6204, 4294901760
    %6206 = vmatmul.mubr.f32.gmra.mrb[0].mxu0 %v6205
    %v6207 = vpop.f32.mrb[0].mxu0
    %v6208 = vadd.f32 0.0, %v6207
    %v6209 = vpop.f32.mrb[0].mxu0
    %6210 = vmatprep.mubr.f32.mxu0 0.0
    %v6211 = vand.u32 %v6022, 4294901760
    %v6212 = vsub.f32 %v6022, %v6211
    %v6213 = vand.u32 %v6212, 4294901760
    %v6214 = vsub.f32 %v6212, %v6213
    %v6215 = vand.u32 %v6214, 4294901760
    %6216 = vmatmul.mubr.f32.gmra.mrb[0].mxu0 %v6215
    %v6217 = vpop.f32.mrb[0].mxu0
    %v6218 = vadd.f32 0.0, %v6217
    %v6219 = vpop.f32.mrb[0].mxu0
    %6220 = vmatprep.mubr.f32.mxu0 0.0
    %v6221 = vand.u32 %v6024, 4294901760
    %v6222 = vsub.f32 %v6024, %v6221
    %v6223 = vand.u32 %v6222, 4294901760
    %v6224 = vsub.f32 %v6222, %v6223
    %v6225 = vand.u32 %v6224, 4294901760
    %6226 = vmatmul.mubr.f32.gmra.mrb[0].mxu0 %v6225
    %v6227 = vpop.f32.mrb[0].mxu0
    %v6228 = vadd.f32 0.0, %v6227
    %v6229 = vpop.f32.mrb[0].mxu0
    %6230 = vmatprep.mubr.f32.mxu0 0.0
    %v6231 = vand.u32 %v6026, 4294901760
    %v6232 = vsub.f32 %v6026, %v6231
    %v6233 = vand.u32 %v6232, 4294901760
    %v6234 = vsub.f32 %v6232, %v6233
    %v6235 = vand.u32 %v6234, 4294901760
    %6236 = vmatmul.mubr.f32.gmra.mrb[0].mxu0 %v6235
    %v6237 = vpop.f32.mrb[0].mxu0
    %v6238 = vadd.f32 0.0, %v6237
    %v6239 = vpop.f32.mrb[0].mxu0
    %6240 = vmatprep.mubr.f32.mxu0 0.0
    %v6241 = vand.u32 %v6028, 4294901760
    %v6242 = vsub.f32 %v6028, %v6241
    %v6243 = vand.u32 %v6242, 4294901760
    %v6244 = vsub.f32 %v6242, %v6243
    %v6245 = vand.u32 %v6244, 4294901760
    %6246 = vmatmul.mubr.f32.gmra.mrb[0].mxu0 %v6245
    %v6247 = vpop.f32.mrb[0].mxu0
    %v6248 = vadd.f32 0.0, %v6247
    %v6249 = vpop.f32.mrb[0].mxu0
    %6250 = vmatprep.mubr.f32.mxu0 0.0
    %v6251 = vand.u32 %v6030, 4294901760
    %v6252 = vsub.f32 %v6030, %v6251
    %v6253 = vand.u32 %v6252, 4294901760
    %v6254 = vsub.f32 %v6252, %v6253
    %v6255 = vand.u32 %v6254, 4294901760
    %6256 = vmatmul.mubr.f32.gmra.mrb[0].mxu0 %v6255
    %v6257 = vpop.f32.mrb[0].mxu0
    %v6258 = vadd.f32 0.0, %v6257
    %v6259 = vpop.f32.mrb[0].mxu0
    %6260 = vdwg.mxu0
    %6261 = vmatprep.subr.mxu0 0.0
    %v6262 = vand.u32 %v6033, 4294901760
    %v6263 = vsub.f32 %v6033, %v6262
    %v6264 = vand.u32 %v6263, 4294901760
    %v6265 = vsub.f32 %v6263, %v6264
    %v6266 = vand.u32 %v6265, 4294901760
    %6267 = vmatpush1.msra.mxu0 %v6266
    %6268 = vmatprep.subr.mxu0 0.0
    %6269 = vmatpush1.msra.mxu0 0.0
    %6270 = vmatprep.subr.mxu0 0.0
    %6271 = vmatpush1.msra.mxu0 0.0
    %6272 = vmatprep.subr.mxu0 0.0
    %6273 = vmatpush1.msra.mxu0 0.0
    %6274 = vmatprep.subr.mxu0 0.0
    %6275 = vmatpush1.msra.mxu0 0.0
    %6276 = vmatprep.subr.mxu0 0.0
    %6277 = vmatpush1.msra.mxu0 0.0
    %6278 = vmatprep.subr.mxu0 0.0
    %6279 = vmatpush1.msra.mxu0 0.0
    %6280 = vmatprep.subr.mxu0 0.0
    %6281 = vmatpush1.msra.mxu0 0.0
    %6282 = vmatprep.subr.mxu0 0.0
    %6283 = vmatpush1.msra.mxu0 0.0
    %6284 = vmatprep.subr.mxu0 0.0
    %6285 = vmatpush1.msra.mxu0 0.0
    %6286 = vmatprep.subr.mxu0 0.0
    %6287 = vmatpush1.msra.mxu0 0.0
    %6288 = vmatprep.subr.mxu0 0.0
    %6289 = vmatpush1.msra.mxu0 0.0
    %6290 = vmatprep.subr.mxu0 0.0
    %6291 = vmatpush1.msra.mxu0 0.0
    %6292 = vmatprep.subr.mxu0 0.0
    %6293 = vmatpush1.msra.mxu0 0.0
    %6294 = vmatprep.subr.mxu0 0.0
    %6295 = vmatpush1.msra.mxu0 0.0
    %6296 = vmatprep.subr.mxu0 0.0
    %6297 = vmatpush1.msra.mxu0 0.0
    %6298 = vmatprep.subr.mxu0 0.0
    %6299 = vmatpush1.msra.mxu0 0.0
    %6300 = vmatprep.subr.mxu0 0.0
    %6301 = vmatpush1.msra.mxu0 0.0
    %6302 = vmatprep.subr.mxu0 0.0
    %6303 = vmatpush1.msra.mxu0 0.0
    %6304 = vmatprep.subr.mxu0 0.0
    %6305 = vmatpush1.msra.mxu0 0.0
    %6306 = vmatprep.subr.mxu0 0.0
    %6307 = vmatpush1.msra.mxu0 0.0
    %6308 = vmatprep.subr.mxu0 0.0
    %6309 = vmatpush1.msra.mxu0 0.0
    %6310 = vmatprep.subr.mxu0 0.0
    %6311 = vmatpush1.msra.mxu0 0.0
    %6312 = vmatprep.subr.mxu0 0.0
    %6313 = vmatpush1.msra.mxu0 0.0
    %6314 = vmatprep.subr.mxu0 0.0
    %6315 = vmatpush1.msra.mxu0 0.0
    %6316 = vmatprep.subr.mxu0 0.0
    %6317 = vmatpush1.msra.mxu0 0.0
    %6318 = vmatprep.subr.mxu0 0.0
    %6319 = vmatpush1.msra.mxu0 0.0
    %6320 = vmatprep.subr.mxu0 0.0
    %6321 = vmatpush1.msra.mxu0 0.0
    %6322 = vmatprep.subr.mxu0 0.0
    %6323 = vmatpush1.msra.mxu0 0.0
    %6324 = vmatprep.subr.mxu0 0.0
    %6325 = vmatpush1.msra.mxu0 0.0
    %6326 = vmatprep.subr.mxu0 0.0
    %6327 = vmatpush1.msra.mxu0 0.0
    %6328 = vmatprep.subr.mxu0 0.0
    %6329 = vmatpush1.msra.mxu0 0.0
    %6330 = vmatprep.mubr.f32.mxu0 0.0
    %v6331 = vand.u32 %v6000, 4294901760
    %6332 = vmatmul.mubr.f32.gmra.mrb[0].mxu0 %v6331
    %v6333 = vpop.f32.mrb[0].mxu0
    %v6334 = vadd.f32 %v6108, %v6333
    %v6335 = vpop.f32.mrb[0].mxu0
    %6336 = vmatprep.mubr.f32.mxu0 0.0
    %v6337 = vand.u32 %v6002, 4294901760
    %6338 = vmatmul.mubr.f32.gmra.mrb[0].mxu0 %v6337
    %v6339 = vpop.f32.mrb[0].mxu0
    %v6340 = vadd.f32 %v6118, %v6339
    %v6341 = vpop.f32.mrb[0].mxu0
    %6342 = vmatprep.mubr.f32.mxu0 0.0
    %v6343 = vand.u32 %v6004, 4294901760
    %6344 = vmatmul.mubr.f32.gmra.mrb[0].mxu0 %v6343
    %v6345 = vpop.f32.mrb[0].mxu0
    %v6346 = vadd.f32 %v6128, %v6345
    %v6347 = vpop.f32.mrb[0].mxu0
    %6348 = vmatprep.mubr.f32.mxu0 0.0
    %v6349 = vand.u32 %v6006, 4294901760
    %6350 = vmatmul.mubr.f32.gmra.mrb[0].mxu0 %v6349
    %v6351 = vpop.f32.mrb[0].mxu0
    %v6352 = vadd.f32 %v6138, %v6351
    %v6353 = vpop.f32.mrb[0].mxu0
    %6354 = vmatprep.mubr.f32.mxu0 0.0
    %v6355 = vand.u32 %v6008, 4294901760
    %6356 = vmatmul.mubr.f32.gmra.mrb[0].mxu0 %v6355
    %v6357 = vpop.f32.mrb[0].mxu0
    %v6358 = vadd.f32 %v6148, %v6357
    %v6359 = vpop.f32.mrb[0].mxu0
    %6360 = vmatprep.mubr.f32.mxu0 0.0
    %v6361 = vand.u32 %v6010, 4294901760
    %6362 = vmatmul.mubr.f32.gmra.mrb[0].mxu0 %v6361
    %v6363 = vpop.f32.mrb[0].mxu0
    %v6364 = vadd.f32 %v6158, %v6363
    %v6365 = vpop.f32.mrb[0].mxu0
    %6366 = vmatprep.mubr.f32.mxu0 0.0
    %v6367 = vand.u32 %v6012, 4294901760
    %6368 = vmatmul.mubr.f32.gmra.mrb[0].mxu0 %v6367
    %v6369 = vpop.f32.mrb[0].mxu0
    %v6370 = vadd.f32 %v6168, %v6369
    %v6371 = vpop.f32.mrb[0].mxu0
    %6372 = vmatprep.mubr.f32.mxu0 0.0
    %v6373 = vand.u32 %v6014, 4294901760
    %6374 = vmatmul.mubr.f32.gmra.mrb[0].mxu0 %v6373
    %v6375 = vpop.f32.mrb[0].mxu0
    %v6376 = vadd.f32 %v6178, %v6375
    %v6377 = vpop.f32.mrb[0].mxu0
    %6378 = vmatprep.mubr.f32.mxu0 0.0
    %v6379 = vand.u32 %v6016, 4294901760
    %6380 = vmatmul.mubr.f32.gmra.mrb[0].mxu0 %v6379
    %v6381 = vpop.f32.mrb[0].mxu0
    %v6382 = vadd.f32 %v6188, %v6381
    %v6383 = vpop.f32.mrb[0].mxu0
    %6384 = vmatprep.mubr.f32.mxu0 0.0
    %v6385 = vand.u32 %v6018, 4294901760
    %6386 = vmatmul.mubr.f32.gmra.mrb[0].mxu0 %v6385
    %v6387 = vpop.f32.mrb[0].mxu0
    %v6388 = vadd.f32 %v6198, %v6387
    %v6389 = vpop.f32.mrb[0].mxu0
    %6390 = vmatprep.mubr.f32.mxu0 0.0
    %v6391 = vand.u32 %v6020, 4294901760
    %6392 = vmatmul.mubr.f32.gmra.mrb[0].mxu0 %v6391
    %v6393 = vpop.f32.mrb[0].mxu0
    %v6394 = vadd.f32 %v6208, %v6393
    %v6395 = vpop.f32.mrb[0].mxu0
    %6396 = vmatprep.mubr.f32.mxu0 0.0
    %v6397 = vand.u32 %v6022, 4294901760
    %6398 = vmatmul.mubr.f32.gmra.mrb[0].mxu0 %v6397
    %v6399 = vpop.f32.mrb[0].mxu0
    %v6400 = vadd.f32 %v6218, %v6399
    %v6401 = vpop.f32.mrb[0].mxu0
    %6402 = vmatprep.mubr.f32.mxu0 0.0
    %v6403 = vand.u32 %v6024, 4294901760
    %6404 = vmatmul.mubr.f32.gmra.mrb[0].mxu0 %v6403
    %v6405 = vpop.f32.mrb[0].mxu0
    %v6406 = vadd.f32 %v6228, %v6405
    %v6407 = vpop.f32.mrb[0].mxu0
    %6408 = vmatprep.mubr.f32.mxu0 0.0
    %v6409 = vand.u32 %v6026, 4294901760
    %6410 = vmatmul.mubr.f32.gmra.mrb[0].mxu0 %v6409
    %v6411 = vpop.f32.mrb[0].mxu0
    %v6412 = vadd.f32 %v6238, %v6411
    %v6413 = vpop.f32.mrb[0].mxu0
    %6414 = vmatprep.mubr.f32.mxu0 0.0
    %v6415 = vand.u32 %v6028, 4294901760
    %6416 = vmatmul.mubr.f32.gmra.mrb[0].mxu0 %v6415
    %v6417 = vpop.f32.mrb[0].mxu0
    %v6418 = vadd.f32 %v6248, %v6417
    %v6419 = vpop.f32.mrb[0].mxu0
    %6420 = vmatprep.mubr.f32.mxu0 0.0
    %v6421 = vand.u32 %v6030, 4294901760
    %6422 = vmatmul.mubr.f32.gmra.mrb[0].mxu0 %v6421
    %v6423 = vpop.f32.mrb[0].mxu0
    %v6424 = vadd.f32 %v6258, %v6423
    %v6425 = vpop.f32.mrb[0].mxu0
    %6426 = vdwg.mxu0
    %6427 = vmatprep.subr.mxu0 0.0
    %v6428 = vand.u32 %v6033, 4294901760
    %v6429 = vsub.f32 %v6033, %v6428
    %6430 = vmatpush1.msra.mxu0 %v6429
    %6431 = vmatprep.subr.mxu0 0.0
    %6432 = vmatpush1.msra.mxu0 0.0
    %6433 = vmatprep.subr.mxu0 0.0
    %6434 = vmatpush1.msra.mxu0 0.0
    %6435 = vmatprep.subr.mxu0 0.0
    %6436 = vmatpush1.msra.mxu0 0.0
    %6437 = vmatprep.subr.mxu0 0.0
    %6438 = vmatpush1.msra.mxu0 0.0
    %6439 = vmatprep.subr.mxu0 0.0
    %6440 = vmatpush1.msra.mxu0 0.0
    %6441 = vmatprep.subr.mxu0 0.0
    %6442 = vmatpush1.msra.mxu0 0.0
    %6443 = vmatprep.subr.mxu0 0.0
    %6444 = vmatpush1.msra.mxu0 0.0
    %6445 = vmatprep.subr.mxu0 0.0
    %6446 = vmatpush1.msra.mxu0 0.0
    %6447 = vmatprep.subr.mxu0 0.0
    %6448 = vmatpush1.msra.mxu0 0.0
    %6449 = vmatprep.subr.mxu0 0.0
    %6450 = vmatpush1.msra.mxu0 0.0
    %6451 = vmatprep.subr.mxu0 0.0
    %6452 = vmatpush1.msra.mxu0 0.0
    %6453 = vmatprep.subr.mxu0 0.0
    %6454 = vmatpush1.msra.mxu0 0.0
    %6455 = vmatprep.subr.mxu0 0.0
    %6456 = vmatpush1.msra.mxu0 0.0
    %6457 = vmatprep.subr.mxu0 0.0
    %6458 = vmatpush1.msra.mxu0 0.0
    %6459 = vmatprep.subr.mxu0 0.0
    %6460 = vmatpush1.msra.mxu0 0.0
    %6461 = vmatprep.subr.mxu0 0.0
    %6462 = vmatpush1.msra.mxu0 0.0
    %6463 = vmatprep.subr.mxu0 0.0
    %6464 = vmatpush1.msra.mxu0 0.0
    %6465 = vmatprep.subr.mxu0 0.0
    %6466 = vmatpush1.msra.mxu0 0.0
    %6467 = vmatprep.subr.mxu0 0.0
    %6468 = vmatpush1.msra.mxu0 0.0
    %6469 = vmatprep.subr.mxu0 0.0
    %6470 = vmatpush1.msra.mxu0 0.0
    %6471 = vmatprep.subr.mxu0 0.0
    %6472 = vmatpush1.msra.mxu0 0.0
    %6473 = vmatprep.subr.mxu0 0.0
    %6474 = vmatpush1.msra.mxu0 0.0
    %6475 = vmatprep.subr.mxu0 0.0
    %6476 = vmatpush1.msra.mxu0 0.0
    %6477 = vmatprep.subr.mxu0 0.0
    %6478 = vmatpush1.msra.mxu0 0.0
    %6479 = vmatprep.subr.mxu0 0.0
    %6480 = vmatpush1.msra.mxu0 0.0
    %6481 = vmatprep.subr.mxu0 0.0
    %6482 = vmatpush1.msra.mxu0 0.0
    %6483 = vmatprep.subr.mxu0 0.0
    %6484 = vmatpush1.msra.mxu0 0.0
    %6485 = vmatprep.subr.mxu0 0.0
    %6486 = vmatpush1.msra.mxu0 0.0
    %6487 = vmatprep.subr.mxu0 0.0
    %6488 = vmatpush1.msra.mxu0 0.0
    %6489 = vmatprep.subr.mxu0 0.0
    %6490 = vmatpush1.msra.mxu0 0.0
    %6491 = vmatprep.subr.mxu0 0.0
    %6492 = vmatpush1.msra.mxu0 0.0
    %6493 = vmatprep.mubr.f32.mxu0 0.0
    %v6494 = vand.u32 %v6000, 4294901760
    %v6495 = vsub.f32 %v6000, %v6494
    %6496 = vmatmul.mubr.f32.gmra.mrb[0].mxu0 %v6495
    %v6497 = vpop.f32.mrb[0].mxu0
    %v6498 = vadd.f32 %v6334, %v6497
    %v6499 = vpop.f32.mrb[0].mxu0
    %6500 = vmatprep.mubr.f32.mxu0 0.0
    %v6501 = vand.u32 %v6002, 4294901760
    %v6502 = vsub.f32 %v6002, %v6501
    %6503 = vmatmul.mubr.f32.gmra.mrb[0].mxu0 %v6502
    %v6504 = vpop.f32.mrb[0].mxu0
    %v6505 = vadd.f32 %v6340, %v6504
    %v6506 = vpop.f32.mrb[0].mxu0
    %6507 = vmatprep.mubr.f32.mxu0 0.0
    %v6508 = vand.u32 %v6004, 4294901760
    %v6509 = vsub.f32 %v6004, %v6508
    %6510 = vmatmul.mubr.f32.gmra.mrb[0].mxu0 %v6509
    %v6511 = vpop.f32.mrb[0].mxu0
    %v6512 = vadd.f32 %v6346, %v6511
    %v6513 = vpop.f32.mrb[0].mxu0
    %6514 = vmatprep.mubr.f32.mxu0 0.0
    %v6515 = vand.u32 %v6006, 4294901760
    %v6516 = vsub.f32 %v6006, %v6515
    %6517 = vmatmul.mubr.f32.gmra.mrb[0].mxu0 %v6516
    %v6518 = vpop.f32.mrb[0].mxu0
    %v6519 = vadd.f32 %v6352, %v6518
    %v6520 = vpop.f32.mrb[0].mxu0
    %6521 = vmatprep.mubr.f32.mxu0 0.0
    %v6522 = vand.u32 %v6008, 4294901760
    %v6523 = vsub.f32 %v6008, %v6522
    %6524 = vmatmul.mubr.f32.gmra.mrb[0].mxu0 %v6523
    %v6525 = vpop.f32.mrb[0].mxu0
    %v6526 = vadd.f32 %v6358, %v6525
    %v6527 = vpop.f32.mrb[0].mxu0
    %6528 = vmatprep.mubr.f32.mxu0 0.0
    %v6529 = vand.u32 %v6010, 4294901760
    %v6530 = vsub.f32 %v6010, %v6529
    %6531 = vmatmul.mubr.f32.gmra.mrb[0].mxu0 %v6530
    %v6532 = vpop.f32.mrb[0].mxu0
    %v6533 = vadd.f32 %v6364, %v6532
    %v6534 = vpop.f32.mrb[0].mxu0
    %6535 = vmatprep.mubr.f32.mxu0 0.0
    %v6536 = vand.u32 %v6012, 4294901760
    %v6537 = vsub.f32 %v6012, %v6536
    %6538 = vmatmul.mubr.f32.gmra.mrb[0].mxu0 %v6537
    %v6539 = vpop.f32.mrb[0].mxu0
    %v6540 = vadd.f32 %v6370, %v6539
    %v6541 = vpop.f32.mrb[0].mxu0
    %6542 = vmatprep.mubr.f32.mxu0 0.0
    %v6543 = vand.u32 %v6014, 4294901760
    %v6544 = vsub.f32 %v6014, %v6543
    %6545 = vmatmul.mubr.f32.gmra.mrb[0].mxu0 %v6544
    %v6546 = vpop.f32.mrb[0].mxu0
    %v6547 = vadd.f32 %v6376, %v6546
    %v6548 = vpop.f32.mrb[0].mxu0
    %6549 = vmatprep.mubr.f32.mxu0 0.0
    %v6550 = vand.u32 %v6016, 4294901760
    %v6551 = vsub.f32 %v6016, %v6550
    %6552 = vmatmul.mubr.f32.gmra.mrb[0].mxu0 %v6551
    %v6553 = vpop.f32.mrb[0].mxu0
    %v6554 = vadd.f32 %v6382, %v6553
    %v6555 = vpop.f32.mrb[0].mxu0
    %6556 = vmatprep.mubr.f32.mxu0 0.0
    %v6557 = vand.u32 %v6018, 4294901760
    %v6558 = vsub.f32 %v6018, %v6557
    %6559 = vmatmul.mubr.f32.gmra.mrb[0].mxu0 %v6558
    %v6560 = vpop.f32.mrb[0].mxu0
    %v6561 = vadd.f32 %v6388, %v6560
    %v6562 = vpop.f32.mrb[0].mxu0
    %6563 = vmatprep.mubr.f32.mxu0 0.0
    %v6564 = vand.u32 %v6020, 4294901760
    %v6565 = vsub.f32 %v6020, %v6564
    %6566 = vmatmul.mubr.f32.gmra.mrb[0].mxu0 %v6565
    %v6567 = vpop.f32.mrb[0].mxu0
    %v6568 = vadd.f32 %v6394, %v6567
    %v6569 = vpop.f32.mrb[0].mxu0
    %6570 = vmatprep.mubr.f32.mxu0 0.0
    %v6571 = vand.u32 %v6022, 4294901760
    %v6572 = vsub.f32 %v6022, %v6571
    %6573 = vmatmul.mubr.f32.gmra.mrb[0].mxu0 %v6572
    %v6574 = vpop.f32.mrb[0].mxu0
    %v6575 = vadd.f32 %v6400, %v6574
    %v6576 = vpop.f32.mrb[0].mxu0
    %6577 = vmatprep.mubr.f32.mxu0 0.0
    %v6578 = vand.u32 %v6024, 4294901760
    %v6579 = vsub.f32 %v6024, %v6578
    %6580 = vmatmul.mubr.f32.gmra.mrb[0].mxu0 %v6579
    %v6581 = vpop.f32.mrb[0].mxu0
    %v6582 = vadd.f32 %v6406, %v6581
    %v6583 = vpop.f32.mrb[0].mxu0
    %6584 = vmatprep.mubr.f32.mxu0 0.0
    %v6585 = vand.u32 %v6026, 4294901760
    %v6586 = vsub.f32 %v6026, %v6585
    %6587 = vmatmul.mubr.f32.gmra.mrb[0].mxu0 %v6586
    %v6588 = vpop.f32.mrb[0].mxu0
    %v6589 = vadd.f32 %v6412, %v6588
    %v6590 = vpop.f32.mrb[0].mxu0
    %6591 = vmatprep.mubr.f32.mxu0 0.0
    %v6592 = vand.u32 %v6028, 4294901760
    %v6593 = vsub.f32 %v6028, %v6592
    %6594 = vmatmul.mubr.f32.gmra.mrb[0].mxu0 %v6593
    %v6595 = vpop.f32.mrb[0].mxu0
    %v6596 = vadd.f32 %v6418, %v6595
    %v6597 = vpop.f32.mrb[0].mxu0
    %6598 = vmatprep.mubr.f32.mxu0 0.0
    %v6599 = vand.u32 %v6030, 4294901760
    %v6600 = vsub.f32 %v6030, %v6599
    %6601 = vmatmul.mubr.f32.gmra.mrb[0].mxu0 %v6600
    %v6602 = vpop.f32.mrb[0].mxu0
    %v6603 = vadd.f32 %v6424, %v6602
    %v6604 = vpop.f32.mrb[0].mxu0
    %6605 = vdwg.mxu0
    %6606 = vmatprep.subr.mxu0 0.0
    %v6607 = vand.u32 %v6033, 4294901760
    %6608 = vmatpush1.msra.mxu0 %v6607
    %6609 = vmatprep.subr.mxu0 0.0
    %6610 = vmatpush1.msra.mxu0 0.0
    %6611 = vmatprep.subr.mxu0 0.0
    %6612 = vmatpush1.msra.mxu0 0.0
    %6613 = vmatprep.subr.mxu0 0.0
    %6614 = vmatpush1.msra.mxu0 0.0
    %6615 = vmatprep.subr.mxu0 0.0
    %6616 = vmatpush1.msra.mxu0 0.0
    %6617 = vmatprep.subr.mxu0 0.0
    %6618 = vmatpush1.msra.mxu0 0.0
    %6619 = vmatprep.subr.mxu0 0.0
    %6620 = vmatpush1.msra.mxu0 0.0
    %6621 = vmatprep.subr.mxu0 0.0
    %6622 = vmatpush1.msra.mxu0 0.0
    %6623 = vmatprep.subr.mxu0 0.0
    %6624 = vmatpush1.msra.mxu0 0.0
    %6625 = vmatprep.subr.mxu0 0.0
    %6626 = vmatpush1.msra.mxu0 0.0
    %6627 = vmatprep.subr.mxu0 0.0
    %6628 = vmatpush1.msra.mxu0 0.0
    %6629 = vmatprep.subr.mxu0 0.0
    %6630 = vmatpush1.msra.mxu0 0.0
    %6631 = vmatprep.subr.mxu0 0.0
    %6632 = vmatpush1.msra.mxu0 0.0
    %6633 = vmatprep.subr.mxu0 0.0
    %6634 = vmatpush1.msra.mxu0 0.0
    %6635 = vmatprep.subr.mxu0 0.0
    %6636 = vmatpush1.msra.mxu0 0.0
    %6637 = vmatprep.subr.mxu0 0.0
    %6638 = vmatpush1.msra.mxu0 0.0
    %6639 = vmatprep.subr.mxu0 0.0
    %6640 = vmatpush1.msra.mxu0 0.0
    %6641 = vmatprep.subr.mxu0 0.0
    %6642 = vmatpush1.msra.mxu0 0.0
    %6643 = vmatprep.subr.mxu0 0.0
    %6644 = vmatpush1.msra.mxu0 0.0
    %6645 = vmatprep.subr.mxu0 0.0
    %6646 = vmatpush1.msra.mxu0 0.0
    %6647 = vmatprep.subr.mxu0 0.0
    %6648 = vmatpush1.msra.mxu0 0.0
    %6649 = vmatprep.subr.mxu0 0.0
    %6650 = vmatpush1.msra.mxu0 0.0
    %6651 = vmatprep.subr.mxu0 0.0
    %6652 = vmatpush1.msra.mxu0 0.0
    %6653 = vmatprep.subr.mxu0 0.0
    %6654 = vmatpush1.msra.mxu0 0.0
    %6655 = vmatprep.subr.mxu0 0.0
    %6656 = vmatpush1.msra.mxu0 0.0
    %6657 = vmatprep.subr.mxu0 0.0
    %6658 = vmatpush1.msra.mxu0 0.0
    %6659 = vmatprep.subr.mxu0 0.0
    %6660 = vmatpush1.msra.mxu0 0.0
    %6661 = vmatprep.subr.mxu0 0.0
    %6662 = vmatpush1.msra.mxu0 0.0
    %6663 = vmatprep.subr.mxu0 0.0
    %6664 = vmatpush1.msra.mxu0 0.0
    %6665 = vmatprep.subr.mxu0 0.0
    %6666 = vmatpush1.msra.mxu0 0.0
    %6667 = vmatprep.subr.mxu0 0.0
    %6668 = vmatpush1.msra.mxu0 0.0
    %6669 = vmatprep.subr.mxu0 0.0
    %6670 = vmatpush1.msra.mxu0 0.0
    %6671 = vmatprep.mubr.f32.mxu0 0.0
    %v6672 = vand.u32 %v6000, 4294901760
    %v6673 = vsub.f32 %v6000, %v6672
    %v6674 = vand.u32 %v6673, 4294901760
    %6675 = vmatmul.mubr.f32.gmra.mrb[0].mxu0 %v6674
    %v6676 = vpop.f32.mrb[0].mxu0
    %v6677 = vadd.f32 %v6498, %v6676
    %v6678 = vpop.f32.mrb[0].mxu0
    %6679 = vmatprep.mubr.f32.mxu0 0.0
    %v6680 = vand.u32 %v6002, 4294901760
    %v6681 = vsub.f32 %v6002, %v6680
    %v6682 = vand.u32 %v6681, 4294901760
    %6683 = vmatmul.mubr.f32.gmra.mrb[0].mxu0 %v6682
    %v6684 = vpop.f32.mrb[0].mxu0
    %v6685 = vadd.f32 %v6505, %v6684
    %v6686 = vpop.f32.mrb[0].mxu0
    %6687 = vmatprep.mubr.f32.mxu0 0.0
    %v6688 = vand.u32 %v6004, 4294901760
    %v6689 = vsub.f32 %v6004, %v6688
    %v6690 = vand.u32 %v6689, 4294901760
    %6691 = vmatmul.mubr.f32.gmra.mrb[0].mxu0 %v6690
    %v6692 = vpop.f32.mrb[0].mxu0
    %v6693 = vadd.f32 %v6512, %v6692
    %v6694 = vpop.f32.mrb[0].mxu0
    %6695 = vmatprep.mubr.f32.mxu0 0.0
    %v6696 = vand.u32 %v6006, 4294901760
    %v6697 = vsub.f32 %v6006, %v6696
    %v6698 = vand.u32 %v6697, 4294901760
    %6699 = vmatmul.mubr.f32.gmra.mrb[0].mxu0 %v6698
    %v6700 = vpop.f32.mrb[0].mxu0
    %v6701 = vadd.f32 %v6519, %v6700
    %v6702 = vpop.f32.mrb[0].mxu0
    %6703 = vmatprep.mubr.f32.mxu0 0.0
    %v6704 = vand.u32 %v6008, 4294901760
    %v6705 = vsub.f32 %v6008, %v6704
    %v6706 = vand.u32 %v6705, 4294901760
    %6707 = vmatmul.mubr.f32.gmra.mrb[0].mxu0 %v6706
    %v6708 = vpop.f32.mrb[0].mxu0
    %v6709 = vadd.f32 %v6526, %v6708
    %v6710 = vpop.f32.mrb[0].mxu0
    %6711 = vmatprep.mubr.f32.mxu0 0.0
    %v6712 = vand.u32 %v6010, 4294901760
    %v6713 = vsub.f32 %v6010, %v6712
    %v6714 = vand.u32 %v6713, 4294901760
    %6715 = vmatmul.mubr.f32.gmra.mrb[0].mxu0 %v6714
    %v6716 = vpop.f32.mrb[0].mxu0
    %v6717 = vadd.f32 %v6533, %v6716
    %v6718 = vpop.f32.mrb[0].mxu0
    %6719 = vmatprep.mubr.f32.mxu0 0.0
    %v6720 = vand.u32 %v6012, 4294901760
    %v6721 = vsub.f32 %v6012, %v6720
    %v6722 = vand.u32 %v6721, 4294901760
    %6723 = vmatmul.mubr.f32.gmra.mrb[0].mxu0 %v6722
    %v6724 = vpop.f32.mrb[0].mxu0
    %v6725 = vadd.f32 %v6540, %v6724
    %v6726 = vpop.f32.mrb[0].mxu0
    %6727 = vmatprep.mubr.f32.mxu0 0.0
    %v6728 = vand.u32 %v6014, 4294901760
    %v6729 = vsub.f32 %v6014, %v6728
    %v6730 = vand.u32 %v6729, 4294901760
    %6731 = vmatmul.mubr.f32.gmra.mrb[0].mxu0 %v6730
    %v6732 = vpop.f32.mrb[0].mxu0
    %v6733 = vadd.f32 %v6547, %v6732
    %v6734 = vpop.f32.mrb[0].mxu0
    %6735 = vmatprep.mubr.f32.mxu0 0.0
    %v6736 = vand.u32 %v6016, 4294901760
    %v6737 = vsub.f32 %v6016, %v6736
    %v6738 = vand.u32 %v6737, 4294901760
    %6739 = vmatmul.mubr.f32.gmra.mrb[0].mxu0 %v6738
    %v6740 = vpop.f32.mrb[0].mxu0
    %v6741 = vadd.f32 %v6554, %v6740
    %v6742 = vpop.f32.mrb[0].mxu0
    %6743 = vmatprep.mubr.f32.mxu0 0.0
    %v6744 = vand.u32 %v6018, 4294901760
    %v6745 = vsub.f32 %v6018, %v6744
    %v6746 = vand.u32 %v6745, 4294901760
    %6747 = vmatmul.mubr.f32.gmra.mrb[0].mxu0 %v6746
    %v6748 = vpop.f32.mrb[0].mxu0
    %v6749 = vadd.f32 %v6561, %v6748
    %v6750 = vpop.f32.mrb[0].mxu0
    %6751 = vmatprep.mubr.f32.mxu0 0.0
    %v6752 = vand.u32 %v6020, 4294901760
    %v6753 = vsub.f32 %v6020, %v6752
    %v6754 = vand.u32 %v6753, 4294901760
    %6755 = vmatmul.mubr.f32.gmra.mrb[0].mxu0 %v6754
    %v6756 = vpop.f32.mrb[0].mxu0
    %v6757 = vadd.f32 %v6568, %v6756
    %v6758 = vpop.f32.mrb[0].mxu0
    %6759 = vmatprep.mubr.f32.mxu0 0.0
    %v6760 = vand.u32 %v6022, 4294901760
    %v6761 = vsub.f32 %v6022, %v6760
    %v6762 = vand.u32 %v6761, 4294901760
    %6763 = vmatmul.mubr.f32.gmra.mrb[0].mxu0 %v6762
    %v6764 = vpop.f32.mrb[0].mxu0
    %v6765 = vadd.f32 %v6575, %v6764
    %v6766 = vpop.f32.mrb[0].mxu0
    %6767 = vmatprep.mubr.f32.mxu0 0.0
    %v6768 = vand.u32 %v6024, 4294901760
    %v6769 = vsub.f32 %v6024, %v6768
    %v6770 = vand.u32 %v6769, 4294901760
    %6771 = vmatmul.mubr.f32.gmra.mrb[0].mxu0 %v6770
    %v6772 = vpop.f32.mrb[0].mxu0
    %v6773 = vadd.f32 %v6582, %v6772
    %v6774 = vpop.f32.mrb[0].mxu0
    %6775 = vmatprep.mubr.f32.mxu0 0.0
    %v6776 = vand.u32 %v6026, 4294901760
    %v6777 = vsub.f32 %v6026, %v6776
    %v6778 = vand.u32 %v6777, 4294901760
    %6779 = vmatmul.mubr.f32.gmra.mrb[0].mxu0 %v6778
    %v6780 = vpop.f32.mrb[0].mxu0
    %v6781 = vadd.f32 %v6589, %v6780
    %v6782 = vpop.f32.mrb[0].mxu0
    %6783 = vmatprep.mubr.f32.mxu0 0.0
    %v6784 = vand.u32 %v6028, 4294901760
    %v6785 = vsub.f32 %v6028, %v6784
    %v6786 = vand.u32 %v6785, 4294901760
    %6787 = vmatmul.mubr.f32.gmra.mrb[0].mxu0 %v6786
    %v6788 = vpop.f32.mrb[0].mxu0
    %v6789 = vadd.f32 %v6596, %v6788
    %v6790 = vpop.f32.mrb[0].mxu0
    %6791 = vmatprep.mubr.f32.mxu0 0.0
    %v6792 = vand.u32 %v6030, 4294901760
    %v6793 = vsub.f32 %v6030, %v6792
    %v6794 = vand.u32 %v6793, 4294901760
    %6795 = vmatmul.mubr.f32.gmra.mrb[0].mxu0 %v6794
    %v6796 = vpop.f32.mrb[0].mxu0
    %v6797 = vadd.f32 %v6603, %v6796
    %v6798 = vpop.f32.mrb[0].mxu0
    %6799 = vdwg.mxu0
    %6800 = vmatprep.subr.mxu0 0.0
    %v6801 = vand.u32 %v6033, 4294901760
    %v6802 = vsub.f32 %v6033, %v6801
    %v6803 = vand.u32 %v6802, 4294901760
    %6804 = vmatpush1.msra.mxu0 %v6803
    %6805 = vmatprep.subr.mxu0 0.0
    %6806 = vmatpush1.msra.mxu0 0.0
    %6807 = vmatprep.subr.mxu0 0.0
    %6808 = vmatpush1.msra.mxu0 0.0
    %6809 = vmatprep.subr.mxu0 0.0
    %6810 = vmatpush1.msra.mxu0 0.0
    %6811 = vmatprep.subr.mxu0 0.0
    %6812 = vmatpush1.msra.mxu0 0.0
    %6813 = vmatprep.subr.mxu0 0.0
    %6814 = vmatpush1.msra.mxu0 0.0
    %6815 = vmatprep.subr.mxu0 0.0
    %6816 = vmatpush1.msra.mxu0 0.0
    %6817 = vmatprep.subr.mxu0 0.0
    %6818 = vmatpush1.msra.mxu0 0.0
    %6819 = vmatprep.subr.mxu0 0.0
    %6820 = vmatpush1.msra.mxu0 0.0
    %6821 = vmatprep.subr.mxu0 0.0
    %6822 = vmatpush1.msra.mxu0 0.0
    %6823 = vmatprep.subr.mxu0 0.0
    %6824 = vmatpush1.msra.mxu0 0.0
    %6825 = vmatprep.subr.mxu0 0.0
    %6826 = vmatpush1.msra.mxu0 0.0
    %6827 = vmatprep.subr.mxu0 0.0
    %6828 = vmatpush1.msra.mxu0 0.0
    %6829 = vmatprep.subr.mxu0 0.0
    %6830 = vmatpush1.msra.mxu0 0.0
    %6831 = vmatprep.subr.mxu0 0.0
    %6832 = vmatpush1.msra.mxu0 0.0
    %6833 = vmatprep.subr.mxu0 0.0
    %6834 = vmatpush1.msra.mxu0 0.0
    %6835 = vmatprep.subr.mxu0 0.0
    %6836 = vmatpush1.msra.mxu0 0.0
    %6837 = vmatprep.subr.mxu0 0.0
    %6838 = vmatpush1.msra.mxu0 0.0
    %6839 = vmatprep.subr.mxu0 0.0
    %6840 = vmatpush1.msra.mxu0 0.0
    %6841 = vmatprep.subr.mxu0 0.0
    %6842 = vmatpush1.msra.mxu0 0.0
    %6843 = vmatprep.subr.mxu0 0.0
    %6844 = vmatpush1.msra.mxu0 0.0
    %6845 = vmatprep.subr.mxu0 0.0
    %6846 = vmatpush1.msra.mxu0 0.0
    %6847 = vmatprep.subr.mxu0 0.0
    %6848 = vmatpush1.msra.mxu0 0.0
    %6849 = vmatprep.subr.mxu0 0.0
    %6850 = vmatpush1.msra.mxu0 0.0
    %6851 = vmatprep.subr.mxu0 0.0
    %6852 = vmatpush1.msra.mxu0 0.0
    %6853 = vmatprep.subr.mxu0 0.0
    %6854 = vmatpush1.msra.mxu0 0.0
    %6855 = vmatprep.subr.mxu0 0.0
    %6856 = vmatpush1.msra.mxu0 0.0
    %6857 = vmatprep.subr.mxu0 0.0
    %6858 = vmatpush1.msra.mxu0 0.0
    %6859 = vmatprep.subr.mxu0 0.0
    %6860 = vmatpush1.msra.mxu0 0.0
    %6861 = vmatprep.subr.mxu0 0.0
    %6862 = vmatpush1.msra.mxu0 0.0
    %6863 = vmatprep.subr.mxu0 0.0
    %6864 = vmatpush1.msra.mxu0 0.0
    %6865 = vmatprep.subr.mxu0 0.0
    %6866 = vmatpush1.msra.mxu0 0.0
    %6867 = vmatprep.mubr.f32.mxu0 0.0
    %v6868 = vand.u32 %v6000, 4294901760
    %6869 = vmatmul.mubr.f32.gmra.mrb[0].mxu0 %v6868
    %v6870 = vpop.f32.mrb[0].mxu0
    %v6871 = vadd.f32 %v6677, %v6870
    %v6872 = vpop.f32.mrb[0].mxu0
    %6873 = vmatprep.mubr.f32.mxu0 0.0
    %v6874 = vand.u32 %v6002, 4294901760
    %6875 = vmatmul.mubr.f32.gmra.mrb[0].mxu0 %v6874
    %v6876 = vpop.f32.mrb[0].mxu0
    %v6877 = vadd.f32 %v6685, %v6876
    %v6878 = vpop.f32.mrb[0].mxu0
    %6879 = vmatprep.mubr.f32.mxu0 0.0
    %v6880 = vand.u32 %v6004, 4294901760
    %6881 = vmatmul.mubr.f32.gmra.mrb[0].mxu0 %v6880
    %v6882 = vpop.f32.mrb[0].mxu0
    %v6883 = vadd.f32 %v6693, %v6882
    %v6884 = vpop.f32.mrb[0].mxu0
    %6885 = vmatprep.mubr.f32.mxu0 0.0
    %v6886 = vand.u32 %v6006, 4294901760
    %6887 = vmatmul.mubr.f32.gmra.mrb[0].mxu0 %v6886
    %v6888 = vpop.f32.mrb[0].mxu0
    %v6889 = vadd.f32 %v6701, %v6888
    %v6890 = vpop.f32.mrb[0].mxu0
    %6891 = vmatprep.mubr.f32.mxu0 0.0
    %v6892 = vand.u32 %v6008, 4294901760
    %6893 = vmatmul.mubr.f32.gmra.mrb[0].mxu0 %v6892
    %v6894 = vpop.f32.mrb[0].mxu0
    %v6895 = vadd.f32 %v6709, %v6894
    %v6896 = vpop.f32.mrb[0].mxu0
    %6897 = vmatprep.mubr.f32.mxu0 0.0
    %v6898 = vand.u32 %v6010, 4294901760
    %6899 = vmatmul.mubr.f32.gmra.mrb[0].mxu0 %v6898
    %v6900 = vpop.f32.mrb[0].mxu0
    %v6901 = vadd.f32 %v6717, %v6900
    %v6902 = vpop.f32.mrb[0].mxu0
    %6903 = vmatprep.mubr.f32.mxu0 0.0
    %v6904 = vand.u32 %v6012, 4294901760
    %6905 = vmatmul.mubr.f32.gmra.mrb[0].mxu0 %v6904
    %v6906 = vpop.f32.mrb[0].mxu0
    %v6907 = vadd.f32 %v6725, %v6906
    %v6908 = vpop.f32.mrb[0].mxu0
    %6909 = vmatprep.mubr.f32.mxu0 0.0
    %v6910 = vand.u32 %v6014, 4294901760
    %6911 = vmatmul.mubr.f32.gmra.mrb[0].mxu0 %v6910
    %v6912 = vpop.f32.mrb[0].mxu0
    %v6913 = vadd.f32 %v6733, %v6912
    %v6914 = vpop.f32.mrb[0].mxu0
    %6915 = vmatprep.mubr.f32.mxu0 0.0
    %v6916 = vand.u32 %v6016, 4294901760
    %6917 = vmatmul.mubr.f32.gmra.mrb[0].mxu0 %v6916
    %v6918 = vpop.f32.mrb[0].mxu0
    %v6919 = vadd.f32 %v6741, %v6918
    %v6920 = vpop.f32.mrb[0].mxu0
    %6921 = vmatprep.mubr.f32.mxu0 0.0
    %v6922 = vand.u32 %v6018, 4294901760
    %6923 = vmatmul.mubr.f32.gmra.mrb[0].mxu0 %v6922
    %v6924 = vpop.f32.mrb[0].mxu0
    %v6925 = vadd.f32 %v6749, %v6924
    %v6926 = vpop.f32.mrb[0].mxu0
    %6927 = vmatprep.mubr.f32.mxu0 0.0
    %v6928 = vand.u32 %v6020, 4294901760
    %6929 = vmatmul.mubr.f32.gmra.mrb[0].mxu0 %v6928
    %v6930 = vpop.f32.mrb[0].mxu0
    %v6931 = vadd.f32 %v6757, %v6930
    %v6932 = vpop.f32.mrb[0].mxu0
    %6933 = vmatprep.mubr.f32.mxu0 0.0
    %v6934 = vand.u32 %v6022, 4294901760
    %6935 = vmatmul.mubr.f32.gmra.mrb[0].mxu0 %v6934
    %v6936 = vpop.f32.mrb[0].mxu0
    %v6937 = vadd.f32 %v6765, %v6936
    %v6938 = vpop.f32.mrb[0].mxu0
    %6939 = vmatprep.mubr.f32.mxu0 0.0
    %v6940 = vand.u32 %v6024, 4294901760
    %6941 = vmatmul.mubr.f32.gmra.mrb[0].mxu0 %v6940
    %v6942 = vpop.f32.mrb[0].mxu0
    %v6943 = vadd.f32 %v6773, %v6942
    %v6944 = vpop.f32.mrb[0].mxu0
    %6945 = vmatprep.mubr.f32.mxu0 0.0
    %v6946 = vand.u32 %v6026, 4294901760
    %6947 = vmatmul.mubr.f32.gmra.mrb[0].mxu0 %v6946
    %v6948 = vpop.f32.mrb[0].mxu0
    %v6949 = vadd.f32 %v6781, %v6948
    %v6950 = vpop.f32.mrb[0].mxu0
    %6951 = vmatprep.mubr.f32.mxu0 0.0
    %v6952 = vand.u32 %v6028, 4294901760
    %6953 = vmatmul.mubr.f32.gmra.mrb[0].mxu0 %v6952
    %v6954 = vpop.f32.mrb[0].mxu0
    %v6955 = vadd.f32 %v6789, %v6954
    %v6956 = vpop.f32.mrb[0].mxu0
    %6957 = vmatprep.mubr.f32.mxu0 0.0
    %v6958 = vand.u32 %v6030, 4294901760
    %6959 = vmatmul.mubr.f32.gmra.mrb[0].mxu0 %v6958
    %v6960 = vpop.f32.mrb[0].mxu0
    %v6961 = vadd.f32 %v6797, %v6960
    %v6962 = vpop.f32.mrb[0].mxu0
    %6963 = vdwg.mxu0
    %6964 = vmatprep.subr.mxu0 0.0
    %v6965 = vand.u32 %v6033, 4294901760
    %6966 = vmatpush1.msra.mxu0 %v6965
    %6967 = vmatprep.subr.mxu0 0.0
    %6968 = vmatpush1.msra.mxu0 0.0
    %6969 = vmatprep.subr.mxu0 0.0
    %6970 = vmatpush1.msra.mxu0 0.0
    %6971 = vmatprep.subr.mxu0 0.0
    %6972 = vmatpush1.msra.mxu0 0.0
    %6973 = vmatprep.subr.mxu0 0.0
    %6974 = vmatpush1.msra.mxu0 0.0
    %6975 = vmatprep.subr.mxu0 0.0
    %6976 = vmatpush1.msra.mxu0 0.0
    %6977 = vmatprep.subr.mxu0 0.0
    %6978 = vmatpush1.msra.mxu0 0.0
    %6979 = vmatprep.subr.mxu0 0.0
    %6980 = vmatpush1.msra.mxu0 0.0
    %6981 = vmatprep.subr.mxu0 0.0
    %6982 = vmatpush1.msra.mxu0 0.0
    %6983 = vmatprep.subr.mxu0 0.0
    %6984 = vmatpush1.msra.mxu0 0.0
    %6985 = vmatprep.subr.mxu0 0.0
    %6986 = vmatpush1.msra.mxu0 0.0
    %6987 = vmatprep.subr.mxu0 0.0
    %6988 = vmatpush1.msra.mxu0 0.0
    %6989 = vmatprep.subr.mxu0 0.0
    %6990 = vmatpush1.msra.mxu0 0.0
    %6991 = vmatprep.subr.mxu0 0.0
    %6992 = vmatpush1.msra.mxu0 0.0
    %6993 = vmatprep.subr.mxu0 0.0
    %6994 = vmatpush1.msra.mxu0 0.0
    %6995 = vmatprep.subr.mxu0 0.0
    %6996 = vmatpush1.msra.mxu0 0.0
    %6997 = vmatprep.subr.mxu0 0.0
    %6998 = vmatpush1.msra.mxu0 0.0
    %6999 = vmatprep.subr.mxu0 0.0
    %7000 = vmatpush1.msra.mxu0 0.0
    %7001 = vmatprep.subr.mxu0 0.0
    %7002 = vmatpush1.msra.mxu0 0.0
    %7003 = vmatprep.subr.mxu0 0.0
    %7004 = vmatpush1.msra.mxu0 0.0
    %7005 = vmatprep.subr.mxu0 0.0
    %7006 = vmatpush1.msra.mxu0 0.0
    %7007 = vmatprep.subr.mxu0 0.0
    %7008 = vmatpush1.msra.mxu0 0.0
    %7009 = vmatprep.subr.mxu0 0.0
    %7010 = vmatpush1.msra.mxu0 0.0
    %7011 = vmatprep.subr.mxu0 0.0
    %7012 = vmatpush1.msra.mxu0 0.0
    %7013 = vmatprep.subr.mxu0 0.0
    %7014 = vmatpush1.msra.mxu0 0.0
    %7015 = vmatprep.subr.mxu0 0.0
    %7016 = vmatpush1.msra.mxu0 0.0
    %7017 = vmatprep.subr.mxu0 0.0
    %7018 = vmatpush1.msra.mxu0 0.0
    %7019 = vmatprep.subr.mxu0 0.0
    %7020 = vmatpush1.msra.mxu0 0.0
    %7021 = vmatprep.subr.mxu0 0.0
    %7022 = vmatpush1.msra.mxu0 0.0
    %7023 = vmatprep.subr.mxu0 0.0
    %7024 = vmatpush1.msra.mxu0 0.0
    %7025 = vmatprep.subr.mxu0 0.0
    %7026 = vmatpush1.msra.mxu0 0.0
    %7027 = vmatprep.subr.mxu0 0.0
    %7028 = vmatpush1.msra.mxu0 0.0
    %7029 = vmatprep.mubr.f32.mxu0 0.0
    %v7030 = vand.u32 %v6000, 4294901760
    %7031 = vmatmul.mubr.f32.gmra.mrb[0].mxu0 %v7030
    %v7032 = vpop.f32.mrb[0].mxu0
    %v7033 = vadd.f32 %v6871, %v7032
    %v7034 = vpop.f32.mrb[0].mxu0
    %7035 = vmatprep.mubr.f32.mxu0 0.0
    %v7036 = vand.u32 %v6002, 4294901760
    %7037 = vmatmul.mubr.f32.gmra.mrb[0].mxu0 %v7036
    %v7038 = vpop.f32.mrb[0].mxu0
    %v7039 = vadd.f32 %v6877, %v7038
    %v7040 = vpop.f32.mrb[0].mxu0
    %7041 = vmatprep.mubr.f32.mxu0 0.0
    %v7042 = vand.u32 %v6004, 4294901760
    %7043 = vmatmul.mubr.f32.gmra.mrb[0].mxu0 %v7042
    %v7044 = vpop.f32.mrb[0].mxu0
    %v7045 = vadd.f32 %v6883, %v7044
    %v7046 = vpop.f32.mrb[0].mxu0
    %7047 = vmatprep.mubr.f32.mxu0 0.0
    %v7048 = vand.u32 %v6006, 4294901760
    %7049 = vmatmul.mubr.f32.gmra.mrb[0].mxu0 %v7048
    %v7050 = vpop.f32.mrb[0].mxu0
    %v7051 = vadd.f32 %v6889, %v7050
    %v7052 = vpop.f32.mrb[0].mxu0
    %7053 = vmatprep.mubr.f32.mxu0 0.0
    %v7054 = vand.u32 %v6008, 4294901760
    %7055 = vmatmul.mubr.f32.gmra.mrb[0].mxu0 %v7054
    %v7056 = vpop.f32.mrb[0].mxu0
    %v7057 = vadd.f32 %v6895, %v7056
    %v7058 = vpop.f32.mrb[0].mxu0
    %7059 = vmatprep.mubr.f32.mxu0 0.0
    %v7060 = vand.u32 %v6010, 4294901760
    %7061 = vmatmul.mubr.f32.gmra.mrb[0].mxu0 %v7060
    %v7062 = vpop.f32.mrb[0].mxu0
    %v7063 = vadd.f32 %v6901, %v7062
    %v7064 = vpop.f32.mrb[0].mxu0
    %7065 = vmatprep.mubr.f32.mxu0 0.0
    %v7066 = vand.u32 %v6012, 4294901760
    %7067 = vmatmul.mubr.f32.gmra.mrb[0].mxu0 %v7066
    %v7068 = vpop.f32.mrb[0].mxu0
    %v7069 = vadd.f32 %v6907, %v7068
    %v7070 = vpop.f32.mrb[0].mxu0
    %7071 = vmatprep.mubr.f32.mxu0 0.0
    %v7072 = vand.u32 %v6014, 4294901760
    %7073 = vmatmul.mubr.f32.gmra.mrb[0].mxu0 %v7072
    %v7074 = vpop.f32.mrb[0].mxu0
    %v7075 = vadd.f32 %v6913, %v7074
    %v7076 = vpop.f32.mrb[0].mxu0
    %7077 = vmatprep.mubr.f32.mxu0 0.0
    %v7078 = vand.u32 %v6016, 4294901760
    %7079 = vmatmul.mubr.f32.gmra.mrb[0].mxu0 %v7078
    %v7080 = vpop.f32.mrb[0].mxu0
    %v7081 = vadd.f32 %v6919, %v7080
    %v7082 = vpop.f32.mrb[0].mxu0
    %7083 = vmatprep.mubr.f32.mxu0 0.0
    %v7084 = vand.u32 %v6018, 4294901760
    %7085 = vmatmul.mubr.f32.gmra.mrb[0].mxu0 %v7084
    %v7086 = vpop.f32.mrb[0].mxu0
    %v7087 = vadd.f32 %v6925, %v7086
    %v7088 = vpop.f32.mrb[0].mxu0
    %7089 = vmatprep.mubr.f32.mxu0 0.0
    %v7090 = vand.u32 %v6020, 4294901760
    %7091 = vmatmul.mubr.f32.gmra.mrb[0].mxu0 %v7090
    %v7092 = vpop.f32.mrb[0].mxu0
    %v7093 = vadd.f32 %v6931, %v7092
    %v7094 = vpop.f32.mrb[0].mxu0
    %7095 = vmatprep.mubr.f32.mxu0 0.0
    %v7096 = vand.u32 %v6022, 4294901760
    %7097 = vmatmul.mubr.f32.gmra.mrb[0].mxu0 %v7096
    %v7098 = vpop.f32.mrb[0].mxu0
    %v7099 = vadd.f32 %v6937, %v7098
    %v7100 = vpop.f32.mrb[0].mxu0
    %7101 = vmatprep.mubr.f32.mxu0 0.0
    %v7102 = vand.u32 %v6024, 4294901760
    %7103 = vmatmul.mubr.f32.gmra.mrb[0].mxu0 %v7102
    %v7104 = vpop.f32.mrb[0].mxu0
    %v7105 = vadd.f32 %v6943, %v7104
    %v7106 = vpop.f32.mrb[0].mxu0
    %7107 = vmatprep.mubr.f32.mxu0 0.0
    %v7108 = vand.u32 %v6026, 4294901760
    %7109 = vmatmul.mubr.f32.gmra.mrb[0].mxu0 %v7108
    %v7110 = vpop.f32.mrb[0].mxu0
    %v7111 = vadd.f32 %v6949, %v7110
    %v7112 = vpop.f32.mrb[0].mxu0
    %7113 = vmatprep.mubr.f32.mxu0 0.0
    %v7114 = vand.u32 %v6028, 4294901760
    %7115 = vmatmul.mubr.f32.gmra.mrb[0].mxu0 %v7114
    %v7116 = vpop.f32.mrb[0].mxu0
    %v7117 = vadd.f32 %v6955, %v7116
    %v7118 = vpop.f32.mrb[0].mxu0
    %7119 = vmatprep.mubr.f32.mxu0 0.0
    %v7120 = vand.u32 %v6030, 4294901760
    %7121 = vmatmul.mubr.f32.gmra.mrb[0].mxu0 %v7120
    %v7122 = vpop.f32.mrb[0].mxu0
    %v7123 = vadd.f32 %v6961, %v7122
    %v7124 = vpop.f32.mrb[0].mxu0
    %7125 = vdwg.mxu0
    %v7126 = vadd.f32 %v5920, %v7033
    %v7127 = vadd.f32 %v5921, %v7039
    %v7128 = vadd.f32 %v5922, %v7045
    %v7129 = vadd.f32 %v5923, %v7051
    %v7130 = vadd.f32 %v5924, %v7057
    %v7131 = vadd.f32 %v5925, %v7063
    %v7132 = vadd.f32 %v5926, %v7069
    %v7133 = vadd.f32 %v5927, %v7075
    %v7134 = vadd.f32 %v5928, %v7081
    %v7135 = vadd.f32 %v5929, %v7087
    %v7136 = vadd.f32 %v5930, %v7093
    %v7137 = vadd.f32 %v5931, %v7099
    %v7138 = vadd.f32 %v5932, %v7105
    %v7139 = vadd.f32 %v5933, %v7111
    %v7140 = vadd.f32 %v5934, %v7117
    %v7141 = vadd.f32 %v5935, %v7123
    %v7143 = vsel %vm127, %v32, 0
    %v7146 = vsel %vm127, %v83, 0
    %v7149 = vsel %vm176, %v124, 0
    %7151 = vmatprep.subr.mxu0 0.0
    %v7152 = vand.u32 %v7149, 4294901760
    %7153 = vmatpush1.msra.mxu0 %v7152
    %7154 = vmatprep.subr.mxu0 0.0
    %7155 = vmatpush1.msra.mxu0 0.0
    %7156 = vmatprep.subr.mxu0 0.0
    %7157 = vmatpush1.msra.mxu0 0.0
    %7158 = vmatprep.subr.mxu0 0.0
    %7159 = vmatpush1.msra.mxu0 0.0
    %7160 = vmatprep.subr.mxu0 0.0
    %7161 = vmatpush1.msra.mxu0 0.0
    %7162 = vmatprep.subr.mxu0 0.0
    %7163 = vmatpush1.msra.mxu0 0.0
    %7164 = vmatprep.subr.mxu0 0.0
    %7165 = vmatpush1.msra.mxu0 0.0
    %7166 = vmatprep.subr.mxu0 0.0
    %7167 = vmatpush1.msra.mxu0 0.0
    %7168 = vmatprep.subr.mxu0 0.0
    %7169 = vmatpush1.msra.mxu0 0.0
    %7170 = vmatprep.subr.mxu0 0.0
    %7171 = vmatpush1.msra.mxu0 0.0
    %7172 = vmatprep.subr.mxu0 0.0
    %7173 = vmatpush1.msra.mxu0 0.0
    %7174 = vmatprep.subr.mxu0 0.0
    %7175 = vmatpush1.msra.mxu0 0.0
    %7176 = vmatprep.subr.mxu0 0.0
    %7177 = vmatpush1.msra.mxu0 0.0
    %7178 = vmatprep.subr.mxu0 0.0
    %7179 = vmatpush1.msra.mxu0 0.0
    %7180 = vmatprep.subr.mxu0 0.0
    %7181 = vmatpush1.msra.mxu0 0.0
    %7182 = vmatprep.subr.mxu0 0.0
    %7183 = vmatpush1.msra.mxu0 0.0
    %7184 = vmatprep.subr.mxu0 0.0
    %7185 = vmatpush1.msra.mxu0 0.0
    %7186 = vmatprep.subr.mxu0 0.0
    %7187 = vmatpush1.msra.mxu0 0.0
    %7188 = vmatprep.subr.mxu0 0.0
    %7189 = vmatpush1.msra.mxu0 0.0
    %7190 = vmatprep.subr.mxu0 0.0
    %7191 = vmatpush1.msra.mxu0 0.0
    %7192 = vmatprep.subr.mxu0 0.0
    %7193 = vmatpush1.msra.mxu0 0.0
    %7194 = vmatprep.subr.mxu0 0.0
    %7195 = vmatpush1.msra.mxu0 0.0
    %7196 = vmatprep.subr.mxu0 0.0
    %7197 = vmatpush1.msra.mxu0 0.0
    %7198 = vmatprep.subr.mxu0 0.0
    %7199 = vmatpush1.msra.mxu0 0.0
    %7200 = vmatprep.subr.mxu0 0.0
    %7201 = vmatpush1.msra.mxu0 0.0
    %7202 = vmatprep.subr.mxu0 0.0
    %7203 = vmatpush1.msra.mxu0 0.0
    %7204 = vmatprep.subr.mxu0 0.0
    %7205 = vmatpush1.msra.mxu0 0.0
    %7206 = vmatprep.subr.mxu0 0.0
    %7207 = vmatpush1.msra.mxu0 0.0
    %7208 = vmatprep.subr.mxu0 0.0
    %7209 = vmatpush1.msra.mxu0 0.0
    %7210 = vmatprep.subr.mxu0 0.0
    %7211 = vmatpush1.msra.mxu0 0.0
    %7212 = vmatprep.subr.mxu0 0.0
    %7213 = vmatpush1.msra.mxu0 0.0
    %7214 = vmatprep.subr.mxu0 0.0
    %7215 = vmatpush1.msra.mxu0 0.0
    %7216 = vmatprep.mubr.f32.mxu0 0.0
    %v7217 = vand.u32 %v1275, 4294901760
    %v7218 = vsub.f32 %v1275, %v7217
    %v7219 = vand.u32 %v7218, 4294901760
    %v7220 = vsub.f32 %v7218, %v7219
    %v7221 = vand.u32 %v7220, 4294901760
    %7222 = vmatmul.mubr.f32.gmra.mrb[0].mxu0 %v7221
    %v7223 = vpop.f32.mrb[0].mxu0
    %v7224 = vadd.f32 0.0, %v7223
    %v7225 = vpop.f32.mrb[0].mxu0
    %7226 = vmatprep.mubr.f32.mxu0 0.0
    %v7227 = vand.u32 %v1278, 4294901760
    %v7228 = vsub.f32 %v1278, %v7227
    %v7229 = vand.u32 %v7228, 4294901760
    %v7230 = vsub.f32 %v7228, %v7229
    %v7231 = vand.u32 %v7230, 4294901760
    %7232 = vmatmul.mubr.f32.gmra.mrb[0].mxu0 %v7231
    %v7233 = vpop.f32.mrb[0].mxu0
    %v7234 = vadd.f32 0.0, %v7233
    %v7235 = vpop.f32.mrb[0].mxu0
    %7236 = vmatprep.mubr.f32.mxu0 0.0
    %v7237 = vand.u32 %v1281, 4294901760
    %v7238 = vsub.f32 %v1281, %v7237
    %v7239 = vand.u32 %v7238, 4294901760
    %v7240 = vsub.f32 %v7238, %v7239
    %v7241 = vand.u32 %v7240, 4294901760
    %7242 = vmatmul.mubr.f32.gmra.mrb[0].mxu0 %v7241
    %v7243 = vpop.f32.mrb[0].mxu0
    %v7244 = vadd.f32 0.0, %v7243
    %v7245 = vpop.f32.mrb[0].mxu0
    %7246 = vmatprep.mubr.f32.mxu0 0.0
    %v7247 = vand.u32 %v1284, 4294901760
    %v7248 = vsub.f32 %v1284, %v7247
    %v7249 = vand.u32 %v7248, 4294901760
    %v7250 = vsub.f32 %v7248, %v7249
    %v7251 = vand.u32 %v7250, 4294901760
    %7252 = vmatmul.mubr.f32.gmra.mrb[0].mxu0 %v7251
    %v7253 = vpop.f32.mrb[0].mxu0
    %v7254 = vadd.f32 0.0, %v7253
    %v7255 = vpop.f32.mrb[0].mxu0
    %7256 = vmatprep.mubr.f32.mxu0 0.0
    %v7257 = vand.u32 %v1287, 4294901760
    %v7258 = vsub.f32 %v1287, %v7257
    %v7259 = vand.u32 %v7258, 4294901760
    %v7260 = vsub.f32 %v7258, %v7259
    %v7261 = vand.u32 %v7260, 4294901760
    %7262 = vmatmul.mubr.f32.gmra.mrb[0].mxu0 %v7261
    %v7263 = vpop.f32.mrb[0].mxu0
    %v7264 = vadd.f32 0.0, %v7263
    %v7265 = vpop.f32.mrb[0].mxu0
    %7266 = vmatprep.mubr.f32.mxu0 0.0
    %v7267 = vand.u32 %v1290, 4294901760
    %v7268 = vsub.f32 %v1290, %v7267
    %v7269 = vand.u32 %v7268, 4294901760
    %v7270 = vsub.f32 %v7268, %v7269
    %v7271 = vand.u32 %v7270, 4294901760
    %7272 = vmatmul.mubr.f32.gmra.mrb[0].mxu0 %v7271
    %v7273 = vpop.f32.mrb[0].mxu0
    %v7274 = vadd.f32 0.0, %v7273
    %v7275 = vpop.f32.mrb[0].mxu0
    %7276 = vmatprep.mubr.f32.mxu0 0.0
    %v7277 = vand.u32 %v1293, 4294901760
    %v7278 = vsub.f32 %v1293, %v7277
    %v7279 = vand.u32 %v7278, 4294901760
    %v7280 = vsub.f32 %v7278, %v7279
    %v7281 = vand.u32 %v7280, 4294901760
    %7282 = vmatmul.mubr.f32.gmra.mrb[0].mxu0 %v7281
    %v7283 = vpop.f32.mrb[0].mxu0
    %v7284 = vadd.f32 0.0, %v7283
    %v7285 = vpop.f32.mrb[0].mxu0
    %7286 = vmatprep.mubr.f32.mxu0 0.0
    %v7287 = vand.u32 %v7143, 4294901760
    %v7288 = vsub.f32 %v7143, %v7287
    %v7289 = vand.u32 %v7288, 4294901760
    %v7290 = vsub.f32 %v7288, %v7289
    %v7291 = vand.u32 %v7290, 4294901760
    %7292 = vmatmul.mubr.f32.gmra.mrb[0].mxu0 %v7291
    %v7293 = vpop.f32.mrb[0].mxu0
    %v7294 = vadd.f32 0.0, %v7293
    %v7295 = vpop.f32.mrb[0].mxu0
    %7296 = vmatprep.mubr.f32.mxu0 0.0
    %v7297 = vand.u32 %v1299, 4294901760
    %v7298 = vsub.f32 %v1299, %v7297
    %v7299 = vand.u32 %v7298, 4294901760
    %v7300 = vsub.f32 %v7298, %v7299
    %v7301 = vand.u32 %v7300, 4294901760
    %7302 = vmatmul.mubr.f32.gmra.mrb[0].mxu0 %v7301
    %v7303 = vpop.f32.mrb[0].mxu0
    %v7304 = vadd.f32 0.0, %v7303
    %v7305 = vpop.f32.mrb[0].mxu0
    %7306 = vmatprep.mubr.f32.mxu0 0.0
    %v7307 = vand.u32 %v1302, 4294901760
    %v7308 = vsub.f32 %v1302, %v7307
    %v7309 = vand.u32 %v7308, 4294901760
    %v7310 = vsub.f32 %v7308, %v7309
    %v7311 = vand.u32 %v7310, 4294901760
    %7312 = vmatmul.mubr.f32.gmra.mrb[0].mxu0 %v7311
    %v7313 = vpop.f32.mrb[0].mxu0
    %v7314 = vadd.f32 0.0, %v7313
    %v7315 = vpop.f32.mrb[0].mxu0
    %7316 = vmatprep.mubr.f32.mxu0 0.0
    %v7317 = vand.u32 %v1305, 4294901760
    %v7318 = vsub.f32 %v1305, %v7317
    %v7319 = vand.u32 %v7318, 4294901760
    %v7320 = vsub.f32 %v7318, %v7319
    %v7321 = vand.u32 %v7320, 4294901760
    %7322 = vmatmul.mubr.f32.gmra.mrb[0].mxu0 %v7321
    %v7323 = vpop.f32.mrb[0].mxu0
    %v7324 = vadd.f32 0.0, %v7323
    %v7325 = vpop.f32.mrb[0].mxu0
    %7326 = vmatprep.mubr.f32.mxu0 0.0
    %v7327 = vand.u32 %v1308, 4294901760
    %v7328 = vsub.f32 %v1308, %v7327
    %v7329 = vand.u32 %v7328, 4294901760
    %v7330 = vsub.f32 %v7328, %v7329
    %v7331 = vand.u32 %v7330, 4294901760
    %7332 = vmatmul.mubr.f32.gmra.mrb[0].mxu0 %v7331
    %v7333 = vpop.f32.mrb[0].mxu0
    %v7334 = vadd.f32 0.0, %v7333
    %v7335 = vpop.f32.mrb[0].mxu0
    %7336 = vmatprep.mubr.f32.mxu0 0.0
    %v7337 = vand.u32 %v1311, 4294901760
    %v7338 = vsub.f32 %v1311, %v7337
    %v7339 = vand.u32 %v7338, 4294901760
    %v7340 = vsub.f32 %v7338, %v7339
    %v7341 = vand.u32 %v7340, 4294901760
    %7342 = vmatmul.mubr.f32.gmra.mrb[0].mxu0 %v7341
    %v7343 = vpop.f32.mrb[0].mxu0
    %v7344 = vadd.f32 0.0, %v7343
    %v7345 = vpop.f32.mrb[0].mxu0
    %7346 = vmatprep.mubr.f32.mxu0 0.0
    %v7347 = vand.u32 %v1314, 4294901760
    %v7348 = vsub.f32 %v1314, %v7347
    %v7349 = vand.u32 %v7348, 4294901760
    %v7350 = vsub.f32 %v7348, %v7349
    %v7351 = vand.u32 %v7350, 4294901760
    %7352 = vmatmul.mubr.f32.gmra.mrb[0].mxu0 %v7351
    %v7353 = vpop.f32.mrb[0].mxu0
    %v7354 = vadd.f32 0.0, %v7353
    %v7355 = vpop.f32.mrb[0].mxu0
    %7356 = vmatprep.mubr.f32.mxu0 0.0
    %v7357 = vand.u32 %v1317, 4294901760
    %v7358 = vsub.f32 %v1317, %v7357
    %v7359 = vand.u32 %v7358, 4294901760
    %v7360 = vsub.f32 %v7358, %v7359
    %v7361 = vand.u32 %v7360, 4294901760
    %7362 = vmatmul.mubr.f32.gmra.mrb[0].mxu0 %v7361
    %v7363 = vpop.f32.mrb[0].mxu0
    %v7364 = vadd.f32 0.0, %v7363
    %v7365 = vpop.f32.mrb[0].mxu0
    %7366 = vmatprep.mubr.f32.mxu0 0.0
    %v7367 = vand.u32 %v7146, 4294901760
    %v7368 = vsub.f32 %v7146, %v7367
    %v7369 = vand.u32 %v7368, 4294901760
    %v7370 = vsub.f32 %v7368, %v7369
    %v7371 = vand.u32 %v7370, 4294901760
    %7372 = vmatmul.mubr.f32.gmra.mrb[0].mxu0 %v7371
    %v7373 = vpop.f32.mrb[0].mxu0
    %v7374 = vadd.f32 0.0, %v7373
    %v7375 = vpop.f32.mrb[0].mxu0
    %7376 = vdwg.mxu0
    %7377 = vmatprep.subr.mxu0 0.0
    %v7378 = vand.u32 %v7149, 4294901760
    %v7379 = vsub.f32 %v7149, %v7378
    %v7380 = vand.u32 %v7379, 4294901760
    %v7381 = vsub.f32 %v7379, %v7380
    %v7382 = vand.u32 %v7381, 4294901760
    %7383 = vmatpush1.msra.mxu0 %v7382
    %7384 = vmatprep.subr.mxu0 0.0
    %7385 = vmatpush1.msra.mxu0 0.0
    %7386 = vmatprep.subr.mxu0 0.0
    %7387 = vmatpush1.msra.mxu0 0.0
    %7388 = vmatprep.subr.mxu0 0.0
    %7389 = vmatpush1.msra.mxu0 0.0
    %7390 = vmatprep.subr.mxu0 0.0
    %7391 = vmatpush1.msra.mxu0 0.0
    %7392 = vmatprep.subr.mxu0 0.0
    %7393 = vmatpush1.msra.mxu0 0.0
    %7394 = vmatprep.subr.mxu0 0.0
    %7395 = vmatpush1.msra.mxu0 0.0
    %7396 = vmatprep.subr.mxu0 0.0
    %7397 = vmatpush1.msra.mxu0 0.0
    %7398 = vmatprep.subr.mxu0 0.0
    %7399 = vmatpush1.msra.mxu0 0.0
    %7400 = vmatprep.subr.mxu0 0.0
    %7401 = vmatpush1.msra.mxu0 0.0
    %7402 = vmatprep.subr.mxu0 0.0
    %7403 = vmatpush1.msra.mxu0 0.0
    %7404 = vmatprep.subr.mxu0 0.0
    %7405 = vmatpush1.msra.mxu0 0.0
    %7406 = vmatprep.subr.mxu0 0.0
    %7407 = vmatpush1.msra.mxu0 0.0
    %7408 = vmatprep.subr.mxu0 0.0
    %7409 = vmatpush1.msra.mxu0 0.0
    %7410 = vmatprep.subr.mxu0 0.0
    %7411 = vmatpush1.msra.mxu0 0.0
    %7412 = vmatprep.subr.mxu0 0.0
    %7413 = vmatpush1.msra.mxu0 0.0
    %7414 = vmatprep.subr.mxu0 0.0
    %7415 = vmatpush1.msra.mxu0 0.0
    %7416 = vmatprep.subr.mxu0 0.0
    %7417 = vmatpush1.msra.mxu0 0.0
    %7418 = vmatprep.subr.mxu0 0.0
    %7419 = vmatpush1.msra.mxu0 0.0
    %7420 = vmatprep.subr.mxu0 0.0
    %7421 = vmatpush1.msra.mxu0 0.0
    %7422 = vmatprep.subr.mxu0 0.0
    %7423 = vmatpush1.msra.mxu0 0.0
    %7424 = vmatprep.subr.mxu0 0.0
    %7425 = vmatpush1.msra.mxu0 0.0
    %7426 = vmatprep.subr.mxu0 0.0
    %7427 = vmatpush1.msra.mxu0 0.0
    %7428 = vmatprep.subr.mxu0 0.0
    %7429 = vmatpush1.msra.mxu0 0.0
    %7430 = vmatprep.subr.mxu0 0.0
    %7431 = vmatpush1.msra.mxu0 0.0
    %7432 = vmatprep.subr.mxu0 0.0
    %7433 = vmatpush1.msra.mxu0 0.0
    %7434 = vmatprep.subr.mxu0 0.0
    %7435 = vmatpush1.msra.mxu0 0.0
    %7436 = vmatprep.subr.mxu0 0.0
    %7437 = vmatpush1.msra.mxu0 0.0
    %7438 = vmatprep.subr.mxu0 0.0
    %7439 = vmatpush1.msra.mxu0 0.0
    %7440 = vmatprep.subr.mxu0 0.0
    %7441 = vmatpush1.msra.mxu0 0.0
    %7442 = vmatprep.subr.mxu0 0.0
    %7443 = vmatpush1.msra.mxu0 0.0
    %7444 = vmatprep.subr.mxu0 0.0
    %7445 = vmatpush1.msra.mxu0 0.0
    %7446 = vmatprep.mubr.f32.mxu0 0.0
    %v7447 = vand.u32 %v1275, 4294901760
    %7448 = vmatmul.mubr.f32.gmra.mrb[0].mxu0 %v7447
    %v7449 = vpop.f32.mrb[0].mxu0
    %v7450 = vadd.f32 %v7224, %v7449
    %v7451 = vpop.f32.mrb[0].mxu0
    %7452 = vmatprep.mubr.f32.mxu0 0.0
    %v7453 = vand.u32 %v1278, 4294901760
    %7454 = vmatmul.mubr.f32.gmra.mrb[0].mxu0 %v7453
    %v7455 = vpop.f32.mrb[0].mxu0
    %v7456 = vadd.f32 %v7234, %v7455
    %v7457 = vpop.f32.mrb[0].mxu0
    %7458 = vmatprep.mubr.f32.mxu0 0.0
    %v7459 = vand.u32 %v1281, 4294901760
    %7460 = vmatmul.mubr.f32.gmra.mrb[0].mxu0 %v7459
    %v7461 = vpop.f32.mrb[0].mxu0
    %v7462 = vadd.f32 %v7244, %v7461
    %v7463 = vpop.f32.mrb[0].mxu0
    %7464 = vmatprep.mubr.f32.mxu0 0.0
    %v7465 = vand.u32 %v1284, 4294901760
    %7466 = vmatmul.mubr.f32.gmra.mrb[0].mxu0 %v7465
    %v7467 = vpop.f32.mrb[0].mxu0
    %v7468 = vadd.f32 %v7254, %v7467
    %v7469 = vpop.f32.mrb[0].mxu0
    %7470 = vmatprep.mubr.f32.mxu0 0.0
    %v7471 = vand.u32 %v1287, 4294901760
    %7472 = vmatmul.mubr.f32.gmra.mrb[0].mxu0 %v7471
    %v7473 = vpop.f32.mrb[0].mxu0
    %v7474 = vadd.f32 %v7264, %v7473
    %v7475 = vpop.f32.mrb[0].mxu0
    %7476 = vmatprep.mubr.f32.mxu0 0.0
    %v7477 = vand.u32 %v1290, 4294901760
    %7478 = vmatmul.mubr.f32.gmra.mrb[0].mxu0 %v7477
    %v7479 = vpop.f32.mrb[0].mxu0
    %v7480 = vadd.f32 %v7274, %v7479
    %v7481 = vpop.f32.mrb[0].mxu0
    %7482 = vmatprep.mubr.f32.mxu0 0.0
    %v7483 = vand.u32 %v1293, 4294901760
    %7484 = vmatmul.mubr.f32.gmra.mrb[0].mxu0 %v7483
    %v7485 = vpop.f32.mrb[0].mxu0
    %v7486 = vadd.f32 %v7284, %v7485
    %v7487 = vpop.f32.mrb[0].mxu0
    %7488 = vmatprep.mubr.f32.mxu0 0.0
    %v7489 = vand.u32 %v7143, 4294901760
    %7490 = vmatmul.mubr.f32.gmra.mrb[0].mxu0 %v7489
    %v7491 = vpop.f32.mrb[0].mxu0
    %v7492 = vadd.f32 %v7294, %v7491
    %v7493 = vpop.f32.mrb[0].mxu0
    %7494 = vmatprep.mubr.f32.mxu0 0.0
    %v7495 = vand.u32 %v1299, 4294901760
    %7496 = vmatmul.mubr.f32.gmra.mrb[0].mxu0 %v7495
    %v7497 = vpop.f32.mrb[0].mxu0
    %v7498 = vadd.f32 %v7304, %v7497
    %v7499 = vpop.f32.mrb[0].mxu0
    %7500 = vmatprep.mubr.f32.mxu0 0.0
    %v7501 = vand.u32 %v1302, 4294901760
    %7502 = vmatmul.mubr.f32.gmra.mrb[0].mxu0 %v7501
    %v7503 = vpop.f32.mrb[0].mxu0
    %v7504 = vadd.f32 %v7314, %v7503
    %v7505 = vpop.f32.mrb[0].mxu0
    %7506 = vmatprep.mubr.f32.mxu0 0.0
    %v7507 = vand.u32 %v1305, 4294901760
    %7508 = vmatmul.mubr.f32.gmra.mrb[0].mxu0 %v7507
    %v7509 = vpop.f32.mrb[0].mxu0
    %v7510 = vadd.f32 %v7324, %v7509
    %v7511 = vpop.f32.mrb[0].mxu0
    %7512 = vmatprep.mubr.f32.mxu0 0.0
    %v7513 = vand.u32 %v1308, 4294901760
    %7514 = vmatmul.mubr.f32.gmra.mrb[0].mxu0 %v7513
    %v7515 = vpop.f32.mrb[0].mxu0
    %v7516 = vadd.f32 %v7334, %v7515
    %v7517 = vpop.f32.mrb[0].mxu0
    %7518 = vmatprep.mubr.f32.mxu0 0.0
    %v7519 = vand.u32 %v1311, 4294901760
    %7520 = vmatmul.mubr.f32.gmra.mrb[0].mxu0 %v7519
    %v7521 = vpop.f32.mrb[0].mxu0
    %v7522 = vadd.f32 %v7344, %v7521
    %v7523 = vpop.f32.mrb[0].mxu0
    %7524 = vmatprep.mubr.f32.mxu0 0.0
    %v7525 = vand.u32 %v1314, 4294901760
    %7526 = vmatmul.mubr.f32.gmra.mrb[0].mxu0 %v7525
    %v7527 = vpop.f32.mrb[0].mxu0
    %v7528 = vadd.f32 %v7354, %v7527
    %v7529 = vpop.f32.mrb[0].mxu0
    %7530 = vmatprep.mubr.f32.mxu0 0.0
    %v7531 = vand.u32 %v1317, 4294901760
    %7532 = vmatmul.mubr.f32.gmra.mrb[0].mxu0 %v7531
    %v7533 = vpop.f32.mrb[0].mxu0
    %v7534 = vadd.f32 %v7364, %v7533
    %v7535 = vpop.f32.mrb[0].mxu0
    %7536 = vmatprep.mubr.f32.mxu0 0.0
    %v7537 = vand.u32 %v7146, 4294901760
    %7538 = vmatmul.mubr.f32.gmra.mrb[0].mxu0 %v7537
    %v7539 = vpop.f32.mrb[0].mxu0
    %v7540 = vadd.f32 %v7374, %v7539
    %v7541 = vpop.f32.mrb[0].mxu0
    %7542 = vdwg.mxu0
    %7543 = vmatprep.subr.mxu0 0.0
    %v7544 = vand.u32 %v7149, 4294901760
    %v7545 = vsub.f32 %v7149, %v7544
    %7546 = vmatpush1.msra.mxu0 %v7545
    %7547 = vmatprep.subr.mxu0 0.0
    %7548 = vmatpush1.msra.mxu0 0.0
    %7549 = vmatprep.subr.mxu0 0.0
    %7550 = vmatpush1.msra.mxu0 0.0
    %7551 = vmatprep.subr.mxu0 0.0
    %7552 = vmatpush1.msra.mxu0 0.0
    %7553 = vmatprep.subr.mxu0 0.0
    %7554 = vmatpush1.msra.mxu0 0.0
    %7555 = vmatprep.subr.mxu0 0.0
    %7556 = vmatpush1.msra.mxu0 0.0
    %7557 = vmatprep.subr.mxu0 0.0
    %7558 = vmatpush1.msra.mxu0 0.0
    %7559 = vmatprep.subr.mxu0 0.0
    %7560 = vmatpush1.msra.mxu0 0.0
    %7561 = vmatprep.subr.mxu0 0.0
    %7562 = vmatpush1.msra.mxu0 0.0
    %7563 = vmatprep.subr.mxu0 0.0
    %7564 = vmatpush1.msra.mxu0 0.0
    %7565 = vmatprep.subr.mxu0 0.0
    %7566 = vmatpush1.msra.mxu0 0.0
    %7567 = vmatprep.subr.mxu0 0.0
    %7568 = vmatpush1.msra.mxu0 0.0
    %7569 = vmatprep.subr.mxu0 0.0
    %7570 = vmatpush1.msra.mxu0 0.0
    %7571 = vmatprep.subr.mxu0 0.0
    %7572 = vmatpush1.msra.mxu0 0.0
    %7573 = vmatprep.subr.mxu0 0.0
    %7574 = vmatpush1.msra.mxu0 0.0
    %7575 = vmatprep.subr.mxu0 0.0
    %7576 = vmatpush1.msra.mxu0 0.0
    %7577 = vmatprep.subr.mxu0 0.0
    %7578 = vmatpush1.msra.mxu0 0.0
    %7579 = vmatprep.subr.mxu0 0.0
    %7580 = vmatpush1.msra.mxu0 0.0
    %7581 = vmatprep.subr.mxu0 0.0
    %7582 = vmatpush1.msra.mxu0 0.0
    %7583 = vmatprep.subr.mxu0 0.0
    %7584 = vmatpush1.msra.mxu0 0.0
    %7585 = vmatprep.subr.mxu0 0.0
    %7586 = vmatpush1.msra.mxu0 0.0
    %7587 = vmatprep.subr.mxu0 0.0
    %7588 = vmatpush1.msra.mxu0 0.0
    %7589 = vmatprep.subr.mxu0 0.0
    %7590 = vmatpush1.msra.mxu0 0.0
    %7591 = vmatprep.subr.mxu0 0.0
    %7592 = vmatpush1.msra.mxu0 0.0
    %7593 = vmatprep.subr.mxu0 0.0
    %7594 = vmatpush1.msra.mxu0 0.0
    %7595 = vmatprep.subr.mxu0 0.0
    %7596 = vmatpush1.msra.mxu0 0.0
    %7597 = vmatprep.subr.mxu0 0.0
    %7598 = vmatpush1.msra.mxu0 0.0
    %7599 = vmatprep.subr.mxu0 0.0
    %7600 = vmatpush1.msra.mxu0 0.0
    %7601 = vmatprep.subr.mxu0 0.0
    %7602 = vmatpush1.msra.mxu0 0.0
    %7603 = vmatprep.subr.mxu0 0.0
    %7604 = vmatpush1.msra.mxu0 0.0
    %7605 = vmatprep.subr.mxu0 0.0
    %7606 = vmatpush1.msra.mxu0 0.0
    %7607 = vmatprep.subr.mxu0 0.0
    %7608 = vmatpush1.msra.mxu0 0.0
    %7609 = vmatprep.mubr.f32.mxu0 0.0
    %v7610 = vand.u32 %v1275, 4294901760
    %v7611 = vsub.f32 %v1275, %v7610
    %7612 = vmatmul.mubr.f32.gmra.mrb[0].mxu0 %v7611
    %v7613 = vpop.f32.mrb[0].mxu0
    %v7614 = vadd.f32 %v7450, %v7613
    %v7615 = vpop.f32.mrb[0].mxu0
    %7616 = vmatprep.mubr.f32.mxu0 0.0
    %v7617 = vand.u32 %v1278, 4294901760
    %v7618 = vsub.f32 %v1278, %v7617
    %7619 = vmatmul.mubr.f32.gmra.mrb[0].mxu0 %v7618
    %v7620 = vpop.f32.mrb[0].mxu0
    %v7621 = vadd.f32 %v7456, %v7620
    %v7622 = vpop.f32.mrb[0].mxu0
    %7623 = vmatprep.mubr.f32.mxu0 0.0
    %v7624 = vand.u32 %v1281, 4294901760
    %v7625 = vsub.f32 %v1281, %v7624
    %7626 = vmatmul.mubr.f32.gmra.mrb[0].mxu0 %v7625
    %v7627 = vpop.f32.mrb[0].mxu0
    %v7628 = vadd.f32 %v7462, %v7627
    %v7629 = vpop.f32.mrb[0].mxu0
    %7630 = vmatprep.mubr.f32.mxu0 0.0
    %v7631 = vand.u32 %v1284, 4294901760
    %v7632 = vsub.f32 %v1284, %v7631
    %7633 = vmatmul.mubr.f32.gmra.mrb[0].mxu0 %v7632
    %v7634 = vpop.f32.mrb[0].mxu0
    %v7635 = vadd.f32 %v7468, %v7634
    %v7636 = vpop.f32.mrb[0].mxu0
    %7637 = vmatprep.mubr.f32.mxu0 0.0
    %v7638 = vand.u32 %v1287, 4294901760
    %v7639 = vsub.f32 %v1287, %v7638
    %7640 = vmatmul.mubr.f32.gmra.mrb[0].mxu0 %v7639
    %v7641 = vpop.f32.mrb[0].mxu0
    %v7642 = vadd.f32 %v7474, %v7641
    %v7643 = vpop.f32.mrb[0].mxu0
    %7644 = vmatprep.mubr.f32.mxu0 0.0
    %v7645 = vand.u32 %v1290, 4294901760
    %v7646 = vsub.f32 %v1290, %v7645
    %7647 = vmatmul.mubr.f32.gmra.mrb[0].mxu0 %v7646
    %v7648 = vpop.f32.mrb[0].mxu0
    %v7649 = vadd.f32 %v7480, %v7648
    %v7650 = vpop.f32.mrb[0].mxu0
    %7651 = vmatprep.mubr.f32.mxu0 0.0
    %v7652 = vand.u32 %v1293, 4294901760
    %v7653 = vsub.f32 %v1293, %v7652
    %7654 = vmatmul.mubr.f32.gmra.mrb[0].mxu0 %v7653
    %v7655 = vpop.f32.mrb[0].mxu0
    %v7656 = vadd.f32 %v7486, %v7655
    %v7657 = vpop.f32.mrb[0].mxu0
    %7658 = vmatprep.mubr.f32.mxu0 0.0
    %v7659 = vand.u32 %v7143, 4294901760
    %v7660 = vsub.f32 %v7143, %v7659
    %7661 = vmatmul.mubr.f32.gmra.mrb[0].mxu0 %v7660
    %v7662 = vpop.f32.mrb[0].mxu0
    %v7663 = vadd.f32 %v7492, %v7662
    %v7664 = vpop.f32.mrb[0].mxu0
    %7665 = vmatprep.mubr.f32.mxu0 0.0
    %v7666 = vand.u32 %v1299, 4294901760
    %v7667 = vsub.f32 %v1299, %v7666
    %7668 = vmatmul.mubr.f32.gmra.mrb[0].mxu0 %v7667
    %v7669 = vpop.f32.mrb[0].mxu0
    %v7670 = vadd.f32 %v7498, %v7669
    %v7671 = vpop.f32.mrb[0].mxu0
    %7672 = vmatprep.mubr.f32.mxu0 0.0
    %v7673 = vand.u32 %v1302, 4294901760
    %v7674 = vsub.f32 %v1302, %v7673
    %7675 = vmatmul.mubr.f32.gmra.mrb[0].mxu0 %v7674
    %v7676 = vpop.f32.mrb[0].mxu0
    %v7677 = vadd.f32 %v7504, %v7676
    %v7678 = vpop.f32.mrb[0].mxu0
    %7679 = vmatprep.mubr.f32.mxu0 0.0
    %v7680 = vand.u32 %v1305, 4294901760
    %v7681 = vsub.f32 %v1305, %v7680
    %7682 = vmatmul.mubr.f32.gmra.mrb[0].mxu0 %v7681
    %v7683 = vpop.f32.mrb[0].mxu0
    %v7684 = vadd.f32 %v7510, %v7683
    %v7685 = vpop.f32.mrb[0].mxu0
    %7686 = vmatprep.mubr.f32.mxu0 0.0
    %v7687 = vand.u32 %v1308, 4294901760
    %v7688 = vsub.f32 %v1308, %v7687
    %7689 = vmatmul.mubr.f32.gmra.mrb[0].mxu0 %v7688
    %v7690 = vpop.f32.mrb[0].mxu0
    %v7691 = vadd.f32 %v7516, %v7690
    %v7692 = vpop.f32.mrb[0].mxu0
    %7693 = vmatprep.mubr.f32.mxu0 0.0
    %v7694 = vand.u32 %v1311, 4294901760
    %v7695 = vsub.f32 %v1311, %v7694
    %7696 = vmatmul.mubr.f32.gmra.mrb[0].mxu0 %v7695
    %v7697 = vpop.f32.mrb[0].mxu0
    %v7698 = vadd.f32 %v7522, %v7697
    %v7699 = vpop.f32.mrb[0].mxu0
    %7700 = vmatprep.mubr.f32.mxu0 0.0
    %v7701 = vand.u32 %v1314, 4294901760
    %v7702 = vsub.f32 %v1314, %v7701
    %7703 = vmatmul.mubr.f32.gmra.mrb[0].mxu0 %v7702
    %v7704 = vpop.f32.mrb[0].mxu0
    %v7705 = vadd.f32 %v7528, %v7704
    %v7706 = vpop.f32.mrb[0].mxu0
    %7707 = vmatprep.mubr.f32.mxu0 0.0
    %v7708 = vand.u32 %v1317, 4294901760
    %v7709 = vsub.f32 %v1317, %v7708
    %7710 = vmatmul.mubr.f32.gmra.mrb[0].mxu0 %v7709
    %v7711 = vpop.f32.mrb[0].mxu0
    %v7712 = vadd.f32 %v7534, %v7711
    %v7713 = vpop.f32.mrb[0].mxu0
    %7714 = vmatprep.mubr.f32.mxu0 0.0
    %v7715 = vand.u32 %v7146, 4294901760
    %v7716 = vsub.f32 %v7146, %v7715
    %7717 = vmatmul.mubr.f32.gmra.mrb[0].mxu0 %v7716
    %v7718 = vpop.f32.mrb[0].mxu0
    %v7719 = vadd.f32 %v7540, %v7718
    %v7720 = vpop.f32.mrb[0].mxu0
    %7721 = vdwg.mxu0
    %7722 = vmatprep.subr.mxu0 0.0
    %v7723 = vand.u32 %v7149, 4294901760
    %7724 = vmatpush1.msra.mxu0 %v7723
    %7725 = vmatprep.subr.mxu0 0.0
    %7726 = vmatpush1.msra.mxu0 0.0
    %7727 = vmatprep.subr.mxu0 0.0
    %7728 = vmatpush1.msra.mxu0 0.0
    %7729 = vmatprep.subr.mxu0 0.0
    %7730 = vmatpush1.msra.mxu0 0.0
    %7731 = vmatprep.subr.mxu0 0.0
    %7732 = vmatpush1.msra.mxu0 0.0
    %7733 = vmatprep.subr.mxu0 0.0
    %7734 = vmatpush1.msra.mxu0 0.0
    %7735 = vmatprep.subr.mxu0 0.0
    %7736 = vmatpush1.msra.mxu0 0.0
    %7737 = vmatprep.subr.mxu0 0.0
    %7738 = vmatpush1.msra.mxu0 0.0
    %7739 = vmatprep.subr.mxu0 0.0
    %7740 = vmatpush1.msra.mxu0 0.0
    %7741 = vmatprep.subr.mxu0 0.0
    %7742 = vmatpush1.msra.mxu0 0.0
    %7743 = vmatprep.subr.mxu0 0.0
    %7744 = vmatpush1.msra.mxu0 0.0
    %7745 = vmatprep.subr.mxu0 0.0
    %7746 = vmatpush1.msra.mxu0 0.0
    %7747 = vmatprep.subr.mxu0 0.0
    %7748 = vmatpush1.msra.mxu0 0.0
    %7749 = vmatprep.subr.mxu0 0.0
    %7750 = vmatpush1.msra.mxu0 0.0
    %7751 = vmatprep.subr.mxu0 0.0
    %7752 = vmatpush1.msra.mxu0 0.0
    %7753 = vmatprep.subr.mxu0 0.0
    %7754 = vmatpush1.msra.mxu0 0.0
    %7755 = vmatprep.subr.mxu0 0.0
    %7756 = vmatpush1.msra.mxu0 0.0
    %7757 = vmatprep.subr.mxu0 0.0
    %7758 = vmatpush1.msra.mxu0 0.0
    %7759 = vmatprep.subr.mxu0 0.0
    %7760 = vmatpush1.msra.mxu0 0.0
    %7761 = vmatprep.subr.mxu0 0.0
    %7762 = vmatpush1.msra.mxu0 0.0
    %7763 = vmatprep.subr.mxu0 0.0
    %7764 = vmatpush1.msra.mxu0 0.0
    %7765 = vmatprep.subr.mxu0 0.0
    %7766 = vmatpush1.msra.mxu0 0.0
    %7767 = vmatprep.subr.mxu0 0.0
    %7768 = vmatpush1.msra.mxu0 0.0
    %7769 = vmatprep.subr.mxu0 0.0
    %7770 = vmatpush1.msra.mxu0 0.0
    %7771 = vmatprep.subr.mxu0 0.0
    %7772 = vmatpush1.msra.mxu0 0.0
    %7773 = vmatprep.subr.mxu0 0.0
    %7774 = vmatpush1.msra.mxu0 0.0
    %7775 = vmatprep.subr.mxu0 0.0
    %7776 = vmatpush1.msra.mxu0 0.0
    %7777 = vmatprep.subr.mxu0 0.0
    %7778 = vmatpush1.msra.mxu0 0.0
    %7779 = vmatprep.subr.mxu0 0.0
    %7780 = vmatpush1.msra.mxu0 0.0
    %7781 = vmatprep.subr.mxu0 0.0
    %7782 = vmatpush1.msra.mxu0 0.0
    %7783 = vmatprep.subr.mxu0 0.0
    %7784 = vmatpush1.msra.mxu0 0.0
    %7785 = vmatprep.subr.mxu0 0.0
    %7786 = vmatpush1.msra.mxu0 0.0
    %7787 = vmatprep.mubr.f32.mxu0 0.0
    %v7788 = vand.u32 %v1275, 4294901760
    %v7789 = vsub.f32 %v1275, %v7788
    %v7790 = vand.u32 %v7789, 4294901760
    %7791 = vmatmul.mubr.f32.gmra.mrb[0].mxu0 %v7790
    %v7792 = vpop.f32.mrb[0].mxu0
    %v7793 = vadd.f32 %v7614, %v7792
    %v7794 = vpop.f32.mrb[0].mxu0
    %7795 = vmatprep.mubr.f32.mxu0 0.0
    %v7796 = vand.u32 %v1278, 4294901760
    %v7797 = vsub.f32 %v1278, %v7796
    %v7798 = vand.u32 %v7797, 4294901760
    %7799 = vmatmul.mubr.f32.gmra.mrb[0].mxu0 %v7798
    %v7800 = vpop.f32.mrb[0].mxu0
    %v7801 = vadd.f32 %v7621, %v7800
    %v7802 = vpop.f32.mrb[0].mxu0
    %7803 = vmatprep.mubr.f32.mxu0 0.0
    %v7804 = vand.u32 %v1281, 4294901760
    %v7805 = vsub.f32 %v1281, %v7804
    %v7806 = vand.u32 %v7805, 4294901760
    %7807 = vmatmul.mubr.f32.gmra.mrb[0].mxu0 %v7806
    %v7808 = vpop.f32.mrb[0].mxu0
    %v7809 = vadd.f32 %v7628, %v7808
    %v7810 = vpop.f32.mrb[0].mxu0
    %7811 = vmatprep.mubr.f32.mxu0 0.0
    %v7812 = vand.u32 %v1284, 4294901760
    %v7813 = vsub.f32 %v1284, %v7812
    %v7814 = vand.u32 %v7813, 4294901760
    %7815 = vmatmul.mubr.f32.gmra.mrb[0].mxu0 %v7814
    %v7816 = vpop.f32.mrb[0].mxu0
    %v7817 = vadd.f32 %v7635, %v7816
    %v7818 = vpop.f32.mrb[0].mxu0
    %7819 = vmatprep.mubr.f32.mxu0 0.0
    %v7820 = vand.u32 %v1287, 4294901760
    %v7821 = vsub.f32 %v1287, %v7820
    %v7822 = vand.u32 %v7821, 4294901760
    %7823 = vmatmul.mubr.f32.gmra.mrb[0].mxu0 %v7822
    %v7824 = vpop.f32.mrb[0].mxu0
    %v7825 = vadd.f32 %v7642, %v7824
    %v7826 = vpop.f32.mrb[0].mxu0
    %7827 = vmatprep.mubr.f32.mxu0 0.0
    %v7828 = vand.u32 %v1290, 4294901760
    %v7829 = vsub.f32 %v1290, %v7828
    %v7830 = vand.u32 %v7829, 4294901760
    %7831 = vmatmul.mubr.f32.gmra.mrb[0].mxu0 %v7830
    %v7832 = vpop.f32.mrb[0].mxu0
    %v7833 = vadd.f32 %v7649, %v7832
    %v7834 = vpop.f32.mrb[0].mxu0
    %7835 = vmatprep.mubr.f32.mxu0 0.0
    %v7836 = vand.u32 %v1293, 4294901760
    %v7837 = vsub.f32 %v1293, %v7836
    %v7838 = vand.u32 %v7837, 4294901760
    %7839 = vmatmul.mubr.f32.gmra.mrb[0].mxu0 %v7838
    %v7840 = vpop.f32.mrb[0].mxu0
    %v7841 = vadd.f32 %v7656, %v7840
    %v7842 = vpop.f32.mrb[0].mxu0
    %7843 = vmatprep.mubr.f32.mxu0 0.0
    %v7844 = vand.u32 %v7143, 4294901760
    %v7845 = vsub.f32 %v7143, %v7844
    %v7846 = vand.u32 %v7845, 4294901760
    %7847 = vmatmul.mubr.f32.gmra.mrb[0].mxu0 %v7846
    %v7848 = vpop.f32.mrb[0].mxu0
    %v7849 = vadd.f32 %v7663, %v7848
    %v7850 = vpop.f32.mrb[0].mxu0
    %7851 = vmatprep.mubr.f32.mxu0 0.0
    %v7852 = vand.u32 %v1299, 4294901760
    %v7853 = vsub.f32 %v1299, %v7852
    %v7854 = vand.u32 %v7853, 4294901760
    %7855 = vmatmul.mubr.f32.gmra.mrb[0].mxu0 %v7854
    %v7856 = vpop.f32.mrb[0].mxu0
    %v7857 = vadd.f32 %v7670, %v7856
    %v7858 = vpop.f32.mrb[0].mxu0
    %7859 = vmatprep.mubr.f32.mxu0 0.0
    %v7860 = vand.u32 %v1302, 4294901760
    %v7861 = vsub.f32 %v1302, %v7860
    %v7862 = vand.u32 %v7861, 4294901760
    %7863 = vmatmul.mubr.f32.gmra.mrb[0].mxu0 %v7862
    %v7864 = vpop.f32.mrb[0].mxu0
    %v7865 = vadd.f32 %v7677, %v7864
    %v7866 = vpop.f32.mrb[0].mxu0
    %7867 = vmatprep.mubr.f32.mxu0 0.0
    %v7868 = vand.u32 %v1305, 4294901760
    %v7869 = vsub.f32 %v1305, %v7868
    %v7870 = vand.u32 %v7869, 4294901760
    %7871 = vmatmul.mubr.f32.gmra.mrb[0].mxu0 %v7870
    %v7872 = vpop.f32.mrb[0].mxu0
    %v7873 = vadd.f32 %v7684, %v7872
    %v7874 = vpop.f32.mrb[0].mxu0
    %7875 = vmatprep.mubr.f32.mxu0 0.0
    %v7876 = vand.u32 %v1308, 4294901760
    %v7877 = vsub.f32 %v1308, %v7876
    %v7878 = vand.u32 %v7877, 4294901760
    %7879 = vmatmul.mubr.f32.gmra.mrb[0].mxu0 %v7878
    %v7880 = vpop.f32.mrb[0].mxu0
    %v7881 = vadd.f32 %v7691, %v7880
    %v7882 = vpop.f32.mrb[0].mxu0
    %7883 = vmatprep.mubr.f32.mxu0 0.0
    %v7884 = vand.u32 %v1311, 4294901760
    %v7885 = vsub.f32 %v1311, %v7884
    %v7886 = vand.u32 %v7885, 4294901760
    %7887 = vmatmul.mubr.f32.gmra.mrb[0].mxu0 %v7886
    %v7888 = vpop.f32.mrb[0].mxu0
    %v7889 = vadd.f32 %v7698, %v7888
    %v7890 = vpop.f32.mrb[0].mxu0
    %7891 = vmatprep.mubr.f32.mxu0 0.0
    %v7892 = vand.u32 %v1314, 4294901760
    %v7893 = vsub.f32 %v1314, %v7892
    %v7894 = vand.u32 %v7893, 4294901760
    %7895 = vmatmul.mubr.f32.gmra.mrb[0].mxu0 %v7894
    %v7896 = vpop.f32.mrb[0].mxu0
    %v7897 = vadd.f32 %v7705, %v7896
    %v7898 = vpop.f32.mrb[0].mxu0
    %7899 = vmatprep.mubr.f32.mxu0 0.0
    %v7900 = vand.u32 %v1317, 4294901760
    %v7901 = vsub.f32 %v1317, %v7900
    %v7902 = vand.u32 %v7901, 4294901760
    %7903 = vmatmul.mubr.f32.gmra.mrb[0].mxu0 %v7902
    %v7904 = vpop.f32.mrb[0].mxu0
    %v7905 = vadd.f32 %v7712, %v7904
    %v7906 = vpop.f32.mrb[0].mxu0
    %7907 = vmatprep.mubr.f32.mxu0 0.0
    %v7908 = vand.u32 %v7146, 4294901760
    %v7909 = vsub.f32 %v7146, %v7908
    %v7910 = vand.u32 %v7909, 4294901760
    %7911 = vmatmul.mubr.f32.gmra.mrb[0].mxu0 %v7910
    %v7912 = vpop.f32.mrb[0].mxu0
    %v7913 = vadd.f32 %v7719, %v7912
    %v7914 = vpop.f32.mrb[0].mxu0
    %7915 = vdwg.mxu0
    %7916 = vmatprep.subr.mxu0 0.0
    %v7917 = vand.u32 %v7149, 4294901760
    %v7918 = vsub.f32 %v7149, %v7917
    %v7919 = vand.u32 %v7918, 4294901760
    %7920 = vmatpush1.msra.mxu0 %v7919
    %7921 = vmatprep.subr.mxu0 0.0
    %7922 = vmatpush1.msra.mxu0 0.0
    %7923 = vmatprep.subr.mxu0 0.0
    %7924 = vmatpush1.msra.mxu0 0.0
    %7925 = vmatprep.subr.mxu0 0.0
    %7926 = vmatpush1.msra.mxu0 0.0
    %7927 = vmatprep.subr.mxu0 0.0
    %7928 = vmatpush1.msra.mxu0 0.0
    %7929 = vmatprep.subr.mxu0 0.0
    %7930 = vmatpush1.msra.mxu0 0.0
    %7931 = vmatprep.subr.mxu0 0.0
    %7932 = vmatpush1.msra.mxu0 0.0
    %7933 = vmatprep.subr.mxu0 0.0
    %7934 = vmatpush1.msra.mxu0 0.0
    %7935 = vmatprep.subr.mxu0 0.0
    %7936 = vmatpush1.msra.mxu0 0.0
    %7937 = vmatprep.subr.mxu0 0.0
    %7938 = vmatpush1.msra.mxu0 0.0
    %7939 = vmatprep.subr.mxu0 0.0
    %7940 = vmatpush1.msra.mxu0 0.0
    %7941 = vmatprep.subr.mxu0 0.0
    %7942 = vmatpush1.msra.mxu0 0.0
    %7943 = vmatprep.subr.mxu0 0.0
    %7944 = vmatpush1.msra.mxu0 0.0
    %7945 = vmatprep.subr.mxu0 0.0
    %7946 = vmatpush1.msra.mxu0 0.0
    %7947 = vmatprep.subr.mxu0 0.0
    %7948 = vmatpush1.msra.mxu0 0.0
    %7949 = vmatprep.subr.mxu0 0.0
    %7950 = vmatpush1.msra.mxu0 0.0
    %7951 = vmatprep.subr.mxu0 0.0
    %7952 = vmatpush1.msra.mxu0 0.0
    %7953 = vmatprep.subr.mxu0 0.0
    %7954 = vmatpush1.msra.mxu0 0.0
    %7955 = vmatprep.subr.mxu0 0.0
    %7956 = vmatpush1.msra.mxu0 0.0
    %7957 = vmatprep.subr.mxu0 0.0
    %7958 = vmatpush1.msra.mxu0 0.0
    %7959 = vmatprep.subr.mxu0 0.0
    %7960 = vmatpush1.msra.mxu0 0.0
    %7961 = vmatprep.subr.mxu0 0.0
    %7962 = vmatpush1.msra.mxu0 0.0
    %7963 = vmatprep.subr.mxu0 0.0
    %7964 = vmatpush1.msra.mxu0 0.0
    %7965 = vmatprep.subr.mxu0 0.0
    %7966 = vmatpush1.msra.mxu0 0.0
    %7967 = vmatprep.subr.mxu0 0.0
    %7968 = vmatpush1.msra.mxu0 0.0
    %7969 = vmatprep.subr.mxu0 0.0
    %7970 = vmatpush1.msra.mxu0 0.0
    %7971 = vmatprep.subr.mxu0 0.0
    %7972 = vmatpush1.msra.mxu0 0.0
    %7973 = vmatprep.subr.mxu0 0.0
    %7974 = vmatpush1.msra.mxu0 0.0
    %7975 = vmatprep.subr.mxu0 0.0
    %7976 = vmatpush1.msra.mxu0 0.0
    %7977 = vmatprep.subr.mxu0 0.0
    %7978 = vmatpush1.msra.mxu0 0.0
    %7979 = vmatprep.subr.mxu0 0.0
    %7980 = vmatpush1.msra.mxu0 0.0
    %7981 = vmatprep.subr.mxu0 0.0
    %7982 = vmatpush1.msra.mxu0 0.0
    %7983 = vmatprep.mubr.f32.mxu0 0.0
    %v7984 = vand.u32 %v1275, 4294901760
    %7985 = vmatmul.mubr.f32.gmra.mrb[0].mxu0 %v7984
    %v7986 = vpop.f32.mrb[0].mxu0
    %v7987 = vadd.f32 %v7793, %v7986
    %v7988 = vpop.f32.mrb[0].mxu0
    %7989 = vmatprep.mubr.f32.mxu0 0.0
    %v7990 = vand.u32 %v1278, 4294901760
    %7991 = vmatmul.mubr.f32.gmra.mrb[0].mxu0 %v7990
    %v7992 = vpop.f32.mrb[0].mxu0
    %v7993 = vadd.f32 %v7801, %v7992
    %v7994 = vpop.f32.mrb[0].mxu0
    %7995 = vmatprep.mubr.f32.mxu0 0.0
    %v7996 = vand.u32 %v1281, 4294901760
    %7997 = vmatmul.mubr.f32.gmra.mrb[0].mxu0 %v7996
    %v7998 = vpop.f32.mrb[0].mxu0
    %v7999 = vadd.f32 %v7809, %v7998
    %v8000 = vpop.f32.mrb[0].mxu0
    %8001 = vmatprep.mubr.f32.mxu0 0.0
    %v8002 = vand.u32 %v1284, 4294901760
    %8003 = vmatmul.mubr.f32.gmra.mrb[0].mxu0 %v8002
    %v8004 = vpop.f32.mrb[0].mxu0
    %v8005 = vadd.f32 %v7817, %v8004
    %v8006 = vpop.f32.mrb[0].mxu0
    %8007 = vmatprep.mubr.f32.mxu0 0.0
    %v8008 = vand.u32 %v1287, 4294901760
    %8009 = vmatmul.mubr.f32.gmra.mrb[0].mxu0 %v8008
    %v8010 = vpop.f32.mrb[0].mxu0
    %v8011 = vadd.f32 %v7825, %v8010
    %v8012 = vpop.f32.mrb[0].mxu0
    %8013 = vmatprep.mubr.f32.mxu0 0.0
    %v8014 = vand.u32 %v1290, 4294901760
    %8015 = vmatmul.mubr.f32.gmra.mrb[0].mxu0 %v8014
    %v8016 = vpop.f32.mrb[0].mxu0
    %v8017 = vadd.f32 %v7833, %v8016
    %v8018 = vpop.f32.mrb[0].mxu0
    %8019 = vmatprep.mubr.f32.mxu0 0.0
    %v8020 = vand.u32 %v1293, 4294901760
    %8021 = vmatmul.mubr.f32.gmra.mrb[0].mxu0 %v8020
    %v8022 = vpop.f32.mrb[0].mxu0
    %v8023 = vadd.f32 %v7841, %v8022
    %v8024 = vpop.f32.mrb[0].mxu0
    %8025 = vmatprep.mubr.f32.mxu0 0.0
    %v8026 = vand.u32 %v7143, 4294901760
    %8027 = vmatmul.mubr.f32.gmra.mrb[0].mxu0 %v8026
    %v8028 = vpop.f32.mrb[0].mxu0
    %v8029 = vadd.f32 %v7849, %v8028
    %v8030 = vpop.f32.mrb[0].mxu0
    %8031 = vmatprep.mubr.f32.mxu0 0.0
    %v8032 = vand.u32 %v1299, 4294901760
    %8033 = vmatmul.mubr.f32.gmra.mrb[0].mxu0 %v8032
    %v8034 = vpop.f32.mrb[0].mxu0
    %v8035 = vadd.f32 %v7857, %v8034
    %v8036 = vpop.f32.mrb[0].mxu0
    %8037 = vmatprep.mubr.f32.mxu0 0.0
    %v8038 = vand.u32 %v1302, 4294901760
    %8039 = vmatmul.mubr.f32.gmra.mrb[0].mxu0 %v8038
    %v8040 = vpop.f32.mrb[0].mxu0
    %v8041 = vadd.f32 %v7865, %v8040
    %v8042 = vpop.f32.mrb[0].mxu0
    %8043 = vmatprep.mubr.f32.mxu0 0.0
    %v8044 = vand.u32 %v1305, 4294901760
    %8045 = vmatmul.mubr.f32.gmra.mrb[0].mxu0 %v8044
    %v8046 = vpop.f32.mrb[0].mxu0
    %v8047 = vadd.f32 %v7873, %v8046
    %v8048 = vpop.f32.mrb[0].mxu0
    %8049 = vmatprep.mubr.f32.mxu0 0.0
    %v8050 = vand.u32 %v1308, 4294901760
    %8051 = vmatmul.mubr.f32.gmra.mrb[0].mxu0 %v8050
    %v8052 = vpop.f32.mrb[0].mxu0
    %v8053 = vadd.f32 %v7881, %v8052
    %v8054 = vpop.f32.mrb[0].mxu0
    %8055 = vmatprep.mubr.f32.mxu0 0.0
    %v8056 = vand.u32 %v1311, 4294901760
    %8057 = vmatmul.mubr.f32.gmra.mrb[0].mxu0 %v8056
    %v8058 = vpop.f32.mrb[0].mxu0
    %v8059 = vadd.f32 %v7889, %v8058
    %v8060 = vpop.f32.mrb[0].mxu0
    %8061 = vmatprep.mubr.f32.mxu0 0.0
    %v8062 = vand.u32 %v1314, 4294901760
    %8063 = vmatmul.mubr.f32.gmra.mrb[0].mxu0 %v8062
    %v8064 = vpop.f32.mrb[0].mxu0
    %v8065 = vadd.f32 %v7897, %v8064
    %v8066 = vpop.f32.mrb[0].mxu0
    %8067 = vmatprep.mubr.f32.mxu0 0.0
    %v8068 = vand.u32 %v1317, 4294901760
    %8069 = vmatmul.mubr.f32.gmra.mrb[0].mxu0 %v8068
    %v8070 = vpop.f32.mrb[0].mxu0
    %v8071 = vadd.f32 %v7905, %v8070
    %v8072 = vpop.f32.mrb[0].mxu0
    %8073 = vmatprep.mubr.f32.mxu0 0.0
    %v8074 = vand.u32 %v7146, 4294901760
    %8075 = vmatmul.mubr.f32.gmra.mrb[0].mxu0 %v8074
    %v8076 = vpop.f32.mrb[0].mxu0
    %v8077 = vadd.f32 %v7913, %v8076
    %v8078 = vpop.f32.mrb[0].mxu0
    %8079 = vdwg.mxu0
    %8080 = vmatprep.subr.mxu0 0.0
    %v8081 = vand.u32 %v7149, 4294901760
    %8082 = vmatpush1.msra.mxu0 %v8081
    %8083 = vmatprep.subr.mxu0 0.0
    %8084 = vmatpush1.msra.mxu0 0.0
    %8085 = vmatprep.subr.mxu0 0.0
    %8086 = vmatpush1.msra.mxu0 0.0
    %8087 = vmatprep.subr.mxu0 0.0
    %8088 = vmatpush1.msra.mxu0 0.0
    %8089 = vmatprep.subr.mxu0 0.0
    %8090 = vmatpush1.msra.mxu0 0.0
    %8091 = vmatprep.subr.mxu0 0.0
    %8092 = vmatpush1.msra.mxu0 0.0
    %8093 = vmatprep.subr.mxu0 0.0
    %8094 = vmatpush1.msra.mxu0 0.0
    %8095 = vmatprep.subr.mxu0 0.0
    %8096 = vmatpush1.msra.mxu0 0.0
    %8097 = vmatprep.subr.mxu0 0.0
    %8098 = vmatpush1.msra.mxu0 0.0
    %8099 = vmatprep.subr.mxu0 0.0
    %8100 = vmatpush1.msra.mxu0 0.0
    %8101 = vmatprep.subr.mxu0 0.0
    %8102 = vmatpush1.msra.mxu0 0.0
    %8103 = vmatprep.subr.mxu0 0.0
    %8104 = vmatpush1.msra.mxu0 0.0
    %8105 = vmatprep.subr.mxu0 0.0
    %8106 = vmatpush1.msra.mxu0 0.0
    %8107 = vmatprep.subr.mxu0 0.0
    %8108 = vmatpush1.msra.mxu0 0.0
    %8109 = vmatprep.subr.mxu0 0.0
    %8110 = vmatpush1.msra.mxu0 0.0
    %8111 = vmatprep.subr.mxu0 0.0
    %8112 = vmatpush1.msra.mxu0 0.0
    %8113 = vmatprep.subr.mxu0 0.0
    %8114 = vmatpush1.msra.mxu0 0.0
    %8115 = vmatprep.subr.mxu0 0.0
    %8116 = vmatpush1.msra.mxu0 0.0
    %8117 = vmatprep.subr.mxu0 0.0
    %8118 = vmatpush1.msra.mxu0 0.0
    %8119 = vmatprep.subr.mxu0 0.0
    %8120 = vmatpush1.msra.mxu0 0.0
    %8121 = vmatprep.subr.mxu0 0.0
    %8122 = vmatpush1.msra.mxu0 0.0
    %8123 = vmatprep.subr.mxu0 0.0
    %8124 = vmatpush1.msra.mxu0 0.0
    %8125 = vmatprep.subr.mxu0 0.0
    %8126 = vmatpush1.msra.mxu0 0.0
    %8127 = vmatprep.subr.mxu0 0.0
    %8128 = vmatpush1.msra.mxu0 0.0
    %8129 = vmatprep.subr.mxu0 0.0
    %8130 = vmatpush1.msra.mxu0 0.0
    %8131 = vmatprep.subr.mxu0 0.0
    %8132 = vmatpush1.msra.mxu0 0.0
    %8133 = vmatprep.subr.mxu0 0.0
    %8134 = vmatpush1.msra.mxu0 0.0
    %8135 = vmatprep.subr.mxu0 0.0
    %8136 = vmatpush1.msra.mxu0 0.0
    %8137 = vmatprep.subr.mxu0 0.0
    %8138 = vmatpush1.msra.mxu0 0.0
    %8139 = vmatprep.subr.mxu0 0.0
    %8140 = vmatpush1.msra.mxu0 0.0
    %8141 = vmatprep.subr.mxu0 0.0
    %8142 = vmatpush1.msra.mxu0 0.0
    %8143 = vmatprep.subr.mxu0 0.0
    %8144 = vmatpush1.msra.mxu0 0.0
    %8145 = vmatprep.mubr.f32.mxu0 0.0
    %v8146 = vand.u32 %v1275, 4294901760
    %8147 = vmatmul.mubr.f32.gmra.mrb[0].mxu0 %v8146
    %v8148 = vpop.f32.mrb[0].mxu0
    %v8149 = vadd.f32 %v7987, %v8148
    %v8150 = vpop.f32.mrb[0].mxu0
    %8151 = vmatprep.mubr.f32.mxu0 0.0
    %v8152 = vand.u32 %v1278, 4294901760
    %8153 = vmatmul.mubr.f32.gmra.mrb[0].mxu0 %v8152
    %v8154 = vpop.f32.mrb[0].mxu0
    %v8155 = vadd.f32 %v7993, %v8154
    %v8156 = vpop.f32.mrb[0].mxu0
    %8157 = vmatprep.mubr.f32.mxu0 0.0
    %v8158 = vand.u32 %v1281, 4294901760
    %8159 = vmatmul.mubr.f32.gmra.mrb[0].mxu0 %v8158
    %v8160 = vpop.f32.mrb[0].mxu0
    %v8161 = vadd.f32 %v7999, %v8160
    %v8162 = vpop.f32.mrb[0].mxu0
    %8163 = vmatprep.mubr.f32.mxu0 0.0
    %v8164 = vand.u32 %v1284, 4294901760
    %8165 = vmatmul.mubr.f32.gmra.mrb[0].mxu0 %v8164
    %v8166 = vpop.f32.mrb[0].mxu0
    %v8167 = vadd.f32 %v8005, %v8166
    %v8168 = vpop.f32.mrb[0].mxu0
    %8169 = vmatprep.mubr.f32.mxu0 0.0
    %v8170 = vand.u32 %v1287, 4294901760
    %8171 = vmatmul.mubr.f32.gmra.mrb[0].mxu0 %v8170
    %v8172 = vpop.f32.mrb[0].mxu0
    %v8173 = vadd.f32 %v8011, %v8172
    %v8174 = vpop.f32.mrb[0].mxu0
    %8175 = vmatprep.mubr.f32.mxu0 0.0
    %v8176 = vand.u32 %v1290, 4294901760
    %8177 = vmatmul.mubr.f32.gmra.mrb[0].mxu0 %v8176
    %v8178 = vpop.f32.mrb[0].mxu0
    %v8179 = vadd.f32 %v8017, %v8178
    %v8180 = vpop.f32.mrb[0].mxu0
    %8181 = vmatprep.mubr.f32.mxu0 0.0
    %v8182 = vand.u32 %v1293, 4294901760
    %8183 = vmatmul.mubr.f32.gmra.mrb[0].mxu0 %v8182
    %v8184 = vpop.f32.mrb[0].mxu0
    %v8185 = vadd.f32 %v8023, %v8184
    %v8186 = vpop.f32.mrb[0].mxu0
    %8187 = vmatprep.mubr.f32.mxu0 0.0
    %v8188 = vand.u32 %v7143, 4294901760
    %8189 = vmatmul.mubr.f32.gmra.mrb[0].mxu0 %v8188
    %v8190 = vpop.f32.mrb[0].mxu0
    %v8191 = vadd.f32 %v8029, %v8190
    %v8192 = vpop.f32.mrb[0].mxu0
    %8193 = vmatprep.mubr.f32.mxu0 0.0
    %v8194 = vand.u32 %v1299, 4294901760
    %8195 = vmatmul.mubr.f32.gmra.mrb[0].mxu0 %v8194
    %v8196 = vpop.f32.mrb[0].mxu0
    %v8197 = vadd.f32 %v8035, %v8196
    %v8198 = vpop.f32.mrb[0].mxu0
    %8199 = vmatprep.mubr.f32.mxu0 0.0
    %v8200 = vand.u32 %v1302, 4294901760
    %8201 = vmatmul.mubr.f32.gmra.mrb[0].mxu0 %v8200
    %v8202 = vpop.f32.mrb[0].mxu0
    %v8203 = vadd.f32 %v8041, %v8202
    %v8204 = vpop.f32.mrb[0].mxu0
    %8205 = vmatprep.mubr.f32.mxu0 0.0
    %v8206 = vand.u32 %v1305, 4294901760
    %8207 = vmatmul.mubr.f32.gmra.mrb[0].mxu0 %v8206
    %v8208 = vpop.f32.mrb[0].mxu0
    %v8209 = vadd.f32 %v8047, %v8208
    %v8210 = vpop.f32.mrb[0].mxu0
    %8211 = vmatprep.mubr.f32.mxu0 0.0
    %v8212 = vand.u32 %v1308, 4294901760
    %8213 = vmatmul.mubr.f32.gmra.mrb[0].mxu0 %v8212
    %v8214 = vpop.f32.mrb[0].mxu0
    %v8215 = vadd.f32 %v8053, %v8214
    %v8216 = vpop.f32.mrb[0].mxu0
    %8217 = vmatprep.mubr.f32.mxu0 0.0
    %v8218 = vand.u32 %v1311, 4294901760
    %8219 = vmatmul.mubr.f32.gmra.mrb[0].mxu0 %v8218
    %v8220 = vpop.f32.mrb[0].mxu0
    %v8221 = vadd.f32 %v8059, %v8220
    %v8222 = vpop.f32.mrb[0].mxu0
    %8223 = vmatprep.mubr.f32.mxu0 0.0
    %v8224 = vand.u32 %v1314, 4294901760
    %8225 = vmatmul.mubr.f32.gmra.mrb[0].mxu0 %v8224
    %v8226 = vpop.f32.mrb[0].mxu0
    %v8227 = vadd.f32 %v8065, %v8226
    %v8228 = vpop.f32.mrb[0].mxu0
    %8229 = vmatprep.mubr.f32.mxu0 0.0
    %v8230 = vand.u32 %v1317, 4294901760
    %8231 = vmatmul.mubr.f32.gmra.mrb[0].mxu0 %v8230
    %v8232 = vpop.f32.mrb[0].mxu0
    %v8233 = vadd.f32 %v8071, %v8232
    %v8234 = vpop.f32.mrb[0].mxu0
    %8235 = vmatprep.mubr.f32.mxu0 0.0
    %v8236 = vand.u32 %v7146, 4294901760
    %8237 = vmatmul.mubr.f32.gmra.mrb[0].mxu0 %v8236
    %v8238 = vpop.f32.mrb[0].mxu0
    %v8239 = vadd.f32 %v8077, %v8238
    %v8240 = vpop.f32.mrb[0].mxu0
    %8241 = vdwg.mxu0
    %v8242 = vadd.f32 %v7126, %v8149
    %v8243 = vadd.f32 %v7127, %v8155
    %v8244 = vadd.f32 %v7128, %v8161
    %v8245 = vadd.f32 %v7129, %v8167
    %v8246 = vadd.f32 %v7130, %v8173
    %v8247 = vadd.f32 %v7131, %v8179
    %v8248 = vadd.f32 %v7132, %v8185
    %v8249 = vadd.f32 %v7133, %v8191
    %v8250 = vadd.f32 %v7134, %v8197
    %v8251 = vadd.f32 %v7135, %v8203
    %v8252 = vadd.f32 %v7136, %v8209
    %v8253 = vadd.f32 %v7137, %v8215
    %v8254 = vadd.f32 %v7138, %v8221
    %v8255 = vadd.f32 %v7139, %v8227
    %v8256 = vadd.f32 %v7140, %v8233
    %v8257 = vadd.f32 %v7141, %v8239
    %v8259 = vsel %vm127, %v42, 0
    %v8262 = vsel %vm127, %v93, 0
    %v8265 = vsel %vm176, %v125, 0
    %8267 = vmatprep.subr.mxu0 0.0
    %v8268 = vand.u32 %v8265, 4294901760
    %8269 = vmatpush1.msra.mxu0 %v8268
    %8270 = vmatprep.subr.mxu0 0.0
    %8271 = vmatpush1.msra.mxu0 0.0
    %8272 = vmatprep.subr.mxu0 0.0
    %8273 = vmatpush1.msra.mxu0 0.0
    %8274 = vmatprep.subr.mxu0 0.0
    %8275 = vmatpush1.msra.mxu0 0.0
    %8276 = vmatprep.subr.mxu0 0.0
    %8277 = vmatpush1.msra.mxu0 0.0
    %8278 = vmatprep.subr.mxu0 0.0
    %8279 = vmatpush1.msra.mxu0 0.0
    %8280 = vmatprep.subr.mxu0 0.0
    %8281 = vmatpush1.msra.mxu0 0.0
    %8282 = vmatprep.subr.mxu0 0.0
    %8283 = vmatpush1.msra.mxu0 0.0
    %8284 = vmatprep.subr.mxu0 0.0
    %8285 = vmatpush1.msra.mxu0 0.0
    %8286 = vmatprep.subr.mxu0 0.0
    %8287 = vmatpush1.msra.mxu0 0.0
    %8288 = vmatprep.subr.mxu0 0.0
    %8289 = vmatpush1.msra.mxu0 0.0
    %8290 = vmatprep.subr.mxu0 0.0
    %8291 = vmatpush1.msra.mxu0 0.0
    %8292 = vmatprep.subr.mxu0 0.0
    %8293 = vmatpush1.msra.mxu0 0.0
    %8294 = vmatprep.subr.mxu0 0.0
    %8295 = vmatpush1.msra.mxu0 0.0
    %8296 = vmatprep.subr.mxu0 0.0
    %8297 = vmatpush1.msra.mxu0 0.0
    %8298 = vmatprep.subr.mxu0 0.0
    %8299 = vmatpush1.msra.mxu0 0.0
    %8300 = vmatprep.subr.mxu0 0.0
    %8301 = vmatpush1.msra.mxu0 0.0
    %8302 = vmatprep.subr.mxu0 0.0
    %8303 = vmatpush1.msra.mxu0 0.0
    %8304 = vmatprep.subr.mxu0 0.0
    %8305 = vmatpush1.msra.mxu0 0.0
    %8306 = vmatprep.subr.mxu0 0.0
    %8307 = vmatpush1.msra.mxu0 0.0
    %8308 = vmatprep.subr.mxu0 0.0
    %8309 = vmatpush1.msra.mxu0 0.0
    %8310 = vmatprep.subr.mxu0 0.0
    %8311 = vmatpush1.msra.mxu0 0.0
    %8312 = vmatprep.subr.mxu0 0.0
    %8313 = vmatpush1.msra.mxu0 0.0
    %8314 = vmatprep.subr.mxu0 0.0
    %8315 = vmatpush1.msra.mxu0 0.0
    %8316 = vmatprep.subr.mxu0 0.0
    %8317 = vmatpush1.msra.mxu0 0.0
    %8318 = vmatprep.subr.mxu0 0.0
    %8319 = vmatpush1.msra.mxu0 0.0
    %8320 = vmatprep.subr.mxu0 0.0
    %8321 = vmatpush1.msra.mxu0 0.0
    %8322 = vmatprep.subr.mxu0 0.0
    %8323 = vmatpush1.msra.mxu0 0.0
    %8324 = vmatprep.subr.mxu0 0.0
    %8325 = vmatpush1.msra.mxu0 0.0
    %8326 = vmatprep.subr.mxu0 0.0
    %8327 = vmatpush1.msra.mxu0 0.0
    %8328 = vmatprep.subr.mxu0 0.0
    %8329 = vmatpush1.msra.mxu0 0.0
    %8330 = vmatprep.subr.mxu0 0.0
    %8331 = vmatpush1.msra.mxu0 0.0
    %8332 = vmatprep.mubr.f32.mxu0 0.0
    %v8333 = vand.u32 %v132, 4294901760
    %v8334 = vsub.f32 %v132, %v8333
    %v8335 = vand.u32 %v8334, 4294901760
    %v8336 = vsub.f32 %v8334, %v8335
    %v8337 = vand.u32 %v8336, 4294901760
    %8338 = vmatmul.mubr.f32.gmra.mrb[0].mxu0 %v8337
    %v8339 = vpop.f32.mrb[0].mxu0
    %v8340 = vadd.f32 0.0, %v8339
    %v8341 = vpop.f32.mrb[0].mxu0
    %8342 = vmatprep.mubr.f32.mxu0 0.0
    %v8343 = vand.u32 %v135, 4294901760
    %v8344 = vsub.f32 %v135, %v8343
    %v8345 = vand.u32 %v8344, 4294901760
    %v8346 = vsub.f32 %v8344, %v8345
    %v8347 = vand.u32 %v8346, 4294901760
    %8348 = vmatmul.mubr.f32.gmra.mrb[0].mxu0 %v8347
    %v8349 = vpop.f32.mrb[0].mxu0
    %v8350 = vadd.f32 0.0, %v8349
    %v8351 = vpop.f32.mrb[0].mxu0
    %8352 = vmatprep.mubr.f32.mxu0 0.0
    %v8353 = vand.u32 %v138, 4294901760
    %v8354 = vsub.f32 %v138, %v8353
    %v8355 = vand.u32 %v8354, 4294901760
    %v8356 = vsub.f32 %v8354, %v8355
    %v8357 = vand.u32 %v8356, 4294901760
    %8358 = vmatmul.mubr.f32.gmra.mrb[0].mxu0 %v8357
    %v8359 = vpop.f32.mrb[0].mxu0
    %v8360 = vadd.f32 0.0, %v8359
    %v8361 = vpop.f32.mrb[0].mxu0
    %8362 = vmatprep.mubr.f32.mxu0 0.0
    %v8363 = vand.u32 %v141, 4294901760
    %v8364 = vsub.f32 %v141, %v8363
    %v8365 = vand.u32 %v8364, 4294901760
    %v8366 = vsub.f32 %v8364, %v8365
    %v8367 = vand.u32 %v8366, 4294901760
    %8368 = vmatmul.mubr.f32.gmra.mrb[0].mxu0 %v8367
    %v8369 = vpop.f32.mrb[0].mxu0
    %v8370 = vadd.f32 0.0, %v8369
    %v8371 = vpop.f32.mrb[0].mxu0
    %8372 = vmatprep.mubr.f32.mxu0 0.0
    %v8373 = vand.u32 %v144, 4294901760
    %v8374 = vsub.f32 %v144, %v8373
    %v8375 = vand.u32 %v8374, 4294901760
    %v8376 = vsub.f32 %v8374, %v8375
    %v8377 = vand.u32 %v8376, 4294901760
    %8378 = vmatmul.mubr.f32.gmra.mrb[0].mxu0 %v8377
    %v8379 = vpop.f32.mrb[0].mxu0
    %v8380 = vadd.f32 0.0, %v8379
    %v8381 = vpop.f32.mrb[0].mxu0
    %8382 = vmatprep.mubr.f32.mxu0 0.0
    %v8383 = vand.u32 %v147, 4294901760
    %v8384 = vsub.f32 %v147, %v8383
    %v8385 = vand.u32 %v8384, 4294901760
    %v8386 = vsub.f32 %v8384, %v8385
    %v8387 = vand.u32 %v8386, 4294901760
    %8388 = vmatmul.mubr.f32.gmra.mrb[0].mxu0 %v8387
    %v8389 = vpop.f32.mrb[0].mxu0
    %v8390 = vadd.f32 0.0, %v8389
    %v8391 = vpop.f32.mrb[0].mxu0
    %8392 = vmatprep.mubr.f32.mxu0 0.0
    %v8393 = vand.u32 %v150, 4294901760
    %v8394 = vsub.f32 %v150, %v8393
    %v8395 = vand.u32 %v8394, 4294901760
    %v8396 = vsub.f32 %v8394, %v8395
    %v8397 = vand.u32 %v8396, 4294901760
    %8398 = vmatmul.mubr.f32.gmra.mrb[0].mxu0 %v8397
    %v8399 = vpop.f32.mrb[0].mxu0
    %v8400 = vadd.f32 0.0, %v8399
    %v8401 = vpop.f32.mrb[0].mxu0
    %8402 = vmatprep.mubr.f32.mxu0 0.0
    %v8403 = vand.u32 %v8259, 4294901760
    %v8404 = vsub.f32 %v8259, %v8403
    %v8405 = vand.u32 %v8404, 4294901760
    %v8406 = vsub.f32 %v8404, %v8405
    %v8407 = vand.u32 %v8406, 4294901760
    %8408 = vmatmul.mubr.f32.gmra.mrb[0].mxu0 %v8407
    %v8409 = vpop.f32.mrb[0].mxu0
    %v8410 = vadd.f32 0.0, %v8409
    %v8411 = vpop.f32.mrb[0].mxu0
    %8412 = vmatprep.mubr.f32.mxu0 0.0
    %v8413 = vand.u32 %v156, 4294901760
    %v8414 = vsub.f32 %v156, %v8413
    %v8415 = vand.u32 %v8414, 4294901760
    %v8416 = vsub.f32 %v8414, %v8415
    %v8417 = vand.u32 %v8416, 4294901760
    %8418 = vmatmul.mubr.f32.gmra.mrb[0].mxu0 %v8417
    %v8419 = vpop.f32.mrb[0].mxu0
    %v8420 = vadd.f32 0.0, %v8419
    %v8421 = vpop.f32.mrb[0].mxu0
    %8422 = vmatprep.mubr.f32.mxu0 0.0
    %v8423 = vand.u32 %v159, 4294901760
    %v8424 = vsub.f32 %v159, %v8423
    %v8425 = vand.u32 %v8424, 4294901760
    %v8426 = vsub.f32 %v8424, %v8425
    %v8427 = vand.u32 %v8426, 4294901760
    %8428 = vmatmul.mubr.f32.gmra.mrb[0].mxu0 %v8427
    %v8429 = vpop.f32.mrb[0].mxu0
    %v8430 = vadd.f32 0.0, %v8429
    %v8431 = vpop.f32.mrb[0].mxu0
    %8432 = vmatprep.mubr.f32.mxu0 0.0
    %v8433 = vand.u32 %v162, 4294901760
    %v8434 = vsub.f32 %v162, %v8433
    %v8435 = vand.u32 %v8434, 4294901760
    %v8436 = vsub.f32 %v8434, %v8435
    %v8437 = vand.u32 %v8436, 4294901760
    %8438 = vmatmul.mubr.f32.gmra.mrb[0].mxu0 %v8437
    %v8439 = vpop.f32.mrb[0].mxu0
    %v8440 = vadd.f32 0.0, %v8439
    %v8441 = vpop.f32.mrb[0].mxu0
    %8442 = vmatprep.mubr.f32.mxu0 0.0
    %v8443 = vand.u32 %v165, 4294901760
    %v8444 = vsub.f32 %v165, %v8443
    %v8445 = vand.u32 %v8444, 4294901760
    %v8446 = vsub.f32 %v8444, %v8445
    %v8447 = vand.u32 %v8446, 4294901760
    %8448 = vmatmul.mubr.f32.gmra.mrb[0].mxu0 %v8447
    %v8449 = vpop.f32.mrb[0].mxu0
    %v8450 = vadd.f32 0.0, %v8449
    %v8451 = vpop.f32.mrb[0].mxu0
    %8452 = vmatprep.mubr.f32.mxu0 0.0
    %v8453 = vand.u32 %v168, 4294901760
    %v8454 = vsub.f32 %v168, %v8453
    %v8455 = vand.u32 %v8454, 4294901760
    %v8456 = vsub.f32 %v8454, %v8455
    %v8457 = vand.u32 %v8456, 4294901760
    %8458 = vmatmul.mubr.f32.gmra.mrb[0].mxu0 %v8457
    %v8459 = vpop.f32.mrb[0].mxu0
    %v8460 = vadd.f32 0.0, %v8459
    %v8461 = vpop.f32.mrb[0].mxu0
    %8462 = vmatprep.mubr.f32.mxu0 0.0
    %v8463 = vand.u32 %v171, 4294901760
    %v8464 = vsub.f32 %v171, %v8463
    %v8465 = vand.u32 %v8464, 4294901760
    %v8466 = vsub.f32 %v8464, %v8465
    %v8467 = vand.u32 %v8466, 4294901760
    %8468 = vmatmul.mubr.f32.gmra.mrb[0].mxu0 %v8467
    %v8469 = vpop.f32.mrb[0].mxu0
    %v8470 = vadd.f32 0.0, %v8469
    %v8471 = vpop.f32.mrb[0].mxu0
    %8472 = vmatprep.mubr.f32.mxu0 0.0
    %v8473 = vand.u32 %v174, 4294901760
    %v8474 = vsub.f32 %v174, %v8473
    %v8475 = vand.u32 %v8474, 4294901760
    %v8476 = vsub.f32 %v8474, %v8475
    %v8477 = vand.u32 %v8476, 4294901760
    %8478 = vmatmul.mubr.f32.gmra.mrb[0].mxu0 %v8477
    %v8479 = vpop.f32.mrb[0].mxu0
    %v8480 = vadd.f32 0.0, %v8479
    %v8481 = vpop.f32.mrb[0].mxu0
    %8482 = vmatprep.mubr.f32.mxu0 0.0
    %v8483 = vand.u32 %v8262, 4294901760
    %v8484 = vsub.f32 %v8262, %v8483
    %v8485 = vand.u32 %v8484, 4294901760
    %v8486 = vsub.f32 %v8484, %v8485
    %v8487 = vand.u32 %v8486, 4294901760
    %8488 = vmatmul.mubr.f32.gmra.mrb[0].mxu0 %v8487
    %v8489 = vpop.f32.mrb[0].mxu0
    %v8490 = vadd.f32 0.0, %v8489
    %v8491 = vpop.f32.mrb[0].mxu0
    %8492 = vdwg.mxu0
    %8493 = vmatprep.subr.mxu0 0.0
    %v8494 = vand.u32 %v8265, 4294901760
    %v8495 = vsub.f32 %v8265, %v8494
    %v8496 = vand.u32 %v8495, 4294901760
    %v8497 = vsub.f32 %v8495, %v8496
    %v8498 = vand.u32 %v8497, 4294901760
    %8499 = vmatpush1.msra.mxu0 %v8498
    %8500 = vmatprep.subr.mxu0 0.0
    %8501 = vmatpush1.msra.mxu0 0.0
    %8502 = vmatprep.subr.mxu0 0.0
    %8503 = vmatpush1.msra.mxu0 0.0
    %8504 = vmatprep.subr.mxu0 0.0
    %8505 = vmatpush1.msra.mxu0 0.0
    %8506 = vmatprep.subr.mxu0 0.0
    %8507 = vmatpush1.msra.mxu0 0.0
    %8508 = vmatprep.subr.mxu0 0.0
    %8509 = vmatpush1.msra.mxu0 0.0
    %8510 = vmatprep.subr.mxu0 0.0
    %8511 = vmatpush1.msra.mxu0 0.0
    %8512 = vmatprep.subr.mxu0 0.0
    %8513 = vmatpush1.msra.mxu0 0.0
    %8514 = vmatprep.subr.mxu0 0.0
    %8515 = vmatpush1.msra.mxu0 0.0
    %8516 = vmatprep.subr.mxu0 0.0
    %8517 = vmatpush1.msra.mxu0 0.0
    %8518 = vmatprep.subr.mxu0 0.0
    %8519 = vmatpush1.msra.mxu0 0.0
    %8520 = vmatprep.subr.mxu0 0.0
    %8521 = vmatpush1.msra.mxu0 0.0
    %8522 = vmatprep.subr.mxu0 0.0
    %8523 = vmatpush1.msra.mxu0 0.0
    %8524 = vmatprep.subr.mxu0 0.0
    %8525 = vmatpush1.msra.mxu0 0.0
    %8526 = vmatprep.subr.mxu0 0.0
    %8527 = vmatpush1.msra.mxu0 0.0
    %8528 = vmatprep.subr.mxu0 0.0
    %8529 = vmatpush1.msra.mxu0 0.0
    %8530 = vmatprep.subr.mxu0 0.0
    %8531 = vmatpush1.msra.mxu0 0.0
    %8532 = vmatprep.subr.mxu0 0.0
    %8533 = vmatpush1.msra.mxu0 0.0
    %8534 = vmatprep.subr.mxu0 0.0
    %8535 = vmatpush1.msra.mxu0 0.0
    %8536 = vmatprep.subr.mxu0 0.0
    %8537 = vmatpush1.msra.mxu0 0.0
    %8538 = vmatprep.subr.mxu0 0.0
    %8539 = vmatpush1.msra.mxu0 0.0
    %8540 = vmatprep.subr.mxu0 0.0
    %8541 = vmatpush1.msra.mxu0 0.0
    %8542 = vmatprep.subr.mxu0 0.0
    %8543 = vmatpush1.msra.mxu0 0.0
    %8544 = vmatprep.subr.mxu0 0.0
    %8545 = vmatpush1.msra.mxu0 0.0
    %8546 = vmatprep.subr.mxu0 0.0
    %8547 = vmatpush1.msra.mxu0 0.0
    %8548 = vmatprep.subr.mxu0 0.0
    %8549 = vmatpush1.msra.mxu0 0.0
    %8550 = vmatprep.subr.mxu0 0.0
    %8551 = vmatpush1.msra.mxu0 0.0
    %8552 = vmatprep.subr.mxu0 0.0
    %8553 = vmatpush1.msra.mxu0 0.0
    %8554 = vmatprep.subr.mxu0 0.0
    %8555 = vmatpush1.msra.mxu0 0.0
    %8556 = vmatprep.subr.mxu0 0.0
    %8557 = vmatpush1.msra.mxu0 0.0
    %8558 = vmatprep.subr.mxu0 0.0
    %8559 = vmatpush1.msra.mxu0 0.0
    %8560 = vmatprep.subr.mxu0 0.0
    %8561 = vmatpush1.msra.mxu0 0.0
    %8562 = vmatprep.mubr.f32.mxu0 0.0
    %v8563 = vand.u32 %v132, 4294901760
    %8564 = vmatmul.mubr.f32.gmra.mrb[0].mxu0 %v8563
    %v8565 = vpop.f32.mrb[0].mxu0
    %v8566 = vadd.f32 %v8340, %v8565
    %v8567 = vpop.f32.mrb[0].mxu0
    %8568 = vmatprep.mubr.f32.mxu0 0.0
    %v8569 = vand.u32 %v135, 4294901760
    %8570 = vmatmul.mubr.f32.gmra.mrb[0].mxu0 %v8569
    %v8571 = vpop.f32.mrb[0].mxu0
    %v8572 = vadd.f32 %v8350, %v8571
    %v8573 = vpop.f32.mrb[0].mxu0
    %8574 = vmatprep.mubr.f32.mxu0 0.0
    %v8575 = vand.u32 %v138, 4294901760
    %8576 = vmatmul.mubr.f32.gmra.mrb[0].mxu0 %v8575
    %v8577 = vpop.f32.mrb[0].mxu0
    %v8578 = vadd.f32 %v8360, %v8577
    %v8579 = vpop.f32.mrb[0].mxu0
    %8580 = vmatprep.mubr.f32.mxu0 0.0
    %v8581 = vand.u32 %v141, 4294901760
    %8582 = vmatmul.mubr.f32.gmra.mrb[0].mxu0 %v8581
    %v8583 = vpop.f32.mrb[0].mxu0
    %v8584 = vadd.f32 %v8370, %v8583
    %v8585 = vpop.f32.mrb[0].mxu0
    %8586 = vmatprep.mubr.f32.mxu0 0.0
    %v8587 = vand.u32 %v144, 4294901760
    %8588 = vmatmul.mubr.f32.gmra.mrb[0].mxu0 %v8587
    %v8589 = vpop.f32.mrb[0].mxu0
    %v8590 = vadd.f32 %v8380, %v8589
    %v8591 = vpop.f32.mrb[0].mxu0
    %8592 = vmatprep.mubr.f32.mxu0 0.0
    %v8593 = vand.u32 %v147, 4294901760
    %8594 = vmatmul.mubr.f32.gmra.mrb[0].mxu0 %v8593
    %v8595 = vpop.f32.mrb[0].mxu0
    %v8596 = vadd.f32 %v8390, %v8595
    %v8597 = vpop.f32.mrb[0].mxu0
    %8598 = vmatprep.mubr.f32.mxu0 0.0
    %v8599 = vand.u32 %v150, 4294901760
    %8600 = vmatmul.mubr.f32.gmra.mrb[0].mxu0 %v8599
    %v8601 = vpop.f32.mrb[0].mxu0
    %v8602 = vadd.f32 %v8400, %v8601
    %v8603 = vpop.f32.mrb[0].mxu0
    %8604 = vmatprep.mubr.f32.mxu0 0.0
    %v8605 = vand.u32 %v8259, 4294901760
    %8606 = vmatmul.mubr.f32.gmra.mrb[0].mxu0 %v8605
    %v8607 = vpop.f32.mrb[0].mxu0
    %v8608 = vadd.f32 %v8410, %v8607
    %v8609 = vpop.f32.mrb[0].mxu0
    %8610 = vmatprep.mubr.f32.mxu0 0.0
    %v8611 = vand.u32 %v156, 4294901760
    %8612 = vmatmul.mubr.f32.gmra.mrb[0].mxu0 %v8611
    %v8613 = vpop.f32.mrb[0].mxu0
    %v8614 = vadd.f32 %v8420, %v8613
    %v8615 = vpop.f32.mrb[0].mxu0
    %8616 = vmatprep.mubr.f32.mxu0 0.0
    %v8617 = vand.u32 %v159, 4294901760
    %8618 = vmatmul.mubr.f32.gmra.mrb[0].mxu0 %v8617
    %v8619 = vpop.f32.mrb[0].mxu0
    %v8620 = vadd.f32 %v8430, %v8619
    %v8621 = vpop.f32.mrb[0].mxu0
    %8622 = vmatprep.mubr.f32.mxu0 0.0
    %v8623 = vand.u32 %v162, 4294901760
    %8624 = vmatmul.mubr.f32.gmra.mrb[0].mxu0 %v8623
    %v8625 = vpop.f32.mrb[0].mxu0
    %v8626 = vadd.f32 %v8440, %v8625
    %v8627 = vpop.f32.mrb[0].mxu0
    %8628 = vmatprep.mubr.f32.mxu0 0.0
    %v8629 = vand.u32 %v165, 4294901760
    %8630 = vmatmul.mubr.f32.gmra.mrb[0].mxu0 %v8629
    %v8631 = vpop.f32.mrb[0].mxu0
    %v8632 = vadd.f32 %v8450, %v8631
    %v8633 = vpop.f32.mrb[0].mxu0
    %8634 = vmatprep.mubr.f32.mxu0 0.0
    %v8635 = vand.u32 %v168, 4294901760
    %8636 = vmatmul.mubr.f32.gmra.mrb[0].mxu0 %v8635
    %v8637 = vpop.f32.mrb[0].mxu0
    %v8638 = vadd.f32 %v8460, %v8637
    %v8639 = vpop.f32.mrb[0].mxu0
    %8640 = vmatprep.mubr.f32.mxu0 0.0
    %v8641 = vand.u32 %v171, 4294901760
    %8642 = vmatmul.mubr.f32.gmra.mrb[0].mxu0 %v8641
    %v8643 = vpop.f32.mrb[0].mxu0
    %v8644 = vadd.f32 %v8470, %v8643
    %v8645 = vpop.f32.mrb[0].mxu0
    %8646 = vmatprep.mubr.f32.mxu0 0.0
    %v8647 = vand.u32 %v174, 4294901760
    %8648 = vmatmul.mubr.f32.gmra.mrb[0].mxu0 %v8647
    %v8649 = vpop.f32.mrb[0].mxu0
    %v8650 = vadd.f32 %v8480, %v8649
    %v8651 = vpop.f32.mrb[0].mxu0
    %8652 = vmatprep.mubr.f32.mxu0 0.0
    %v8653 = vand.u32 %v8262, 4294901760
    %8654 = vmatmul.mubr.f32.gmra.mrb[0].mxu0 %v8653
    %v8655 = vpop.f32.mrb[0].mxu0
    %v8656 = vadd.f32 %v8490, %v8655
    %v8657 = vpop.f32.mrb[0].mxu0
    %8658 = vdwg.mxu0
    %8659 = vmatprep.subr.mxu0 0.0
    %v8660 = vand.u32 %v8265, 4294901760
    %v8661 = vsub.f32 %v8265, %v8660
    %8662 = vmatpush1.msra.mxu0 %v8661
    %8663 = vmatprep.subr.mxu0 0.0
    %8664 = vmatpush1.msra.mxu0 0.0
    %8665 = vmatprep.subr.mxu0 0.0
    %8666 = vmatpush1.msra.mxu0 0.0
    %8667 = vmatprep.subr.mxu0 0.0
    %8668 = vmatpush1.msra.mxu0 0.0
    %8669 = vmatprep.subr.mxu0 0.0
    %8670 = vmatpush1.msra.mxu0 0.0
    %8671 = vmatprep.subr.mxu0 0.0
    %8672 = vmatpush1.msra.mxu0 0.0
    %8673 = vmatprep.subr.mxu0 0.0
    %8674 = vmatpush1.msra.mxu0 0.0
    %8675 = vmatprep.subr.mxu0 0.0
    %8676 = vmatpush1.msra.mxu0 0.0
    %8677 = vmatprep.subr.mxu0 0.0
    %8678 = vmatpush1.msra.mxu0 0.0
    %8679 = vmatprep.subr.mxu0 0.0
    %8680 = vmatpush1.msra.mxu0 0.0
    %8681 = vmatprep.subr.mxu0 0.0
    %8682 = vmatpush1.msra.mxu0 0.0
    %8683 = vmatprep.subr.mxu0 0.0
    %8684 = vmatpush1.msra.mxu0 0.0
    %8685 = vmatprep.subr.mxu0 0.0
    %8686 = vmatpush1.msra.mxu0 0.0
    %8687 = vmatprep.subr.mxu0 0.0
    %8688 = vmatpush1.msra.mxu0 0.0
    %8689 = vmatprep.subr.mxu0 0.0
    %8690 = vmatpush1.msra.mxu0 0.0
    %8691 = vmatprep.subr.mxu0 0.0
    %8692 = vmatpush1.msra.mxu0 0.0
    %8693 = vmatprep.subr.mxu0 0.0
    %8694 = vmatpush1.msra.mxu0 0.0
    %8695 = vmatprep.subr.mxu0 0.0
    %8696 = vmatpush1.msra.mxu0 0.0
    %8697 = vmatprep.subr.mxu0 0.0
    %8698 = vmatpush1.msra.mxu0 0.0
    %8699 = vmatprep.subr.mxu0 0.0
    %8700 = vmatpush1.msra.mxu0 0.0
    %8701 = vmatprep.subr.mxu0 0.0
    %8702 = vmatpush1.msra.mxu0 0.0
    %8703 = vmatprep.subr.mxu0 0.0
    %8704 = vmatpush1.msra.mxu0 0.0
    %8705 = vmatprep.subr.mxu0 0.0
    %8706 = vmatpush1.msra.mxu0 0.0
    %8707 = vmatprep.subr.mxu0 0.0
    %8708 = vmatpush1.msra.mxu0 0.0
    %8709 = vmatprep.subr.mxu0 0.0
    %8710 = vmatpush1.msra.mxu0 0.0
    %8711 = vmatprep.subr.mxu0 0.0
    %8712 = vmatpush1.msra.mxu0 0.0
    %8713 = vmatprep.subr.mxu0 0.0
    %8714 = vmatpush1.msra.mxu0 0.0
    %8715 = vmatprep.subr.mxu0 0.0
    %8716 = vmatpush1.msra.mxu0 0.0
    %8717 = vmatprep.subr.mxu0 0.0
    %8718 = vmatpush1.msra.mxu0 0.0
    %8719 = vmatprep.subr.mxu0 0.0
    %8720 = vmatpush1.msra.mxu0 0.0
    %8721 = vmatprep.subr.mxu0 0.0
    %8722 = vmatpush1.msra.mxu0 0.0
    %8723 = vmatprep.subr.mxu0 0.0
    %8724 = vmatpush1.msra.mxu0 0.0
    %8725 = vmatprep.mubr.f32.mxu0 0.0
    %v8726 = vand.u32 %v132, 4294901760
    %v8727 = vsub.f32 %v132, %v8726
    %8728 = vmatmul.mubr.f32.gmra.mrb[0].mxu0 %v8727
    %v8729 = vpop.f32.mrb[0].mxu0
    %v8730 = vadd.f32 %v8566, %v8729
    %v8731 = vpop.f32.mrb[0].mxu0
    %8732 = vmatprep.mubr.f32.mxu0 0.0
    %v8733 = vand.u32 %v135, 4294901760
    %v8734 = vsub.f32 %v135, %v8733
    %8735 = vmatmul.mubr.f32.gmra.mrb[0].mxu0 %v8734
    %v8736 = vpop.f32.mrb[0].mxu0
    %v8737 = vadd.f32 %v8572, %v8736
    %v8738 = vpop.f32.mrb[0].mxu0
    %8739 = vmatprep.mubr.f32.mxu0 0.0
    %v8740 = vand.u32 %v138, 4294901760
    %v8741 = vsub.f32 %v138, %v8740
    %8742 = vmatmul.mubr.f32.gmra.mrb[0].mxu0 %v8741
    %v8743 = vpop.f32.mrb[0].mxu0
    %v8744 = vadd.f32 %v8578, %v8743
    %v8745 = vpop.f32.mrb[0].mxu0
    %8746 = vmatprep.mubr.f32.mxu0 0.0
    %v8747 = vand.u32 %v141, 4294901760
    %v8748 = vsub.f32 %v141, %v8747
    %8749 = vmatmul.mubr.f32.gmra.mrb[0].mxu0 %v8748
    %v8750 = vpop.f32.mrb[0].mxu0
    %v8751 = vadd.f32 %v8584, %v8750
    %v8752 = vpop.f32.mrb[0].mxu0
    %8753 = vmatprep.mubr.f32.mxu0 0.0
    %v8754 = vand.u32 %v144, 4294901760
    %v8755 = vsub.f32 %v144, %v8754
    %8756 = vmatmul.mubr.f32.gmra.mrb[0].mxu0 %v8755
    %v8757 = vpop.f32.mrb[0].mxu0
    %v8758 = vadd.f32 %v8590, %v8757
    %v8759 = vpop.f32.mrb[0].mxu0
    %8760 = vmatprep.mubr.f32.mxu0 0.0
    %v8761 = vand.u32 %v147, 4294901760
    %v8762 = vsub.f32 %v147, %v8761
    %8763 = vmatmul.mubr.f32.gmra.mrb[0].mxu0 %v8762
    %v8764 = vpop.f32.mrb[0].mxu0
    %v8765 = vadd.f32 %v8596, %v8764
    %v8766 = vpop.f32.mrb[0].mxu0
    %8767 = vmatprep.mubr.f32.mxu0 0.0
    %v8768 = vand.u32 %v150, 4294901760
    %v8769 = vsub.f32 %v150, %v8768
    %8770 = vmatmul.mubr.f32.gmra.mrb[0].mxu0 %v8769
    %v8771 = vpop.f32.mrb[0].mxu0
    %v8772 = vadd.f32 %v8602, %v8771
    %v8773 = vpop.f32.mrb[0].mxu0
    %8774 = vmatprep.mubr.f32.mxu0 0.0
    %v8775 = vand.u32 %v8259, 4294901760
    %v8776 = vsub.f32 %v8259, %v8775
    %8777 = vmatmul.mubr.f32.gmra.mrb[0].mxu0 %v8776
    %v8778 = vpop.f32.mrb[0].mxu0
    %v8779 = vadd.f32 %v8608, %v8778
    %v8780 = vpop.f32.mrb[0].mxu0
    %8781 = vmatprep.mubr.f32.mxu0 0.0
    %v8782 = vand.u32 %v156, 4294901760
    %v8783 = vsub.f32 %v156, %v8782
    %8784 = vmatmul.mubr.f32.gmra.mrb[0].mxu0 %v8783
    %v8785 = vpop.f32.mrb[0].mxu0
    %v8786 = vadd.f32 %v8614, %v8785
    %v8787 = vpop.f32.mrb[0].mxu0
    %8788 = vmatprep.mubr.f32.mxu0 0.0
    %v8789 = vand.u32 %v159, 4294901760
    %v8790 = vsub.f32 %v159, %v8789
    %8791 = vmatmul.mubr.f32.gmra.mrb[0].mxu0 %v8790
    %v8792 = vpop.f32.mrb[0].mxu0
    %v8793 = vadd.f32 %v8620, %v8792
    %v8794 = vpop.f32.mrb[0].mxu0
    %8795 = vmatprep.mubr.f32.mxu0 0.0
    %v8796 = vand.u32 %v162, 4294901760
    %v8797 = vsub.f32 %v162, %v8796
    %8798 = vmatmul.mubr.f32.gmra.mrb[0].mxu0 %v8797
    %v8799 = vpop.f32.mrb[0].mxu0
    %v8800 = vadd.f32 %v8626, %v8799
    %v8801 = vpop.f32.mrb[0].mxu0
    %8802 = vmatprep.mubr.f32.mxu0 0.0
    %v8803 = vand.u32 %v165, 4294901760
    %v8804 = vsub.f32 %v165, %v8803
    %8805 = vmatmul.mubr.f32.gmra.mrb[0].mxu0 %v8804
    %v8806 = vpop.f32.mrb[0].mxu0
    %v8807 = vadd.f32 %v8632, %v8806
    %v8808 = vpop.f32.mrb[0].mxu0
    %8809 = vmatprep.mubr.f32.mxu0 0.0
    %v8810 = vand.u32 %v168, 4294901760
    %v8811 = vsub.f32 %v168, %v8810
    %8812 = vmatmul.mubr.f32.gmra.mrb[0].mxu0 %v8811
    %v8813 = vpop.f32.mrb[0].mxu0
    %v8814 = vadd.f32 %v8638, %v8813
    %v8815 = vpop.f32.mrb[0].mxu0
    %8816 = vmatprep.mubr.f32.mxu0 0.0
    %v8817 = vand.u32 %v171, 4294901760
    %v8818 = vsub.f32 %v171, %v8817
    %8819 = vmatmul.mubr.f32.gmra.mrb[0].mxu0 %v8818
    %v8820 = vpop.f32.mrb[0].mxu0
    %v8821 = vadd.f32 %v8644, %v8820
    %v8822 = vpop.f32.mrb[0].mxu0
    %8823 = vmatprep.mubr.f32.mxu0 0.0
    %v8824 = vand.u32 %v174, 4294901760
    %v8825 = vsub.f32 %v174, %v8824
    %8826 = vmatmul.mubr.f32.gmra.mrb[0].mxu0 %v8825
    %v8827 = vpop.f32.mrb[0].mxu0
    %v8828 = vadd.f32 %v8650, %v8827
    %v8829 = vpop.f32.mrb[0].mxu0
    %8830 = vmatprep.mubr.f32.mxu0 0.0
    %v8831 = vand.u32 %v8262, 4294901760
    %v8832 = vsub.f32 %v8262, %v8831
    %8833 = vmatmul.mubr.f32.gmra.mrb[0].mxu0 %v8832
    %v8834 = vpop.f32.mrb[0].mxu0
    %v8835 = vadd.f32 %v8656, %v8834
    %v8836 = vpop.f32.mrb[0].mxu0
    %8837 = vdwg.mxu0
    %8838 = vmatprep.subr.mxu0 0.0
    %v8839 = vand.u32 %v8265, 4294901760
    %8840 = vmatpush1.msra.mxu0 %v8839
    %8841 = vmatprep.subr.mxu0 0.0
    %8842 = vmatpush1.msra.mxu0 0.0
    %8843 = vmatprep.subr.mxu0 0.0
    %8844 = vmatpush1.msra.mxu0 0.0
    %8845 = vmatprep.subr.mxu0 0.0
    %8846 = vmatpush1.msra.mxu0 0.0
    %8847 = vmatprep.subr.mxu0 0.0
    %8848 = vmatpush1.msra.mxu0 0.0
    %8849 = vmatprep.subr.mxu0 0.0
    %8850 = vmatpush1.msra.mxu0 0.0
    %8851 = vmatprep.subr.mxu0 0.0
    %8852 = vmatpush1.msra.mxu0 0.0
    %8853 = vmatprep.subr.mxu0 0.0
    %8854 = vmatpush1.msra.mxu0 0.0
    %8855 = vmatprep.subr.mxu0 0.0
    %8856 = vmatpush1.msra.mxu0 0.0
    %8857 = vmatprep.subr.mxu0 0.0
    %8858 = vmatpush1.msra.mxu0 0.0
    %8859 = vmatprep.subr.mxu0 0.0
    %8860 = vmatpush1.msra.mxu0 0.0
    %8861 = vmatprep.subr.mxu0 0.0
    %8862 = vmatpush1.msra.mxu0 0.0
    %8863 = vmatprep.subr.mxu0 0.0
    %8864 = vmatpush1.msra.mxu0 0.0
    %8865 = vmatprep.subr.mxu0 0.0
    %8866 = vmatpush1.msra.mxu0 0.0
    %8867 = vmatprep.subr.mxu0 0.0
    %8868 = vmatpush1.msra.mxu0 0.0
    %8869 = vmatprep.subr.mxu0 0.0
    %8870 = vmatpush1.msra.mxu0 0.0
    %8871 = vmatprep.subr.mxu0 0.0
    %8872 = vmatpush1.msra.mxu0 0.0
    %8873 = vmatprep.subr.mxu0 0.0
    %8874 = vmatpush1.msra.mxu0 0.0
    %8875 = vmatprep.subr.mxu0 0.0
    %8876 = vmatpush1.msra.mxu0 0.0
    %8877 = vmatprep.subr.mxu0 0.0
    %8878 = vmatpush1.msra.mxu0 0.0
    %8879 = vmatprep.subr.mxu0 0.0
    %8880 = vmatpush1.msra.mxu0 0.0
    %8881 = vmatprep.subr.mxu0 0.0
    %8882 = vmatpush1.msra.mxu0 0.0
    %8883 = vmatprep.subr.mxu0 0.0
    %8884 = vmatpush1.msra.mxu0 0.0
    %8885 = vmatprep.subr.mxu0 0.0
    %8886 = vmatpush1.msra.mxu0 0.0
    %8887 = vmatprep.subr.mxu0 0.0
    %8888 = vmatpush1.msra.mxu0 0.0
    %8889 = vmatprep.subr.mxu0 0.0
    %8890 = vmatpush1.msra.mxu0 0.0
    %8891 = vmatprep.subr.mxu0 0.0
    %8892 = vmatpush1.msra.mxu0 0.0
    %8893 = vmatprep.subr.mxu0 0.0
    %8894 = vmatpush1.msra.mxu0 0.0
    %8895 = vmatprep.subr.mxu0 0.0
    %8896 = vmatpush1.msra.mxu0 0.0
    %8897 = vmatprep.subr.mxu0 0.0
    %8898 = vmatpush1.msra.mxu0 0.0
    %8899 = vmatprep.subr.mxu0 0.0
    %8900 = vmatpush1.msra.mxu0 0.0
    %8901 = vmatprep.subr.mxu0 0.0
    %8902 = vmatpush1.msra.mxu0 0.0
    %8903 = vmatprep.mubr.f32.mxu0 0.0
    %v8904 = vand.u32 %v132, 4294901760
    %v8905 = vsub.f32 %v132, %v8904
    %v8906 = vand.u32 %v8905, 4294901760
    %8907 = vmatmul.mubr.f32.gmra.mrb[0].mxu0 %v8906
    %v8908 = vpop.f32.mrb[0].mxu0
    %v8909 = vadd.f32 %v8730, %v8908
    %v8910 = vpop.f32.mrb[0].mxu0
    %8911 = vmatprep.mubr.f32.mxu0 0.0
    %v8912 = vand.u32 %v135, 4294901760
    %v8913 = vsub.f32 %v135, %v8912
    %v8914 = vand.u32 %v8913, 4294901760
    %8915 = vmatmul.mubr.f32.gmra.mrb[0].mxu0 %v8914
    %v8916 = vpop.f32.mrb[0].mxu0
    %v8917 = vadd.f32 %v8737, %v8916
    %v8918 = vpop.f32.mrb[0].mxu0
    %8919 = vmatprep.mubr.f32.mxu0 0.0
    %v8920 = vand.u32 %v138, 4294901760
    %v8921 = vsub.f32 %v138, %v8920
    %v8922 = vand.u32 %v8921, 4294901760
    %8923 = vmatmul.mubr.f32.gmra.mrb[0].mxu0 %v8922
    %v8924 = vpop.f32.mrb[0].mxu0
    %v8925 = vadd.f32 %v8744, %v8924
    %v8926 = vpop.f32.mrb[0].mxu0
    %8927 = vmatprep.mubr.f32.mxu0 0.0
    %v8928 = vand.u32 %v141, 4294901760
    %v8929 = vsub.f32 %v141, %v8928
    %v8930 = vand.u32 %v8929, 4294901760
    %8931 = vmatmul.mubr.f32.gmra.mrb[0].mxu0 %v8930
    %v8932 = vpop.f32.mrb[0].mxu0
    %v8933 = vadd.f32 %v8751, %v8932
    %v8934 = vpop.f32.mrb[0].mxu0
    %8935 = vmatprep.mubr.f32.mxu0 0.0
    %v8936 = vand.u32 %v144, 4294901760
    %v8937 = vsub.f32 %v144, %v8936
    %v8938 = vand.u32 %v8937, 4294901760
    %8939 = vmatmul.mubr.f32.gmra.mrb[0].mxu0 %v8938
    %v8940 = vpop.f32.mrb[0].mxu0
    %v8941 = vadd.f32 %v8758, %v8940
    %v8942 = vpop.f32.mrb[0].mxu0
    %8943 = vmatprep.mubr.f32.mxu0 0.0
    %v8944 = vand.u32 %v147, 4294901760
    %v8945 = vsub.f32 %v147, %v8944
    %v8946 = vand.u32 %v8945, 4294901760
    %8947 = vmatmul.mubr.f32.gmra.mrb[0].mxu0 %v8946
    %v8948 = vpop.f32.mrb[0].mxu0
    %v8949 = vadd.f32 %v8765, %v8948
    %v8950 = vpop.f32.mrb[0].mxu0
    %8951 = vmatprep.mubr.f32.mxu0 0.0
    %v8952 = vand.u32 %v150, 4294901760
    %v8953 = vsub.f32 %v150, %v8952
    %v8954 = vand.u32 %v8953, 4294901760
    %8955 = vmatmul.mubr.f32.gmra.mrb[0].mxu0 %v8954
    %v8956 = vpop.f32.mrb[0].mxu0
    %v8957 = vadd.f32 %v8772, %v8956
    %v8958 = vpop.f32.mrb[0].mxu0
    %8959 = vmatprep.mubr.f32.mxu0 0.0
    %v8960 = vand.u32 %v8259, 4294901760
    %v8961 = vsub.f32 %v8259, %v8960
    %v8962 = vand.u32 %v8961, 4294901760
    %8963 = vmatmul.mubr.f32.gmra.mrb[0].mxu0 %v8962
    %v8964 = vpop.f32.mrb[0].mxu0
    %v8965 = vadd.f32 %v8779, %v8964
    %v8966 = vpop.f32.mrb[0].mxu0
    %8967 = vmatprep.mubr.f32.mxu0 0.0
    %v8968 = vand.u32 %v156, 4294901760
    %v8969 = vsub.f32 %v156, %v8968
    %v8970 = vand.u32 %v8969, 4294901760
    %8971 = vmatmul.mubr.f32.gmra.mrb[0].mxu0 %v8970
    %v8972 = vpop.f32.mrb[0].mxu0
    %v8973 = vadd.f32 %v8786, %v8972
    %v8974 = vpop.f32.mrb[0].mxu0
    %8975 = vmatprep.mubr.f32.mxu0 0.0
    %v8976 = vand.u32 %v159, 4294901760
    %v8977 = vsub.f32 %v159, %v8976
    %v8978 = vand.u32 %v8977, 4294901760
    %8979 = vmatmul.mubr.f32.gmra.mrb[0].mxu0 %v8978
    %v8980 = vpop.f32.mrb[0].mxu0
    %v8981 = vadd.f32 %v8793, %v8980
    %v8982 = vpop.f32.mrb[0].mxu0
    %8983 = vmatprep.mubr.f32.mxu0 0.0
    %v8984 = vand.u32 %v162, 4294901760
    %v8985 = vsub.f32 %v162, %v8984
    %v8986 = vand.u32 %v8985, 4294901760
    %8987 = vmatmul.mubr.f32.gmra.mrb[0].mxu0 %v8986
    %v8988 = vpop.f32.mrb[0].mxu0
    %v8989 = vadd.f32 %v8800, %v8988
    %v8990 = vpop.f32.mrb[0].mxu0
    %8991 = vmatprep.mubr.f32.mxu0 0.0
    %v8992 = vand.u32 %v165, 4294901760
    %v8993 = vsub.f32 %v165, %v8992
    %v8994 = vand.u32 %v8993, 4294901760
    %8995 = vmatmul.mubr.f32.gmra.mrb[0].mxu0 %v8994
    %v8996 = vpop.f32.mrb[0].mxu0
    %v8997 = vadd.f32 %v8807, %v8996
    %v8998 = vpop.f32.mrb[0].mxu0
    %8999 = vmatprep.mubr.f32.mxu0 0.0
    %v9000 = vand.u32 %v168, 4294901760
    %v9001 = vsub.f32 %v168, %v9000
    %v9002 = vand.u32 %v9001, 4294901760
    %9003 = vmatmul.mubr.f32.gmra.mrb[0].mxu0 %v9002
    %v9004 = vpop.f32.mrb[0].mxu0
    %v9005 = vadd.f32 %v8814, %v9004
    %v9006 = vpop.f32.mrb[0].mxu0
    %9007 = vmatprep.mubr.f32.mxu0 0.0
    %v9008 = vand.u32 %v171, 4294901760
    %v9009 = vsub.f32 %v171, %v9008
    %v9010 = vand.u32 %v9009, 4294901760
    %9011 = vmatmul.mubr.f32.gmra.mrb[0].mxu0 %v9010
    %v9012 = vpop.f32.mrb[0].mxu0
    %v9013 = vadd.f32 %v8821, %v9012
    %v9014 = vpop.f32.mrb[0].mxu0
    %9015 = vmatprep.mubr.f32.mxu0 0.0
    %v9016 = vand.u32 %v174, 4294901760
    %v9017 = vsub.f32 %v174, %v9016
    %v9018 = vand.u32 %v9017, 4294901760
    %9019 = vmatmul.mubr.f32.gmra.mrb[0].mxu0 %v9018
    %v9020 = vpop.f32.mrb[0].mxu0
    %v9021 = vadd.f32 %v8828, %v9020
    %v9022 = vpop.f32.mrb[0].mxu0
    %9023 = vmatprep.mubr.f32.mxu0 0.0
    %v9024 = vand.u32 %v8262, 4294901760
    %v9025 = vsub.f32 %v8262, %v9024
    %v9026 = vand.u32 %v9025, 4294901760
    %9027 = vmatmul.mubr.f32.gmra.mrb[0].mxu0 %v9026
    %v9028 = vpop.f32.mrb[0].mxu0
    %v9029 = vadd.f32 %v8835, %v9028
    %v9030 = vpop.f32.mrb[0].mxu0
    %9031 = vdwg.mxu0
    %9032 = vmatprep.subr.mxu0 0.0
    %v9033 = vand.u32 %v8265, 4294901760
    %v9034 = vsub.f32 %v8265, %v9033
    %v9035 = vand.u32 %v9034, 4294901760
    %9036 = vmatpush1.msra.mxu0 %v9035
    %9037 = vmatprep.subr.mxu0 0.0
    %9038 = vmatpush1.msra.mxu0 0.0
    %9039 = vmatprep.subr.mxu0 0.0
    %9040 = vmatpush1.msra.mxu0 0.0
    %9041 = vmatprep.subr.mxu0 0.0
    %9042 = vmatpush1.msra.mxu0 0.0
    %9043 = vmatprep.subr.mxu0 0.0
    %9044 = vmatpush1.msra.mxu0 0.0
    %9045 = vmatprep.subr.mxu0 0.0
    %9046 = vmatpush1.msra.mxu0 0.0
    %9047 = vmatprep.subr.mxu0 0.0
    %9048 = vmatpush1.msra.mxu0 0.0
    %9049 = vmatprep.subr.mxu0 0.0
    %9050 = vmatpush1.msra.mxu0 0.0
    %9051 = vmatprep.subr.mxu0 0.0
    %9052 = vmatpush1.msra.mxu0 0.0
    %9053 = vmatprep.subr.mxu0 0.0
    %9054 = vmatpush1.msra.mxu0 0.0
    %9055 = vmatprep.subr.mxu0 0.0
    %9056 = vmatpush1.msra.mxu0 0.0
    %9057 = vmatprep.subr.mxu0 0.0
    %9058 = vmatpush1.msra.mxu0 0.0
    %9059 = vmatprep.subr.mxu0 0.0
    %9060 = vmatpush1.msra.mxu0 0.0
    %9061 = vmatprep.subr.mxu0 0.0
    %9062 = vmatpush1.msra.mxu0 0.0
    %9063 = vmatprep.subr.mxu0 0.0
    %9064 = vmatpush1.msra.mxu0 0.0
    %9065 = vmatprep.subr.mxu0 0.0
    %9066 = vmatpush1.msra.mxu0 0.0
    %9067 = vmatprep.subr.mxu0 0.0
    %9068 = vmatpush1.msra.mxu0 0.0
    %9069 = vmatprep.subr.mxu0 0.0
    %9070 = vmatpush1.msra.mxu0 0.0
    %9071 = vmatprep.subr.mxu0 0.0
    %9072 = vmatpush1.msra.mxu0 0.0
    %9073 = vmatprep.subr.mxu0 0.0
    %9074 = vmatpush1.msra.mxu0 0.0
    %9075 = vmatprep.subr.mxu0 0.0
    %9076 = vmatpush1.msra.mxu0 0.0
    %9077 = vmatprep.subr.mxu0 0.0
    %9078 = vmatpush1.msra.mxu0 0.0
    %9079 = vmatprep.subr.mxu0 0.0
    %9080 = vmatpush1.msra.mxu0 0.0
    %9081 = vmatprep.subr.mxu0 0.0
    %9082 = vmatpush1.msra.mxu0 0.0
    %9083 = vmatprep.subr.mxu0 0.0
    %9084 = vmatpush1.msra.mxu0 0.0
    %9085 = vmatprep.subr.mxu0 0.0
    %9086 = vmatpush1.msra.mxu0 0.0
    %9087 = vmatprep.subr.mxu0 0.0
    %9088 = vmatpush1.msra.mxu0 0.0
    %9089 = vmatprep.subr.mxu0 0.0
    %9090 = vmatpush1.msra.mxu0 0.0
    %9091 = vmatprep.subr.mxu0 0.0
    %9092 = vmatpush1.msra.mxu0 0.0
    %9093 = vmatprep.subr.mxu0 0.0
    %9094 = vmatpush1.msra.mxu0 0.0
    %9095 = vmatprep.subr.mxu0 0.0
    %9096 = vmatpush1.msra.mxu0 0.0
    %9097 = vmatprep.subr.mxu0 0.0
    %9098 = vmatpush1.msra.mxu0 0.0
    %9099 = vmatprep.mubr.f32.mxu0 0.0
    %v9100 = vand.u32 %v132, 4294901760
    %9101 = vmatmul.mubr.f32.gmra.mrb[0].mxu0 %v9100
    %v9102 = vpop.f32.mrb[0].mxu0
    %v9103 = vadd.f32 %v8909, %v9102
    %v9104 = vpop.f32.mrb[0].mxu0
    %9105 = vmatprep.mubr.f32.mxu0 0.0
    %v9106 = vand.u32 %v135, 4294901760
    %9107 = vmatmul.mubr.f32.gmra.mrb[0].mxu0 %v9106
    %v9108 = vpop.f32.mrb[0].mxu0
    %v9109 = vadd.f32 %v8917, %v9108
    %v9110 = vpop.f32.mrb[0].mxu0
    %9111 = vmatprep.mubr.f32.mxu0 0.0
    %v9112 = vand.u32 %v138, 4294901760
    %9113 = vmatmul.mubr.f32.gmra.mrb[0].mxu0 %v9112
    %v9114 = vpop.f32.mrb[0].mxu0
    %v9115 = vadd.f32 %v8925, %v9114
    %v9116 = vpop.f32.mrb[0].mxu0
    %9117 = vmatprep.mubr.f32.mxu0 0.0
    %v9118 = vand.u32 %v141, 4294901760
    %9119 = vmatmul.mubr.f32.gmra.mrb[0].mxu0 %v9118
    %v9120 = vpop.f32.mrb[0].mxu0
    %v9121 = vadd.f32 %v8933, %v9120
    %v9122 = vpop.f32.mrb[0].mxu0
    %9123 = vmatprep.mubr.f32.mxu0 0.0
    %v9124 = vand.u32 %v144, 4294901760
    %9125 = vmatmul.mubr.f32.gmra.mrb[0].mxu0 %v9124
    %v9126 = vpop.f32.mrb[0].mxu0
    %v9127 = vadd.f32 %v8941, %v9126
    %v9128 = vpop.f32.mrb[0].mxu0
    %9129 = vmatprep.mubr.f32.mxu0 0.0
    %v9130 = vand.u32 %v147, 4294901760
    %9131 = vmatmul.mubr.f32.gmra.mrb[0].mxu0 %v9130
    %v9132 = vpop.f32.mrb[0].mxu0
    %v9133 = vadd.f32 %v8949, %v9132
    %v9134 = vpop.f32.mrb[0].mxu0
    %9135 = vmatprep.mubr.f32.mxu0 0.0
    %v9136 = vand.u32 %v150, 4294901760
    %9137 = vmatmul.mubr.f32.gmra.mrb[0].mxu0 %v9136
    %v9138 = vpop.f32.mrb[0].mxu0
    %v9139 = vadd.f32 %v8957, %v9138
    %v9140 = vpop.f32.mrb[0].mxu0
    %9141 = vmatprep.mubr.f32.mxu0 0.0
    %v9142 = vand.u32 %v8259, 4294901760
    %9143 = vmatmul.mubr.f32.gmra.mrb[0].mxu0 %v9142
    %v9144 = vpop.f32.mrb[0].mxu0
    %v9145 = vadd.f32 %v8965, %v9144
    %v9146 = vpop.f32.mrb[0].mxu0
    %9147 = vmatprep.mubr.f32.mxu0 0.0
    %v9148 = vand.u32 %v156, 4294901760
    %9149 = vmatmul.mubr.f32.gmra.mrb[0].mxu0 %v9148
    %v9150 = vpop.f32.mrb[0].mxu0
    %v9151 = vadd.f32 %v8973, %v9150
    %v9152 = vpop.f32.mrb[0].mxu0
    %9153 = vmatprep.mubr.f32.mxu0 0.0
    %v9154 = vand.u32 %v159, 4294901760
    %9155 = vmatmul.mubr.f32.gmra.mrb[0].mxu0 %v9154
    %v9156 = vpop.f32.mrb[0].mxu0
    %v9157 = vadd.f32 %v8981, %v9156
    %v9158 = vpop.f32.mrb[0].mxu0
    %9159 = vmatprep.mubr.f32.mxu0 0.0
    %v9160 = vand.u32 %v162, 4294901760
    %9161 = vmatmul.mubr.f32.gmra.mrb[0].mxu0 %v9160
    %v9162 = vpop.f32.mrb[0].mxu0
    %v9163 = vadd.f32 %v8989, %v9162
    %v9164 = vpop.f32.mrb[0].mxu0
    %9165 = vmatprep.mubr.f32.mxu0 0.0
    %v9166 = vand.u32 %v165, 4294901760
    %9167 = vmatmul.mubr.f32.gmra.mrb[0].mxu0 %v9166
    %v9168 = vpop.f32.mrb[0].mxu0
    %v9169 = vadd.f32 %v8997, %v9168
    %v9170 = vpop.f32.mrb[0].mxu0
    %9171 = vmatprep.mubr.f32.mxu0 0.0
    %v9172 = vand.u32 %v168, 4294901760
    %9173 = vmatmul.mubr.f32.gmra.mrb[0].mxu0 %v9172
    %v9174 = vpop.f32.mrb[0].mxu0
    %v9175 = vadd.f32 %v9005, %v9174
    %v9176 = vpop.f32.mrb[0].mxu0
    %9177 = vmatprep.mubr.f32.mxu0 0.0
    %v9178 = vand.u32 %v171, 4294901760
    %9179 = vmatmul.mubr.f32.gmra.mrb[0].mxu0 %v9178
    %v9180 = vpop.f32.mrb[0].mxu0
    %v9181 = vadd.f32 %v9013, %v9180
    %v9182 = vpop.f32.mrb[0].mxu0
    %9183 = vmatprep.mubr.f32.mxu0 0.0
    %v9184 = vand.u32 %v174, 4294901760
    %9185 = vmatmul.mubr.f32.gmra.mrb[0].mxu0 %v9184
    %v9186 = vpop.f32.mrb[0].mxu0
    %v9187 = vadd.f32 %v9021, %v9186
    %v9188 = vpop.f32.mrb[0].mxu0
    %9189 = vmatprep.mubr.f32.mxu0 0.0
    %v9190 = vand.u32 %v8262, 4294901760
    %9191 = vmatmul.mubr.f32.gmra.mrb[0].mxu0 %v9190
    %v9192 = vpop.f32.mrb[0].mxu0
    %v9193 = vadd.f32 %v9029, %v9192
    %v9194 = vpop.f32.mrb[0].mxu0
    %9195 = vdwg.mxu0
    %9196 = vmatprep.subr.mxu0 0.0
    %v9197 = vand.u32 %v8265, 4294901760
    %9198 = vmatpush1.msra.mxu0 %v9197
    %9199 = vmatprep.subr.mxu0 0.0
    %9200 = vmatpush1.msra.mxu0 0.0
    %9201 = vmatprep.subr.mxu0 0.0
    %9202 = vmatpush1.msra.mxu0 0.0
    %9203 = vmatprep.subr.mxu0 0.0
    %9204 = vmatpush1.msra.mxu0 0.0
    %9205 = vmatprep.subr.mxu0 0.0
    %9206 = vmatpush1.msra.mxu0 0.0
    %9207 = vmatprep.subr.mxu0 0.0
    %9208 = vmatpush1.msra.mxu0 0.0
    %9209 = vmatprep.subr.mxu0 0.0
    %9210 = vmatpush1.msra.mxu0 0.0
    %9211 = vmatprep.subr.mxu0 0.0
    %9212 = vmatpush1.msra.mxu0 0.0
    %9213 = vmatprep.subr.mxu0 0.0
    %9214 = vmatpush1.msra.mxu0 0.0
    %9215 = vmatprep.subr.mxu0 0.0
    %9216 = vmatpush1.msra.mxu0 0.0
    %9217 = vmatprep.subr.mxu0 0.0
    %9218 = vmatpush1.msra.mxu0 0.0
    %9219 = vmatprep.subr.mxu0 0.0
    %9220 = vmatpush1.msra.mxu0 0.0
    %9221 = vmatprep.subr.mxu0 0.0
    %9222 = vmatpush1.msra.mxu0 0.0
    %9223 = vmatprep.subr.mxu0 0.0
    %9224 = vmatpush1.msra.mxu0 0.0
    %9225 = vmatprep.subr.mxu0 0.0
    %9226 = vmatpush1.msra.mxu0 0.0
    %9227 = vmatprep.subr.mxu0 0.0
    %9228 = vmatpush1.msra.mxu0 0.0
    %9229 = vmatprep.subr.mxu0 0.0
    %9230 = vmatpush1.msra.mxu0 0.0
    %9231 = vmatprep.subr.mxu0 0.0
    %9232 = vmatpush1.msra.mxu0 0.0
    %9233 = vmatprep.subr.mxu0 0.0
    %9234 = vmatpush1.msra.mxu0 0.0
    %9235 = vmatprep.subr.mxu0 0.0
    %9236 = vmatpush1.msra.mxu0 0.0
    %9237 = vmatprep.subr.mxu0 0.0
    %9238 = vmatpush1.msra.mxu0 0.0
    %9239 = vmatprep.subr.mxu0 0.0
    %9240 = vmatpush1.msra.mxu0 0.0
    %9241 = vmatprep.subr.mxu0 0.0
    %9242 = vmatpush1.msra.mxu0 0.0
    %9243 = vmatprep.subr.mxu0 0.0
    %9244 = vmatpush1.msra.mxu0 0.0
    %9245 = vmatprep.subr.mxu0 0.0
    %9246 = vmatpush1.msra.mxu0 0.0
    %9247 = vmatprep.subr.mxu0 0.0
    %9248 = vmatpush1.msra.mxu0 0.0
    %9249 = vmatprep.subr.mxu0 0.0
    %9250 = vmatpush1.msra.mxu0 0.0
    %9251 = vmatprep.subr.mxu0 0.0
    %9252 = vmatpush1.msra.mxu0 0.0
    %9253 = vmatprep.subr.mxu0 0.0
    %9254 = vmatpush1.msra.mxu0 0.0
    %9255 = vmatprep.subr.mxu0 0.0
    %9256 = vmatpush1.msra.mxu0 0.0
    %9257 = vmatprep.subr.mxu0 0.0
    %9258 = vmatpush1.msra.mxu0 0.0
    %9259 = vmatprep.subr.mxu0 0.0
    %9260 = vmatpush1.msra.mxu0 0.0
    %9261 = vmatprep.mubr.f32.mxu0 0.0
    %v9262 = vand.u32 %v132, 4294901760
    %9263 = vmatmul.mubr.f32.gmra.mrb[0].mxu0 %v9262
    %v9264 = vpop.f32.mrb[0].mxu0
    %v9265 = vadd.f32 %v9103, %v9264
    %v9266 = vpop.f32.mrb[0].mxu0
    %9267 = vmatprep.mubr.f32.mxu0 0.0
    %v9268 = vand.u32 %v135, 4294901760
    %9269 = vmatmul.mubr.f32.gmra.mrb[0].mxu0 %v9268
    %v9270 = vpop.f32.mrb[0].mxu0
    %v9271 = vadd.f32 %v9109, %v9270
    %v9272 = vpop.f32.mrb[0].mxu0
    %9273 = vmatprep.mubr.f32.mxu0 0.0
    %v9274 = vand.u32 %v138, 4294901760
    %9275 = vmatmul.mubr.f32.gmra.mrb[0].mxu0 %v9274
    %v9276 = vpop.f32.mrb[0].mxu0
    %v9277 = vadd.f32 %v9115, %v9276
    %v9278 = vpop.f32.mrb[0].mxu0
    %9279 = vmatprep.mubr.f32.mxu0 0.0
    %v9280 = vand.u32 %v141, 4294901760
    %9281 = vmatmul.mubr.f32.gmra.mrb[0].mxu0 %v9280
    %v9282 = vpop.f32.mrb[0].mxu0
    %v9283 = vadd.f32 %v9121, %v9282
    %v9284 = vpop.f32.mrb[0].mxu0
    %9285 = vmatprep.mubr.f32.mxu0 0.0
    %v9286 = vand.u32 %v144, 4294901760
    %9287 = vmatmul.mubr.f32.gmra.mrb[0].mxu0 %v9286
    %v9288 = vpop.f32.mrb[0].mxu0
    %v9289 = vadd.f32 %v9127, %v9288
    %v9290 = vpop.f32.mrb[0].mxu0
    %9291 = vmatprep.mubr.f32.mxu0 0.0
    %v9292 = vand.u32 %v147, 4294901760
    %9293 = vmatmul.mubr.f32.gmra.mrb[0].mxu0 %v9292
    %v9294 = vpop.f32.mrb[0].mxu0
    %v9295 = vadd.f32 %v9133, %v9294
    %v9296 = vpop.f32.mrb[0].mxu0
    %9297 = vmatprep.mubr.f32.mxu0 0.0
    %v9298 = vand.u32 %v150, 4294901760
    %9299 = vmatmul.mubr.f32.gmra.mrb[0].mxu0 %v9298
    %v9300 = vpop.f32.mrb[0].mxu0
    %v9301 = vadd.f32 %v9139, %v9300
    %v9302 = vpop.f32.mrb[0].mxu0
    %9303 = vmatprep.mubr.f32.mxu0 0.0
    %v9304 = vand.u32 %v8259, 4294901760
    %9305 = vmatmul.mubr.f32.gmra.mrb[0].mxu0 %v9304
    %v9306 = vpop.f32.mrb[0].mxu0
    %v9307 = vadd.f32 %v9145, %v9306
    %v9308 = vpop.f32.mrb[0].mxu0
    %9309 = vmatprep.mubr.f32.mxu0 0.0
    %v9310 = vand.u32 %v156, 4294901760
    %9311 = vmatmul.mubr.f32.gmra.mrb[0].mxu0 %v9310
    %v9312 = vpop.f32.mrb[0].mxu0
    %v9313 = vadd.f32 %v9151, %v9312
    %v9314 = vpop.f32.mrb[0].mxu0
    %9315 = vmatprep.mubr.f32.mxu0 0.0
    %v9316 = vand.u32 %v159, 4294901760
    %9317 = vmatmul.mubr.f32.gmra.mrb[0].mxu0 %v9316
    %v9318 = vpop.f32.mrb[0].mxu0
    %v9319 = vadd.f32 %v9157, %v9318
    %v9320 = vpop.f32.mrb[0].mxu0
    %9321 = vmatprep.mubr.f32.mxu0 0.0
    %v9322 = vand.u32 %v162, 4294901760
    %9323 = vmatmul.mubr.f32.gmra.mrb[0].mxu0 %v9322
    %v9324 = vpop.f32.mrb[0].mxu0
    %v9325 = vadd.f32 %v9163, %v9324
    %v9326 = vpop.f32.mrb[0].mxu0
    %9327 = vmatprep.mubr.f32.mxu0 0.0
    %v9328 = vand.u32 %v165, 4294901760
    %9329 = vmatmul.mubr.f32.gmra.mrb[0].mxu0 %v9328
    %v9330 = vpop.f32.mrb[0].mxu0
    %v9331 = vadd.f32 %v9169, %v9330
    %v9332 = vpop.f32.mrb[0].mxu0
    %9333 = vmatprep.mubr.f32.mxu0 0.0
    %v9334 = vand.u32 %v168, 4294901760
    %9335 = vmatmul.mubr.f32.gmra.mrb[0].mxu0 %v9334
    %v9336 = vpop.f32.mrb[0].mxu0
    %v9337 = vadd.f32 %v9175, %v9336
    %v9338 = vpop.f32.mrb[0].mxu0
    %9339 = vmatprep.mubr.f32.mxu0 0.0
    %v9340 = vand.u32 %v171, 4294901760
    %9341 = vmatmul.mubr.f32.gmra.mrb[0].mxu0 %v9340
    %v9342 = vpop.f32.mrb[0].mxu0
    %v9343 = vadd.f32 %v9181, %v9342
    %v9344 = vpop.f32.mrb[0].mxu0
    %9345 = vmatprep.mubr.f32.mxu0 0.0
    %v9346 = vand.u32 %v174, 4294901760
    %9347 = vmatmul.mubr.f32.gmra.mrb[0].mxu0 %v9346
    %v9348 = vpop.f32.mrb[0].mxu0
    %v9349 = vadd.f32 %v9187, %v9348
    %v9350 = vpop.f32.mrb[0].mxu0
    %9351 = vmatprep.mubr.f32.mxu0 0.0
    %v9352 = vand.u32 %v8262, 4294901760
    %9353 = vmatmul.mubr.f32.gmra.mrb[0].mxu0 %v9352
    %v9354 = vpop.f32.mrb[0].mxu0
    %v9355 = vadd.f32 %v9193, %v9354
    %v9356 = vpop.f32.mrb[0].mxu0
    %9357 = vdwg.mxu0
    %v9358 = vadd.f32 %v8242, %v9265
    %v9359 = vadd.f32 %v8243, %v9271
    %v9360 = vadd.f32 %v8244, %v9277
    %v9361 = vadd.f32 %v8245, %v9283
    %v9362 = vadd.f32 %v8246, %v9289
    %v9363 = vadd.f32 %v8247, %v9295
    %v9364 = vadd.f32 %v8248, %v9301
    %v9365 = vadd.f32 %v8249, %v9307
    %v9366 = vadd.f32 %v8250, %v9313
    %v9367 = vadd.f32 %v8251, %v9319
    %v9368 = vadd.f32 %v8252, %v9325
    %v9369 = vadd.f32 %v8253, %v9331
    %v9370 = vadd.f32 %v8254, %v9337
    %v9371 = vadd.f32 %v8255, %v9343
    %v9372 = vadd.f32 %v8256, %v9349
    %v9373 = vadd.f32 %v8257, %v9355
    %v9376 = vrot.slane %v32, 1
    %v9377 = vrot.slane %v33, 1
    %v9378 = vsel %vm2429, %v9376, %v9377
    %v9379 = vrot.slane %v83, 1
    %v9380 = vrot.slane %v84, 1
    %v9381 = vsel %vm2429, %v9379, %v9380
    %v9382 = vsel %vm127, %v9378, 0
    %v9384 = vsel %vm127, %v9381, 0
    %v9387 = vsel %vm176, %v126, 0
    %9389 = vmatprep.subr.mxu0 0.0
    %v9390 = vand.u32 %v9387, 4294901760
    %9391 = vmatpush1.msra.mxu0 %v9390
    %9392 = vmatprep.subr.mxu0 0.0
    %9393 = vmatpush1.msra.mxu0 0.0
    %9394 = vmatprep.subr.mxu0 0.0
    %9395 = vmatpush1.msra.mxu0 0.0
    %9396 = vmatprep.subr.mxu0 0.0
    %9397 = vmatpush1.msra.mxu0 0.0
    %9398 = vmatprep.subr.mxu0 0.0
    %9399 = vmatpush1.msra.mxu0 0.0
    %9400 = vmatprep.subr.mxu0 0.0
    %9401 = vmatpush1.msra.mxu0 0.0
    %9402 = vmatprep.subr.mxu0 0.0
    %9403 = vmatpush1.msra.mxu0 0.0
    %9404 = vmatprep.subr.mxu0 0.0
    %9405 = vmatpush1.msra.mxu0 0.0
    %9406 = vmatprep.subr.mxu0 0.0
    %9407 = vmatpush1.msra.mxu0 0.0
    %9408 = vmatprep.subr.mxu0 0.0
    %9409 = vmatpush1.msra.mxu0 0.0
    %9410 = vmatprep.subr.mxu0 0.0
    %9411 = vmatpush1.msra.mxu0 0.0
    %9412 = vmatprep.subr.mxu0 0.0
    %9413 = vmatpush1.msra.mxu0 0.0
    %9414 = vmatprep.subr.mxu0 0.0
    %9415 = vmatpush1.msra.mxu0 0.0
    %9416 = vmatprep.subr.mxu0 0.0
    %9417 = vmatpush1.msra.mxu0 0.0
    %9418 = vmatprep.subr.mxu0 0.0
    %9419 = vmatpush1.msra.mxu0 0.0
    %9420 = vmatprep.subr.mxu0 0.0
    %9421 = vmatpush1.msra.mxu0 0.0
    %9422 = vmatprep.subr.mxu0 0.0
    %9423 = vmatpush1.msra.mxu0 0.0
    %9424 = vmatprep.subr.mxu0 0.0
    %9425 = vmatpush1.msra.mxu0 0.0
    %9426 = vmatprep.subr.mxu0 0.0
    %9427 = vmatpush1.msra.mxu0 0.0
    %9428 = vmatprep.subr.mxu0 0.0
    %9429 = vmatpush1.msra.mxu0 0.0
    %9430 = vmatprep.subr.mxu0 0.0
    %9431 = vmatpush1.msra.mxu0 0.0
    %9432 = vmatprep.subr.mxu0 0.0
    %9433 = vmatpush1.msra.mxu0 0.0
    %9434 = vmatprep.subr.mxu0 0.0
    %9435 = vmatpush1.msra.mxu0 0.0
    %9436 = vmatprep.subr.mxu0 0.0
    %9437 = vmatpush1.msra.mxu0 0.0
    %9438 = vmatprep.subr.mxu0 0.0
    %9439 = vmatpush1.msra.mxu0 0.0
    %9440 = vmatprep.subr.mxu0 0.0
    %9441 = vmatpush1.msra.mxu0 0.0
    %9442 = vmatprep.subr.mxu0 0.0
    %9443 = vmatpush1.msra.mxu0 0.0
    %9444 = vmatprep.subr.mxu0 0.0
    %9445 = vmatpush1.msra.mxu0 0.0
    %9446 = vmatprep.subr.mxu0 0.0
    %9447 = vmatpush1.msra.mxu0 0.0
    %9448 = vmatprep.subr.mxu0 0.0
    %9449 = vmatpush1.msra.mxu0 0.0
    %9450 = vmatprep.subr.mxu0 0.0
    %9451 = vmatpush1.msra.mxu0 0.0
    %9452 = vmatprep.subr.mxu0 0.0
    %9453 = vmatpush1.msra.mxu0 0.0
    %9454 = vmatprep.mubr.f32.mxu0 0.0
    %v9455 = vand.u32 %v2480, 4294901760
    %v9456 = vsub.f32 %v2480, %v9455
    %v9457 = vand.u32 %v9456, 4294901760
    %v9458 = vsub.f32 %v9456, %v9457
    %v9459 = vand.u32 %v9458, 4294901760
    %9460 = vmatmul.mubr.f32.gmra.mrb[0].mxu0 %v9459
    %v9461 = vpop.f32.mrb[0].mxu0
    %v9462 = vadd.f32 0.0, %v9461
    %v9463 = vpop.f32.mrb[0].mxu0
    %9464 = vmatprep.mubr.f32.mxu0 0.0
    %v9465 = vand.u32 %v2482, 4294901760
    %v9466 = vsub.f32 %v2482, %v9465
    %v9467 = vand.u32 %v9466, 4294901760
    %v9468 = vsub.f32 %v9466, %v9467
    %v9469 = vand.u32 %v9468, 4294901760
    %9470 = vmatmul.mubr.f32.gmra.mrb[0].mxu0 %v9469
    %v9471 = vpop.f32.mrb[0].mxu0
    %v9472 = vadd.f32 0.0, %v9471
    %v9473 = vpop.f32.mrb[0].mxu0
    %9474 = vmatprep.mubr.f32.mxu0 0.0
    %v9475 = vand.u32 %v2484, 4294901760
    %v9476 = vsub.f32 %v2484, %v9475
    %v9477 = vand.u32 %v9476, 4294901760
    %v9478 = vsub.f32 %v9476, %v9477
    %v9479 = vand.u32 %v9478, 4294901760
    %9480 = vmatmul.mubr.f32.gmra.mrb[0].mxu0 %v9479
    %v9481 = vpop.f32.mrb[0].mxu0
    %v9482 = vadd.f32 0.0, %v9481
    %v9483 = vpop.f32.mrb[0].mxu0
    %9484 = vmatprep.mubr.f32.mxu0 0.0
    %v9485 = vand.u32 %v2486, 4294901760
    %v9486 = vsub.f32 %v2486, %v9485
    %v9487 = vand.u32 %v9486, 4294901760
    %v9488 = vsub.f32 %v9486, %v9487
    %v9489 = vand.u32 %v9488, 4294901760
    %9490 = vmatmul.mubr.f32.gmra.mrb[0].mxu0 %v9489
    %v9491 = vpop.f32.mrb[0].mxu0
    %v9492 = vadd.f32 0.0, %v9491
    %v9493 = vpop.f32.mrb[0].mxu0
    %9494 = vmatprep.mubr.f32.mxu0 0.0
    %v9495 = vand.u32 %v2488, 4294901760
    %v9496 = vsub.f32 %v2488, %v9495
    %v9497 = vand.u32 %v9496, 4294901760
    %v9498 = vsub.f32 %v9496, %v9497
    %v9499 = vand.u32 %v9498, 4294901760
    %9500 = vmatmul.mubr.f32.gmra.mrb[0].mxu0 %v9499
    %v9501 = vpop.f32.mrb[0].mxu0
    %v9502 = vadd.f32 0.0, %v9501
    %v9503 = vpop.f32.mrb[0].mxu0
    %9504 = vmatprep.mubr.f32.mxu0 0.0
    %v9505 = vand.u32 %v2490, 4294901760
    %v9506 = vsub.f32 %v2490, %v9505
    %v9507 = vand.u32 %v9506, 4294901760
    %v9508 = vsub.f32 %v9506, %v9507
    %v9509 = vand.u32 %v9508, 4294901760
    %9510 = vmatmul.mubr.f32.gmra.mrb[0].mxu0 %v9509
    %v9511 = vpop.f32.mrb[0].mxu0
    %v9512 = vadd.f32 0.0, %v9511
    %v9513 = vpop.f32.mrb[0].mxu0
    %9514 = vmatprep.mubr.f32.mxu0 0.0
    %v9515 = vand.u32 %v2492, 4294901760
    %v9516 = vsub.f32 %v2492, %v9515
    %v9517 = vand.u32 %v9516, 4294901760
    %v9518 = vsub.f32 %v9516, %v9517
    %v9519 = vand.u32 %v9518, 4294901760
    %9520 = vmatmul.mubr.f32.gmra.mrb[0].mxu0 %v9519
    %v9521 = vpop.f32.mrb[0].mxu0
    %v9522 = vadd.f32 0.0, %v9521
    %v9523 = vpop.f32.mrb[0].mxu0
    %9524 = vmatprep.mubr.f32.mxu0 0.0
    %v9525 = vand.u32 %v9382, 4294901760
    %v9526 = vsub.f32 %v9382, %v9525
    %v9527 = vand.u32 %v9526, 4294901760
    %v9528 = vsub.f32 %v9526, %v9527
    %v9529 = vand.u32 %v9528, 4294901760
    %9530 = vmatmul.mubr.f32.gmra.mrb[0].mxu0 %v9529
    %v9531 = vpop.f32.mrb[0].mxu0
    %v9532 = vadd.f32 0.0, %v9531
    %v9533 = vpop.f32.mrb[0].mxu0
    %9534 = vmatprep.mubr.f32.mxu0 0.0
    %v9535 = vand.u32 %v2496, 4294901760
    %v9536 = vsub.f32 %v2496, %v9535
    %v9537 = vand.u32 %v9536, 4294901760
    %v9538 = vsub.f32 %v9536, %v9537
    %v9539 = vand.u32 %v9538, 4294901760
    %9540 = vmatmul.mubr.f32.gmra.mrb[0].mxu0 %v9539
    %v9541 = vpop.f32.mrb[0].mxu0
    %v9542 = vadd.f32 0.0, %v9541
    %v9543 = vpop.f32.mrb[0].mxu0
    %9544 = vmatprep.mubr.f32.mxu0 0.0
    %v9545 = vand.u32 %v2498, 4294901760
    %v9546 = vsub.f32 %v2498, %v9545
    %v9547 = vand.u32 %v9546, 4294901760
    %v9548 = vsub.f32 %v9546, %v9547
    %v9549 = vand.u32 %v9548, 4294901760
    %9550 = vmatmul.mubr.f32.gmra.mrb[0].mxu0 %v9549
    %v9551 = vpop.f32.mrb[0].mxu0
    %v9552 = vadd.f32 0.0, %v9551
    %v9553 = vpop.f32.mrb[0].mxu0
    %9554 = vmatprep.mubr.f32.mxu0 0.0
    %v9555 = vand.u32 %v2500, 4294901760
    %v9556 = vsub.f32 %v2500, %v9555
    %v9557 = vand.u32 %v9556, 4294901760
    %v9558 = vsub.f32 %v9556, %v9557
    %v9559 = vand.u32 %v9558, 4294901760
    %9560 = vmatmul.mubr.f32.gmra.mrb[0].mxu0 %v9559
    %v9561 = vpop.f32.mrb[0].mxu0
    %v9562 = vadd.f32 0.0, %v9561
    %v9563 = vpop.f32.mrb[0].mxu0
    %9564 = vmatprep.mubr.f32.mxu0 0.0
    %v9565 = vand.u32 %v2502, 4294901760
    %v9566 = vsub.f32 %v2502, %v9565
    %v9567 = vand.u32 %v9566, 4294901760
    %v9568 = vsub.f32 %v9566, %v9567
    %v9569 = vand.u32 %v9568, 4294901760
    %9570 = vmatmul.mubr.f32.gmra.mrb[0].mxu0 %v9569
    %v9571 = vpop.f32.mrb[0].mxu0
    %v9572 = vadd.f32 0.0, %v9571
    %v9573 = vpop.f32.mrb[0].mxu0
    %9574 = vmatprep.mubr.f32.mxu0 0.0
    %v9575 = vand.u32 %v2504, 4294901760
    %v9576 = vsub.f32 %v2504, %v9575
    %v9577 = vand.u32 %v9576, 4294901760
    %v9578 = vsub.f32 %v9576, %v9577
    %v9579 = vand.u32 %v9578, 4294901760
    %9580 = vmatmul.mubr.f32.gmra.mrb[0].mxu0 %v9579
    %v9581 = vpop.f32.mrb[0].mxu0
    %v9582 = vadd.f32 0.0, %v9581
    %v9583 = vpop.f32.mrb[0].mxu0
    %9584 = vmatprep.mubr.f32.mxu0 0.0
    %v9585 = vand.u32 %v2506, 4294901760
    %v9586 = vsub.f32 %v2506, %v9585
    %v9587 = vand.u32 %v9586, 4294901760
    %v9588 = vsub.f32 %v9586, %v9587
    %v9589 = vand.u32 %v9588, 4294901760
    %9590 = vmatmul.mubr.f32.gmra.mrb[0].mxu0 %v9589
    %v9591 = vpop.f32.mrb[0].mxu0
    %v9592 = vadd.f32 0.0, %v9591
    %v9593 = vpop.f32.mrb[0].mxu0
    %9594 = vmatprep.mubr.f32.mxu0 0.0
    %v9595 = vand.u32 %v2508, 4294901760
    %v9596 = vsub.f32 %v2508, %v9595
    %v9597 = vand.u32 %v9596, 4294901760
    %v9598 = vsub.f32 %v9596, %v9597
    %v9599 = vand.u32 %v9598, 4294901760
    %9600 = vmatmul.mubr.f32.gmra.mrb[0].mxu0 %v9599
    %v9601 = vpop.f32.mrb[0].mxu0
    %v9602 = vadd.f32 0.0, %v9601
    %v9603 = vpop.f32.mrb[0].mxu0
    %9604 = vmatprep.mubr.f32.mxu0 0.0
    %v9605 = vand.u32 %v9384, 4294901760
    %v9606 = vsub.f32 %v9384, %v9605
    %v9607 = vand.u32 %v9606, 4294901760
    %v9608 = vsub.f32 %v9606, %v9607
    %v9609 = vand.u32 %v9608, 4294901760
    %9610 = vmatmul.mubr.f32.gmra.mrb[0].mxu0 %v9609
    %v9611 = vpop.f32.mrb[0].mxu0
    %v9612 = vadd.f32 0.0, %v9611
    %v9613 = vpop.f32.mrb[0].mxu0
    %9614 = vdwg.mxu0
    %9615 = vmatprep.subr.mxu0 0.0
    %v9616 = vand.u32 %v9387, 4294901760
    %v9617 = vsub.f32 %v9387, %v9616
    %v9618 = vand.u32 %v9617, 4294901760
    %v9619 = vsub.f32 %v9617, %v9618
    %v9620 = vand.u32 %v9619, 4294901760
    %9621 = vmatpush1.msra.mxu0 %v9620
    %9622 = vmatprep.subr.mxu0 0.0
    %9623 = vmatpush1.msra.mxu0 0.0
    %9624 = vmatprep.subr.mxu0 0.0
    %9625 = vmatpush1.msra.mxu0 0.0
    %9626 = vmatprep.subr.mxu0 0.0
    %9627 = vmatpush1.msra.mxu0 0.0
    %9628 = vmatprep.subr.mxu0 0.0
    %9629 = vmatpush1.msra.mxu0 0.0
    %9630 = vmatprep.subr.mxu0 0.0
    %9631 = vmatpush1.msra.mxu0 0.0
    %9632 = vmatprep.subr.mxu0 0.0
    %9633 = vmatpush1.msra.mxu0 0.0
    %9634 = vmatprep.subr.mxu0 0.0
    %9635 = vmatpush1.msra.mxu0 0.0
    %9636 = vmatprep.subr.mxu0 0.0
    %9637 = vmatpush1.msra.mxu0 0.0
    %9638 = vmatprep.subr.mxu0 0.0
    %9639 = vmatpush1.msra.mxu0 0.0
    %9640 = vmatprep.subr.mxu0 0.0
    %9641 = vmatpush1.msra.mxu0 0.0
    %9642 = vmatprep.subr.mxu0 0.0
    %9643 = vmatpush1.msra.mxu0 0.0
    %9644 = vmatprep.subr.mxu0 0.0
    %9645 = vmatpush1.msra.mxu0 0.0
    %9646 = vmatprep.subr.mxu0 0.0
    %9647 = vmatpush1.msra.mxu0 0.0
    %9648 = vmatprep.subr.mxu0 0.0
    %9649 = vmatpush1.msra.mxu0 0.0
    %9650 = vmatprep.subr.mxu0 0.0
    %9651 = vmatpush1.msra.mxu0 0.0
    %9652 = vmatprep.subr.mxu0 0.0
    %9653 = vmatpush1.msra.mxu0 0.0
    %9654 = vmatprep.subr.mxu0 0.0
    %9655 = vmatpush1.msra.mxu0 0.0
    %9656 = vmatprep.subr.mxu0 0.0
    %9657 = vmatpush1.msra.mxu0 0.0
    %9658 = vmatprep.subr.mxu0 0.0
    %9659 = vmatpush1.msra.mxu0 0.0
    %9660 = vmatprep.subr.mxu0 0.0
    %9661 = vmatpush1.msra.mxu0 0.0
    %9662 = vmatprep.subr.mxu0 0.0
    %9663 = vmatpush1.msra.mxu0 0.0
    %9664 = vmatprep.subr.mxu0 0.0
    %9665 = vmatpush1.msra.mxu0 0.0
    %9666 = vmatprep.subr.mxu0 0.0
    %9667 = vmatpush1.msra.mxu0 0.0
    %9668 = vmatprep.subr.mxu0 0.0
    %9669 = vmatpush1.msra.mxu0 0.0
    %9670 = vmatprep.subr.mxu0 0.0
    %9671 = vmatpush1.msra.mxu0 0.0
    %9672 = vmatprep.subr.mxu0 0.0
    %9673 = vmatpush1.msra.mxu0 0.0
    %9674 = vmatprep.subr.mxu0 0.0
    %9675 = vmatpush1.msra.mxu0 0.0
    %9676 = vmatprep.subr.mxu0 0.0
    %9677 = vmatpush1.msra.mxu0 0.0
    %9678 = vmatprep.subr.mxu0 0.0
    %9679 = vmatpush1.msra.mxu0 0.0
    %9680 = vmatprep.subr.mxu0 0.0
    %9681 = vmatpush1.msra.mxu0 0.0
    %9682 = vmatprep.subr.mxu0 0.0
    %9683 = vmatpush1.msra.mxu0 0.0
    %9684 = vmatprep.mubr.f32.mxu0 0.0
    %v9685 = vand.u32 %v2480, 4294901760
    %9686 = vmatmul.mubr.f32.gmra.mrb[0].mxu0 %v9685
    %v9687 = vpop.f32.mrb[0].mxu0
    %v9688 = vadd.f32 %v9462, %v9687
    %v9689 = vpop.f32.mrb[0].mxu0
    %9690 = vmatprep.mubr.f32.mxu0 0.0
    %v9691 = vand.u32 %v2482, 4294901760
    %9692 = vmatmul.mubr.f32.gmra.mrb[0].mxu0 %v9691
    %v9693 = vpop.f32.mrb[0].mxu0
    %v9694 = vadd.f32 %v9472, %v9693
    %v9695 = vpop.f32.mrb[0].mxu0
    %9696 = vmatprep.mubr.f32.mxu0 0.0
    %v9697 = vand.u32 %v2484, 4294901760
    %9698 = vmatmul.mubr.f32.gmra.mrb[0].mxu0 %v9697
    %v9699 = vpop.f32.mrb[0].mxu0
    %v9700 = vadd.f32 %v9482, %v9699
    %v9701 = vpop.f32.mrb[0].mxu0
    %9702 = vmatprep.mubr.f32.mxu0 0.0
    %v9703 = vand.u32 %v2486, 4294901760
    %9704 = vmatmul.mubr.f32.gmra.mrb[0].mxu0 %v9703
    %v9705 = vpop.f32.mrb[0].mxu0
    %v9706 = vadd.f32 %v9492, %v9705
    %v9707 = vpop.f32.mrb[0].mxu0
    %9708 = vmatprep.mubr.f32.mxu0 0.0
    %v9709 = vand.u32 %v2488, 4294901760
    %9710 = vmatmul.mubr.f32.gmra.mrb[0].mxu0 %v9709
    %v9711 = vpop.f32.mrb[0].mxu0
    %v9712 = vadd.f32 %v9502, %v9711
    %v9713 = vpop.f32.mrb[0].mxu0
    %9714 = vmatprep.mubr.f32.mxu0 0.0
    %v9715 = vand.u32 %v2490, 4294901760
    %9716 = vmatmul.mubr.f32.gmra.mrb[0].mxu0 %v9715
    %v9717 = vpop.f32.mrb[0].mxu0
    %v9718 = vadd.f32 %v9512, %v9717
    %v9719 = vpop.f32.mrb[0].mxu0
    %9720 = vmatprep.mubr.f32.mxu0 0.0
    %v9721 = vand.u32 %v2492, 4294901760
    %9722 = vmatmul.mubr.f32.gmra.mrb[0].mxu0 %v9721
    %v9723 = vpop.f32.mrb[0].mxu0
    %v9724 = vadd.f32 %v9522, %v9723
    %v9725 = vpop.f32.mrb[0].mxu0
    %9726 = vmatprep.mubr.f32.mxu0 0.0
    %v9727 = vand.u32 %v9382, 4294901760
    %9728 = vmatmul.mubr.f32.gmra.mrb[0].mxu0 %v9727
    %v9729 = vpop.f32.mrb[0].mxu0
    %v9730 = vadd.f32 %v9532, %v9729
    %v9731 = vpop.f32.mrb[0].mxu0
    %9732 = vmatprep.mubr.f32.mxu0 0.0
    %v9733 = vand.u32 %v2496, 4294901760
    %9734 = vmatmul.mubr.f32.gmra.mrb[0].mxu0 %v9733
    %v9735 = vpop.f32.mrb[0].mxu0
    %v9736 = vadd.f32 %v9542, %v9735
    %v9737 = vpop.f32.mrb[0].mxu0
    %9738 = vmatprep.mubr.f32.mxu0 0.0
    %v9739 = vand.u32 %v2498, 4294901760
    %9740 = vmatmul.mubr.f32.gmra.mrb[0].mxu0 %v9739
    %v9741 = vpop.f32.mrb[0].mxu0
    %v9742 = vadd.f32 %v9552, %v9741
    %v9743 = vpop.f32.mrb[0].mxu0
    %9744 = vmatprep.mubr.f32.mxu0 0.0
    %v9745 = vand.u32 %v2500, 4294901760
    %9746 = vmatmul.mubr.f32.gmra.mrb[0].mxu0 %v9745
    %v9747 = vpop.f32.mrb[0].mxu0
    %v9748 = vadd.f32 %v9562, %v9747
    %v9749 = vpop.f32.mrb[0].mxu0
    %9750 = vmatprep.mubr.f32.mxu0 0.0
    %v9751 = vand.u32 %v2502, 4294901760
    %9752 = vmatmul.mubr.f32.gmra.mrb[0].mxu0 %v9751
    %v9753 = vpop.f32.mrb[0].mxu0
    %v9754 = vadd.f32 %v9572, %v9753
    %v9755 = vpop.f32.mrb[0].mxu0
    %9756 = vmatprep.mubr.f32.mxu0 0.0
    %v9757 = vand.u32 %v2504, 4294901760
    %9758 = vmatmul.mubr.f32.gmra.mrb[0].mxu0 %v9757
    %v9759 = vpop.f32.mrb[0].mxu0
    %v9760 = vadd.f32 %v9582, %v9759
    %v9761 = vpop.f32.mrb[0].mxu0
    %9762 = vmatprep.mubr.f32.mxu0 0.0
    %v9763 = vand.u32 %v2506, 4294901760
    %9764 = vmatmul.mubr.f32.gmra.mrb[0].mxu0 %v9763
    %v9765 = vpop.f32.mrb[0].mxu0
    %v9766 = vadd.f32 %v9592, %v9765
    %v9767 = vpop.f32.mrb[0].mxu0
    %9768 = vmatprep.mubr.f32.mxu0 0.0
    %v9769 = vand.u32 %v2508, 4294901760
    %9770 = vmatmul.mubr.f32.gmra.mrb[0].mxu0 %v9769
    %v9771 = vpop.f32.mrb[0].mxu0
    %v9772 = vadd.f32 %v9602, %v9771
    %v9773 = vpop.f32.mrb[0].mxu0
    %9774 = vmatprep.mubr.f32.mxu0 0.0
    %v9775 = vand.u32 %v9384, 4294901760
    %9776 = vmatmul.mubr.f32.gmra.mrb[0].mxu0 %v9775
    %v9777 = vpop.f32.mrb[0].mxu0
    %v9778 = vadd.f32 %v9612, %v9777
    %v9779 = vpop.f32.mrb[0].mxu0
    %9780 = vdwg.mxu0
    %9781 = vmatprep.subr.mxu0 0.0
    %v9782 = vand.u32 %v9387, 4294901760
    %v9783 = vsub.f32 %v9387, %v9782
    %9784 = vmatpush1.msra.mxu0 %v9783
    %9785 = vmatprep.subr.mxu0 0.0
    %9786 = vmatpush1.msra.mxu0 0.0
    %9787 = vmatprep.subr.mxu0 0.0
    %9788 = vmatpush1.msra.mxu0 0.0
    %9789 = vmatprep.subr.mxu0 0.0
    %9790 = vmatpush1.msra.mxu0 0.0
    %9791 = vmatprep.subr.mxu0 0.0
    %9792 = vmatpush1.msra.mxu0 0.0
    %9793 = vmatprep.subr.mxu0 0.0
    %9794 = vmatpush1.msra.mxu0 0.0
    %9795 = vmatprep.subr.mxu0 0.0
    %9796 = vmatpush1.msra.mxu0 0.0
    %9797 = vmatprep.subr.mxu0 0.0
    %9798 = vmatpush1.msra.mxu0 0.0
    %9799 = vmatprep.subr.mxu0 0.0
    %9800 = vmatpush1.msra.mxu0 0.0
    %9801 = vmatprep.subr.mxu0 0.0
    %9802 = vmatpush1.msra.mxu0 0.0
    %9803 = vmatprep.subr.mxu0 0.0
    %9804 = vmatpush1.msra.mxu0 0.0
    %9805 = vmatprep.subr.mxu0 0.0
    %9806 = vmatpush1.msra.mxu0 0.0
    %9807 = vmatprep.subr.mxu0 0.0
    %9808 = vmatpush1.msra.mxu0 0.0
    %9809 = vmatprep.subr.mxu0 0.0
    %9810 = vmatpush1.msra.mxu0 0.0
    %9811 = vmatprep.subr.mxu0 0.0
    %9812 = vmatpush1.msra.mxu0 0.0
    %9813 = vmatprep.subr.mxu0 0.0
    %9814 = vmatpush1.msra.mxu0 0.0
    %9815 = vmatprep.subr.mxu0 0.0
    %9816 = vmatpush1.msra.mxu0 0.0
    %9817 = vmatprep.subr.mxu0 0.0
    %9818 = vmatpush1.msra.mxu0 0.0
    %9819 = vmatprep.subr.mxu0 0.0
    %9820 = vmatpush1.msra.mxu0 0.0
    %9821 = vmatprep.subr.mxu0 0.0
    %9822 = vmatpush1.msra.mxu0 0.0
    %9823 = vmatprep.subr.mxu0 0.0
    %9824 = vmatpush1.msra.mxu0 0.0
    %9825 = vmatprep.subr.mxu0 0.0
    %9826 = vmatpush1.msra.mxu0 0.0
    %9827 = vmatprep.subr.mxu0 0.0
    %9828 = vmatpush1.msra.mxu0 0.0
    %9829 = vmatprep.subr.mxu0 0.0
    %9830 = vmatpush1.msra.mxu0 0.0
    %9831 = vmatprep.subr.mxu0 0.0
    %9832 = vmatpush1.msra.mxu0 0.0
    %9833 = vmatprep.subr.mxu0 0.0
    %9834 = vmatpush1.msra.mxu0 0.0
    %9835 = vmatprep.subr.mxu0 0.0
    %9836 = vmatpush1.msra.mxu0 0.0
    %9837 = vmatprep.subr.mxu0 0.0
    %9838 = vmatpush1.msra.mxu0 0.0
    %9839 = vmatprep.subr.mxu0 0.0
    %9840 = vmatpush1.msra.mxu0 0.0
    %9841 = vmatprep.subr.mxu0 0.0
    %9842 = vmatpush1.msra.mxu0 0.0
    %9843 = vmatprep.subr.mxu0 0.0
    %9844 = vmatpush1.msra.mxu0 0.0
    %9845 = vmatprep.subr.mxu0 0.0
    %9846 = vmatpush1.msra.mxu0 0.0
    %9847 = vmatprep.mubr.f32.mxu0 0.0
    %v9848 = vand.u32 %v2480, 4294901760
    %v9849 = vsub.f32 %v2480, %v9848
    %9850 = vmatmul.mubr.f32.gmra.mrb[0].mxu0 %v9849
    %v9851 = vpop.f32.mrb[0].mxu0
    %v9852 = vadd.f32 %v9688, %v9851
    %v9853 = vpop.f32.mrb[0].mxu0
    %9854 = vmatprep.mubr.f32.mxu0 0.0
    %v9855 = vand.u32 %v2482, 4294901760
    %v9856 = vsub.f32 %v2482, %v9855
    %9857 = vmatmul.mubr.f32.gmra.mrb[0].mxu0 %v9856
    %v9858 = vpop.f32.mrb[0].mxu0
    %v9859 = vadd.f32 %v9694, %v9858
    %v9860 = vpop.f32.mrb[0].mxu0
    %9861 = vmatprep.mubr.f32.mxu0 0.0
    %v9862 = vand.u32 %v2484, 4294901760
    %v9863 = vsub.f32 %v2484, %v9862
    %9864 = vmatmul.mubr.f32.gmra.mrb[0].mxu0 %v9863
    %v9865 = vpop.f32.mrb[0].mxu0
    %v9866 = vadd.f32 %v9700, %v9865
    %v9867 = vpop.f32.mrb[0].mxu0
    %9868 = vmatprep.mubr.f32.mxu0 0.0
    %v9869 = vand.u32 %v2486, 4294901760
    %v9870 = vsub.f32 %v2486, %v9869
    %9871 = vmatmul.mubr.f32.gmra.mrb[0].mxu0 %v9870
    %v9872 = vpop.f32.mrb[0].mxu0
    %v9873 = vadd.f32 %v9706, %v9872
    %v9874 = vpop.f32.mrb[0].mxu0
    %9875 = vmatprep.mubr.f32.mxu0 0.0
    %v9876 = vand.u32 %v2488, 4294901760
    %v9877 = vsub.f32 %v2488, %v9876
    %9878 = vmatmul.mubr.f32.gmra.mrb[0].mxu0 %v9877
    %v9879 = vpop.f32.mrb[0].mxu0
    %v9880 = vadd.f32 %v9712, %v9879
    %v9881 = vpop.f32.mrb[0].mxu0
    %9882 = vmatprep.mubr.f32.mxu0 0.0
    %v9883 = vand.u32 %v2490, 4294901760
    %v9884 = vsub.f32 %v2490, %v9883
    %9885 = vmatmul.mubr.f32.gmra.mrb[0].mxu0 %v9884
    %v9886 = vpop.f32.mrb[0].mxu0
    %v9887 = vadd.f32 %v9718, %v9886
    %v9888 = vpop.f32.mrb[0].mxu0
    %9889 = vmatprep.mubr.f32.mxu0 0.0
    %v9890 = vand.u32 %v2492, 4294901760
    %v9891 = vsub.f32 %v2492, %v9890
    %9892 = vmatmul.mubr.f32.gmra.mrb[0].mxu0 %v9891
    %v9893 = vpop.f32.mrb[0].mxu0
    %v9894 = vadd.f32 %v9724, %v9893
    %v9895 = vpop.f32.mrb[0].mxu0
    %9896 = vmatprep.mubr.f32.mxu0 0.0
    %v9897 = vand.u32 %v9382, 4294901760
    %v9898 = vsub.f32 %v9382, %v9897
    %9899 = vmatmul.mubr.f32.gmra.mrb[0].mxu0 %v9898
    %v9900 = vpop.f32.mrb[0].mxu0
    %v9901 = vadd.f32 %v9730, %v9900
    %v9902 = vpop.f32.mrb[0].mxu0
    %9903 = vmatprep.mubr.f32.mxu0 0.0
    %v9904 = vand.u32 %v2496, 4294901760
    %v9905 = vsub.f32 %v2496, %v9904
    %9906 = vmatmul.mubr.f32.gmra.mrb[0].mxu0 %v9905
    %v9907 = vpop.f32.mrb[0].mxu0
    %v9908 = vadd.f32 %v9736, %v9907
    %v9909 = vpop.f32.mrb[0].mxu0
    %9910 = vmatprep.mubr.f32.mxu0 0.0
    %v9911 = vand.u32 %v2498, 4294901760
    %v9912 = vsub.f32 %v2498, %v9911
    %9913 = vmatmul.mubr.f32.gmra.mrb[0].mxu0 %v9912
    %v9914 = vpop.f32.mrb[0].mxu0
    %v9915 = vadd.f32 %v9742, %v9914
    %v9916 = vpop.f32.mrb[0].mxu0
    %9917 = vmatprep.mubr.f32.mxu0 0.0
    %v9918 = vand.u32 %v2500, 4294901760
    %v9919 = vsub.f32 %v2500, %v9918
    %9920 = vmatmul.mubr.f32.gmra.mrb[0].mxu0 %v9919
    %v9921 = vpop.f32.mrb[0].mxu0
    %v9922 = vadd.f32 %v9748, %v9921
    %v9923 = vpop.f32.mrb[0].mxu0
    %9924 = vmatprep.mubr.f32.mxu0 0.0
    %v9925 = vand.u32 %v2502, 4294901760
    %v9926 = vsub.f32 %v2502, %v9925
    %9927 = vmatmul.mubr.f32.gmra.mrb[0].mxu0 %v9926
    %v9928 = vpop.f32.mrb[0].mxu0
    %v9929 = vadd.f32 %v9754, %v9928
    %v9930 = vpop.f32.mrb[0].mxu0
    %9931 = vmatprep.mubr.f32.mxu0 0.0
    %v9932 = vand.u32 %v2504, 4294901760
    %v9933 = vsub.f32 %v2504, %v9932
    %9934 = vmatmul.mubr.f32.gmra.mrb[0].mxu0 %v9933
    %v9935 = vpop.f32.mrb[0].mxu0
    %v9936 = vadd.f32 %v9760, %v9935
    %v9937 = vpop.f32.mrb[0].mxu0
    %9938 = vmatprep.mubr.f32.mxu0 0.0
    %v9939 = vand.u32 %v2506, 4294901760
    %v9940 = vsub.f32 %v2506, %v9939
    %9941 = vmatmul.mubr.f32.gmra.mrb[0].mxu0 %v9940
    %v9942 = vpop.f32.mrb[0].mxu0
    %v9943 = vadd.f32 %v9766, %v9942
    %v9944 = vpop.f32.mrb[0].mxu0
    %9945 = vmatprep.mubr.f32.mxu0 0.0
    %v9946 = vand.u32 %v2508, 4294901760
    %v9947 = vsub.f32 %v2508, %v9946
    %9948 = vmatmul.mubr.f32.gmra.mrb[0].mxu0 %v9947
    %v9949 = vpop.f32.mrb[0].mxu0
    %v9950 = vadd.f32 %v9772, %v9949
    %v9951 = vpop.f32.mrb[0].mxu0
    %9952 = vmatprep.mubr.f32.mxu0 0.0
    %v9953 = vand.u32 %v9384, 4294901760
    %v9954 = vsub.f32 %v9384, %v9953
    %9955 = vmatmul.mubr.f32.gmra.mrb[0].mxu0 %v9954
    %v9956 = vpop.f32.mrb[0].mxu0
    %v9957 = vadd.f32 %v9778, %v9956
    %v9958 = vpop.f32.mrb[0].mxu0
    %9959 = vdwg.mxu0
    %9960 = vmatprep.subr.mxu0 0.0
    %v9961 = vand.u32 %v9387, 4294901760
    %9962 = vmatpush1.msra.mxu0 %v9961
    %9963 = vmatprep.subr.mxu0 0.0
    %9964 = vmatpush1.msra.mxu0 0.0
    %9965 = vmatprep.subr.mxu0 0.0
    %9966 = vmatpush1.msra.mxu0 0.0
    %9967 = vmatprep.subr.mxu0 0.0
    %9968 = vmatpush1.msra.mxu0 0.0
    %9969 = vmatprep.subr.mxu0 0.0
    %9970 = vmatpush1.msra.mxu0 0.0
    %9971 = vmatprep.subr.mxu0 0.0
    %9972 = vmatpush1.msra.mxu0 0.0
    %9973 = vmatprep.subr.mxu0 0.0
    %9974 = vmatpush1.msra.mxu0 0.0
    %9975 = vmatprep.subr.mxu0 0.0
    %9976 = vmatpush1.msra.mxu0 0.0
    %9977 = vmatprep.subr.mxu0 0.0
    %9978 = vmatpush1.msra.mxu0 0.0
    %9979 = vmatprep.subr.mxu0 0.0
    %9980 = vmatpush1.msra.mxu0 0.0
    %9981 = vmatprep.subr.mxu0 0.0
    %9982 = vmatpush1.msra.mxu0 0.0
    %9983 = vmatprep.subr.mxu0 0.0
    %9984 = vmatpush1.msra.mxu0 0.0
    %9985 = vmatprep.subr.mxu0 0.0
    %9986 = vmatpush1.msra.mxu0 0.0
    %9987 = vmatprep.subr.mxu0 0.0
    %9988 = vmatpush1.msra.mxu0 0.0
    %9989 = vmatprep.subr.mxu0 0.0
    %9990 = vmatpush1.msra.mxu0 0.0
    %9991 = vmatprep.subr.mxu0 0.0
    %9992 = vmatpush1.msra.mxu0 0.0
    %9993 = vmatprep.subr.mxu0 0.0
    %9994 = vmatpush1.msra.mxu0 0.0
    %9995 = vmatprep.subr.mxu0 0.0
    %9996 = vmatpush1.msra.mxu0 0.0
    %9997 = vmatprep.subr.mxu0 0.0
    %9998 = vmatpush1.msra.mxu0 0.0
    %9999 = vmatprep.subr.mxu0 0.0
    %10000 = vmatpush1.msra.mxu0 0.0
    %10001 = vmatprep.subr.mxu0 0.0
    %10002 = vmatpush1.msra.mxu0 0.0
    %10003 = vmatprep.subr.mxu0 0.0
    %10004 = vmatpush1.msra.mxu0 0.0
    %10005 = vmatprep.subr.mxu0 0.0
    %10006 = vmatpush1.msra.mxu0 0.0
    %10007 = vmatprep.subr.mxu0 0.0
    %10008 = vmatpush1.msra.mxu0 0.0
    %10009 = vmatprep.subr.mxu0 0.0
    %10010 = vmatpush1.msra.mxu0 0.0
    %10011 = vmatprep.subr.mxu0 0.0
    %10012 = vmatpush1.msra.mxu0 0.0
    %10013 = vmatprep.subr.mxu0 0.0
    %10014 = vmatpush1.msra.mxu0 0.0
    %10015 = vmatprep.subr.mxu0 0.0
    %10016 = vmatpush1.msra.mxu0 0.0
    %10017 = vmatprep.subr.mxu0 0.0
    %10018 = vmatpush1.msra.mxu0 0.0
    %10019 = vmatprep.subr.mxu0 0.0
    %10020 = vmatpush1.msra.mxu0 0.0
    %10021 = vmatprep.subr.mxu0 0.0
    %10022 = vmatpush1.msra.mxu0 0.0
    %10023 = vmatprep.subr.mxu0 0.0
    %10024 = vmatpush1.msra.mxu0 0.0
    %10025 = vmatprep.mubr.f32.mxu0 0.0
    %v10026 = vand.u32 %v2480, 4294901760
    %v10027 = vsub.f32 %v2480, %v10026
    %v10028 = vand.u32 %v10027, 4294901760
    %10029 = vmatmul.mubr.f32.gmra.mrb[0].mxu0 %v10028
    %v10030 = vpop.f32.mrb[0].mxu0
    %v10031 = vadd.f32 %v9852, %v10030
    %v10032 = vpop.f32.mrb[0].mxu0
    %10033 = vmatprep.mubr.f32.mxu0 0.0
    %v10034 = vand.u32 %v2482, 4294901760
    %v10035 = vsub.f32 %v2482, %v10034
    %v10036 = vand.u32 %v10035, 4294901760
    %10037 = vmatmul.mubr.f32.gmra.mrb[0].mxu0 %v10036
    %v10038 = vpop.f32.mrb[0].mxu0
    %v10039 = vadd.f32 %v9859, %v10038
    %v10040 = vpop.f32.mrb[0].mxu0
    %10041 = vmatprep.mubr.f32.mxu0 0.0
    %v10042 = vand.u32 %v2484, 4294901760
    %v10043 = vsub.f32 %v2484, %v10042
    %v10044 = vand.u32 %v10043, 4294901760
    %10045 = vmatmul.mubr.f32.gmra.mrb[0].mxu0 %v10044
    %v10046 = vpop.f32.mrb[0].mxu0
    %v10047 = vadd.f32 %v9866, %v10046
    %v10048 = vpop.f32.mrb[0].mxu0
    %10049 = vmatprep.mubr.f32.mxu0 0.0
    %v10050 = vand.u32 %v2486, 4294901760
    %v10051 = vsub.f32 %v2486, %v10050
    %v10052 = vand.u32 %v10051, 4294901760
    %10053 = vmatmul.mubr.f32.gmra.mrb[0].mxu0 %v10052
    %v10054 = vpop.f32.mrb[0].mxu0
    %v10055 = vadd.f32 %v9873, %v10054
    %v10056 = vpop.f32.mrb[0].mxu0
    %10057 = vmatprep.mubr.f32.mxu0 0.0
    %v10058 = vand.u32 %v2488, 4294901760
    %v10059 = vsub.f32 %v2488, %v10058
    %v10060 = vand.u32 %v10059, 4294901760
    %10061 = vmatmul.mubr.f32.gmra.mrb[0].mxu0 %v10060
    %v10062 = vpop.f32.mrb[0].mxu0
    %v10063 = vadd.f32 %v9880, %v10062
    %v10064 = vpop.f32.mrb[0].mxu0
    %10065 = vmatprep.mubr.f32.mxu0 0.0
    %v10066 = vand.u32 %v2490, 4294901760
    %v10067 = vsub.f32 %v2490, %v10066
    %v10068 = vand.u32 %v10067, 4294901760
    %10069 = vmatmul.mubr.f32.gmra.mrb[0].mxu0 %v10068
    %v10070 = vpop.f32.mrb[0].mxu0
    %v10071 = vadd.f32 %v9887, %v10070
    %v10072 = vpop.f32.mrb[0].mxu0
    %10073 = vmatprep.mubr.f32.mxu0 0.0
    %v10074 = vand.u32 %v2492, 4294901760
    %v10075 = vsub.f32 %v2492, %v10074
    %v10076 = vand.u32 %v10075, 4294901760
    %10077 = vmatmul.mubr.f32.gmra.mrb[0].mxu0 %v10076
    %v10078 = vpop.f32.mrb[0].mxu0
    %v10079 = vadd.f32 %v9894, %v10078
    %v10080 = vpop.f32.mrb[0].mxu0
    %10081 = vmatprep.mubr.f32.mxu0 0.0
    %v10082 = vand.u32 %v9382, 4294901760
    %v10083 = vsub.f32 %v9382, %v10082
    %v10084 = vand.u32 %v10083, 4294901760
    %10085 = vmatmul.mubr.f32.gmra.mrb[0].mxu0 %v10084
    %v10086 = vpop.f32.mrb[0].mxu0
    %v10087 = vadd.f32 %v9901, %v10086
    %v10088 = vpop.f32.mrb[0].mxu0
    %10089 = vmatprep.mubr.f32.mxu0 0.0
    %v10090 = vand.u32 %v2496, 4294901760
    %v10091 = vsub.f32 %v2496, %v10090
    %v10092 = vand.u32 %v10091, 4294901760
    %10093 = vmatmul.mubr.f32.gmra.mrb[0].mxu0 %v10092
    %v10094 = vpop.f32.mrb[0].mxu0
    %v10095 = vadd.f32 %v9908, %v10094
    %v10096 = vpop.f32.mrb[0].mxu0
    %10097 = vmatprep.mubr.f32.mxu0 0.0
    %v10098 = vand.u32 %v2498, 4294901760
    %v10099 = vsub.f32 %v2498, %v10098
    %v10100 = vand.u32 %v10099, 4294901760
    %10101 = vmatmul.mubr.f32.gmra.mrb[0].mxu0 %v10100
    %v10102 = vpop.f32.mrb[0].mxu0
    %v10103 = vadd.f32 %v9915, %v10102
    %v10104 = vpop.f32.mrb[0].mxu0
    %10105 = vmatprep.mubr.f32.mxu0 0.0
    %v10106 = vand.u32 %v2500, 4294901760
    %v10107 = vsub.f32 %v2500, %v10106
    %v10108 = vand.u32 %v10107, 4294901760
    %10109 = vmatmul.mubr.f32.gmra.mrb[0].mxu0 %v10108
    %v10110 = vpop.f32.mrb[0].mxu0
    %v10111 = vadd.f32 %v9922, %v10110
    %v10112 = vpop.f32.mrb[0].mxu0
    %10113 = vmatprep.mubr.f32.mxu0 0.0
    %v10114 = vand.u32 %v2502, 4294901760
    %v10115 = vsub.f32 %v2502, %v10114
    %v10116 = vand.u32 %v10115, 4294901760
    %10117 = vmatmul.mubr.f32.gmra.mrb[0].mxu0 %v10116
    %v10118 = vpop.f32.mrb[0].mxu0
    %v10119 = vadd.f32 %v9929, %v10118
    %v10120 = vpop.f32.mrb[0].mxu0
    %10121 = vmatprep.mubr.f32.mxu0 0.0
    %v10122 = vand.u32 %v2504, 4294901760
    %v10123 = vsub.f32 %v2504, %v10122
    %v10124 = vand.u32 %v10123, 4294901760
    %10125 = vmatmul.mubr.f32.gmra.mrb[0].mxu0 %v10124
    %v10126 = vpop.f32.mrb[0].mxu0
    %v10127 = vadd.f32 %v9936, %v10126
    %v10128 = vpop.f32.mrb[0].mxu0
    %10129 = vmatprep.mubr.f32.mxu0 0.0
    %v10130 = vand.u32 %v2506, 4294901760
    %v10131 = vsub.f32 %v2506, %v10130
    %v10132 = vand.u32 %v10131, 4294901760
    %10133 = vmatmul.mubr.f32.gmra.mrb[0].mxu0 %v10132
    %v10134 = vpop.f32.mrb[0].mxu0
    %v10135 = vadd.f32 %v9943, %v10134
    %v10136 = vpop.f32.mrb[0].mxu0
    %10137 = vmatprep.mubr.f32.mxu0 0.0
    %v10138 = vand.u32 %v2508, 4294901760
    %v10139 = vsub.f32 %v2508, %v10138
    %v10140 = vand.u32 %v10139, 4294901760
    %10141 = vmatmul.mubr.f32.gmra.mrb[0].mxu0 %v10140
    %v10142 = vpop.f32.mrb[0].mxu0
    %v10143 = vadd.f32 %v9950, %v10142
    %v10144 = vpop.f32.mrb[0].mxu0
    %10145 = vmatprep.mubr.f32.mxu0 0.0
    %v10146 = vand.u32 %v9384, 4294901760
    %v10147 = vsub.f32 %v9384, %v10146
    %v10148 = vand.u32 %v10147, 4294901760
    %10149 = vmatmul.mubr.f32.gmra.mrb[0].mxu0 %v10148
    %v10150 = vpop.f32.mrb[0].mxu0
    %v10151 = vadd.f32 %v9957, %v10150
    %v10152 = vpop.f32.mrb[0].mxu0
    %10153 = vdwg.mxu0
    %10154 = vmatprep.subr.mxu0 0.0
    %v10155 = vand.u32 %v9387, 4294901760
    %v10156 = vsub.f32 %v9387, %v10155
    %v10157 = vand.u32 %v10156, 4294901760
    %10158 = vmatpush1.msra.mxu0 %v10157
    %10159 = vmatprep.subr.mxu0 0.0
    %10160 = vmatpush1.msra.mxu0 0.0
    %10161 = vmatprep.subr.mxu0 0.0
    %10162 = vmatpush1.msra.mxu0 0.0
    %10163 = vmatprep.subr.mxu0 0.0
    %10164 = vmatpush1.msra.mxu0 0.0
    %10165 = vmatprep.subr.mxu0 0.0
    %10166 = vmatpush1.msra.mxu0 0.0
    %10167 = vmatprep.subr.mxu0 0.0
    %10168 = vmatpush1.msra.mxu0 0.0
    %10169 = vmatprep.subr.mxu0 0.0
    %10170 = vmatpush1.msra.mxu0 0.0
    %10171 = vmatprep.subr.mxu0 0.0
    %10172 = vmatpush1.msra.mxu0 0.0
    %10173 = vmatprep.subr.mxu0 0.0
    %10174 = vmatpush1.msra.mxu0 0.0
    %10175 = vmatprep.subr.mxu0 0.0
    %10176 = vmatpush1.msra.mxu0 0.0
    %10177 = vmatprep.subr.mxu0 0.0
    %10178 = vmatpush1.msra.mxu0 0.0
    %10179 = vmatprep.subr.mxu0 0.0
    %10180 = vmatpush1.msra.mxu0 0.0
    %10181 = vmatprep.subr.mxu0 0.0
    %10182 = vmatpush1.msra.mxu0 0.0
    %10183 = vmatprep.subr.mxu0 0.0
    %10184 = vmatpush1.msra.mxu0 0.0
    %10185 = vmatprep.subr.mxu0 0.0
    %10186 = vmatpush1.msra.mxu0 0.0
    %10187 = vmatprep.subr.mxu0 0.0
    %10188 = vmatpush1.msra.mxu0 0.0
    %10189 = vmatprep.subr.mxu0 0.0
    %10190 = vmatpush1.msra.mxu0 0.0
    %10191 = vmatprep.subr.mxu0 0.0
    %10192 = vmatpush1.msra.mxu0 0.0
    %10193 = vmatprep.subr.mxu0 0.0
    %10194 = vmatpush1.msra.mxu0 0.0
    %10195 = vmatprep.subr.mxu0 0.0
    %10196 = vmatpush1.msra.mxu0 0.0
    %10197 = vmatprep.subr.mxu0 0.0
    %10198 = vmatpush1.msra.mxu0 0.0
    %10199 = vmatprep.subr.mxu0 0.0
    %10200 = vmatpush1.msra.mxu0 0.0
    %10201 = vmatprep.subr.mxu0 0.0
    %10202 = vmatpush1.msra.mxu0 0.0
    %10203 = vmatprep.subr.mxu0 0.0
    %10204 = vmatpush1.msra.mxu0 0.0
    %10205 = vmatprep.subr.mxu0 0.0
    %10206 = vmatpush1.msra.mxu0 0.0
    %10207 = vmatprep.subr.mxu0 0.0
    %10208 = vmatpush1.msra.mxu0 0.0
    %10209 = vmatprep.subr.mxu0 0.0
    %10210 = vmatpush1.msra.mxu0 0.0
    %10211 = vmatprep.subr.mxu0 0.0
    %10212 = vmatpush1.msra.mxu0 0.0
    %10213 = vmatprep.subr.mxu0 0.0
    %10214 = vmatpush1.msra.mxu0 0.0
    %10215 = vmatprep.subr.mxu0 0.0
    %10216 = vmatpush1.msra.mxu0 0.0
    %10217 = vmatprep.subr.mxu0 0.0
    %10218 = vmatpush1.msra.mxu0 0.0
    %10219 = vmatprep.subr.mxu0 0.0
    %10220 = vmatpush1.msra.mxu0 0.0
    %10221 = vmatprep.mubr.f32.mxu0 0.0
    %v10222 = vand.u32 %v2480, 4294901760
    %10223 = vmatmul.mubr.f32.gmra.mrb[0].mxu0 %v10222
    %v10224 = vpop.f32.mrb[0].mxu0
    %v10225 = vadd.f32 %v10031, %v10224
    %v10226 = vpop.f32.mrb[0].mxu0
    %10227 = vmatprep.mubr.f32.mxu0 0.0
    %v10228 = vand.u32 %v2482, 4294901760
    %10229 = vmatmul.mubr.f32.gmra.mrb[0].mxu0 %v10228
    %v10230 = vpop.f32.mrb[0].mxu0
    %v10231 = vadd.f32 %v10039, %v10230
    %v10232 = vpop.f32.mrb[0].mxu0
    %10233 = vmatprep.mubr.f32.mxu0 0.0
    %v10234 = vand.u32 %v2484, 4294901760
    %10235 = vmatmul.mubr.f32.gmra.mrb[0].mxu0 %v10234
    %v10236 = vpop.f32.mrb[0].mxu0
    %v10237 = vadd.f32 %v10047, %v10236
    %v10238 = vpop.f32.mrb[0].mxu0
    %10239 = vmatprep.mubr.f32.mxu0 0.0
    %v10240 = vand.u32 %v2486, 4294901760
    %10241 = vmatmul.mubr.f32.gmra.mrb[0].mxu0 %v10240
    %v10242 = vpop.f32.mrb[0].mxu0
    %v10243 = vadd.f32 %v10055, %v10242
    %v10244 = vpop.f32.mrb[0].mxu0
    %10245 = vmatprep.mubr.f32.mxu0 0.0
    %v10246 = vand.u32 %v2488, 4294901760
    %10247 = vmatmul.mubr.f32.gmra.mrb[0].mxu0 %v10246
    %v10248 = vpop.f32.mrb[0].mxu0
    %v10249 = vadd.f32 %v10063, %v10248
    %v10250 = vpop.f32.mrb[0].mxu0
    %10251 = vmatprep.mubr.f32.mxu0 0.0
    %v10252 = vand.u32 %v2490, 4294901760
    %10253 = vmatmul.mubr.f32.gmra.mrb[0].mxu0 %v10252
    %v10254 = vpop.f32.mrb[0].mxu0
    %v10255 = vadd.f32 %v10071, %v10254
    %v10256 = vpop.f32.mrb[0].mxu0
    %10257 = vmatprep.mubr.f32.mxu0 0.0
    %v10258 = vand.u32 %v2492, 4294901760
    %10259 = vmatmul.mubr.f32.gmra.mrb[0].mxu0 %v10258
    %v10260 = vpop.f32.mrb[0].mxu0
    %v10261 = vadd.f32 %v10079, %v10260
    %v10262 = vpop.f32.mrb[0].mxu0
    %10263 = vmatprep.mubr.f32.mxu0 0.0
    %v10264 = vand.u32 %v9382, 4294901760
    %10265 = vmatmul.mubr.f32.gmra.mrb[0].mxu0 %v10264
    %v10266 = vpop.f32.mrb[0].mxu0
    %v10267 = vadd.f32 %v10087, %v10266
    %v10268 = vpop.f32.mrb[0].mxu0
    %10269 = vmatprep.mubr.f32.mxu0 0.0
    %v10270 = vand.u32 %v2496, 4294901760
    %10271 = vmatmul.mubr.f32.gmra.mrb[0].mxu0 %v10270
    %v10272 = vpop.f32.mrb[0].mxu0
    %v10273 = vadd.f32 %v10095, %v10272
    %v10274 = vpop.f32.mrb[0].mxu0
    %10275 = vmatprep.mubr.f32.mxu0 0.0
    %v10276 = vand.u32 %v2498, 4294901760
    %10277 = vmatmul.mubr.f32.gmra.mrb[0].mxu0 %v10276
    %v10278 = vpop.f32.mrb[0].mxu0
    %v10279 = vadd.f32 %v10103, %v10278
    %v10280 = vpop.f32.mrb[0].mxu0
    %10281 = vmatprep.mubr.f32.mxu0 0.0
    %v10282 = vand.u32 %v2500, 4294901760
    %10283 = vmatmul.mubr.f32.gmra.mrb[0].mxu0 %v10282
    %v10284 = vpop.f32.mrb[0].mxu0
    %v10285 = vadd.f32 %v10111, %v10284
    %v10286 = vpop.f32.mrb[0].mxu0
    %10287 = vmatprep.mubr.f32.mxu0 0.0
    %v10288 = vand.u32 %v2502, 4294901760
    %10289 = vmatmul.mubr.f32.gmra.mrb[0].mxu0 %v10288
    %v10290 = vpop.f32.mrb[0].mxu0
    %v10291 = vadd.f32 %v10119, %v10290
    %v10292 = vpop.f32.mrb[0].mxu0
    %10293 = vmatprep.mubr.f32.mxu0 0.0
    %v10294 = vand.u32 %v2504, 4294901760
    %10295 = vmatmul.mubr.f32.gmra.mrb[0].mxu0 %v10294
    %v10296 = vpop.f32.mrb[0].mxu0
    %v10297 = vadd.f32 %v10127, %v10296
    %v10298 = vpop.f32.mrb[0].mxu0
    %10299 = vmatprep.mubr.f32.mxu0 0.0
    %v10300 = vand.u32 %v2506, 4294901760
    %10301 = vmatmul.mubr.f32.gmra.mrb[0].mxu0 %v10300
    %v10302 = vpop.f32.mrb[0].mxu0
    %v10303 = vadd.f32 %v10135, %v10302
    %v10304 = vpop.f32.mrb[0].mxu0
    %10305 = vmatprep.mubr.f32.mxu0 0.0
    %v10306 = vand.u32 %v2508, 4294901760
    %10307 = vmatmul.mubr.f32.gmra.mrb[0].mxu0 %v10306
    %v10308 = vpop.f32.mrb[0].mxu0
    %v10309 = vadd.f32 %v10143, %v10308
    %v10310 = vpop.f32.mrb[0].mxu0
    %10311 = vmatprep.mubr.f32.mxu0 0.0
    %v10312 = vand.u32 %v9384, 4294901760
    %10313 = vmatmul.mubr.f32.gmra.mrb[0].mxu0 %v10312
    %v10314 = vpop.f32.mrb[0].mxu0
    %v10315 = vadd.f32 %v10151, %v10314
    %v10316 = vpop.f32.mrb[0].mxu0
    %10317 = vdwg.mxu0
    %10318 = vmatprep.subr.mxu0 0.0
    %v10319 = vand.u32 %v9387, 4294901760
    %10320 = vmatpush1.msra.mxu0 %v10319
    %10321 = vmatprep.subr.mxu0 0.0
    %10322 = vmatpush1.msra.mxu0 0.0
    %10323 = vmatprep.subr.mxu0 0.0
    %10324 = vmatpush1.msra.mxu0 0.0
    %10325 = vmatprep.subr.mxu0 0.0
    %10326 = vmatpush1.msra.mxu0 0.0
    %10327 = vmatprep.subr.mxu0 0.0
    %10328 = vmatpush1.msra.mxu0 0.0
    %10329 = vmatprep.subr.mxu0 0.0
    %10330 = vmatpush1.msra.mxu0 0.0
    %10331 = vmatprep.subr.mxu0 0.0
    %10332 = vmatpush1.msra.mxu0 0.0
    %10333 = vmatprep.subr.mxu0 0.0
    %10334 = vmatpush1.msra.mxu0 0.0
    %10335 = vmatprep.subr.mxu0 0.0
    %10336 = vmatpush1.msra.mxu0 0.0
    %10337 = vmatprep.subr.mxu0 0.0
    %10338 = vmatpush1.msra.mxu0 0.0
    %10339 = vmatprep.subr.mxu0 0.0
    %10340 = vmatpush1.msra.mxu0 0.0
    %10341 = vmatprep.subr.mxu0 0.0
    %10342 = vmatpush1.msra.mxu0 0.0
    %10343 = vmatprep.subr.mxu0 0.0
    %10344 = vmatpush1.msra.mxu0 0.0
    %10345 = vmatprep.subr.mxu0 0.0
    %10346 = vmatpush1.msra.mxu0 0.0
    %10347 = vmatprep.subr.mxu0 0.0
    %10348 = vmatpush1.msra.mxu0 0.0
    %10349 = vmatprep.subr.mxu0 0.0
    %10350 = vmatpush1.msra.mxu0 0.0
    %10351 = vmatprep.subr.mxu0 0.0
    %10352 = vmatpush1.msra.mxu0 0.0
    %10353 = vmatprep.subr.mxu0 0.0
    %10354 = vmatpush1.msra.mxu0 0.0
    %10355 = vmatprep.subr.mxu0 0.0
    %10356 = vmatpush1.msra.mxu0 0.0
    %10357 = vmatprep.subr.mxu0 0.0
    %10358 = vmatpush1.msra.mxu0 0.0
    %10359 = vmatprep.subr.mxu0 0.0
    %10360 = vmatpush1.msra.mxu0 0.0
    %10361 = vmatprep.subr.mxu0 0.0
    %10362 = vmatpush1.msra.mxu0 0.0
    %10363 = vmatprep.subr.mxu0 0.0
    %10364 = vmatpush1.msra.mxu0 0.0
    %10365 = vmatprep.subr.mxu0 0.0
    %10366 = vmatpush1.msra.mxu0 0.0
    %10367 = vmatprep.subr.mxu0 0.0
    %10368 = vmatpush1.msra.mxu0 0.0
    %10369 = vmatprep.subr.mxu0 0.0
    %10370 = vmatpush1.msra.mxu0 0.0
    %10371 = vmatprep.subr.mxu0 0.0
    %10372 = vmatpush1.msra.mxu0 0.0
    %10373 = vmatprep.subr.mxu0 0.0
    %10374 = vmatpush1.msra.mxu0 0.0
    %10375 = vmatprep.subr.mxu0 0.0
    %10376 = vmatpush1.msra.mxu0 0.0
    %10377 = vmatprep.subr.mxu0 0.0
    %10378 = vmatpush1.msra.mxu0 0.0
    %10379 = vmatprep.subr.mxu0 0.0
    %10380 = vmatpush1.msra.mxu0 0.0
    %10381 = vmatprep.subr.mxu0 0.0
    %10382 = vmatpush1.msra.mxu0 0.0
    %10383 = vmatprep.mubr.f32.mxu0 0.0
    %v10384 = vand.u32 %v2480, 4294901760
    %10385 = vmatmul.mubr.f32.gmra.mrb[0].mxu0 %v10384
    %v10386 = vpop.f32.mrb[0].mxu0
    %v10387 = vadd.f32 %v10225, %v10386
    %v10388 = vpop.f32.mrb[0].mxu0
    %10389 = vmatprep.mubr.f32.mxu0 0.0
    %v10390 = vand.u32 %v2482, 4294901760
    %10391 = vmatmul.mubr.f32.gmra.mrb[0].mxu0 %v10390
    %v10392 = vpop.f32.mrb[0].mxu0
    %v10393 = vadd.f32 %v10231, %v10392
    %v10394 = vpop.f32.mrb[0].mxu0
    %10395 = vmatprep.mubr.f32.mxu0 0.0
    %v10396 = vand.u32 %v2484, 4294901760
    %10397 = vmatmul.mubr.f32.gmra.mrb[0].mxu0 %v10396
    %v10398 = vpop.f32.mrb[0].mxu0
    %v10399 = vadd.f32 %v10237, %v10398
    %v10400 = vpop.f32.mrb[0].mxu0
    %10401 = vmatprep.mubr.f32.mxu0 0.0
    %v10402 = vand.u32 %v2486, 4294901760
    %10403 = vmatmul.mubr.f32.gmra.mrb[0].mxu0 %v10402
    %v10404 = vpop.f32.mrb[0].mxu0
    %v10405 = vadd.f32 %v10243, %v10404
    %v10406 = vpop.f32.mrb[0].mxu0
    %10407 = vmatprep.mubr.f32.mxu0 0.0
    %v10408 = vand.u32 %v2488, 4294901760
    %10409 = vmatmul.mubr.f32.gmra.mrb[0].mxu0 %v10408
    %v10410 = vpop.f32.mrb[0].mxu0
    %v10411 = vadd.f32 %v10249, %v10410
    %v10412 = vpop.f32.mrb[0].mxu0
    %10413 = vmatprep.mubr.f32.mxu0 0.0
    %v10414 = vand.u32 %v2490, 4294901760
    %10415 = vmatmul.mubr.f32.gmra.mrb[0].mxu0 %v10414
    %v10416 = vpop.f32.mrb[0].mxu0
    %v10417 = vadd.f32 %v10255, %v10416
    %v10418 = vpop.f32.mrb[0].mxu0
    %10419 = vmatprep.mubr.f32.mxu0 0.0
    %v10420 = vand.u32 %v2492, 4294901760
    %10421 = vmatmul.mubr.f32.gmra.mrb[0].mxu0 %v10420
    %v10422 = vpop.f32.mrb[0].mxu0
    %v10423 = vadd.f32 %v10261, %v10422
    %v10424 = vpop.f32.mrb[0].mxu0
    %10425 = vmatprep.mubr.f32.mxu0 0.0
    %v10426 = vand.u32 %v9382, 4294901760
    %10427 = vmatmul.mubr.f32.gmra.mrb[0].mxu0 %v10426
    %v10428 = vpop.f32.mrb[0].mxu0
    %v10429 = vadd.f32 %v10267, %v10428
    %v10430 = vpop.f32.mrb[0].mxu0
    %10431 = vmatprep.mubr.f32.mxu0 0.0
    %v10432 = vand.u32 %v2496, 4294901760
    %10433 = vmatmul.mubr.f32.gmra.mrb[0].mxu0 %v10432
    %v10434 = vpop.f32.mrb[0].mxu0
    %v10435 = vadd.f32 %v10273, %v10434
    %v10436 = vpop.f32.mrb[0].mxu0
    %10437 = vmatprep.mubr.f32.mxu0 0.0
    %v10438 = vand.u32 %v2498, 4294901760
    %10439 = vmatmul.mubr.f32.gmra.mrb[0].mxu0 %v10438
    %v10440 = vpop.f32.mrb[0].mxu0
    %v10441 = vadd.f32 %v10279, %v10440
    %v10442 = vpop.f32.mrb[0].mxu0
    %10443 = vmatprep.mubr.f32.mxu0 0.0
    %v10444 = vand.u32 %v2500, 4294901760
    %10445 = vmatmul.mubr.f32.gmra.mrb[0].mxu0 %v10444
    %v10446 = vpop.f32.mrb[0].mxu0
    %v10447 = vadd.f32 %v10285, %v10446
    %v10448 = vpop.f32.mrb[0].mxu0
    %10449 = vmatprep.mubr.f32.mxu0 0.0
    %v10450 = vand.u32 %v2502, 4294901760
    %10451 = vmatmul.mubr.f32.gmra.mrb[0].mxu0 %v10450
    %v10452 = vpop.f32.mrb[0].mxu0
    %v10453 = vadd.f32 %v10291, %v10452
    %v10454 = vpop.f32.mrb[0].mxu0
    %10455 = vmatprep.mubr.f32.mxu0 0.0
    %v10456 = vand.u32 %v2504, 4294901760
    %10457 = vmatmul.mubr.f32.gmra.mrb[0].mxu0 %v10456
    %v10458 = vpop.f32.mrb[0].mxu0
    %v10459 = vadd.f32 %v10297, %v10458
    %v10460 = vpop.f32.mrb[0].mxu0
    %10461 = vmatprep.mubr.f32.mxu0 0.0
    %v10462 = vand.u32 %v2506, 4294901760
    %10463 = vmatmul.mubr.f32.gmra.mrb[0].mxu0 %v10462
    %v10464 = vpop.f32.mrb[0].mxu0
    %v10465 = vadd.f32 %v10303, %v10464
    %v10466 = vpop.f32.mrb[0].mxu0
    %10467 = vmatprep.mubr.f32.mxu0 0.0
    %v10468 = vand.u32 %v2508, 4294901760
    %10469 = vmatmul.mubr.f32.gmra.mrb[0].mxu0 %v10468
    %v10470 = vpop.f32.mrb[0].mxu0
    %v10471 = vadd.f32 %v10309, %v10470
    %v10472 = vpop.f32.mrb[0].mxu0
    %10473 = vmatprep.mubr.f32.mxu0 0.0
    %v10474 = vand.u32 %v9384, 4294901760
    %10475 = vmatmul.mubr.f32.gmra.mrb[0].mxu0 %v10474
    %v10476 = vpop.f32.mrb[0].mxu0
    %v10477 = vadd.f32 %v10315, %v10476
    %v10478 = vpop.f32.mrb[0].mxu0
    %10479 = vdwg.mxu0
    %v10480 = vadd.f32 %v9358, %v10387
    %v10481 = vadd.f32 %v9359, %v10393
    %v10482 = vadd.f32 %v9360, %v10399
    %v10483 = vadd.f32 %v9361, %v10405
    %v10484 = vadd.f32 %v9362, %v10411
    %v10485 = vadd.f32 %v9363, %v10417
    %v10486 = vadd.f32 %v9364, %v10423
    %v10487 = vadd.f32 %v9365, %v10429
    %v10488 = vadd.f32 %v9366, %v10435
    %v10489 = vadd.f32 %v9367, %v10441
    %v10490 = vadd.f32 %v9368, %v10447
    %v10491 = vadd.f32 %v9369, %v10453
    %v10492 = vadd.f32 %v9370, %v10459
    %v10493 = vadd.f32 %v9371, %v10465
    %v10494 = vadd.f32 %v9372, %v10471
    %v10495 = vadd.f32 %v9373, %v10477
    %10496 = vst [vmem:[#allocation2] sm:$0xff] %v10480
    %10497 = vst [vmem:[#allocation2 + $0x8] sm:$0xff] %v10481
    %10498 = vst [vmem:[#allocation2 + $0x10] sm:$0xff] %v10482
    %10499 = vst [vmem:[#allocation2 + $0x18] sm:$0xff] %v10483
    %10500 = vst [vmem:[#allocation2 + $0x20] sm:$0xff] %v10484
    %10501 = vst [vmem:[#allocation2 + $0x28] sm:$0xff] %v10485
    %10502 = vst [vmem:[#allocation2 + $0x30] sm:$0xff] %v10486
    %10503 = vst [vmem:[#allocation2 + $0x38] sm:$0xff] %v10487
    %10504 = vst [vmem:[#allocation2 + $0x40] sm:$0xff] %v10488
    %10505 = vst [vmem:[#allocation2 + $0x48] sm:$0xff] %v10489
    %10506 = vst [vmem:[#allocation2 + $0x50] sm:$0xff] %v10490
    %10507 = vst [vmem:[#allocation2 + $0x58] sm:$0xff] %v10491
    %10508 = vst [vmem:[#allocation2 + $0x60] sm:$0xff] %v10492
    %10509 = vst [vmem:[#allocation2 + $0x68] sm:$0xff] %v10493
    %10510 = vst [vmem:[#allocation2 + $0x70] sm:$0xff] %v10494
    %10511 = vst [vmem:[#allocation2 + $0x78] sm:$0xff] %v10495
    %v10512 = vadd.f32 %v10480, %v10481
    %v10513 = vadd.f32 %v10512, %v10482
    %v10514 = vadd.f32 %v10513, %v10483
    %v10515 = vadd.f32 %v10514, %v10484
    %v10516 = vadd.f32 %v10515, %v10485
    %v10517 = vadd.f32 %v10516, %v10486
    %v10518 = vadd.f32 %v10517, %v10487
    %v10519 = vadd.f32 %v10518, %v10488
    %v10520 = vadd.f32 %v10519, %v10489
    %v10521 = vadd.f32 %v10520, %v10490
    %v10522 = vadd.f32 %v10521, %v10491
    %v10523 = vadd.f32 %v10522, %v10492
    %v10524 = vadd.f32 %v10523, %v10493
    %v10525 = vadd.f32 %v10524, %v10494
    %v10526 = vadd.f32 %v10525, %v10495
    %v10527 = vrot.slane %v10526, 4
    %v10528 = vadd.f32 %v10526, %v10527
    %v10529 = vrot.slane %v10528, 2
    %v10530 = vadd.f32 %v10528, %v10529
    %v10531 = vrot.slane %v10530, 1
    %v10532 = vadd.f32 %v10530, %v10531
    %v10533 = vmul.f32 %v10480, %v10480
    %v10534 = vmul.f32 %v10481, %v10481
    %v10535 = vmul.f32 %v10482, %v10482
    %v10536 = vmul.f32 %v10483, %v10483
    %v10537 = vmul.f32 %v10484, %v10484
    %v10538 = vmul.f32 %v10485, %v10485
    %v10539 = vmul.f32 %v10486, %v10486
    %v10540 = vmul.f32 %v10487, %v10487
    %v10541 = vmul.f32 %v10488, %v10488
    %v10542 = vmul.f32 %v10489, %v10489
    %v10543 = vmul.f32 %v10490, %v10490
    %v10544 = vmul.f32 %v10491, %v10491
    %v10545 = vmul.f32 %v10492, %v10492
    %v10546 = vmul.f32 %v10493, %v10493
    %v10547 = vmul.f32 %v10494, %v10494
    %v10548 = vmul.f32 %v10495, %v10495
    %v10549 = vadd.f32 %v10533, %v10534
    %v10550 = vadd.f32 %v10549, %v10535
    %v10551 = vadd.f32 %v10550, %v10536
    %v10552 = vadd.f32 %v10551, %v10537
    %v10553 = vadd.f32 %v10552, %v10538
    %v10554 = vadd.f32 %v10553, %v10539
    %v10555 = vadd.f32 %v10554, %v10540
    %v10556 = vadd.f32 %v10555, %v10541
    %v10557 = vadd.f32 %v10556, %v10542
    %v10558 = vadd.f32 %v10557, %v10543
    %v10559 = vadd.f32 %v10558, %v10544
    %v10560 = vadd.f32 %v10559, %v10545
    %v10561 = vadd.f32 %v10560, %v10546
    %v10562 = vadd.f32 %v10561, %v10547
    %v10563 = vadd.f32 %v10562, %v10548
    %v10564 = vrot.slane %v10563, 4
    %v10565 = vadd.f32 %v10563, %v10564
    %v10566 = vrot.slane %v10565, 2
    %v10567 = vadd.f32 %v10565, %v10566
    %v10568 = vrot.slane %v10567, 1
    %v10569 = vadd.f32 %v10567, %v10568
    %10570 = vst [vmem:[#allocation4] sm:$0xff] %v10532
    %10571 = vst [vmem:[#allocation6] sm:$0xff] %v10569
    // Predicated region
    $region10: #{tpu_custom_call.1} parent=1 // pred_check
      _
    $region11: #{tpu_custom_call.1} parent=1 // pred_check_branch
      %10573 = sbr.rel (0) target = $region13
    $region12: #{tpu_custom_call.1} parent=1 // pred_region
      %s10575 = ssub.s32 2048, 2048
      %10576 = vsyncadd [#allocation3], %s10575
      %s10577 = sshll.u32 [#allocation2], 4
      %s10578 = int_to_ptr.vmem [resolvable:$true] %s10577
      %10583 = dma.vmem_to_hbm [thread:$0]  %s10578, 2048, %s2, [#allocation3], 128, 128, 8
    $region13: #{tpu_custom_call.1} parent=1 // pred_fallthru
      _
    // Predicated region
    $region14: #{tpu_custom_call.1} parent=1 // pred_check
      _
    $region15: #{tpu_custom_call.1} parent=1 // pred_check_branch
      %10585 = sbr.rel (0) target = $region17
    $region16: #{tpu_custom_call.1} parent=1 // pred_region
      %s10587 = ssub.s32 128, 128
      %10588 = vsyncadd [#allocation5], %s10587
      %s10590 = sshll.u32 [#allocation4], 4
      %s10591 = int_to_ptr.vmem [resolvable:$true] %s10590
      %10593 = dma.vmem_to_hbm [thread:$0]  %s10591, 128, %s3, [#allocation5]
    $region17: #{tpu_custom_call.1} parent=1 // pred_fallthru
      _
    // Predicated region
    $region18: #{tpu_custom_call.1} parent=1 // pred_check
      _
    $region19: #{tpu_custom_call.1} parent=1 // pred_check_branch
      %10595 = sbr.rel (0) target = $region21
    $region20: #{tpu_custom_call.1} parent=1 // pred_region
      %s10597 = ssub.s32 128, 128
      %10598 = vsyncadd [#allocation5], %s10597
      %s10600 = sshll.u32 [#allocation6], 4
      %s10601 = int_to_ptr.vmem [resolvable:$true] %s10600
      %10603 = dma.vmem_to_hbm [thread:$0]  %s10601, 128, %s4, [#allocation5]
    $region21: #{tpu_custom_call.1} parent=1 // pred_fallthru
      _
    // Predicated region
    $region22: #{tpu_custom_call.1} parent=1 // pred_check
      _
    $region23: #{tpu_custom_call.1} parent=1 // pred_check_branch
      %10605 = sbr.rel (0) target = $region25
    $region24: #{tpu_custom_call.1} parent=1 // pred_region
      %10606 = dma.done [#allocation3], 2048
    $region25: #{tpu_custom_call.1} parent=1 // pred_fallthru
      _
    // Predicated region
    $region26: #{tpu_custom_call.1} parent=1 // pred_check
      _
    $region27: #{tpu_custom_call.1} parent=1 // pred_check_branch
      %10608 = sbr.rel (0) target = $region29
    $region28: #{tpu_custom_call.1} parent=1 // pred_region
      %10609 = dma.done [#allocation5], 128
    $region29: #{tpu_custom_call.1} parent=1 // pred_fallthru
      _
    // Predicated region
    $region30: #{tpu_custom_call.1} parent=1 // pred_check
      _
    $region31: #{tpu_custom_call.1} parent=1 // pred_check_branch
      %10611 = sbr.rel (0) target = $region33
    $region32: #{tpu_custom_call.1} parent=1 // pred_region
      %10612 = dma.done [#allocation5], 128
    $region33: #{tpu_custom_call.1} parent=1 // pred_fallthru
      _
    %10613 = vsyncpa [#allocation3], 1
    %10614 = vsyncpa [#allocation5], 1

</llo_original>
